<compile_context>
chip_gen: v7x
topology: tpu7x:2x2x1
jax: 0.10.0
libtpu: 0.0.40
codegen_flags: <defaults>
</compile_context>

<pallas_src>
from functools import partial

import jax
import jax.numpy as jnp
from jax import lax
from jax.experimental import pallas as pl
from jax.experimental.pallas import tpu as pltpu

LEAKY_SLOPE = 0.01               # nn.LeakyReLU default negative_slope
BN_EPS = 1e-5                    # nn.BatchNorm3d default eps
K = 3                            # kernel_size
ACT_DTYPE = jnp.bfloat16         # activation storage dtype (compute is f32)
VMEM_LIMIT = 32 * 1024 * 1024    # explicit scoped-VMEM budget (v5e/v6e/v7x safe)


# ----------------------------- Pallas kernels ------------------------------ #

def conv_bn_stats_kernel(x0_ref, x1_ref, x2_ref, w_ref, y_ref, s1_ref, s2_ref):
    """3x3x3 conv (stride 1, pad 1) for one (d, n) output slice, with fused
    BatchNorm batch-statistics epilogue.

    x{k}_ref : (1, 1, H+2, W+2, Cin)  padded D-slices d+k, k = 0..2
    w_ref    : (3, 3, 3, Cin, Cout)   f32 weights, resident across the grid
    y_ref    : (1, 1, H*W, Cout)      pre-BN conv output tile
    s1_ref   : (1, 1, 1, Cout)        per-tile channel sum          (f32)
    s2_ref   : (1, 1, 1, Cout)        per-tile channel sum-of-sqrs  (f32)
    """
    Hp, Wp, cin = x0_ref.shape[2], x0_ref.shape[3], x0_ref.shape[4]
    H, W = Hp - 2, Wp - 2
    cout = w_ref.shape[-1]

    slabs = (x0_ref[0, 0].astype(jnp.float32),
             x1_ref[0, 0].astype(jnp.float32),
             x2_ref[0, 0].astype(jnp.float32))

    acc = jnp.zeros((H * W, cout), jnp.float32)
    for kd in range(K):                       # 27 taps, unrolled at trace time
        slab = slabs[kd]                      # (Hp, Wp, Cin)
        for kh in range(K):
            for kw in range(K):
                xs = slab[kh:kh + H, kw:kw + W, :].reshape(H * W, cin)
                acc = acc + jnp.dot(xs, w_ref[kd, kh, kw],
                                    preferred_element_type=jnp.float32)

    y_ref[0, 0] = acc.astype(y_ref.dtype)
    # BN statistics epilogue while the f32 tile is still in VMEM.
    s1_ref[0, 0] = jnp.sum(acc, axis=0, keepdims=True)
    s2_ref[0, 0] = jnp.sum(acc * acc, axis=0, keepdims=True)


def bn_act_kernel(x_ref, scale_ref, bias_ref, o_ref):
    """Fused BatchNorm affine (precomputed scale/bias) + LeakyReLU(0.01)."""
    x = x_ref[...].astype(jnp.float32)            # (1, 1, H*W, C)
    z = x * scale_ref[...] + bias_ref[...]        # scale/bias: (1, 1, 1, C)
    o_ref[...] = jnp.maximum(z, LEAKY_SLOPE * z).astype(o_ref.dtype)


# ------------------------------ JAX wrappers ------------------------------- #

def conv3d_bn_stats(x_ndhwc, w, act_dtype=ACT_DTYPE):
    """Conv3d(k=3, stride=1, pad=1) + fused per-(n, d) BN partial statistics.

    x: (N, D, H, W, Cin);  w: (3, 3, 3, Cin, Cout) f32.
    Returns y (N, D, H*W, Cout) in act_dtype (pre-BN) and f32 partial sums
    s1, s2 of shape (N, D, 1, Cout).
    """
    N, D, H, W, Cin = x_ndhwc.shape
    Cout = w.shape[-1]
    Hp, Wp = H + 2, W + 2
    xp = jnp.pad(x_ndhwc.astype(act_dtype),
                 ((0, 0), (1, 1), (1, 1), (1, 1), (0, 0)))

    def slab_spec(kd):
        # Block size 1 along padded-D => block index is the element index, so
        # (d + kd) selects the halo slice without materializing im2col in HBM.
        return pl.BlockSpec((1, 1, Hp, Wp, Cin),
                            lambda d, n, kd=kd: (n, d + kd, 0, 0, 0))

    y, s1, s2 = pl.pallas_call(
        conv_bn_stats_kernel,
        out_shape=(
            jax.ShapeDtypeStruct((N, D, H * W, Cout), act_dtype),
            jax.ShapeDtypeStruct((N, D, 1, Cout), jnp.float32),
            jax.ShapeDtypeStruct((N, D, 1, Cout), jnp.float32),
        ),
        grid=(D, N),     # spatial axis leading; both axes parallel (megacore)
        in_specs=[
            slab_spec(0), slab_spec(1), slab_spec(2),
            pl.BlockSpec((K, K, K, Cin, Cout), lambda d, n: (0, 0, 0, 0, 0)),
        ],
        out_specs=(
            pl.BlockSpec((1, 1, H * W, Cout), lambda d, n: (n, d, 0, 0)),
            pl.BlockSpec((1, 1, 1, Cout), lambda d, n: (n, d, 0, 0)),
            pl.BlockSpec((1, 1, 1, Cout), lambda d, n: (n, d, 0, 0)),
        ),
        compiler_params=pltpu.CompilerParams(
            dimension_semantics=("parallel", "parallel"),
            vmem_limit_bytes=VMEM_LIMIT),
    )(xp, xp, xp, w)
    return y, s1, s2


def bn_scale_bias(s1, s2, gamma, beta, count):
    """Fold batch statistics into per-channel scale/bias (tiny, left to XLA)."""
    tot = jnp.sum(s1, axis=(0, 1, 2))
    tot2 = jnp.sum(s2, axis=(0, 1, 2))
    mean = tot / count
    var = jnp.maximum(tot2 / count - mean * mean, 0.0)   # biased var, clamped
    scale = gamma / jnp.sqrt(var + BN_EPS)
    bias = beta - mean * scale
    C = gamma.shape[0]
    return (scale.astype(jnp.float32).reshape(1, 1, 1, C),
            bias.astype(jnp.float32).reshape(1, 1, 1, C))


def bn_leaky_apply(y, scale, bias, out_dtype):
    """Fused BN-affine + LeakyReLU over y: (N, D, H*W, C)."""
    N, D, P, C = y.shape
    return pl.pallas_call(
        bn_act_kernel,
        out_shape=jax.ShapeDtypeStruct((N, D, P, C), out_dtype),
        grid=(D, N),
        in_specs=[
            pl.BlockSpec((1, 1, P, C), lambda d, n: (n, d, 0, 0)),
            pl.BlockSpec((1, 1, 1, C), lambda d, n: (0, 0, 0, 0)),
            pl.BlockSpec((1, 1, 1, C), lambda d, n: (0, 0, 0, 0)),
        ],
        out_specs=pl.BlockSpec((1, 1, P, C), lambda d, n: (n, d, 0, 0)),
        compiler_params=pltpu.CompilerParams(
            dimension_semantics=("parallel", "parallel"),
            vmem_limit_bytes=VMEM_LIMIT),
    )(y, scale, bias)


def bridge_block(x_ncdhw, params, act_dtype=ACT_DTYPE):
    """Forward pass of BridgeBlock.  Input/output are NCDHW (PyTorch layout)."""
    x = jnp.transpose(x_ncdhw, (0, 2, 3, 4, 1))           # NCDHW -> NDHWC
    N, D, H, W, _ = x.shape
    count = float(N * D * H * W)

    # ---- layer 1: conv1 + BN1 (training-mode batch stats) + LeakyReLU ----
    y1, s1, q1 = conv3d_bn_stats(x, params["w1"], act_dtype)
    sc1, bi1 = bn_scale_bias(s1, q1, params["g1"], params["beta1"], count)
    h1 = bn_leaky_apply(y1, sc1, bi1, act_dtype)          # (N, D, H*W, Cmid)
    Cmid = params["w1"].shape[-1]
    h1 = h1.reshape(N, D, H, W, Cmid)

    # ---- layer 2: conv2 + BN2 (training-mode batch stats) + LeakyReLU ----
    y2, s2, q2 = conv3d_bn_stats(h1, params["w2"], act_dtype)
    sc2, bi2 = bn_scale_bias(s2, q2, params["g2"], params["beta2"], count)
    h2 = bn_leaky_apply(y2, sc2, bi2, jnp.float32)        # final output in f32
    Cout = params["w2"].shape[-1]
    h2 = h2.reshape(N, D, H, W, Cout)

    return jnp.transpose(h2, (0, 4, 1, 2, 3))             # NDHWC -> NCDHW


# -------------------------- Pure-JAX f32 reference -------------------------- #

def bridge_block_reference(x_ncdhw, params):
    x = jnp.transpose(x_ncdhw, (0, 2, 3, 4, 1))

    def layer(h, w, g, b):
        y = lax.conv_general_dilated(
            h, w, window_strides=(1, 1, 1), padding=[(1, 1)] * 3,
            dimension_numbers=("NDHWC", "DHWIO", "NDHWC"),
            precision=lax.Precision.HIGHEST)
        mean = jnp.mean(y, axis=(0, 1, 2, 3))
        var = jnp.mean(jnp.square(y - mean), axis=(0, 1, 2, 3))
        z = (y - mean) / jnp.sqrt(var + BN_EPS) * g + b
        return jnp.maximum(z, LEAKY_SLOPE * z)

    h = layer(x, params["w1"], params["g1"], params["beta1"])
    h = layer(h, params["w2"], params["g2"], params["beta2"])
    return jnp.transpose(h, (0, 4, 1, 2, 3))


# ---------------------------- Parameter init ------------------------------- #

def init_params(key, in_ch, mid_ch, out_ch):
    k1, k2 = jax.random.split(key)

    def conv_init(k, cin, cout):
        fan_in = cin * K ** 3
        bound = 1.0 / float(fan_in) ** 0.5
        # PyTorch layout (Cout, Cin, kD, kH, kW) -> kernel layout (kD,kH,kW,Cin,Cout)
        w = jax.random.uniform(k, (cout, cin, K, K, K), jnp.float32, -bound, bound)
        return jnp.transpose(w, (2, 3, 4, 1, 0))

    # NOTE: Conv3d bias is omitted — it is cancelled exactly by the
    # training-mode BatchNorm that follows (it only shifts the batch mean).
    return dict(
        w1=conv_init(k1, in_ch, mid_ch),
        g1=jnp.ones((mid_ch,), jnp.float32),
        beta1=jnp.zeros((mid_ch,), jnp.float32),
        w2=conv_init(k2, mid_ch, out_ch),
        g2=jnp.ones((out_ch,), jnp.float32),
        beta2=jnp.zeros((out_ch,), jnp.float32),
    )


# --------------------------------- main ------------------------------------ #

if __name__ == "__main__":
    key = jax.random.PRNGKey(0)
    kx, kp = jax.random.split(key)

    N, Cin, Cmid, Cout, S = 2, 4, 8, 4, 8           # (N, C, D, H, W) toy volume
    x = jax.random.normal(kx, (N, Cin, S, S, S), jnp.float32)
    params = init_params(kp, Cin, Cmid, Cout)

    fwd = jax.jit(partial(bridge_block, params=params))
    out = fwd(x)
    jax.block_until_ready(out)

    assert out.shape == (N, Cout, S, S, S), out.shape
    assert out.dtype == jnp.float32
    assert bool(jnp.all(jnp.isfinite(out)))

    # Correctness vs. pure-JAX f32 reference (loose tol: bf16 activations).
    ref = jax.jit(partial(bridge_block_reference, params=params))(x)
    max_err = float(jnp.max(jnp.abs(out - ref)))
    assert max_err < 0.3, max_err

    print("KERNEL_OK")
</pallas_src>

<mosaic_0001>
module attributes {stable_mosaic.version = 11 : i64} {
  func.func @conv_bn_stats_kernel(%arg0: i32, %arg1: i32, %arg2: memref<1x1x10x10x4xbf16, #tpu.memory_space<vmem>>, %arg3: memref<1x1x10x10x4xbf16, #tpu.memory_space<vmem>>, %arg4: memref<1x1x10x10x4xbf16, #tpu.memory_space<vmem>>, %arg5: memref<3x3x3x4x8xf32, #tpu.memory_space<vmem>>, %arg6: memref<1x1x64x8xbf16, #tpu.memory_space<vmem>>, %arg7: memref<1x1x1x8xf32, #tpu.memory_space<vmem>>, %arg8: memref<1x1x1x8xf32, #tpu.memory_space<vmem>>) attributes {dimension_semantics = [#tpu.dimension_semantics<parallel>, #tpu.dimension_semantics<parallel>], iteration_bounds = array<i64: 8, 2>, scalar_prefetch = 0 : i64, scratch_operands = 0 : i64, tpu.core_type = #tpu.core_type<tc>, window_params = [{transform_indices = @transform_0, window_bounds = array<i64: 1, 1, 10, 10, 4>}, {transform_indices = @transform_1, window_bounds = array<i64: 1, 1, 10, 10, 4>}, {transform_indices = @transform_2, window_bounds = array<i64: 1, 1, 10, 10, 4>}, {pipeline_mode = #tpu.pipeline_mode<synchronous>, transform_indices = @transform_3, window_bounds = array<i64: 3, 3, 3, 4, 8>}, {transform_indices = @transform_4, window_bounds = array<i64: 1, 1, 64, 8>}, {transform_indices = @transform_5, window_bounds = array<i64: 1, 1, 1, 8>}, {transform_indices = @transform_6, window_bounds = array<i64: 1, 1, 1, 8>}]} {
    %c0 = arith.constant 0 : index
    %c0_0 = arith.constant 0 : index
    %c0_1 = arith.constant 0 : index
    %c0_2 = arith.constant 0 : index
    %c0_3 = arith.constant 0 : index
    %0 = vector.load %arg2[%c0, %c0_0, %c0_1, %c0_2, %c0_3] : memref<1x1x10x10x4xbf16, #tpu.memory_space<vmem>>, vector<1x1x10x10x4xbf16>
    %1 = vector.shape_cast %0 : vector<1x1x10x10x4xbf16> to vector<10x10x4xbf16>
    %2 = arith.extf %1 : vector<10x10x4xbf16> to vector<10x10x4xf32>
    %c0_4 = arith.constant 0 : index
    %c0_5 = arith.constant 0 : index
    %c0_6 = arith.constant 0 : index
    %c0_7 = arith.constant 0 : index
    %c0_8 = arith.constant 0 : index
    %3 = vector.load %arg3[%c0_4, %c0_5, %c0_6, %c0_7, %c0_8] : memref<1x1x10x10x4xbf16, #tpu.memory_space<vmem>>, vector<1x1x10x10x4xbf16>
    %4 = vector.shape_cast %3 : vector<1x1x10x10x4xbf16> to vector<10x10x4xbf16>
    %5 = arith.extf %4 : vector<10x10x4xbf16> to vector<10x10x4xf32>
    %c0_9 = arith.constant 0 : index
    %c0_10 = arith.constant 0 : index
    %c0_11 = arith.constant 0 : index
    %c0_12 = arith.constant 0 : index
    %c0_13 = arith.constant 0 : index
    %6 = vector.load %arg4[%c0_9, %c0_10, %c0_11, %c0_12, %c0_13] : memref<1x1x10x10x4xbf16, #tpu.memory_space<vmem>>, vector<1x1x10x10x4xbf16>
    %7 = vector.shape_cast %6 : vector<1x1x10x10x4xbf16> to vector<10x10x4xbf16>
    %8 = arith.extf %7 : vector<10x10x4xbf16> to vector<10x10x4xf32>
    %cst = arith.constant 0.000000e+00 : f32
    %9 = vector.broadcast %cst : f32 to vector<64x8xf32>
    %10 = vector.extract_strided_slice %2 {offsets = [0, 0, 0], sizes = [8, 8, 4], strides = [1, 1, 1]} : vector<10x10x4xf32> to vector<8x8x4xf32>
    %11 = vector.shape_cast %10 : vector<8x8x4xf32> to vector<64x4xf32>
    %c0_14 = arith.constant 0 : index
    %c0_15 = arith.constant 0 : index
    %c0_16 = arith.constant 0 : index
    %c0_17 = arith.constant 0 : index
    %c0_18 = arith.constant 0 : index
    %12 = vector.load %arg5[%c0_14, %c0_15, %c0_16, %c0_17, %c0_18] : memref<3x3x3x4x8xf32, #tpu.memory_space<vmem>>, vector<1x1x1x4x8xf32>
    %13 = vector.shape_cast %12 : vector<1x1x1x4x8xf32> to vector<4x8xf32>
    %cst_19 = arith.constant dense<0.000000e+00> : vector<64x8xf32>
    %14 = tpu.matmul %11, %13, %cst_19 {dimension_numbers = #tpu.dot_dimension_numbers<[1], [0], [0], [1], [0, 0, 1, 1], [], []>} : vector<64x4xf32>, vector<4x8xf32>, vector<64x8xf32> -> vector<64x8xf32>
    %15 = arith.addf %9, %14 : vector<64x8xf32>
    %16 = vector.extract_strided_slice %2 {offsets = [0, 1, 0], sizes = [8, 8, 4], strides = [1, 1, 1]} : vector<10x10x4xf32> to vector<8x8x4xf32>
    %17 = vector.shape_cast %16 : vector<8x8x4xf32> to vector<64x4xf32>
    %c0_20 = arith.constant 0 : index
    %c0_21 = arith.constant 0 : index
    %c1 = arith.constant 1 : index
    %c0_22 = arith.constant 0 : index
    %c0_23 = arith.constant 0 : index
    %18 = vector.load %arg5[%c0_20, %c0_21, %c1, %c0_22, %c0_23] : memref<3x3x3x4x8xf32, #tpu.memory_space<vmem>>, vector<1x1x1x4x8xf32>
    %19 = vector.shape_cast %18 : vector<1x1x1x4x8xf32> to vector<4x8xf32>
    %cst_24 = arith.constant dense<0.000000e+00> : vector<64x8xf32>
    %20 = tpu.matmul %17, %19, %cst_24 {dimension_numbers = #tpu.dot_dimension_numbers<[1], [0], [0], [1], [0, 0, 1, 1], [], []>} : vector<64x4xf32>, vector<4x8xf32>, vector<64x8xf32> -> vector<64x8xf32>
    %21 = arith.addf %15, %20 : vector<64x8xf32>
    %22 = vector.extract_strided_slice %2 {offsets = [0, 2, 0], sizes = [8, 8, 4], strides = [1, 1, 1]} : vector<10x10x4xf32> to vector<8x8x4xf32>
    %23 = vector.shape_cast %22 : vector<8x8x4xf32> to vector<64x4xf32>
    %c0_25 = arith.constant 0 : index
    %c0_26 = arith.constant 0 : index
    %c2 = arith.constant 2 : index
    %c0_27 = arith.constant 0 : index
    %c0_28 = arith.constant 0 : index
    %24 = vector.load %arg5[%c0_25, %c0_26, %c2, %c0_27, %c0_28] : memref<3x3x3x4x8xf32, #tpu.memory_space<vmem>>, vector<1x1x1x4x8xf32>
    %25 = vector.shape_cast %24 : vector<1x1x1x4x8xf32> to vector<4x8xf32>
    %cst_29 = arith.constant dense<0.000000e+00> : vector<64x8xf32>
    %26 = tpu.matmul %23, %25, %cst_29 {dimension_numbers = #tpu.dot_dimension_numbers<[1], [0], [0], [1], [0, 0, 1, 1], [], []>} : vector<64x4xf32>, vector<4x8xf32>, vector<64x8xf32> -> vector<64x8xf32>
    %27 = arith.addf %21, %26 : vector<64x8xf32>
    %28 = vector.extract_strided_slice %2 {offsets = [1, 0, 0], sizes = [8, 8, 4], strides = [1, 1, 1]} : vector<10x10x4xf32> to vector<8x8x4xf32>
    %29 = vector.shape_cast %28 : vector<8x8x4xf32> to vector<64x4xf32>
    %c0_30 = arith.constant 0 : index
    %c1_31 = arith.constant 1 : index
    %c0_32 = arith.constant 0 : index
    %c0_33 = arith.constant 0 : index
    %c0_34 = arith.constant 0 : index
    %30 = vector.load %arg5[%c0_30, %c1_31, %c0_32, %c0_33, %c0_34] : memref<3x3x3x4x8xf32, #tpu.memory_space<vmem>>, vector<1x1x1x4x8xf32>
    %31 = vector.shape_cast %30 : vector<1x1x1x4x8xf32> to vector<4x8xf32>
    %cst_35 = arith.constant dense<0.000000e+00> : vector<64x8xf32>
    %32 = tpu.matmul %29, %31, %cst_35 {dimension_numbers = #tpu.dot_dimension_numbers<[1], [0], [0], [1], [0, 0, 1, 1], [], []>} : vector<64x4xf32>, vector<4x8xf32>, vector<64x8xf32> -> vector<64x8xf32>
    %33 = arith.addf %27, %32 : vector<64x8xf32>
    %34 = vector.extract_strided_slice %2 {offsets = [1, 1, 0], sizes = [8, 8, 4], strides = [1, 1, 1]} : vector<10x10x4xf32> to vector<8x8x4xf32>
    %35 = vector.shape_cast %34 : vector<8x8x4xf32> to vector<64x4xf32>
    %c0_36 = arith.constant 0 : index
    %c1_37 = arith.constant 1 : index
    %c1_38 = arith.constant 1 : index
    %c0_39 = arith.constant 0 : index
    %c0_40 = arith.constant 0 : index
    %36 = vector.load %arg5[%c0_36, %c1_37, %c1_38, %c0_39, %c0_40] : memref<3x3x3x4x8xf32, #tpu.memory_space<vmem>>, vector<1x1x1x4x8xf32>
    %37 = vector.shape_cast %36 : vector<1x1x1x4x8xf32> to vector<4x8xf32>
    %cst_41 = arith.constant dense<0.000000e+00> : vector<64x8xf32>
    %38 = tpu.matmul %35, %37, %cst_41 {dimension_numbers = #tpu.dot_dimension_numbers<[1], [0], [0], [1], [0, 0, 1, 1], [], []>} : vector<64x4xf32>, vector<4x8xf32>, vector<64x8xf32> -> vector<64x8xf32>
    %39 = arith.addf %33, %38 : vector<64x8xf32>
    %40 = vector.extract_strided_slice %2 {offsets = [1, 2, 0], sizes = [8, 8, 4], strides = [1, 1, 1]} : vector<10x10x4xf32> to vector<8x8x4xf32>
    %41 = vector.shape_cast %40 : vector<8x8x4xf32> to vector<64x4xf32>
    %c0_42 = arith.constant 0 : index
    %c1_43 = arith.constant 1 : index
    %c2_44 = arith.constant 2 : index
    %c0_45 = arith.constant 0 : index
    %c0_46 = arith.constant 0 : index
    %42 = vector.load %arg5[%c0_42, %c1_43, %c2_44, %c0_45, %c0_46] : memref<3x3x3x4x8xf32, #tpu.memory_space<vmem>>, vector<1x1x1x4x8xf32>
    %43 = vector.shape_cast %42 : vector<1x1x1x4x8xf32> to vector<4x8xf32>
    %cst_47 = arith.constant dense<0.000000e+00> : vector<64x8xf32>
    %44 = tpu.matmul %41, %43, %cst_47 {dimension_numbers = #tpu.dot_dimension_numbers<[1], [0], [0], [1], [0, 0, 1, 1], [], []>} : vector<64x4xf32>, vector<4x8xf32>, vector<64x8xf32> -> vector<64x8xf32>
    %45 = arith.addf %39, %44 : vector<64x8xf32>
    %46 = vector.extract_strided_slice %2 {offsets = [2, 0, 0], sizes = [8, 8, 4], strides = [1, 1, 1]} : vector<10x10x4xf32> to vector<8x8x4xf32>
    %47 = vector.shape_cast %46 : vector<8x8x4xf32> to vector<64x4xf32>
    %c0_48 = arith.constant 0 : index
    %c2_49 = arith.constant 2 : index
    %c0_50 = arith.constant 0 : index
    %c0_51 = arith.constant 0 : index
    %c0_52 = arith.constant 0 : index
    %48 = vector.load %arg5[%c0_48, %c2_49, %c0_50, %c0_51, %c0_52] : memref<3x3x3x4x8xf32, #tpu.memory_space<vmem>>, vector<1x1x1x4x8xf32>
    %49 = vector.shape_cast %48 : vector<1x1x1x4x8xf32> to vector<4x8xf32>
    %cst_53 = arith.constant dense<0.000000e+00> : vector<64x8xf32>
    %50 = tpu.matmul %47, %49, %cst_53 {dimension_numbers = #tpu.dot_dimension_numbers<[1], [0], [0], [1], [0, 0, 1, 1], [], []>} : vector<64x4xf32>, vector<4x8xf32>, vector<64x8xf32> -> vector<64x8xf32>
    %51 = arith.addf %45, %50 : vector<64x8xf32>
    %52 = vector.extract_strided_slice %2 {offsets = [2, 1, 0], sizes = [8, 8, 4], strides = [1, 1, 1]} : vector<10x10x4xf32> to vector<8x8x4xf32>
    %53 = vector.shape_cast %52 : vector<8x8x4xf32> to vector<64x4xf32>
    %c0_54 = arith.constant 0 : index
    %c2_55 = arith.constant 2 : index
    %c1_56 = arith.constant 1 : index
    %c0_57 = arith.constant 0 : index
    %c0_58 = arith.constant 0 : index
    %54 = vector.load %arg5[%c0_54, %c2_55, %c1_56, %c0_57, %c0_58] : memref<3x3x3x4x8xf32, #tpu.memory_space<vmem>>, vector<1x1x1x4x8xf32>
    %55 = vector.shape_cast %54 : vector<1x1x1x4x8xf32> to vector<4x8xf32>
    %cst_59 = arith.constant dense<0.000000e+00> : vector<64x8xf32>
    %56 = tpu.matmul %53, %55, %cst_59 {dimension_numbers = #tpu.dot_dimension_numbers<[1], [0], [0], [1], [0, 0, 1, 1], [], []>} : vector<64x4xf32>, vector<4x8xf32>, vector<64x8xf32> -> vector<64x8xf32>
    %57 = arith.addf %51, %56 : vector<64x8xf32>
    %58 = vector.extract_strided_slice %2 {offsets = [2, 2, 0], sizes = [8, 8, 4], strides = [1, 1, 1]} : vector<10x10x4xf32> to vector<8x8x4xf32>
    %59 = vector.shape_cast %58 : vector<8x8x4xf32> to vector<64x4xf32>
    %c0_60 = arith.constant 0 : index
    %c2_61 = arith.constant 2 : index
    %c2_62 = arith.constant 2 : index
    %c0_63 = arith.constant 0 : index
    %c0_64 = arith.constant 0 : index
    %60 = vector.load %arg5[%c0_60, %c2_61, %c2_62, %c0_63, %c0_64] : memref<3x3x3x4x8xf32, #tpu.memory_space<vmem>>, vector<1x1x1x4x8xf32>
    %61 = vector.shape_cast %60 : vector<1x1x1x4x8xf32> to vector<4x8xf32>
    %cst_65 = arith.constant dense<0.000000e+00> : vector<64x8xf32>
    %62 = tpu.matmul %59, %61, %cst_65 {dimension_numbers = #tpu.dot_dimension_numbers<[1], [0], [0], [1], [0, 0, 1, 1], [], []>} : vector<64x4xf32>, vector<4x8xf32>, vector<64x8xf32> -> vector<64x8xf32>
    %63 = arith.addf %57, %62 : vector<64x8xf32>
    %64 = vector.extract_strided_slice %5 {offsets = [0, 0, 0], sizes = [8, 8, 4], strides = [1, 1, 1]} : vector<10x10x4xf32> to vector<8x8x4xf32>
    %65 = vector.shape_cast %64 : vector<8x8x4xf32> to vector<64x4xf32>
    %c1_66 = arith.constant 1 : index
    %c0_67 = arith.constant 0 : index
    %c0_68 = arith.constant 0 : index
    %c0_69 = arith.constant 0 : index
    %c0_70 = arith.constant 0 : index
    %66 = vector.load %arg5[%c1_66, %c0_67, %c0_68, %c0_69, %c0_70] : memref<3x3x3x4x8xf32, #tpu.memory_space<vmem>>, vector<1x1x1x4x8xf32>
    %67 = vector.shape_cast %66 : vector<1x1x1x4x8xf32> to vector<4x8xf32>
    %cst_71 = arith.constant dense<0.000000e+00> : vector<64x8xf32>
    %68 = tpu.matmul %65, %67, %cst_71 {dimension_numbers = #tpu.dot_dimension_numbers<[1], [0], [0], [1], [0, 0, 1, 1], [], []>} : vector<64x4xf32>, vector<4x8xf32>, vector<64x8xf32> -> vector<64x8xf32>
    %69 = arith.addf %63, %68 : vector<64x8xf32>
    %70 = vector.extract_strided_slice %5 {offsets = [0, 1, 0], sizes = [8, 8, 4], strides = [1, 1, 1]} : vector<10x10x4xf32> to vector<8x8x4xf32>
    %71 = vector.shape_cast %70 : vector<8x8x4xf32> to vector<64x4xf32>
    %c1_72 = arith.constant 1 : index
    %c0_73 = arith.constant 0 : index
    %c1_74 = arith.constant 1 : index
    %c0_75 = arith.constant 0 : index
    %c0_76 = arith.constant 0 : index
    %72 = vector.load %arg5[%c1_72, %c0_73, %c1_74, %c0_75, %c0_76] : memref<3x3x3x4x8xf32, #tpu.memory_space<vmem>>, vector<1x1x1x4x8xf32>
    %73 = vector.shape_cast %72 : vector<1x1x1x4x8xf32> to vector<4x8xf32>
    %cst_77 = arith.constant dense<0.000000e+00> : vector<64x8xf32>
    %74 = tpu.matmul %71, %73, %cst_77 {dimension_numbers = #tpu.dot_dimension_numbers<[1], [0], [0], [1], [0, 0, 1, 1], [], []>} : vector<64x4xf32>, vector<4x8xf32>, vector<64x8xf32> -> vector<64x8xf32>
    %75 = arith.addf %69, %74 : vector<64x8xf32>
    %76 = vector.extract_strided_slice %5 {offsets = [0, 2, 0], sizes = [8, 8, 4], strides = [1, 1, 1]} : vector<10x10x4xf32> to vector<8x8x4xf32>
    %77 = vector.shape_cast %76 : vector<8x8x4xf32> to vector<64x4xf32>
    %c1_78 = arith.constant 1 : index
    %c0_79 = arith.constant 0 : index
    %c2_80 = arith.constant 2 : index
    %c0_81 = arith.constant 0 : index
    %c0_82 = arith.constant 0 : index
    %78 = vector.load %arg5[%c1_78, %c0_79, %c2_80, %c0_81, %c0_82] : memref<3x3x3x4x8xf32, #tpu.memory_space<vmem>>, vector<1x1x1x4x8xf32>
    %79 = vector.shape_cast %78 : vector<1x1x1x4x8xf32> to vector<4x8xf32>
    %cst_83 = arith.constant dense<0.000000e+00> : vector<64x8xf32>
    %80 = tpu.matmul %77, %79, %cst_83 {dimension_numbers = #tpu.dot_dimension_numbers<[1], [0], [0], [1], [0, 0, 1, 1], [], []>} : vector<64x4xf32>, vector<4x8xf32>, vector<64x8xf32> -> vector<64x8xf32>
    %81 = arith.addf %75, %80 : vector<64x8xf32>
    %82 = vector.extract_strided_slice %5 {offsets = [1, 0, 0], sizes = [8, 8, 4], strides = [1, 1, 1]} : vector<10x10x4xf32> to vector<8x8x4xf32>
    %83 = vector.shape_cast %82 : vector<8x8x4xf32> to vector<64x4xf32>
    %c1_84 = arith.constant 1 : index
    %c1_85 = arith.constant 1 : index
    %c0_86 = arith.constant 0 : index
    %c0_87 = arith.constant 0 : index
    %c0_88 = arith.constant 0 : index
    %84 = vector.load %arg5[%c1_84, %c1_85, %c0_86, %c0_87, %c0_88] : memref<3x3x3x4x8xf32, #tpu.memory_space<vmem>>, vector<1x1x1x4x8xf32>
    %85 = vector.shape_cast %84 : vector<1x1x1x4x8xf32> to vector<4x8xf32>
    %cst_89 = arith.constant dense<0.000000e+00> : vector<64x8xf32>
    %86 = tpu.matmul %83, %85, %cst_89 {dimension_numbers = #tpu.dot_dimension_numbers<[1], [0], [0], [1], [0, 0, 1, 1], [], []>} : vector<64x4xf32>, vector<4x8xf32>, vector<64x8xf32> -> vector<64x8xf32>
    %87 = arith.addf %81, %86 : vector<64x8xf32>
    %88 = vector.extract_strided_slice %5 {offsets = [1, 1, 0], sizes = [8, 8, 4], strides = [1, 1, 1]} : vector<10x10x4xf32> to vector<8x8x4xf32>
    %89 = vector.shape_cast %88 : vector<8x8x4xf32> to vector<64x4xf32>
    %c1_90 = arith.constant 1 : index
    %c1_91 = arith.constant 1 : index
    %c1_92 = arith.constant 1 : index
    %c0_93 = arith.constant 0 : index
    %c0_94 = arith.constant 0 : index
    %90 = vector.load %arg5[%c1_90, %c1_91, %c1_92, %c0_93, %c0_94] : memref<3x3x3x4x8xf32, #tpu.memory_space<vmem>>, vector<1x1x1x4x8xf32>
    %91 = vector.shape_cast %90 : vector<1x1x1x4x8xf32> to vector<4x8xf32>
    %cst_95 = arith.constant dense<0.000000e+00> : vector<64x8xf32>
    %92 = tpu.matmul %89, %91, %cst_95 {dimension_numbers = #tpu.dot_dimension_numbers<[1], [0], [0], [1], [0, 0, 1, 1], [], []>} : vector<64x4xf32>, vector<4x8xf32>, vector<64x8xf32> -> vector<64x8xf32>
    %93 = arith.addf %87, %92 : vector<64x8xf32>
    %94 = vector.extract_strided_slice %5 {offsets = [1, 2, 0], sizes = [8, 8, 4], strides = [1, 1, 1]} : vector<10x10x4xf32> to vector<8x8x4xf32>
    %95 = vector.shape_cast %94 : vector<8x8x4xf32> to vector<64x4xf32>
    %c1_96 = arith.constant 1 : index
    %c1_97 = arith.constant 1 : index
    %c2_98 = arith.constant 2 : index
    %c0_99 = arith.constant 0 : index
    %c0_100 = arith.constant 0 : index
    %96 = vector.load %arg5[%c1_96, %c1_97, %c2_98, %c0_99, %c0_100] : memref<3x3x3x4x8xf32, #tpu.memory_space<vmem>>, vector<1x1x1x4x8xf32>
    %97 = vector.shape_cast %96 : vector<1x1x1x4x8xf32> to vector<4x8xf32>
    %cst_101 = arith.constant dense<0.000000e+00> : vector<64x8xf32>
    %98 = tpu.matmul %95, %97, %cst_101 {dimension_numbers = #tpu.dot_dimension_numbers<[1], [0], [0], [1], [0, 0, 1, 1], [], []>} : vector<64x4xf32>, vector<4x8xf32>, vector<64x8xf32> -> vector<64x8xf32>
    %99 = arith.addf %93, %98 : vector<64x8xf32>
    %100 = vector.extract_strided_slice %5 {offsets = [2, 0, 0], sizes = [8, 8, 4], strides = [1, 1, 1]} : vector<10x10x4xf32> to vector<8x8x4xf32>
    %101 = vector.shape_cast %100 : vector<8x8x4xf32> to vector<64x4xf32>
    %c1_102 = arith.constant 1 : index
    %c2_103 = arith.constant 2 : index
    %c0_104 = arith.constant 0 : index
    %c0_105 = arith.constant 0 : index
    %c0_106 = arith.constant 0 : index
    %102 = vector.load %arg5[%c1_102, %c2_103, %c0_104, %c0_105, %c0_106] : memref<3x3x3x4x8xf32, #tpu.memory_space<vmem>>, vector<1x1x1x4x8xf32>
    %103 = vector.shape_cast %102 : vector<1x1x1x4x8xf32> to vector<4x8xf32>
    %cst_107 = arith.constant dense<0.000000e+00> : vector<64x8xf32>
    %104 = tpu.matmul %101, %103, %cst_107 {dimension_numbers = #tpu.dot_dimension_numbers<[1], [0], [0], [1], [0, 0, 1, 1], [], []>} : vector<64x4xf32>, vector<4x8xf32>, vector<64x8xf32> -> vector<64x8xf32>
    %105 = arith.addf %99, %104 : vector<64x8xf32>
    %106 = vector.extract_strided_slice %5 {offsets = [2, 1, 0], sizes = [8, 8, 4], strides = [1, 1, 1]} : vector<10x10x4xf32> to vector<8x8x4xf32>
    %107 = vector.shape_cast %106 : vector<8x8x4xf32> to vector<64x4xf32>
    %c1_108 = arith.constant 1 : index
    %c2_109 = arith.constant 2 : index
    %c1_110 = arith.constant 1 : index
    %c0_111 = arith.constant 0 : index
    %c0_112 = arith.constant 0 : index
    %108 = vector.load %arg5[%c1_108, %c2_109, %c1_110, %c0_111, %c0_112] : memref<3x3x3x4x8xf32, #tpu.memory_space<vmem>>, vector<1x1x1x4x8xf32>
    %109 = vector.shape_cast %108 : vector<1x1x1x4x8xf32> to vector<4x8xf32>
    %cst_113 = arith.constant dense<0.000000e+00> : vector<64x8xf32>
    %110 = tpu.matmul %107, %109, %cst_113 {dimension_numbers = #tpu.dot_dimension_numbers<[1], [0], [0], [1], [0, 0, 1, 1], [], []>} : vector<64x4xf32>, vector<4x8xf32>, vector<64x8xf32> -> vector<64x8xf32>
    %111 = arith.addf %105, %110 : vector<64x8xf32>
    %112 = vector.extract_strided_slice %5 {offsets = [2, 2, 0], sizes = [8, 8, 4], strides = [1, 1, 1]} : vector<10x10x4xf32> to vector<8x8x4xf32>
    %113 = vector.shape_cast %112 : vector<8x8x4xf32> to vector<64x4xf32>
    %c1_114 = arith.constant 1 : index
    %c2_115 = arith.constant 2 : index
    %c2_116 = arith.constant 2 : index
    %c0_117 = arith.constant 0 : index
    %c0_118 = arith.constant 0 : index
    %114 = vector.load %arg5[%c1_114, %c2_115, %c2_116, %c0_117, %c0_118] : memref<3x3x3x4x8xf32, #tpu.memory_space<vmem>>, vector<1x1x1x4x8xf32>
    %115 = vector.shape_cast %114 : vector<1x1x1x4x8xf32> to vector<4x8xf32>
    %cst_119 = arith.constant dense<0.000000e+00> : vector<64x8xf32>
    %116 = tpu.matmul %113, %115, %cst_119 {dimension_numbers = #tpu.dot_dimension_numbers<[1], [0], [0], [1], [0, 0, 1, 1], [], []>} : vector<64x4xf32>, vector<4x8xf32>, vector<64x8xf32> -> vector<64x8xf32>
    %117 = arith.addf %111, %116 : vector<64x8xf32>
    %118 = vector.extract_strided_slice %8 {offsets = [0, 0, 0], sizes = [8, 8, 4], strides = [1, 1, 1]} : vector<10x10x4xf32> to vector<8x8x4xf32>
    %119 = vector.shape_cast %118 : vector<8x8x4xf32> to vector<64x4xf32>
    %c2_120 = arith.constant 2 : index
    %c0_121 = arith.constant 0 : index
    %c0_122 = arith.constant 0 : index
    %c0_123 = arith.constant 0 : index
    %c0_124 = arith.constant 0 : index
    %120 = vector.load %arg5[%c2_120, %c0_121, %c0_122, %c0_123, %c0_124] : memref<3x3x3x4x8xf32, #tpu.memory_space<vmem>>, vector<1x1x1x4x8xf32>
    %121 = vector.shape_cast %120 : vector<1x1x1x4x8xf32> to vector<4x8xf32>
    %cst_125 = arith.constant dense<0.000000e+00> : vector<64x8xf32>
    %122 = tpu.matmul %119, %121, %cst_125 {dimension_numbers = #tpu.dot_dimension_numbers<[1], [0], [0], [1], [0, 0, 1, 1], [], []>} : vector<64x4xf32>, vector<4x8xf32>, vector<64x8xf32> -> vector<64x8xf32>
    %123 = arith.addf %117, %122 : vector<64x8xf32>
    %124 = vector.extract_strided_slice %8 {offsets = [0, 1, 0], sizes = [8, 8, 4], strides = [1, 1, 1]} : vector<10x10x4xf32> to vector<8x8x4xf32>
    %125 = vector.shape_cast %124 : vector<8x8x4xf32> to vector<64x4xf32>
    %c2_126 = arith.constant 2 : index
    %c0_127 = arith.constant 0 : index
    %c1_128 = arith.constant 1 : index
    %c0_129 = arith.constant 0 : index
    %c0_130 = arith.constant 0 : index
    %126 = vector.load %arg5[%c2_126, %c0_127, %c1_128, %c0_129, %c0_130] : memref<3x3x3x4x8xf32, #tpu.memory_space<vmem>>, vector<1x1x1x4x8xf32>
    %127 = vector.shape_cast %126 : vector<1x1x1x4x8xf32> to vector<4x8xf32>
    %cst_131 = arith.constant dense<0.000000e+00> : vector<64x8xf32>
    %128 = tpu.matmul %125, %127, %cst_131 {dimension_numbers = #tpu.dot_dimension_numbers<[1], [0], [0], [1], [0, 0, 1, 1], [], []>} : vector<64x4xf32>, vector<4x8xf32>, vector<64x8xf32> -> vector<64x8xf32>
    %129 = arith.addf %123, %128 : vector<64x8xf32>
    %130 = vector.extract_strided_slice %8 {offsets = [0, 2, 0], sizes = [8, 8, 4], strides = [1, 1, 1]} : vector<10x10x4xf32> to vector<8x8x4xf32>
    %131 = vector.shape_cast %130 : vector<8x8x4xf32> to vector<64x4xf32>
    %c2_132 = arith.constant 2 : index
    %c0_133 = arith.constant 0 : index
    %c2_134 = arith.constant 2 : index
    %c0_135 = arith.constant 0 : index
    %c0_136 = arith.constant 0 : index
    %132 = vector.load %arg5[%c2_132, %c0_133, %c2_134, %c0_135, %c0_136] : memref<3x3x3x4x8xf32, #tpu.memory_space<vmem>>, vector<1x1x1x4x8xf32>
    %133 = vector.shape_cast %132 : vector<1x1x1x4x8xf32> to vector<4x8xf32>
    %cst_137 = arith.constant dense<0.000000e+00> : vector<64x8xf32>
    %134 = tpu.matmul %131, %133, %cst_137 {dimension_numbers = #tpu.dot_dimension_numbers<[1], [0], [0], [1], [0, 0, 1, 1], [], []>} : vector<64x4xf32>, vector<4x8xf32>, vector<64x8xf32> -> vector<64x8xf32>
    %135 = arith.addf %129, %134 : vector<64x8xf32>
    %136 = vector.extract_strided_slice %8 {offsets = [1, 0, 0], sizes = [8, 8, 4], strides = [1, 1, 1]} : vector<10x10x4xf32> to vector<8x8x4xf32>
    %137 = vector.shape_cast %136 : vector<8x8x4xf32> to vector<64x4xf32>
    %c2_138 = arith.constant 2 : index
    %c1_139 = arith.constant 1 : index
    %c0_140 = arith.constant 0 : index
    %c0_141 = arith.constant 0 : index
    %c0_142 = arith.constant 0 : index
    %138 = vector.load %arg5[%c2_138, %c1_139, %c0_140, %c0_141, %c0_142] : memref<3x3x3x4x8xf32, #tpu.memory_space<vmem>>, vector<1x1x1x4x8xf32>
    %139 = vector.shape_cast %138 : vector<1x1x1x4x8xf32> to vector<4x8xf32>
    %cst_143 = arith.constant dense<0.000000e+00> : vector<64x8xf32>
    %140 = tpu.matmul %137, %139, %cst_143 {dimension_numbers = #tpu.dot_dimension_numbers<[1], [0], [0], [1], [0, 0, 1, 1], [], []>} : vector<64x4xf32>, vector<4x8xf32>, vector<64x8xf32> -> vector<64x8xf32>
    %141 = arith.addf %135, %140 : vector<64x8xf32>
    %142 = vector.extract_strided_slice %8 {offsets = [1, 1, 0], sizes = [8, 8, 4], strides = [1, 1, 1]} : vector<10x10x4xf32> to vector<8x8x4xf32>
    %143 = vector.shape_cast %142 : vector<8x8x4xf32> to vector<64x4xf32>
    %c2_144 = arith.constant 2 : index
    %c1_145 = arith.constant 1 : index
    %c1_146 = arith.constant 1 : index
    %c0_147 = arith.constant 0 : index
    %c0_148 = arith.constant 0 : index
    %144 = vector.load %arg5[%c2_144, %c1_145, %c1_146, %c0_147, %c0_148] : memref<3x3x3x4x8xf32, #tpu.memory_space<vmem>>, vector<1x1x1x4x8xf32>
    %145 = vector.shape_cast %144 : vector<1x1x1x4x8xf32> to vector<4x8xf32>
    %cst_149 = arith.constant dense<0.000000e+00> : vector<64x8xf32>
    %146 = tpu.matmul %143, %145, %cst_149 {dimension_numbers = #tpu.dot_dimension_numbers<[1], [0], [0], [1], [0, 0, 1, 1], [], []>} : vector<64x4xf32>, vector<4x8xf32>, vector<64x8xf32> -> vector<64x8xf32>
    %147 = arith.addf %141, %146 : vector<64x8xf32>
    %148 = vector.extract_strided_slice %8 {offsets = [1, 2, 0], sizes = [8, 8, 4], strides = [1, 1, 1]} : vector<10x10x4xf32> to vector<8x8x4xf32>
    %149 = vector.shape_cast %148 : vector<8x8x4xf32> to vector<64x4xf32>
    %c2_150 = arith.constant 2 : index
    %c1_151 = arith.constant 1 : index
    %c2_152 = arith.constant 2 : index
    %c0_153 = arith.constant 0 : index
    %c0_154 = arith.constant 0 : index
    %150 = vector.load %arg5[%c2_150, %c1_151, %c2_152, %c0_153, %c0_154] : memref<3x3x3x4x8xf32, #tpu.memory_space<vmem>>, vector<1x1x1x4x8xf32>
    %151 = vector.shape_cast %150 : vector<1x1x1x4x8xf32> to vector<4x8xf32>
    %cst_155 = arith.constant dense<0.000000e+00> : vector<64x8xf32>
    %152 = tpu.matmul %149, %151, %cst_155 {dimension_numbers = #tpu.dot_dimension_numbers<[1], [0], [0], [1], [0, 0, 1, 1], [], []>} : vector<64x4xf32>, vector<4x8xf32>, vector<64x8xf32> -> vector<64x8xf32>
    %153 = arith.addf %147, %152 : vector<64x8xf32>
    %154 = vector.extract_strided_slice %8 {offsets = [2, 0, 0], sizes = [8, 8, 4], strides = [1, 1, 1]} : vector<10x10x4xf32> to vector<8x8x4xf32>
    %155 = vector.shape_cast %154 : vector<8x8x4xf32> to vector<64x4xf32>
    %c2_156 = arith.constant 2 : index
    %c2_157 = arith.constant 2 : index
    %c0_158 = arith.constant 0 : index
    %c0_159 = arith.constant 0 : index
    %c0_160 = arith.constant 0 : index
    %156 = vector.load %arg5[%c2_156, %c2_157, %c0_158, %c0_159, %c0_160] : memref<3x3x3x4x8xf32, #tpu.memory_space<vmem>>, vector<1x1x1x4x8xf32>
    %157 = vector.shape_cast %156 : vector<1x1x1x4x8xf32> to vector<4x8xf32>
    %cst_161 = arith.constant dense<0.000000e+00> : vector<64x8xf32>
    %158 = tpu.matmul %155, %157, %cst_161 {dimension_numbers = #tpu.dot_dimension_numbers<[1], [0], [0], [1], [0, 0, 1, 1], [], []>} : vector<64x4xf32>, vector<4x8xf32>, vector<64x8xf32> -> vector<64x8xf32>
    %159 = arith.addf %153, %158 : vector<64x8xf32>
    %160 = vector.extract_strided_slice %8 {offsets = [2, 1, 0], sizes = [8, 8, 4], strides = [1, 1, 1]} : vector<10x10x4xf32> to vector<8x8x4xf32>
    %161 = vector.shape_cast %160 : vector<8x8x4xf32> to vector<64x4xf32>
    %c2_162 = arith.constant 2 : index
    %c2_163 = arith.constant 2 : index
    %c1_164 = arith.constant 1 : index
    %c0_165 = arith.constant 0 : index
    %c0_166 = arith.constant 0 : index
    %162 = vector.load %arg5[%c2_162, %c2_163, %c1_164, %c0_165, %c0_166] : memref<3x3x3x4x8xf32, #tpu.memory_space<vmem>>, vector<1x1x1x4x8xf32>
    %163 = vector.shape_cast %162 : vector<1x1x1x4x8xf32> to vector<4x8xf32>
    %cst_167 = arith.constant dense<0.000000e+00> : vector<64x8xf32>
    %164 = tpu.matmul %161, %163, %cst_167 {dimension_numbers = #tpu.dot_dimension_numbers<[1], [0], [0], [1], [0, 0, 1, 1], [], []>} : vector<64x4xf32>, vector<4x8xf32>, vector<64x8xf32> -> vector<64x8xf32>
    %165 = arith.addf %159, %164 : vector<64x8xf32>
    %166 = vector.extract_strided_slice %8 {offsets = [2, 2, 0], sizes = [8, 8, 4], strides = [1, 1, 1]} : vector<10x10x4xf32> to vector<8x8x4xf32>
    %167 = vector.shape_cast %166 : vector<8x8x4xf32> to vector<64x4xf32>
    %c2_168 = arith.constant 2 : index
    %c2_169 = arith.constant 2 : index
    %c2_170 = arith.constant 2 : index
    %c0_171 = arith.constant 0 : index
    %c0_172 = arith.constant 0 : index
    %168 = vector.load %arg5[%c2_168, %c2_169, %c2_170, %c0_171, %c0_172] : memref<3x3x3x4x8xf32, #tpu.memory_space<vmem>>, vector<1x1x1x4x8xf32>
    %169 = vector.shape_cast %168 : vector<1x1x1x4x8xf32> to vector<4x8xf32>
    %cst_173 = arith.constant dense<0.000000e+00> : vector<64x8xf32>
    %170 = tpu.matmul %167, %169, %cst_173 {dimension_numbers = #tpu.dot_dimension_numbers<[1], [0], [0], [1], [0, 0, 1, 1], [], []>} : vector<64x4xf32>, vector<4x8xf32>, vector<64x8xf32> -> vector<64x8xf32>
    %171 = arith.addf %165, %170 : vector<64x8xf32>
    %172 = arith.truncf %171 : vector<64x8xf32> to vector<64x8xbf16>
    %c0_174 = arith.constant 0 : index
    %c0_175 = arith.constant 0 : index
    %c0_176 = arith.constant 0 : index
    %c0_177 = arith.constant 0 : index
    %173 = vector.load %arg6[%c0_174, %c0_175, %c0_176, %c0_177] : memref<1x1x64x8xbf16, #tpu.memory_space<vmem>>, vector<1x1x64x8xbf16>
    %174 = vector.shape_cast %173 : vector<1x1x64x8xbf16> to vector<64x8xbf16>
    %175 = vector.shape_cast %172 : vector<64x8xbf16> to vector<1x1x64x8xbf16>
    tpu.vector_store %arg6[%c0_174, %c0_175, %c0_176, %c0_177], %175 {strides = array<i32>} : memref<1x1x64x8xbf16, #tpu.memory_space<vmem>>, vector<1x1x64x8xbf16>,
    %cst_178 = arith.constant dense<0.000000e+00> : vector<8xf32>
    %176 = vector.multi_reduction <add>, %171, %cst_178 [0] : vector<64x8xf32> to vector<8xf32>
    %177 = vector.shape_cast %176 : vector<8xf32> to vector<1x8xf32>
    %c0_179 = arith.constant 0 : index
    %c0_180 = arith.constant 0 : index
    %c0_181 = arith.constant 0 : index
    %c0_182 = arith.constant 0 : index
    %178 = vector.load %arg7[%c0_179, %c0_180, %c0_181, %c0_182] : memref<1x1x1x8xf32, #tpu.memory_space<vmem>>, vector<1x1x1x8xf32>
    %179 = vector.shape_cast %178 : vector<1x1x1x8xf32> to vector<1x8xf32>
    %180 = vector.shape_cast %177 : vector<1x8xf32> to vector<1x1x1x8xf32>
    tpu.vector_store %arg7[%c0_179, %c0_180, %c0_181, %c0_182], %180 {strides = array<i32>} : memref<1x1x1x8xf32, #tpu.memory_space<vmem>>, vector<1x1x1x8xf32>,
    %181 = arith.mulf %171, %171 : vector<64x8xf32>
    %cst_183 = arith.constant dense<0.000000e+00> : vector<8xf32>
    %182 = vector.multi_reduction <add>, %181, %cst_183 [0] : vector<64x8xf32> to vector<8xf32>
    %183 = vector.shape_cast %182 : vector<8xf32> to vector<1x8xf32>
    %c0_184 = arith.constant 0 : index
    %c0_185 = arith.constant 0 : index
    %c0_186 = arith.constant 0 : index
    %c0_187 = arith.constant 0 : index
    %184 = vector.load %arg8[%c0_184, %c0_185, %c0_186, %c0_187] : memref<1x1x1x8xf32, #tpu.memory_space<vmem>>, vector<1x1x1x8xf32>
    %185 = vector.shape_cast %184 : vector<1x1x1x8xf32> to vector<1x8xf32>
    %186 = vector.shape_cast %183 : vector<1x8xf32> to vector<1x1x1x8xf32>
    tpu.vector_store %arg8[%c0_184, %c0_185, %c0_186, %c0_187], %186 {strides = array<i32>} : memref<1x1x1x8xf32, #tpu.memory_space<vmem>>, vector<1x1x1x8xf32>,
    return
  }
  func.func @transform_0(%arg0: i32, %arg1: i32) -> (i32, i32, i32, i32, i32) {
    %c0_i32 = arith.constant 0 : i32
    %0 = arith.addi %arg0, %c0_i32 : i32
    %c0_i32_0 = arith.constant 0 : i32
    %c0_i32_1 = arith.constant 0 : i32
    %c0_i32_2 = arith.constant 0 : i32
    %c0_i32_3 = arith.constant 0 : i32
    return %arg1, %0, %c0_i32_0, %c0_i32_1, %c0_i32_2 : i32, i32, i32, i32, i32
  }
  func.func @transform_1(%arg0: i32, %arg1: i32) -> (i32, i32, i32, i32, i32) {
    %c1_i32 = arith.constant 1 : i32
    %0 = arith.addi %arg0, %c1_i32 : i32
    %c0_i32 = arith.constant 0 : i32
    %c0_i32_0 = arith.constant 0 : i32
    %c0_i32_1 = arith.constant 0 : i32
    %c0_i32_2 = arith.constant 0 : i32
    return %arg1, %0, %c0_i32, %c0_i32_0, %c0_i32_1 : i32, i32, i32, i32, i32
  }
  func.func @transform_2(%arg0: i32, %arg1: i32) -> (i32, i32, i32, i32, i32) {
    %c2_i32 = arith.constant 2 : i32
    %0 = arith.addi %arg0, %c2_i32 : i32
    %c0_i32 = arith.constant 0 : i32
    %c0_i32_0 = arith.constant 0 : i32
    %c0_i32_1 = arith.constant 0 : i32
    %c0_i32_2 = arith.constant 0 : i32
    return %arg1, %0, %c0_i32, %c0_i32_0, %c0_i32_1 : i32, i32, i32, i32, i32
  }
  func.func @transform_3(%arg0: i32, %arg1: i32) -> (i32, i32, i32, i32, i32) {
    %c0_i32 = arith.constant 0 : i32
    %c0_i32_0 = arith.constant 0 : i32
    %c0_i32_1 = arith.constant 0 : i32
    %c0_i32_2 = arith.constant 0 : i32
    %c0_i32_3 = arith.constant 0 : i32
    %c0_i32_4 = arith.constant 0 : i32
    return %c0_i32, %c0_i32_0, %c0_i32_1, %c0_i32_2, %c0_i32_3 : i32, i32, i32, i32, i32
  }
  func.func @transform_4(%arg0: i32, %arg1: i32) -> (i32, i32, i32, i32) {
    %c0_i32 = arith.constant 0 : i32
    %c0_i32_0 = arith.constant 0 : i32
    %c0_i32_1 = arith.constant 0 : i32
    return %arg1, %arg0, %c0_i32, %c0_i32_0 : i32, i32, i32, i32
  }
  func.func @transform_5(%arg0: i32, %arg1: i32) -> (i32, i32, i32, i32) {
    %c0_i32 = arith.constant 0 : i32
    %c0_i32_0 = arith.constant 0 : i32
    %c0_i32_1 = arith.constant 0 : i32
    return %arg1, %arg0, %c0_i32, %c0_i32_0 : i32, i32, i32, i32
  }
  func.func @transform_6(%arg0: i32, %arg1: i32) -> (i32, i32, i32, i32) {
    %c0_i32 = arith.constant 0 : i32
    %c0_i32_0 = arith.constant 0 : i32
    %c0_i32_1 = arith.constant 0 : i32
    return %arg1, %arg0, %c0_i32, %c0_i32_0 : i32, i32, i32, i32
  }
}

module attributes {stable_mosaic.version = 11 : i64} {
  func.func @bn_act_kernel(%arg0: i32, %arg1: i32, %arg2: memref<1x1x64x8xbf16, #tpu.memory_space<vmem>>, %arg3: memref<1x1x1x8xf32, #tpu.memory_space<vmem>>, %arg4: memref<1x1x1x8xf32, #tpu.memory_space<vmem>>, %arg5: memref<1x1x64x8xbf16, #tpu.memory_space<vmem>>) attributes {dimension_semantics = [#tpu.dimension_semantics<parallel>, #tpu.dimension_semantics<parallel>], iteration_bounds = array<i64: 8, 2>, scalar_prefetch = 0 : i64, scratch_operands = 0 : i64, tpu.core_type = #tpu.core_type<tc>, window_params = [{transform_indices = @transform_0, window_bounds = array<i64: 1, 1, 64, 8>}, {pipeline_mode = #tpu.pipeline_mode<synchronous>, transform_indices = @transform_1, window_bounds = array<i64: 1, 1, 1, 8>}, {pipeline_mode = #tpu.pipeline_mode<synchronous>, transform_indices = @transform_2, window_bounds = array<i64: 1, 1, 1, 8>}, {transform_indices = @transform_3, window_bounds = array<i64: 1, 1, 64, 8>}]} {
    %c0 = arith.constant 0 : index
    %c0_0 = arith.constant 0 : index
    %c0_1 = arith.constant 0 : index
    %c0_2 = arith.constant 0 : index
    %0 = vector.load %arg2[%c0, %c0_0, %c0_1, %c0_2] : memref<1x1x64x8xbf16, #tpu.memory_space<vmem>>, vector<1x1x64x8xbf16>
    %1 = arith.extf %0 : vector<1x1x64x8xbf16> to vector<1x1x64x8xf32>
    %c0_3 = arith.constant 0 : index
    %c0_4 = arith.constant 0 : index
    %c0_5 = arith.constant 0 : index
    %c0_6 = arith.constant 0 : index
    %2 = vector.load %arg3[%c0_3, %c0_4, %c0_5, %c0_6] : memref<1x1x1x8xf32, #tpu.memory_space<vmem>>, vector<1x1x1x8xf32>
    %3 = vector.broadcast %2 : vector<1x1x1x8xf32> to vector<1x1x64x8xf32>
    %4 = arith.mulf %1, %3 : vector<1x1x64x8xf32>
    %c0_7 = arith.constant 0 : index
    %c0_8 = arith.constant 0 : index
    %c0_9 = arith.constant 0 : index
    %c0_10 = arith.constant 0 : index
    %5 = vector.load %arg4[%c0_7, %c0_8, %c0_9, %c0_10] : memref<1x1x1x8xf32, #tpu.memory_space<vmem>>, vector<1x1x1x8xf32>
    %6 = vector.broadcast %5 : vector<1x1x1x8xf32> to vector<1x1x64x8xf32>
    %7 = arith.addf %4, %6 : vector<1x1x64x8xf32>
    %cst = arith.constant 0.00999999977 : f32
    %8 = vector.broadcast %cst : f32 to vector<1x1x64x8xf32>
    %9 = arith.mulf %8, %7 : vector<1x1x64x8xf32>
    %10 = arith.maximumf %7, %9 : vector<1x1x64x8xf32>
    %11 = arith.truncf %10 : vector<1x1x64x8xf32> to vector<1x1x64x8xbf16>
    %c0_11 = arith.constant 0 : index
    %c0_12 = arith.constant 0 : index
    %c0_13 = arith.constant 0 : index
    %c0_14 = arith.constant 0 : index
    %12 = vector.load %arg5[%c0_11, %c0_12, %c0_13, %c0_14] : memref<1x1x64x8xbf16, #tpu.memory_space<vmem>>, vector<1x1x64x8xbf16>
    tpu.vector_store %arg5[%c0_11, %c0_12, %c0_13, %c0_14], %11 {strides = array<i32>} : memref<1x1x64x8xbf16, #tpu.memory_space<vmem>>, vector<1x1x64x8xbf16>,
    return
  }
  func.func @transform_0(%arg0: i32, %arg1: i32) -> (i32, i32, i32, i32) {
    %c0_i32 = arith.constant 0 : i32
    %c0_i32_0 = arith.constant 0 : i32
    %c0_i32_1 = arith.constant 0 : i32
    return %arg1, %arg0, %c0_i32, %c0_i32_0 : i32, i32, i32, i32
  }
  func.func @transform_1(%arg0: i32, %arg1: i32) -> (i32, i32, i32, i32) {
    %c0_i32 = arith.constant 0 : i32
    %c0_i32_0 = arith.constant 0 : i32
    %c0_i32_1 = arith.constant 0 : i32
    %c0_i32_2 = arith.constant 0 : i32
    %c0_i32_3 = arith.constant 0 : i32
    return %c0_i32, %c0_i32_0, %c0_i32_1, %c0_i32_2 : i32, i32, i32, i32
  }
  func.func @transform_2(%arg0: i32, %arg1: i32) -> (i32, i32, i32, i32) {
    %c0_i32 = arith.constant 0 : i32
    %c0_i32_0 = arith.constant 0 : i32
    %c0_i32_1 = arith.constant 0 : i32
    %c0_i32_2 = arith.constant 0 : i32
    %c0_i32_3 = arith.constant 0 : i32
    return %c0_i32, %c0_i32_0, %c0_i32_1, %c0_i32_2 : i32, i32, i32, i32
  }
  func.func @transform_3(%arg0: i32, %arg1: i32) -> (i32, i32, i32, i32) {
    %c0_i32 = arith.constant 0 : i32
    %c0_i32_0 = arith.constant 0 : i32
    %c0_i32_1 = arith.constant 0 : i32
    return %arg1, %arg0, %c0_i32, %c0_i32_0 : i32, i32, i32, i32
  }
}

module attributes {stable_mosaic.version = 11 : i64} {
  func.func @conv_bn_stats_kernel(%arg0: i32, %arg1: i32, %arg2: memref<1x1x10x10x8xbf16, #tpu.memory_space<vmem>>, %arg3: memref<1x1x10x10x8xbf16, #tpu.memory_space<vmem>>, %arg4: memref<1x1x10x10x8xbf16, #tpu.memory_space<vmem>>, %arg5: memref<3x3x3x8x4xf32, #tpu.memory_space<vmem>>, %arg6: memref<1x1x64x4xbf16, #tpu.memory_space<vmem>>, %arg7: memref<1x1x1x4xf32, #tpu.memory_space<vmem>>, %arg8: memref<1x1x1x4xf32, #tpu.memory_space<vmem>>) attributes {dimension_semantics = [#tpu.dimension_semantics<parallel>, #tpu.dimension_semantics<parallel>], iteration_bounds = array<i64: 8, 2>, scalar_prefetch = 0 : i64, scratch_operands = 0 : i64, tpu.core_type = #tpu.core_type<tc>, window_params = [{transform_indices = @transform_0, window_bounds = array<i64: 1, 1, 10, 10, 8>}, {transform_indices = @transform_1, window_bounds = array<i64: 1, 1, 10, 10, 8>}, {transform_indices = @transform_2, window_bounds = array<i64: 1, 1, 10, 10, 8>}, {pipeline_mode = #tpu.pipeline_mode<synchronous>, transform_indices = @transform_3, window_bounds = array<i64: 3, 3, 3, 8, 4>}, {transform_indices = @transform_4, window_bounds = array<i64: 1, 1, 64, 4>}, {transform_indices = @transform_5, window_bounds = array<i64: 1, 1, 1, 4>}, {transform_indices = @transform_6, window_bounds = array<i64: 1, 1, 1, 4>}]} {
    %c0 = arith.constant 0 : index
    %c0_0 = arith.constant 0 : index
    %c0_1 = arith.constant 0 : index
    %c0_2 = arith.constant 0 : index
    %c0_3 = arith.constant 0 : index
    %0 = vector.load %arg2[%c0, %c0_0, %c0_1, %c0_2, %c0_3] : memref<1x1x10x10x8xbf16, #tpu.memory_space<vmem>>, vector<1x1x10x10x8xbf16>
    %1 = vector.shape_cast %0 : vector<1x1x10x10x8xbf16> to vector<10x10x8xbf16>
    %2 = arith.extf %1 : vector<10x10x8xbf16> to vector<10x10x8xf32>
    %c0_4 = arith.constant 0 : index
    %c0_5 = arith.constant 0 : index
    %c0_6 = arith.constant 0 : index
    %c0_7 = arith.constant 0 : index
    %c0_8 = arith.constant 0 : index
    %3 = vector.load %arg3[%c0_4, %c0_5, %c0_6, %c0_7, %c0_8] : memref<1x1x10x10x8xbf16, #tpu.memory_space<vmem>>, vector<1x1x10x10x8xbf16>
    %4 = vector.shape_cast %3 : vector<1x1x10x10x8xbf16> to vector<10x10x8xbf16>
    %5 = arith.extf %4 : vector<10x10x8xbf16> to vector<10x10x8xf32>
    %c0_9 = arith.constant 0 : index
    %c0_10 = arith.constant 0 : index
    %c0_11 = arith.constant 0 : index
    %c0_12 = arith.constant 0 : index
    %c0_13 = arith.constant 0 : index
    %6 = vector.load %arg4[%c0_9, %c0_10, %c0_11, %c0_12, %c0_13] : memref<1x1x10x10x8xbf16, #tpu.memory_space<vmem>>, vector<1x1x10x10x8xbf16>
    %7 = vector.shape_cast %6 : vector<1x1x10x10x8xbf16> to vector<10x10x8xbf16>
    %8 = arith.extf %7 : vector<10x10x8xbf16> to vector<10x10x8xf32>
    %cst = arith.constant 0.000000e+00 : f32
    %9 = vector.broadcast %cst : f32 to vector<64x4xf32>
    %10 = vector.extract_strided_slice %2 {offsets = [0, 0, 0], sizes = [8, 8, 8], strides = [1, 1, 1]} : vector<10x10x8xf32> to vector<8x8x8xf32>
    %11 = vector.shape_cast %10 : vector<8x8x8xf32> to vector<64x8xf32>
    %c0_14 = arith.constant 0 : index
    %c0_15 = arith.constant 0 : index
    %c0_16 = arith.constant 0 : index
    %c0_17 = arith.constant 0 : index
    %c0_18 = arith.constant 0 : index
    %12 = vector.load %arg5[%c0_14, %c0_15, %c0_16, %c0_17, %c0_18] : memref<3x3x3x8x4xf32, #tpu.memory_space<vmem>>, vector<1x1x1x8x4xf32>
    %13 = vector.shape_cast %12 : vector<1x1x1x8x4xf32> to vector<8x4xf32>
    %cst_19 = arith.constant dense<0.000000e+00> : vector<64x4xf32>
    %14 = tpu.matmul %11, %13, %cst_19 {dimension_numbers = #tpu.dot_dimension_numbers<[1], [0], [0], [1], [0, 0, 1, 1], [], []>} : vector<64x8xf32>, vector<8x4xf32>, vector<64x4xf32> -> vector<64x4xf32>
    %15 = arith.addf %9, %14 : vector<64x4xf32>
    %16 = vector.extract_strided_slice %2 {offsets = [0, 1, 0], sizes = [8, 8, 8], strides = [1, 1, 1]} : vector<10x10x8xf32> to vector<8x8x8xf32>
    %17 = vector.shape_cast %16 : vector<8x8x8xf32> to vector<64x8xf32>
    %c0_20 = arith.constant 0 : index
    %c0_21 = arith.constant 0 : index
    %c1 = arith.constant 1 : index
    %c0_22 = arith.constant 0 : index
    %c0_23 = arith.constant 0 : index
    %18 = vector.load %arg5[%c0_20, %c0_21, %c1, %c0_22, %c0_23] : memref<3x3x3x8x4xf32, #tpu.memory_space<vmem>>, vector<1x1x1x8x4xf32>
    %19 = vector.shape_cast %18 : vector<1x1x1x8x4xf32> to vector<8x4xf32>
    %cst_24 = arith.constant dense<0.000000e+00> : vector<64x4xf32>
    %20 = tpu.matmul %17, %19, %cst_24 {dimension_numbers = #tpu.dot_dimension_numbers<[1], [0], [0], [1], [0, 0, 1, 1], [], []>} : vector<64x8xf32>, vector<8x4xf32>, vector<64x4xf32> -> vector<64x4xf32>
    %21 = arith.addf %15, %20 : vector<64x4xf32>
    %22 = vector.extract_strided_slice %2 {offsets = [0, 2, 0], sizes = [8, 8, 8], strides = [1, 1, 1]} : vector<10x10x8xf32> to vector<8x8x8xf32>
    %23 = vector.shape_cast %22 : vector<8x8x8xf32> to vector<64x8xf32>
    %c0_25 = arith.constant 0 : index
    %c0_26 = arith.constant 0 : index
    %c2 = arith.constant 2 : index
    %c0_27 = arith.constant 0 : index
    %c0_28 = arith.constant 0 : index
    %24 = vector.load %arg5[%c0_25, %c0_26, %c2, %c0_27, %c0_28] : memref<3x3x3x8x4xf32, #tpu.memory_space<vmem>>, vector<1x1x1x8x4xf32>
    %25 = vector.shape_cast %24 : vector<1x1x1x8x4xf32> to vector<8x4xf32>
    %cst_29 = arith.constant dense<0.000000e+00> : vector<64x4xf32>
    %26 = tpu.matmul %23, %25, %cst_29 {dimension_numbers = #tpu.dot_dimension_numbers<[1], [0], [0], [1], [0, 0, 1, 1], [], []>} : vector<64x8xf32>, vector<8x4xf32>, vector<64x4xf32> -> vector<64x4xf32>
    %27 = arith.addf %21, %26 : vector<64x4xf32>
    %28 = vector.extract_strided_slice %2 {offsets = [1, 0, 0], sizes = [8, 8, 8], strides = [1, 1, 1]} : vector<10x10x8xf32> to vector<8x8x8xf32>
    %29 = vector.shape_cast %28 : vector<8x8x8xf32> to vector<64x8xf32>
    %c0_30 = arith.constant 0 : index
    %c1_31 = arith.constant 1 : index
    %c0_32 = arith.constant 0 : index
    %c0_33 = arith.constant 0 : index
    %c0_34 = arith.constant 0 : index
    %30 = vector.load %arg5[%c0_30, %c1_31, %c0_32, %c0_33, %c0_34] : memref<3x3x3x8x4xf32, #tpu.memory_space<vmem>>, vector<1x1x1x8x4xf32>
    %31 = vector.shape_cast %30 : vector<1x1x1x8x4xf32> to vector<8x4xf32>
    %cst_35 = arith.constant dense<0.000000e+00> : vector<64x4xf32>
    %32 = tpu.matmul %29, %31, %cst_35 {dimension_numbers = #tpu.dot_dimension_numbers<[1], [0], [0], [1], [0, 0, 1, 1], [], []>} : vector<64x8xf32>, vector<8x4xf32>, vector<64x4xf32> -> vector<64x4xf32>
    %33 = arith.addf %27, %32 : vector<64x4xf32>
    %34 = vector.extract_strided_slice %2 {offsets = [1, 1, 0], sizes = [8, 8, 8], strides = [1, 1, 1]} : vector<10x10x8xf32> to vector<8x8x8xf32>
    %35 = vector.shape_cast %34 : vector<8x8x8xf32> to vector<64x8xf32>
    %c0_36 = arith.constant 0 : index
    %c1_37 = arith.constant 1 : index
    %c1_38 = arith.constant 1 : index
    %c0_39 = arith.constant 0 : index
    %c0_40 = arith.constant 0 : index
    %36 = vector.load %arg5[%c0_36, %c1_37, %c1_38, %c0_39, %c0_40] : memref<3x3x3x8x4xf32, #tpu.memory_space<vmem>>, vector<1x1x1x8x4xf32>
    %37 = vector.shape_cast %36 : vector<1x1x1x8x4xf32> to vector<8x4xf32>
    %cst_41 = arith.constant dense<0.000000e+00> : vector<64x4xf32>
    %38 = tpu.matmul %35, %37, %cst_41 {dimension_numbers = #tpu.dot_dimension_numbers<[1], [0], [0], [1], [0, 0, 1, 1], [], []>} : vector<64x8xf32>, vector<8x4xf32>, vector<64x4xf32> -> vector<64x4xf32>
    %39 = arith.addf %33, %38 : vector<64x4xf32>
    %40 = vector.extract_strided_slice %2 {offsets = [1, 2, 0], sizes = [8, 8, 8], strides = [1, 1, 1]} : vector<10x10x8xf32> to vector<8x8x8xf32>
    %41 = vector.shape_cast %40 : vector<8x8x8xf32> to vector<64x8xf32>
    %c0_42 = arith.constant 0 : index
    %c1_43 = arith.constant 1 : index
    %c2_44 = arith.constant 2 : index
    %c0_45 = arith.constant 0 : index
    %c0_46 = arith.constant 0 : index
    %42 = vector.load %arg5[%c0_42, %c1_43, %c2_44, %c0_45, %c0_46] : memref<3x3x3x8x4xf32, #tpu.memory_space<vmem>>, vector<1x1x1x8x4xf32>
    %43 = vector.shape_cast %42 : vector<1x1x1x8x4xf32> to vector<8x4xf32>
    %cst_47 = arith.constant dense<0.000000e+00> : vector<64x4xf32>
    %44 = tpu.matmul %41, %43, %cst_47 {dimension_numbers = #tpu.dot_dimension_numbers<[1], [0], [0], [1], [0, 0, 1, 1], [], []>} : vector<64x8xf32>, vector<8x4xf32>, vector<64x4xf32> -> vector<64x4xf32>
    %45 = arith.addf %39, %44 : vector<64x4xf32>
    %46 = vector.extract_strided_slice %2 {offsets = [2, 0, 0], sizes = [8, 8, 8], strides = [1, 1, 1]} : vector<10x10x8xf32> to vector<8x8x8xf32>
    %47 = vector.shape_cast %46 : vector<8x8x8xf32> to vector<64x8xf32>
    %c0_48 = arith.constant 0 : index
    %c2_49 = arith.constant 2 : index
    %c0_50 = arith.constant 0 : index
    %c0_51 = arith.constant 0 : index
    %c0_52 = arith.constant 0 : index
    %48 = vector.load %arg5[%c0_48, %c2_49, %c0_50, %c0_51, %c0_52] : memref<3x3x3x8x4xf32, #tpu.memory_space<vmem>>, vector<1x1x1x8x4xf32>
    %49 = vector.shape_cast %48 : vector<1x1x1x8x4xf32> to vector<8x4xf32>
    %cst_53 = arith.constant dense<0.000000e+00> : vector<64x4xf32>
    %50 = tpu.matmul %47, %49, %cst_53 {dimension_numbers = #tpu.dot_dimension_numbers<[1], [0], [0], [1], [0, 0, 1, 1], [], []>} : vector<64x8xf32>, vector<8x4xf32>, vector<64x4xf32> -> vector<64x4xf32>
    %51 = arith.addf %45, %50 : vector<64x4xf32>
    %52 = vector.extract_strided_slice %2 {offsets = [2, 1, 0], sizes = [8, 8, 8], strides = [1, 1, 1]} : vector<10x10x8xf32> to vector<8x8x8xf32>
    %53 = vector.shape_cast %52 : vector<8x8x8xf32> to vector<64x8xf32>
    %c0_54 = arith.constant 0 : index
    %c2_55 = arith.constant 2 : index
    %c1_56 = arith.constant 1 : index
    %c0_57 = arith.constant 0 : index
    %c0_58 = arith.constant 0 : index
    %54 = vector.load %arg5[%c0_54, %c2_55, %c1_56, %c0_57, %c0_58] : memref<3x3x3x8x4xf32, #tpu.memory_space<vmem>>, vector<1x1x1x8x4xf32>
    %55 = vector.shape_cast %54 : vector<1x1x1x8x4xf32> to vector<8x4xf32>
    %cst_59 = arith.constant dense<0.000000e+00> : vector<64x4xf32>
    %56 = tpu.matmul %53, %55, %cst_59 {dimension_numbers = #tpu.dot_dimension_numbers<[1], [0], [0], [1], [0, 0, 1, 1], [], []>} : vector<64x8xf32>, vector<8x4xf32>, vector<64x4xf32> -> vector<64x4xf32>
    %57 = arith.addf %51, %56 : vector<64x4xf32>
    %58 = vector.extract_strided_slice %2 {offsets = [2, 2, 0], sizes = [8, 8, 8], strides = [1, 1, 1]} : vector<10x10x8xf32> to vector<8x8x8xf32>
    %59 = vector.shape_cast %58 : vector<8x8x8xf32> to vector<64x8xf32>
    %c0_60 = arith.constant 0 : index
    %c2_61 = arith.constant 2 : index
    %c2_62 = arith.constant 2 : index
    %c0_63 = arith.constant 0 : index
    %c0_64 = arith.constant 0 : index
    %60 = vector.load %arg5[%c0_60, %c2_61, %c2_62, %c0_63, %c0_64] : memref<3x3x3x8x4xf32, #tpu.memory_space<vmem>>, vector<1x1x1x8x4xf32>
    %61 = vector.shape_cast %60 : vector<1x1x1x8x4xf32> to vector<8x4xf32>
    %cst_65 = arith.constant dense<0.000000e+00> : vector<64x4xf32>
    %62 = tpu.matmul %59, %61, %cst_65 {dimension_numbers = #tpu.dot_dimension_numbers<[1], [0], [0], [1], [0, 0, 1, 1], [], []>} : vector<64x8xf32>, vector<8x4xf32>, vector<64x4xf32> -> vector<64x4xf32>
    %63 = arith.addf %57, %62 : vector<64x4xf32>
    %64 = vector.extract_strided_slice %5 {offsets = [0, 0, 0], sizes = [8, 8, 8], strides = [1, 1, 1]} : vector<10x10x8xf32> to vector<8x8x8xf32>
    %65 = vector.shape_cast %64 : vector<8x8x8xf32> to vector<64x8xf32>
    %c1_66 = arith.constant 1 : index
    %c0_67 = arith.constant 0 : index
    %c0_68 = arith.constant 0 : index
    %c0_69 = arith.constant 0 : index
    %c0_70 = arith.constant 0 : index
    %66 = vector.load %arg5[%c1_66, %c0_67, %c0_68, %c0_69, %c0_70] : memref<3x3x3x8x4xf32, #tpu.memory_space<vmem>>, vector<1x1x1x8x4xf32>
    %67 = vector.shape_cast %66 : vector<1x1x1x8x4xf32> to vector<8x4xf32>
    %cst_71 = arith.constant dense<0.000000e+00> : vector<64x4xf32>
    %68 = tpu.matmul %65, %67, %cst_71 {dimension_numbers = #tpu.dot_dimension_numbers<[1], [0], [0], [1], [0, 0, 1, 1], [], []>} : vector<64x8xf32>, vector<8x4xf32>, vector<64x4xf32> -> vector<64x4xf32>
    %69 = arith.addf %63, %68 : vector<64x4xf32>
    %70 = vector.extract_strided_slice %5 {offsets = [0, 1, 0], sizes = [8, 8, 8], strides = [1, 1, 1]} : vector<10x10x8xf32> to vector<8x8x8xf32>
    %71 = vector.shape_cast %70 : vector<8x8x8xf32> to vector<64x8xf32>
    %c1_72 = arith.constant 1 : index
    %c0_73 = arith.constant 0 : index
    %c1_74 = arith.constant 1 : index
    %c0_75 = arith.constant 0 : index
    %c0_76 = arith.constant 0 : index
    %72 = vector.load %arg5[%c1_72, %c0_73, %c1_74, %c0_75, %c0_76] : memref<3x3x3x8x4xf32, #tpu.memory_space<vmem>>, vector<1x1x1x8x4xf32>
    %73 = vector.shape_cast %72 : vector<1x1x1x8x4xf32> to vector<8x4xf32>
    %cst_77 = arith.constant dense<0.000000e+00> : vector<64x4xf32>
    %74 = tpu.matmul %71, %73, %cst_77 {dimension_numbers = #tpu.dot_dimension_numbers<[1], [0], [0], [1], [0, 0, 1, 1], [], []>} : vector<64x8xf32>, vector<8x4xf32>, vector<64x4xf32> -> vector<64x4xf32>
    %75 = arith.addf %69, %74 : vector<64x4xf32>
    %76 = vector.extract_strided_slice %5 {offsets = [0, 2, 0], sizes = [8, 8, 8], strides = [1, 1, 1]} : vector<10x10x8xf32> to vector<8x8x8xf32>
    %77 = vector.shape_cast %76 : vector<8x8x8xf32> to vector<64x8xf32>
    %c1_78 = arith.constant 1 : index
    %c0_79 = arith.constant 0 : index
    %c2_80 = arith.constant 2 : index
    %c0_81 = arith.constant 0 : index
    %c0_82 = arith.constant 0 : index
    %78 = vector.load %arg5[%c1_78, %c0_79, %c2_80, %c0_81, %c0_82] : memref<3x3x3x8x4xf32, #tpu.memory_space<vmem>>, vector<1x1x1x8x4xf32>
    %79 = vector.shape_cast %78 : vector<1x1x1x8x4xf32> to vector<8x4xf32>
    %cst_83 = arith.constant dense<0.000000e+00> : vector<64x4xf32>
    %80 = tpu.matmul %77, %79, %cst_83 {dimension_numbers = #tpu.dot_dimension_numbers<[1], [0], [0], [1], [0, 0, 1, 1], [], []>} : vector<64x8xf32>, vector<8x4xf32>, vector<64x4xf32> -> vector<64x4xf32>
    %81 = arith.addf %75, %80 : vector<64x4xf32>
    %82 = vector.extract_strided_slice %5 {offsets = [1, 0, 0], sizes = [8, 8, 8], strides = [1, 1, 1]} : vector<10x10x8xf32> to vector<8x8x8xf32>
    %83 = vector.shape_cast %82 : vector<8x8x8xf32> to vector<64x8xf32>
    %c1_84 = arith.constant 1 : index
    %c1_85 = arith.constant 1 : index
    %c0_86 = arith.constant 0 : index
    %c0_87 = arith.constant 0 : index
    %c0_88 = arith.constant 0 : index
    %84 = vector.load %arg5[%c1_84, %c1_85, %c0_86, %c0_87, %c0_88] : memref<3x3x3x8x4xf32, #tpu.memory_space<vmem>>, vector<1x1x1x8x4xf32>
    %85 = vector.shape_cast %84 : vector<1x1x1x8x4xf32> to vector<8x4xf32>
    %cst_89 = arith.constant dense<0.000000e+00> : vector<64x4xf32>
    %86 = tpu.matmul %83, %85, %cst_89 {dimension_numbers = #tpu.dot_dimension_numbers<[1], [0], [0], [1], [0, 0, 1, 1], [], []>} : vector<64x8xf32>, vector<8x4xf32>, vector<64x4xf32> -> vector<64x4xf32>
    %87 = arith.addf %81, %86 : vector<64x4xf32>
    %88 = vector.extract_strided_slice %5 {offsets = [1, 1, 0], sizes = [8, 8, 8], strides = [1, 1, 1]} : vector<10x10x8xf32> to vector<8x8x8xf32>
    %89 = vector.shape_cast %88 : vector<8x8x8xf32> to vector<64x8xf32>
    %c1_90 = arith.constant 1 : index
    %c1_91 = arith.constant 1 : index
    %c1_92 = arith.constant 1 : index
    %c0_93 = arith.constant 0 : index
    %c0_94 = arith.constant 0 : index
    %90 = vector.load %arg5[%c1_90, %c1_91, %c1_92, %c0_93, %c0_94] : memref<3x3x3x8x4xf32, #tpu.memory_space<vmem>>, vector<1x1x1x8x4xf32>
    %91 = vector.shape_cast %90 : vector<1x1x1x8x4xf32> to vector<8x4xf32>
    %cst_95 = arith.constant dense<0.000000e+00> : vector<64x4xf32>
    %92 = tpu.matmul %89, %91, %cst_95 {dimension_numbers = #tpu.dot_dimension_numbers<[1], [0], [0], [1], [0, 0, 1, 1], [], []>} : vector<64x8xf32>, vector<8x4xf32>, vector<64x4xf32> -> vector<64x4xf32>
    %93 = arith.addf %87, %92 : vector<64x4xf32>
    %94 = vector.extract_strided_slice %5 {offsets = [1, 2, 0], sizes = [8, 8, 8], strides = [1, 1, 1]} : vector<10x10x8xf32> to vector<8x8x8xf32>
    %95 = vector.shape_cast %94 : vector<8x8x8xf32> to vector<64x8xf32>
    %c1_96 = arith.constant 1 : index
    %c1_97 = arith.constant 1 : index
    %c2_98 = arith.constant 2 : index
    %c0_99 = arith.constant 0 : index
    %c0_100 = arith.constant 0 : index
    %96 = vector.load %arg5[%c1_96, %c1_97, %c2_98, %c0_99, %c0_100] : memref<3x3x3x8x4xf32, #tpu.memory_space<vmem>>, vector<1x1x1x8x4xf32>
    %97 = vector.shape_cast %96 : vector<1x1x1x8x4xf32> to vector<8x4xf32>
    %cst_101 = arith.constant dense<0.000000e+00> : vector<64x4xf32>
    %98 = tpu.matmul %95, %97, %cst_101 {dimension_numbers = #tpu.dot_dimension_numbers<[1], [0], [0], [1], [0, 0, 1, 1], [], []>} : vector<64x8xf32>, vector<8x4xf32>, vector<64x4xf32> -> vector<64x4xf32>
    %99 = arith.addf %93, %98 : vector<64x4xf32>
    %100 = vector.extract_strided_slice %5 {offsets = [2, 0, 0], sizes = [8, 8, 8], strides = [1, 1, 1]} : vector<10x10x8xf32> to vector<8x8x8xf32>
    %101 = vector.shape_cast %100 : vector<8x8x8xf32> to vector<64x8xf32>
    %c1_102 = arith.constant 1 : index
    %c2_103 = arith.constant 2 : index
    %c0_104 = arith.constant 0 : index
    %c0_105 = arith.constant 0 : index
    %c0_106 = arith.constant 0 : index
    %102 = vector.load %arg5[%c1_102, %c2_103, %c0_104, %c0_105, %c0_106] : memref<3x3x3x8x4xf32, #tpu.memory_space<vmem>>, vector<1x1x1x8x4xf32>
    %103 = vector.shape_cast %102 : vector<1x1x1x8x4xf32> to vector<8x4xf32>
    %cst_107 = arith.constant dense<0.000000e+00> : vector<64x4xf32>
    %104 = tpu.matmul %101, %103, %cst_107 {dimension_numbers = #tpu.dot_dimension_numbers<[1], [0], [0], [1], [0, 0, 1, 1], [], []>} : vector<64x8xf32>, vector<8x4xf32>, vector<64x4xf32> -> vector<64x4xf32>
    %105 = arith.addf %99, %104 : vector<64x4xf32>
    %106 = vector.extract_strided_slice %5 {offsets = [2, 1, 0], sizes = [8, 8, 8], strides = [1, 1, 1]} : vector<10x10x8xf32> to vector<8x8x8xf32>
    %107 = vector.shape_cast %106 : vector<8x8x8xf32> to vector<64x8xf32>
    %c1_108 = arith.constant 1 : index
    %c2_109 = arith.constant 2 : index
    %c1_110 = arith.constant 1 : index
    %c0_111 = arith.constant 0 : index
    %c0_112 = arith.constant 0 : index
    %108 = vector.load %arg5[%c1_108, %c2_109, %c1_110, %c0_111, %c0_112] : memref<3x3x3x8x4xf32, #tpu.memory_space<vmem>>, vector<1x1x1x8x4xf32>
    %109 = vector.shape_cast %108 : vector<1x1x1x8x4xf32> to vector<8x4xf32>
    %cst_113 = arith.constant dense<0.000000e+00> : vector<64x4xf32>
    %110 = tpu.matmul %107, %109, %cst_113 {dimension_numbers = #tpu.dot_dimension_numbers<[1], [0], [0], [1], [0, 0, 1, 1], [], []>} : vector<64x8xf32>, vector<8x4xf32>, vector<64x4xf32> -> vector<64x4xf32>
    %111 = arith.addf %105, %110 : vector<64x4xf32>
    %112 = vector.extract_strided_slice %5 {offsets = [2, 2, 0], sizes = [8, 8, 8], strides = [1, 1, 1]} : vector<10x10x8xf32> to vector<8x8x8xf32>
    %113 = vector.shape_cast %112 : vector<8x8x8xf32> to vector<64x8xf32>
    %c1_114 = arith.constant 1 : index
    %c2_115 = arith.constant 2 : index
    %c2_116 = arith.constant 2 : index
    %c0_117 = arith.constant 0 : index
    %c0_118 = arith.constant 0 : index
    %114 = vector.load %arg5[%c1_114, %c2_115, %c2_116, %c0_117, %c0_118] : memref<3x3x3x8x4xf32, #tpu.memory_space<vmem>>, vector<1x1x1x8x4xf32>
    %115 = vector.shape_cast %114 : vector<1x1x1x8x4xf32> to vector<8x4xf32>
    %cst_119 = arith.constant dense<0.000000e+00> : vector<64x4xf32>
    %116 = tpu.matmul %113, %115, %cst_119 {dimension_numbers = #tpu.dot_dimension_numbers<[1], [0], [0], [1], [0, 0, 1, 1], [], []>} : vector<64x8xf32>, vector<8x4xf32>, vector<64x4xf32> -> vector<64x4xf32>
    %117 = arith.addf %111, %116 : vector<64x4xf32>
    %118 = vector.extract_strided_slice %8 {offsets = [0, 0, 0], sizes = [8, 8, 8], strides = [1, 1, 1]} : vector<10x10x8xf32> to vector<8x8x8xf32>
    %119 = vector.shape_cast %118 : vector<8x8x8xf32> to vector<64x8xf32>
    %c2_120 = arith.constant 2 : index
    %c0_121 = arith.constant 0 : index
    %c0_122 = arith.constant 0 : index
    %c0_123 = arith.constant 0 : index
    %c0_124 = arith.constant 0 : index
    %120 = vector.load %arg5[%c2_120, %c0_121, %c0_122, %c0_123, %c0_124] : memref<3x3x3x8x4xf32, #tpu.memory_space<vmem>>, vector<1x1x1x8x4xf32>
    %121 = vector.shape_cast %120 : vector<1x1x1x8x4xf32> to vector<8x4xf32>
    %cst_125 = arith.constant dense<0.000000e+00> : vector<64x4xf32>
    %122 = tpu.matmul %119, %121, %cst_125 {dimension_numbers = #tpu.dot_dimension_numbers<[1], [0], [0], [1], [0, 0, 1, 1], [], []>} : vector<64x8xf32>, vector<8x4xf32>, vector<64x4xf32> -> vector<64x4xf32>
    %123 = arith.addf %117, %122 : vector<64x4xf32>
    %124 = vector.extract_strided_slice %8 {offsets = [0, 1, 0], sizes = [8, 8, 8], strides = [1, 1, 1]} : vector<10x10x8xf32> to vector<8x8x8xf32>
    %125 = vector.shape_cast %124 : vector<8x8x8xf32> to vector<64x8xf32>
    %c2_126 = arith.constant 2 : index
    %c0_127 = arith.constant 0 : index
    %c1_128 = arith.constant 1 : index
    %c0_129 = arith.constant 0 : index
    %c0_130 = arith.constant 0 : index
    %126 = vector.load %arg5[%c2_126, %c0_127, %c1_128, %c0_129, %c0_130] : memref<3x3x3x8x4xf32, #tpu.memory_space<vmem>>, vector<1x1x1x8x4xf32>
    %127 = vector.shape_cast %126 : vector<1x1x1x8x4xf32> to vector<8x4xf32>
    %cst_131 = arith.constant dense<0.000000e+00> : vector<64x4xf32>
    %128 = tpu.matmul %125, %127, %cst_131 {dimension_numbers = #tpu.dot_dimension_numbers<[1], [0], [0], [1], [0, 0, 1, 1], [], []>} : vector<64x8xf32>, vector<8x4xf32>, vector<64x4xf32> -> vector<64x4xf32>
    %129 = arith.addf %123, %128 : vector<64x4xf32>
    %130 = vector.extract_strided_slice %8 {offsets = [0, 2, 0], sizes = [8, 8, 8], strides = [1, 1, 1]} : vector<10x10x8xf32> to vector<8x8x8xf32>
    %131 = vector.shape_cast %130 : vector<8x8x8xf32> to vector<64x8xf32>
    %c2_132 = arith.constant 2 : index
    %c0_133 = arith.constant 0 : index
    %c2_134 = arith.constant 2 : index
    %c0_135 = arith.constant 0 : index
    %c0_136 = arith.constant 0 : index
    %132 = vector.load %arg5[%c2_132, %c0_133, %c2_134, %c0_135, %c0_136] : memref<3x3x3x8x4xf32, #tpu.memory_space<vmem>>, vector<1x1x1x8x4xf32>
    %133 = vector.shape_cast %132 : vector<1x1x1x8x4xf32> to vector<8x4xf32>
    %cst_137 = arith.constant dense<0.000000e+00> : vector<64x4xf32>
    %134 = tpu.matmul %131, %133, %cst_137 {dimension_numbers = #tpu.dot_dimension_numbers<[1], [0], [0], [1], [0, 0, 1, 1], [], []>} : vector<64x8xf32>, vector<8x4xf32>, vector<64x4xf32> -> vector<64x4xf32>
    %135 = arith.addf %129, %134 : vector<64x4xf32>
    %136 = vector.extract_strided_slice %8 {offsets = [1, 0, 0], sizes = [8, 8, 8], strides = [1, 1, 1]} : vector<10x10x8xf32> to vector<8x8x8xf32>
    %137 = vector.shape_cast %136 : vector<8x8x8xf32> to vector<64x8xf32>
    %c2_138 = arith.constant 2 : index
    %c1_139 = arith.constant 1 : index
    %c0_140 = arith.constant 0 : index
    %c0_141 = arith.constant 0 : index
    %c0_142 = arith.constant 0 : index
    %138 = vector.load %arg5[%c2_138, %c1_139, %c0_140, %c0_141, %c0_142] : memref<3x3x3x8x4xf32, #tpu.memory_space<vmem>>, vector<1x1x1x8x4xf32>
    %139 = vector.shape_cast %138 : vector<1x1x1x8x4xf32> to vector<8x4xf32>
    %cst_143 = arith.constant dense<0.000000e+00> : vector<64x4xf32>
    %140 = tpu.matmul %137, %139, %cst_143 {dimension_numbers = #tpu.dot_dimension_numbers<[1], [0], [0], [1], [0, 0, 1, 1], [], []>} : vector<64x8xf32>, vector<8x4xf32>, vector<64x4xf32> -> vector<64x4xf32>
    %141 = arith.addf %135, %140 : vector<64x4xf32>
    %142 = vector.extract_strided_slice %8 {offsets = [1, 1, 0], sizes = [8, 8, 8], strides = [1, 1, 1]} : vector<10x10x8xf32> to vector<8x8x8xf32>
    %143 = vector.shape_cast %142 : vector<8x8x8xf32> to vector<64x8xf32>
    %c2_144 = arith.constant 2 : index
    %c1_145 = arith.constant 1 : index
    %c1_146 = arith.constant 1 : index
    %c0_147 = arith.constant 0 : index
    %c0_148 = arith.constant 0 : index
    %144 = vector.load %arg5[%c2_144, %c1_145, %c1_146, %c0_147, %c0_148] : memref<3x3x3x8x4xf32, #tpu.memory_space<vmem>>, vector<1x1x1x8x4xf32>
    %145 = vector.shape_cast %144 : vector<1x1x1x8x4xf32> to vector<8x4xf32>
    %cst_149 = arith.constant dense<0.000000e+00> : vector<64x4xf32>
    %146 = tpu.matmul %143, %145, %cst_149 {dimension_numbers = #tpu.dot_dimension_numbers<[1], [0], [0], [1], [0, 0, 1, 1], [], []>} : vector<64x8xf32>, vector<8x4xf32>, vector<64x4xf32> -> vector<64x4xf32>
    %147 = arith.addf %141, %146 : vector<64x4xf32>
    %148 = vector.extract_strided_slice %8 {offsets = [1, 2, 0], sizes = [8, 8, 8], strides = [1, 1, 1]} : vector<10x10x8xf32> to vector<8x8x8xf32>
    %149 = vector.shape_cast %148 : vector<8x8x8xf32> to vector<64x8xf32>
    %c2_150 = arith.constant 2 : index
    %c1_151 = arith.constant 1 : index
    %c2_152 = arith.constant 2 : index
    %c0_153 = arith.constant 0 : index
    %c0_154 = arith.constant 0 : index
    %150 = vector.load %arg5[%c2_150, %c1_151, %c2_152, %c0_153, %c0_154] : memref<3x3x3x8x4xf32, #tpu.memory_space<vmem>>, vector<1x1x1x8x4xf32>
    %151 = vector.shape_cast %150 : vector<1x1x1x8x4xf32> to vector<8x4xf32>
    %cst_155 = arith.constant dense<0.000000e+00> : vector<64x4xf32>
    %152 = tpu.matmul %149, %151, %cst_155 {dimension_numbers = #tpu.dot_dimension_numbers<[1], [0], [0], [1], [0, 0, 1, 1], [], []>} : vector<64x8xf32>, vector<8x4xf32>, vector<64x4xf32> -> vector<64x4xf32>
    %153 = arith.addf %147, %152 : vector<64x4xf32>
    %154 = vector.extract_strided_slice %8 {offsets = [2, 0, 0], sizes = [8, 8, 8], strides = [1, 1, 1]} : vector<10x10x8xf32> to vector<8x8x8xf32>
    %155 = vector.shape_cast %154 : vector<8x8x8xf32> to vector<64x8xf32>
    %c2_156 = arith.constant 2 : index
    %c2_157 = arith.constant 2 : index
    %c0_158 = arith.constant 0 : index
    %c0_159 = arith.constant 0 : index
    %c0_160 = arith.constant 0 : index
    %156 = vector.load %arg5[%c2_156, %c2_157, %c0_158, %c0_159, %c0_160] : memref<3x3x3x8x4xf32, #tpu.memory_space<vmem>>, vector<1x1x1x8x4xf32>
    %157 = vector.shape_cast %156 : vector<1x1x1x8x4xf32> to vector<8x4xf32>
    %cst_161 = arith.constant dense<0.000000e+00> : vector<64x4xf32>
    %158 = tpu.matmul %155, %157, %cst_161 {dimension_numbers = #tpu.dot_dimension_numbers<[1], [0], [0], [1], [0, 0, 1, 1], [], []>} : vector<64x8xf32>, vector<8x4xf32>, vector<64x4xf32> -> vector<64x4xf32>
    %159 = arith.addf %153, %158 : vector<64x4xf32>
    %160 = vector.extract_strided_slice %8 {offsets = [2, 1, 0], sizes = [8, 8, 8], strides = [1, 1, 1]} : vector<10x10x8xf32> to vector<8x8x8xf32>
    %161 = vector.shape_cast %160 : vector<8x8x8xf32> to vector<64x8xf32>
    %c2_162 = arith.constant 2 : index
    %c2_163 = arith.constant 2 : index
    %c1_164 = arith.constant 1 : index
    %c0_165 = arith.constant 0 : index
    %c0_166 = arith.constant 0 : index
    %162 = vector.load %arg5[%c2_162, %c2_163, %c1_164, %c0_165, %c0_166] : memref<3x3x3x8x4xf32, #tpu.memory_space<vmem>>, vector<1x1x1x8x4xf32>
    %163 = vector.shape_cast %162 : vector<1x1x1x8x4xf32> to vector<8x4xf32>
    %cst_167 = arith.constant dense<0.000000e+00> : vector<64x4xf32>
    %164 = tpu.matmul %161, %163, %cst_167 {dimension_numbers = #tpu.dot_dimension_numbers<[1], [0], [0], [1], [0, 0, 1, 1], [], []>} : vector<64x8xf32>, vector<8x4xf32>, vector<64x4xf32> -> vector<64x4xf32>
    %165 = arith.addf %159, %164 : vector<64x4xf32>
    %166 = vector.extract_strided_slice %8 {offsets = [2, 2, 0], sizes = [8, 8, 8], strides = [1, 1, 1]} : vector<10x10x8xf32> to vector<8x8x8xf32>
    %167 = vector.shape_cast %166 : vector<8x8x8xf32> to vector<64x8xf32>
    %c2_168 = arith.constant 2 : index
    %c2_169 = arith.constant 2 : index
    %c2_170 = arith.constant 2 : index
    %c0_171 = arith.constant 0 : index
    %c0_172 = arith.constant 0 : index
    %168 = vector.load %arg5[%c2_168, %c2_169, %c2_170, %c0_171, %c0_172] : memref<3x3x3x8x4xf32, #tpu.memory_space<vmem>>, vector<1x1x1x8x4xf32>
    %169 = vector.shape_cast %168 : vector<1x1x1x8x4xf32> to vector<8x4xf32>
    %cst_173 = arith.constant dense<0.000000e+00> : vector<64x4xf32>
    %170 = tpu.matmul %167, %169, %cst_173 {dimension_numbers = #tpu.dot_dimension_numbers<[1], [0], [0], [1], [0, 0, 1, 1], [], []>} : vector<64x8xf32>, vector<8x4xf32>, vector<64x4xf32> -> vector<64x4xf32>
    %171 = arith.addf %165, %170 : vector<64x4xf32>
    %172 = arith.truncf %171 : vector<64x4xf32> to vector<64x4xbf16>
    %c0_174 = arith.constant 0 : index
    %c0_175 = arith.constant 0 : index
    %c0_176 = arith.constant 0 : index
    %c0_177 = arith.constant 0 : index
    %173 = vector.load %arg6[%c0_174, %c0_175, %c0_176, %c0_177] : memref<1x1x64x4xbf16, #tpu.memory_space<vmem>>, vector<1x1x64x4xbf16>
    %174 = vector.shape_cast %173 : vector<1x1x64x4xbf16> to vector<64x4xbf16>
    %175 = vector.shape_cast %172 : vector<64x4xbf16> to vector<1x1x64x4xbf16>
    tpu.vector_store %arg6[%c0_174, %c0_175, %c0_176, %c0_177], %175 {strides = array<i32>} : memref<1x1x64x4xbf16, #tpu.memory_space<vmem>>, vector<1x1x64x4xbf16>,
    %cst_178 = arith.constant dense<0.000000e+00> : vector<4xf32>
    %176 = vector.multi_reduction <add>, %171, %cst_178 [0] : vector<64x4xf32> to vector<4xf32>
    %177 = vector.shape_cast %176 : vector<4xf32> to vector<1x4xf32>
    %c0_179 = arith.constant 0 : index
    %c0_180 = arith.constant 0 : index
    %c0_181 = arith.constant 0 : index
    %c0_182 = arith.constant 0 : index
    %178 = vector.load %arg7[%c0_179, %c0_180, %c0_181, %c0_182] : memref<1x1x1x4xf32, #tpu.memory_space<vmem>>, vector<1x1x1x4xf32>
    %179 = vector.shape_cast %178 : vector<1x1x1x4xf32> to vector<1x4xf32>
    %180 = vector.shape_cast %177 : vector<1x4xf32> to vector<1x1x1x4xf32>
    tpu.vector_store %arg7[%c0_179, %c0_180, %c0_181, %c0_182], %180 {strides = array<i32>} : memref<1x1x1x4xf32, #tpu.memory_space<vmem>>, vector<1x1x1x4xf32>,
    %181 = arith.mulf %171, %171 : vector<64x4xf32>
    %cst_183 = arith.constant dense<0.000000e+00> : vector<4xf32>
    %182 = vector.multi_reduction <add>, %181, %cst_183 [0] : vector<64x4xf32> to vector<4xf32>
    %183 = vector.shape_cast %182 : vector<4xf32> to vector<1x4xf32>
    %c0_184 = arith.constant 0 : index
    %c0_185 = arith.constant 0 : index
    %c0_186 = arith.constant 0 : index
    %c0_187 = arith.constant 0 : index
    %184 = vector.load %arg8[%c0_184, %c0_185, %c0_186, %c0_187] : memref<1x1x1x4xf32, #tpu.memory_space<vmem>>, vector<1x1x1x4xf32>
    %185 = vector.shape_cast %184 : vector<1x1x1x4xf32> to vector<1x4xf32>
    %186 = vector.shape_cast %183 : vector<1x4xf32> to vector<1x1x1x4xf32>
    tpu.vector_store %arg8[%c0_184, %c0_185, %c0_186, %c0_187], %186 {strides = array<i32>} : memref<1x1x1x4xf32, #tpu.memory_space<vmem>>, vector<1x1x1x4xf32>,
    return
  }
  func.func @transform_0(%arg0: i32, %arg1: i32) -> (i32, i32, i32, i32, i32) {
    %c0_i32 = arith.constant 0 : i32
    %0 = arith.addi %arg0, %c0_i32 : i32
    %c0_i32_0 = arith.constant 0 : i32
    %c0_i32_1 = arith.constant 0 : i32
    %c0_i32_2 = arith.constant 0 : i32
    %c0_i32_3 = arith.constant 0 : i32
    return %arg1, %0, %c0_i32_0, %c0_i32_1, %c0_i32_2 : i32, i32, i32, i32, i32
  }
  func.func @transform_1(%arg0: i32, %arg1: i32) -> (i32, i32, i32, i32, i32) {
    %c1_i32 = arith.constant 1 : i32
    %0 = arith.addi %arg0, %c1_i32 : i32
    %c0_i32 = arith.constant 0 : i32
    %c0_i32_0 = arith.constant 0 : i32
    %c0_i32_1 = arith.constant 0 : i32
    %c0_i32_2 = arith.constant 0 : i32
    return %arg1, %0, %c0_i32, %c0_i32_0, %c0_i32_1 : i32, i32, i32, i32, i32
  }
  func.func @transform_2(%arg0: i32, %arg1: i32) -> (i32, i32, i32, i32, i32) {
    %c2_i32 = arith.constant 2 : i32
    %0 = arith.addi %arg0, %c2_i32 : i32
    %c0_i32 = arith.constant 0 : i32
    %c0_i32_0 = arith.constant 0 : i32
    %c0_i32_1 = arith.constant 0 : i32
    %c0_i32_2 = arith.constant 0 : i32
    return %arg1, %0, %c0_i32, %c0_i32_0, %c0_i32_1 : i32, i32, i32, i32, i32
  }
  func.func @transform_3(%arg0: i32, %arg1: i32) -> (i32, i32, i32, i32, i32) {
    %c0_i32 = arith.constant 0 : i32
    %c0_i32_0 = arith.constant 0 : i32
    %c0_i32_1 = arith.constant 0 : i32
    %c0_i32_2 = arith.constant 0 : i32
    %c0_i32_3 = arith.constant 0 : i32
    %c0_i32_4 = arith.constant 0 : i32
    return %c0_i32, %c0_i32_0, %c0_i32_1, %c0_i32_2, %c0_i32_3 : i32, i32, i32, i32, i32
  }
  func.func @transform_4(%arg0: i32, %arg1: i32) -> (i32, i32, i32, i32) {
    %c0_i32 = arith.constant 0 : i32
    %c0_i32_0 = arith.constant 0 : i32
    %c0_i32_1 = arith.constant 0 : i32
    return %arg1, %arg0, %c0_i32, %c0_i32_0 : i32, i32, i32, i32
  }
  func.func @transform_5(%arg0: i32, %arg1: i32) -> (i32, i32, i32, i32) {
    %c0_i32 = arith.constant 0 : i32
    %c0_i32_0 = arith.constant 0 : i32
    %c0_i32_1 = arith.constant 0 : i32
    return %arg1, %arg0, %c0_i32, %c0_i32_0 : i32, i32, i32, i32
  }
  func.func @transform_6(%arg0: i32, %arg1: i32) -> (i32, i32, i32, i32) {
    %c0_i32 = arith.constant 0 : i32
    %c0_i32_0 = arith.constant 0 : i32
    %c0_i32_1 = arith.constant 0 : i32
    return %arg1, %arg0, %c0_i32, %c0_i32_0 : i32, i32, i32, i32
  }
}

module attributes {stable_mosaic.version = 11 : i64} {
  func.func @bn_act_kernel(%arg0: i32, %arg1: i32, %arg2: memref<1x1x64x4xbf16, #tpu.memory_space<vmem>>, %arg3: memref<1x1x1x4xf32, #tpu.memory_space<vmem>>, %arg4: memref<1x1x1x4xf32, #tpu.memory_space<vmem>>, %arg5: memref<1x1x64x4xf32, #tpu.memory_space<vmem>>) attributes {dimension_semantics = [#tpu.dimension_semantics<parallel>, #tpu.dimension_semantics<parallel>], iteration_bounds = array<i64: 8, 2>, scalar_prefetch = 0 : i64, scratch_operands = 0 : i64, tpu.core_type = #tpu.core_type<tc>, window_params = [{transform_indices = @transform_0, window_bounds = array<i64: 1, 1, 64, 4>}, {pipeline_mode = #tpu.pipeline_mode<synchronous>, transform_indices = @transform_1, window_bounds = array<i64: 1, 1, 1, 4>}, {pipeline_mode = #tpu.pipeline_mode<synchronous>, transform_indices = @transform_2, window_bounds = array<i64: 1, 1, 1, 4>}, {transform_indices = @transform_3, window_bounds = array<i64: 1, 1, 64, 4>}]} {
    %c0 = arith.constant 0 : index
    %c0_0 = arith.constant 0 : index
    %c0_1 = arith.constant 0 : index
    %c0_2 = arith.constant 0 : index
    %0 = vector.load %arg2[%c0, %c0_0, %c0_1, %c0_2] : memref<1x1x64x4xbf16, #tpu.memory_space<vmem>>, vector<1x1x64x4xbf16>
    %1 = arith.extf %0 : vector<1x1x64x4xbf16> to vector<1x1x64x4xf32>
    %c0_3 = arith.constant 0 : index
    %c0_4 = arith.constant 0 : index
    %c0_5 = arith.constant 0 : index
    %c0_6 = arith.constant 0 : index
    %2 = vector.load %arg3[%c0_3, %c0_4, %c0_5, %c0_6] : memref<1x1x1x4xf32, #tpu.memory_space<vmem>>, vector<1x1x1x4xf32>
    %3 = vector.broadcast %2 : vector<1x1x1x4xf32> to vector<1x1x64x4xf32>
    %4 = arith.mulf %1, %3 : vector<1x1x64x4xf32>
    %c0_7 = arith.constant 0 : index
    %c0_8 = arith.constant 0 : index
    %c0_9 = arith.constant 0 : index
    %c0_10 = arith.constant 0 : index
    %5 = vector.load %arg4[%c0_7, %c0_8, %c0_9, %c0_10] : memref<1x1x1x4xf32, #tpu.memory_space<vmem>>, vector<1x1x1x4xf32>
    %6 = vector.broadcast %5 : vector<1x1x1x4xf32> to vector<1x1x64x4xf32>
    %7 = arith.addf %4, %6 : vector<1x1x64x4xf32>
    %cst = arith.constant 0.00999999977 : f32
    %8 = vector.broadcast %cst : f32 to vector<1x1x64x4xf32>
    %9 = arith.mulf %8, %7 : vector<1x1x64x4xf32>
    %10 = arith.maximumf %7, %9 : vector<1x1x64x4xf32>
    %c0_11 = arith.constant 0 : index
    %c0_12 = arith.constant 0 : index
    %c0_13 = arith.constant 0 : index
    %c0_14 = arith.constant 0 : index
    %11 = vector.load %arg5[%c0_11, %c0_12, %c0_13, %c0_14] : memref<1x1x64x4xf32, #tpu.memory_space<vmem>>, vector<1x1x64x4xf32>
    tpu.vector_store %arg5[%c0_11, %c0_12, %c0_13, %c0_14], %10 {strides = array<i32>} : memref<1x1x64x4xf32, #tpu.memory_space<vmem>>, vector<1x1x64x4xf32>,
    return
  }
  func.func @transform_0(%arg0: i32, %arg1: i32) -> (i32, i32, i32, i32) {
    %c0_i32 = arith.constant 0 : i32
    %c0_i32_0 = arith.constant 0 : i32
    %c0_i32_1 = arith.constant 0 : i32
    return %arg1, %arg0, %c0_i32, %c0_i32_0 : i32, i32, i32, i32
  }
  func.func @transform_1(%arg0: i32, %arg1: i32) -> (i32, i32, i32, i32) {
    %c0_i32 = arith.constant 0 : i32
    %c0_i32_0 = arith.constant 0 : i32
    %c0_i32_1 = arith.constant 0 : i32
    %c0_i32_2 = arith.constant 0 : i32
    %c0_i32_3 = arith.constant 0 : i32
    return %c0_i32, %c0_i32_0, %c0_i32_1, %c0_i32_2 : i32, i32, i32, i32
  }
  func.func @transform_2(%arg0: i32, %arg1: i32) -> (i32, i32, i32, i32) {
    %c0_i32 = arith.constant 0 : i32
    %c0_i32_0 = arith.constant 0 : i32
    %c0_i32_1 = arith.constant 0 : i32
    %c0_i32_2 = arith.constant 0 : i32
    %c0_i32_3 = arith.constant 0 : i32
    return %c0_i32, %c0_i32_0, %c0_i32_1, %c0_i32_2 : i32, i32, i32, i32
  }
  func.func @transform_3(%arg0: i32, %arg1: i32) -> (i32, i32, i32, i32) {
    %c0_i32 = arith.constant 0 : i32
    %c0_i32_0 = arith.constant 0 : i32
    %c0_i32_1 = arith.constant 0 : i32
    return %arg1, %arg0, %c0_i32, %c0_i32_0 : i32, i32, i32, i32
  }
}

</mosaic_0001>

<llo_original>
// kernel: bridge_block.5
$region0: #{bridge_block.5}
  #allocation0 [shape = 'u32[]', space=smem, size = 0x4, offset = 0x4, fixed_abs, tag = 'smem constant byte address 0x4 - core index']
  #allocation1 [shape = 'u32[144,128]{1,0:T(1,128)}', space=vmem, size = 0x12000, scoped, tag = 'internal scratch']
  %s0 = inlined_call_operand.vmem [shape: bf16[2,8,64,8], index: 0, kind: input, shape index: {}]
  %s1 = inlined_call_operand.vmem [shape: f32[1,1,1,8], index: 1, kind: input, shape index: {}]
  %s2 = inlined_call_operand.vmem [shape: f32[1,1,1,8], index: 2, kind: input, shape index: {}]
  %s3 = inlined_call_operand.vmem [shape: bf16[2,8,64,8], index: 3, kind: output, shape index: {}]
  %s4 = sld [smem:[#allocation0]]
  $region45: #{bridge_block.5} parent=0
    _
  %s6 = ssub.s32 1, %s4
  %s7 = scalar_select 0, %s6, %s4
  loop: start=0, step=1, limit=18
  $region2: #{bridge_block.5} parent=0 // loop_pre_header
    _
  $region3: #{bridge_block.5} parent=0 // loop_header
    %s9 = sphi 0, %s13
    %p10 = scmp.ge.s32.totalorder %s9, 18
    %s16 = sphi 0, %s28
    %s17 = sphi 0, %s24
    %s18 = sphi 0, %s16
    %s19 = sphi 0, %s17
    %s20 = sphi 0, %s18
    %s21 = sphi 0, %s19
    %s33 = sphi 0, %s35
    %s36 = sphi 0, %s33
    %s37 = sphi 0, %s36
    %s53 = sphi 0, %s37
    %s57 = sphi 0, %s57
    %s59 = sphi 0, %s57
    %s60 = sphi 0, %s59
    %s74 = sphi 0, %s60
    %s78 = sphi 0, %s78
    %s80 = sphi 0, %s78
    %s81 = sphi 0, %s80
    %s95 = sphi 0, %s81
    %s103 = sphi 0, %s105
    %s106 = sphi 0, %s103
    %s107 = sphi 0, %s106
    %s123 = sphi 0, %s107
  $region4: #{bridge_block.5} parent=0 // loop_header_branch
    %12 = sbr.rel (%p10) target = $region8
  $region5: #{bridge_block.5} parent=0 // loop_body
    %s14 = ssub.s32 %s9, 1
    %s15 = ssub.s32 %s9, 2
    %s22 = sadd.s32 1, %s17
    %p23 = scmp.ge.s32.totalorder %s22, 2
    %s24 = scalar_select %p23, 0, %s22
    %s25 = sadd.s32 1, %s16
    %s26 = scalar_select %p23, %s25, %s16
    %p27 = scmp.ge.s32.totalorder %s26, 8
    %s28 = scalar_select %p27, 0, %s26
    %s29 = ssub.s32 %s17, %s24
    %s30 = ssub.s32 %s16, %s28
    %s31 = sor.u32 %s29, %s30
    %p32 = scmp.eq.s32.totalorder %s31, 0
    %s34 = sadd.s32 %s33, 1
    %s35 = scalar_select %p32, %s33, %s34
    %p38 = pneg %p32
    %p39 = scmp.eq.s32.totalorder %s9, 15
    %p40 = por %p38, %p39
    %p41 = scmp.ne.s32.totalorder %s33, %s36
    %p42 = scmp.eq.s32.totalorder %s9, 0
    %p43 = por %p41, %p42
    %p44 = scmp.ne.s32.totalorder %s33, %s36
    %p45 = scmp.eq.s32.totalorder %s14, 15
    %p46 = por %p44, %p45
    %p47 = scmp.ne.s32.totalorder %s36, %s37
    %p48 = scmp.eq.s32.totalorder %s14, 0
    %p49 = por %p47, %p48
    %p50 = scmp.ne.s32.totalorder %s36, %s37
    %p51 = scmp.eq.s32.totalorder %s15, 15
    %p52 = por %p50, %p51
    %p54 = scmp.ne.s32.totalorder %s37, %s53
    %p55 = scmp.eq.s32.totalorder %s15, 0
    %p56 = por %p54, %p55
    %s58 = sadd.s32 %s57, 1
    %p61 = scmp.eq.s32.totalorder %s9, 15
    %p62 = scmp.ne.s32.totalorder %s57, %s59
    %p63 = scmp.eq.s32.totalorder %s9, 0
    %p64 = por %p62, %p63
    %p65 = scmp.ne.s32.totalorder %s57, %s59
    %p66 = scmp.eq.s32.totalorder %s14, 15
    %p67 = por %p65, %p66
    %p68 = scmp.ne.s32.totalorder %s59, %s60
    %p69 = scmp.eq.s32.totalorder %s14, 0
    %p70 = por %p68, %p69
    %p71 = scmp.ne.s32.totalorder %s59, %s60
    %p72 = scmp.eq.s32.totalorder %s15, 15
    %p73 = por %p71, %p72
    %p75 = scmp.ne.s32.totalorder %s60, %s74
    %p76 = scmp.eq.s32.totalorder %s15, 0
    %p77 = por %p75, %p76
    %s79 = sadd.s32 %s78, 1
    %p82 = scmp.eq.s32.totalorder %s9, 15
    %p83 = scmp.ne.s32.totalorder %s78, %s80
    %p84 = scmp.eq.s32.totalorder %s9, 0
    %p85 = por %p83, %p84
    %p86 = scmp.ne.s32.totalorder %s78, %s80
    %p87 = scmp.eq.s32.totalorder %s14, 15
    %p88 = por %p86, %p87
    %p89 = scmp.ne.s32.totalorder %s80, %s81
    %p90 = scmp.eq.s32.totalorder %s14, 0
    %p91 = por %p89, %p90
    %p92 = scmp.ne.s32.totalorder %s80, %s81
    %p93 = scmp.eq.s32.totalorder %s15, 15
    %p94 = por %p92, %p93
    %p96 = scmp.ne.s32.totalorder %s81, %s95
    %p97 = scmp.eq.s32.totalorder %s15, 0
    %p98 = por %p96, %p97
    %s99 = ssub.s32 %s17, %s24
    %s100 = ssub.s32 %s16, %s28
    %s101 = sor.u32 %s99, %s100
    %p102 = scmp.eq.s32.totalorder %s101, 0
    %s104 = sadd.s32 %s103, 1
    %s105 = scalar_select %p102, %s103, %s104
    %p108 = pneg %p102
    %p109 = scmp.eq.s32.totalorder %s9, 15
    %p110 = por %p108, %p109
    %p111 = scmp.ne.s32.totalorder %s103, %s106
    %p112 = scmp.eq.s32.totalorder %s9, 0
    %p113 = por %p111, %p112
    %p114 = scmp.ne.s32.totalorder %s103, %s106
    %p115 = scmp.eq.s32.totalorder %s14, 15
    %p116 = por %p114, %p115
    %p117 = scmp.ne.s32.totalorder %s106, %s107
    %p118 = scmp.eq.s32.totalorder %s14, 0
    %p119 = por %p117, %p118
    %p120 = scmp.ne.s32.totalorder %s106, %s107
    %p121 = scmp.eq.s32.totalorder %s15, 15
    %p122 = por %p120, %p121
    %p124 = scmp.ne.s32.totalorder %s107, %s123
    %p125 = scmp.eq.s32.totalorder %s15, 0
    %p126 = por %p124, %p125
    %p127 = scmp.le.s32.totalorder 1, %s9
    %p128 = scmp.lt.s32.totalorder %s9, 17
    %p129 = pnand %p127, %p128
    %p130 = pneg %p129
    // Predicated region
    $region9: #{bridge_block.5} parent=5 // pred_check
      _
    $region10: #{bridge_block.5} parent=5 // pred_check_branch
      %132 = sbr.rel (%p129) target = $region12
    $region11: #{bridge_block.5} parent=5 // pred_region
      %s133 = ssub.s32 %s9, 1
      // Predicated region
      $region13: #{bridge_block.5} parent=11 // pred_check
        %p134 = pneg %p70
      $region14: #{bridge_block.5} parent=11 // pred_check_branch
        %136 = sbr.rel (%p134) target = $region16
      $region15: #{bridge_block.5} parent=11 // pred_region
        _
      $region16: #{bridge_block.5} parent=11 // pred_fallthru
        _
      // Predicated region
      $region17: #{bridge_block.5} parent=11 // pred_check
        %p137 = pneg %p91
      $region18: #{bridge_block.5} parent=11 // pred_check_branch
        %139 = sbr.rel (%p137) target = $region20
      $region19: #{bridge_block.5} parent=11 // pred_region
        _
      $region20: #{bridge_block.5} parent=11 // pred_fallthru
        _
    $region12: #{bridge_block.5} parent=5 // pred_fallthru
      _
    %p140 = scmp.lt.s32.totalorder %s9, 16
    // Predicated region
    $region21: #{bridge_block.5} parent=5 // pred_check
      %p141 = pneg %p140
    $region22: #{bridge_block.5} parent=5 // pred_check_branch
      %143 = sbr.rel (%p141) target = $region24
    $region23: #{bridge_block.5} parent=5 // pred_region
      // Predicated region
      $region25: #{bridge_block.5} parent=23 // pred_check
        %p144 = pneg %p43
      $region26: #{bridge_block.5} parent=23 // pred_check_branch
        %146 = sbr.rel (%p144) target = $region28
      $region27: #{bridge_block.5} parent=23 // pred_region
        %p147 = scmp.lt.s32.totalorder %s17, 1
        %s148 = scalar_select %p147, %s17, 1
        %p149 = scmp.lt.s32.totalorder %s16, 7
        %s150 = scalar_select %p149, %s16, 7
        %s151 = smul.addr %s150, 8
        %s152 = smul.addr %s148, 64
        %s153 = sadd.s32 %s151, %s152
        %s154 = smul.addr %s153, 4
        %s155 = scalar_lea.vmem %s0, %s154
      $region28: #{bridge_block.5} parent=23 // pred_fallthru
        _
    $region24: #{bridge_block.5} parent=5 // pred_fallthru
      _
    %p156 = scmp.le.s32.totalorder 1, %s9
    %p157 = scmp.lt.s32.totalorder %s9, 17
    %p158 = pnand %p156, %p157
    %p159 = pneg %p158
    // Predicated region
    $region29: #{bridge_block.5} parent=5 // pred_check
      _
    $region30: #{bridge_block.5} parent=5 // pred_check_branch
      %161 = sbr.rel (%p158) target = $region32
    $region31: #{bridge_block.5} parent=5 // pred_region
      %s162 = ssub.s32 %s9, 1
      %p163 = scmp.lt.s32.totalorder %s19, 1
      %s164 = scalar_select %p163, %s19, 1
      %p165 = scmp.lt.s32.totalorder %s18, 7
      %s166 = scalar_select %p165, %s18, 7
      %s167 = smul.addr %s166, 8
      %s168 = smul.addr %s164, 64
      %s169 = sadd.s32 %s167, %s168
      %s170 = smul.addr %s169, 4
      %s171 = scalar_lea.vmem %s0, %s170
      %p172 = pneg %p49
      %p173 = pneg %p46
      %p174 = pneg %p70
      %p175 = pneg %p67
      %p176 = pneg %p91
      %p177 = pneg %p88
      %p178 = pneg %p119
      %p179 = pneg %p116
      %p180 = scmp.lt.s32.totalorder %s19, 1
      %s181 = scalar_select %p180, %s19, 1
      %p182 = scmp.lt.s32.totalorder %s18, 7
      %s183 = scalar_select %p182, %s18, 7
      %s184 = smul.addr %s183, 8
      %s185 = smul.addr %s181, 64
      %s186 = sadd.s32 %s184, %s185
      %s187 = smul.addr %s186, 4
      %s188 = scalar_lea.vmem %s3, %s187
      %p189 = scmp.lt.s32.totalorder %s19, 1
      %s190 = scalar_select %p189, %s19, 1
      %p191 = scmp.lt.s32.totalorder %s18, 7
      %s192 = scalar_select %p191, %s18, 7
      %s193 = smul.addr %s192, 8
      %s194 = smul.addr %s190, 64
      %s195 = sadd.s32 %s193, %s194
      %s196 = smul.addr %s195, 4
      %s197 = scalar_lea.vmem %s0, %s196
      %p198 = scmp.lt.s32.totalorder %s19, 1
      %s199 = scalar_select %p198, %s19, 1
      %p200 = scmp.lt.s32.totalorder %s18, 7
      %s201 = scalar_select %p200, %s18, 7
      %s202 = smul.addr %s201, 8
      %s203 = smul.addr %s199, 64
      %s204 = sadd.s32 %s202, %s203
      %s205 = smul.addr %s204, 4
      %s206 = scalar_lea.vmem %s3, %s205
      %v207 = vld [vmem:[%s197] sm:$0xf]
      %v208 = vld [vmem:[%s197 + $0x4] sm:$0xf]
      %v209 = vld [vmem:[%s197 + $0x8] sm:$0xf]
      %v210 = vld [vmem:[%s197 + $0xc] sm:$0xf]
      %v211 = vld [vmem:[%s197 + $0x10] sm:$0xf]
      %v212 = vld [vmem:[%s197 + $0x14] sm:$0xf]
      %v213 = vld [vmem:[%s197 + $0x18] sm:$0xf]
      %v214 = vld [vmem:[%s197 + $0x1c] sm:$0xf]
      %v215 = vunpack.c.l.bf16 %v207
      %v216 = vunpack.c.l.bf16 %v208
      %v217 = vunpack.c.l.bf16 %v209
      %v218 = vunpack.c.l.bf16 %v210
      %v219 = vunpack.c.l.bf16 %v211
      %v220 = vunpack.c.l.bf16 %v212
      %v221 = vunpack.c.l.bf16 %v213
      %v222 = vunpack.c.l.bf16 %v214
      %v223 = vld [vmem:[%s1] sm:$0x1]
      %v225 = vlaneseq
      %v226 = vshrl.u32 %v225, 7
      %v227 = vsub.s32 0, %v226
      %v228 = vrot.slane %v223, %v227
      %v230 = vmul.f32 %v215, %v228
      %v231 = vmul.f32 %v216, %v228
      %v232 = vmul.f32 %v217, %v228
      %v233 = vmul.f32 %v218, %v228
      %v234 = vmul.f32 %v219, %v228
      %v235 = vmul.f32 %v220, %v228
      %v236 = vmul.f32 %v221, %v228
      %v237 = vmul.f32 %v222, %v228
      %v238 = vld [vmem:[%s2] sm:$0x1]
      %v240 = vlaneseq
      %v241 = vshrl.u32 %v240, 7
      %v242 = vsub.s32 0, %v241
      %v243 = vrot.slane %v238, %v242
      %v245 = vadd.f32 %v230, %v243
      %v246 = vadd.f32 %v231, %v243
      %v247 = vadd.f32 %v232, %v243
      %v248 = vadd.f32 %v233, %v243
      %v249 = vadd.f32 %v234, %v243
      %v250 = vadd.f32 %v235, %v243
      %v251 = vadd.f32 %v236, %v243
      %v252 = vadd.f32 %v237, %v243
      %v253 = vmul.f32 %v245, 0.01
      %v254 = vmul.f32 %v246, 0.01
      %v255 = vmul.f32 %v247, 0.01
      %v256 = vmul.f32 %v248, 0.01
      %v257 = vmul.f32 %v249, 0.01
      %v258 = vmul.f32 %v250, 0.01
      %v259 = vmul.f32 %v251, 0.01
      %v260 = vmul.f32 %v252, 0.01
      %v261 = vmax.f32 %v245, %v253
      %v262 = vmax.f32 %v246, %v254
      %v263 = vmax.f32 %v247, %v255
      %v264 = vmax.f32 %v248, %v256
      %v265 = vmax.f32 %v249, %v257
      %v266 = vmax.f32 %v250, %v258
      %v267 = vmax.f32 %v251, %v259
      %v268 = vmax.f32 %v252, %v260
      %v269 = vpack.c.bf16 %v262, %v261
      %v270 = vpack.c.bf16 %v264, %v263
      %v271 = vpack.c.bf16 %v266, %v265
      %v272 = vpack.c.bf16 %v268, %v267
      %v277 = vunpack.c.l.b16 %v269
      %v278 = vunpack.c.h.b16 %v269
      %v279 = vunpack.c.l.b16 %v270
      %v280 = vunpack.c.h.b16 %v270
      %v281 = vunpack.c.l.b16 %v271
      %v282 = vunpack.c.h.b16 %v271
      %v283 = vunpack.c.l.b16 %v272
      %v284 = vunpack.c.h.b16 %v272
      %v285 = vpack.c.b16 %v277, %v277
      %v286 = vpack.c.b16 %v278, %v278
      %v287 = vpack.c.b16 %v279, %v279
      %v288 = vpack.c.b16 %v280, %v280
      %v289 = vpack.c.b16 %v281, %v281
      %v290 = vpack.c.b16 %v282, %v282
      %v291 = vpack.c.b16 %v283, %v283
      %v292 = vpack.c.b16 %v284, %v284
      %vm301 = vcmask 60416
      %302 = vst.msk [vmem:[%s206] sm:$0xf] %vm301, %v285
      %303 = vst.msk [vmem:[%s206 + $0x4] sm:$0xf] %vm301, %v286
      %304 = vst.msk [vmem:[%s206 + $0x8] sm:$0xf] %vm301, %v287
      %305 = vst.msk [vmem:[%s206 + $0xc] sm:$0xf] %vm301, %v288
      %306 = vst.msk [vmem:[%s206 + $0x10] sm:$0xf] %vm301, %v289
      %307 = vst.msk [vmem:[%s206 + $0x14] sm:$0xf] %vm301, %v290
      %308 = vst.msk [vmem:[%s206 + $0x18] sm:$0xf] %vm301, %v291
      %309 = vst.msk [vmem:[%s206 + $0x1c] sm:$0xf] %vm301, %v292
      %p310 = scmp.lt.s32.totalorder %s19, 1
      %s311 = scalar_select %p310, %s19, 1
      %p312 = scmp.lt.s32.totalorder %s18, 7
      %s313 = scalar_select %p312, %s18, 7
      %s314 = smul.addr %s313, 8
      %s315 = smul.addr %s311, 64
      %s316 = sadd.s32 %s314, %s315
      %s317 = smul.addr %s316, 4
      %s318 = scalar_lea.vmem %s3, %s317
      // Predicated region
      $region33: #{bridge_block.5} parent=31 // pred_check
        %p319 = pneg %p116
      $region34: #{bridge_block.5} parent=31 // pred_check_branch
        %321 = sbr.rel (%p319) target = $region36
      $region35: #{bridge_block.5} parent=31 // pred_region
        _
      $region36: #{bridge_block.5} parent=31 // pred_fallthru
        _
    $region32: #{bridge_block.5} parent=5 // pred_fallthru
      _
    %p322 = scmp.le.s32.totalorder 2, %s9
    // Predicated region
    $region37: #{bridge_block.5} parent=5 // pred_check
      %p323 = pneg %p322
    $region38: #{bridge_block.5} parent=5 // pred_check_branch
      %325 = sbr.rel (%p323) target = $region40
    $region39: #{bridge_block.5} parent=5 // pred_region
      %s326 = ssub.s32 %s9, 2
      // Predicated region
      $region41: #{bridge_block.5} parent=39 // pred_check
        %p327 = pneg %p122
      $region42: #{bridge_block.5} parent=39 // pred_check_branch
        %329 = sbr.rel (%p327) target = $region44
      $region43: #{bridge_block.5} parent=39 // pred_region
        %p330 = scmp.lt.s32.totalorder %s21, 1
        %s331 = scalar_select %p330, %s21, 1
        %p332 = scmp.lt.s32.totalorder %s20, 7
        %s333 = scalar_select %p332, %s20, 7
        %s334 = smul.addr %s333, 8
        %s335 = smul.addr %s331, 64
        %s336 = sadd.s32 %s334, %s335
        %s337 = smul.addr %s336, 4
        %s338 = scalar_lea.vmem %s3, %s337
      $region44: #{bridge_block.5} parent=39 // pred_fallthru
        _
    $region40: #{bridge_block.5} parent=5 // pred_fallthru
      _
  $region6: #{bridge_block.5} parent=0 // loop_footer
    %s13 = sadd.s32 1, %s9
  $region7: #{bridge_block.5} parent=0 // loop_footer_branch
    %8 = sbr.rel target = $region3
  $region8: #{bridge_block.5} parent=0 // loop_exit
    _

// kernel: bridge_block.4
$region0: #{bridge_block.4}
  #allocation0 [shape = 'u32[]', space=smem, size = 0x4, offset = 0x4, fixed_abs, tag = 'smem constant byte address 0x4 - core index']
  #allocation1 [shape = 'u32[144,128]{1,0:T(1,128)}', space=vmem, size = 0x12000, scoped, tag = 'internal scratch']
  %s0 = inlined_call_operand.vmem [shape: bf16[2,10,10,10,4], index: 0, kind: input, shape index: {}, may-alias: {0,1,2}]
  %s1 = inlined_call_operand.vmem [shape: bf16[2,10,10,10,4], index: 1, kind: input, shape index: {}, may-alias: {0,1,2}]
  %s2 = inlined_call_operand.vmem [shape: bf16[2,10,10,10,4], index: 2, kind: input, shape index: {}, may-alias: {0,1,2}]
  %s3 = inlined_call_operand.vmem [shape: f32[3,3,3,4,8], index: 3, kind: input, shape index: {}]
  %s4 = inlined_call_operand.vmem [shape: bf16[2,8,64,8], index: 4, kind: output, shape index: {0}]
  %s5 = inlined_call_operand.vmem [shape: f32[2,8,1,8], index: 5, kind: output, shape index: {1}]
  %s6 = inlined_call_operand.vmem [shape: f32[2,8,1,8], index: 6, kind: output, shape index: {2}]
  %7 = xla_tuple %s4, %s5, %s6
  %s8 = sld [smem:[#allocation0]]
  $region65: #{bridge_block.4} parent=0
    _
  %s10 = ssub.s32 1, %s8
  %s11 = scalar_select 0, %s10, %s8
  loop: start=0, step=1, limit=18
  $region2: #{bridge_block.4} parent=0 // loop_pre_header
    _
  $region3: #{bridge_block.4} parent=0 // loop_header
    %s13 = sphi 0, %s17
    %p14 = scmp.ge.s32.totalorder %s13, 18
    %s20 = sphi 0, %s32
    %s21 = sphi 0, %s28
    %s22 = sphi 0, %s20
    %s23 = sphi 0, %s21
    %s24 = sphi 0, %s22
    %s25 = sphi 0, %s23
    %s37 = sphi 0, %s39
    %s40 = sphi 0, %s37
    %s41 = sphi 0, %s40
    %s57 = sphi 0, %s41
    %s67 = sphi 0, %s69
    %s70 = sphi 0, %s67
    %s71 = sphi 0, %s70
    %s87 = sphi 0, %s71
    %s97 = sphi 0, %s99
    %s100 = sphi 0, %s97
    %s101 = sphi 0, %s100
    %s117 = sphi 0, %s101
    %s121 = sphi 0, %s121
    %s123 = sphi 0, %s121
    %s124 = sphi 0, %s123
    %s138 = sphi 0, %s124
    %s146 = sphi 0, %s148
    %s149 = sphi 0, %s146
    %s150 = sphi 0, %s149
    %s166 = sphi 0, %s150
    %s174 = sphi 0, %s176
    %s177 = sphi 0, %s174
    %s178 = sphi 0, %s177
    %s194 = sphi 0, %s178
    %s202 = sphi 0, %s204
    %s205 = sphi 0, %s202
    %s206 = sphi 0, %s205
    %s222 = sphi 0, %s206
  $region4: #{bridge_block.4} parent=0 // loop_header_branch
    %16 = sbr.rel (%p14) target = $region8
  $region5: #{bridge_block.4} parent=0 // loop_body
    %s18 = ssub.s32 %s13, 1
    %s19 = ssub.s32 %s13, 2
    %s26 = sadd.s32 1, %s21
    %p27 = scmp.ge.s32.totalorder %s26, 2
    %s28 = scalar_select %p27, 0, %s26
    %s29 = sadd.s32 1, %s20
    %s30 = scalar_select %p27, %s29, %s20
    %p31 = scmp.ge.s32.totalorder %s30, 8
    %s32 = scalar_select %p31, 0, %s30
    %s33 = ssub.s32 %s21, %s28
    %s34 = ssub.s32 %s20, %s32
    %s35 = sor.u32 %s33, %s34
    %p36 = scmp.eq.s32.totalorder %s35, 0
    %s38 = sadd.s32 %s37, 1
    %s39 = scalar_select %p36, %s37, %s38
    %p42 = pneg %p36
    %p43 = scmp.eq.s32.totalorder %s13, 15
    %p44 = por %p42, %p43
    %p45 = scmp.ne.s32.totalorder %s37, %s40
    %p46 = scmp.eq.s32.totalorder %s13, 0
    %p47 = por %p45, %p46
    %p48 = scmp.ne.s32.totalorder %s37, %s40
    %p49 = scmp.eq.s32.totalorder %s18, 15
    %p50 = por %p48, %p49
    %p51 = scmp.ne.s32.totalorder %s40, %s41
    %p52 = scmp.eq.s32.totalorder %s18, 0
    %p53 = por %p51, %p52
    %p54 = scmp.ne.s32.totalorder %s40, %s41
    %p55 = scmp.eq.s32.totalorder %s19, 15
    %p56 = por %p54, %p55
    %p58 = scmp.ne.s32.totalorder %s41, %s57
    %p59 = scmp.eq.s32.totalorder %s19, 0
    %p60 = por %p58, %p59
    %s61 = sadd.s32 %s20, 1
    %s62 = sadd.s32 %s32, 1
    %s63 = ssub.s32 %s21, %s28
    %s64 = ssub.s32 %s61, %s62
    %s65 = sor.u32 %s63, %s64
    %p66 = scmp.eq.s32.totalorder %s65, 0
    %s68 = sadd.s32 %s67, 1
    %s69 = scalar_select %p66, %s67, %s68
    %p72 = pneg %p66
    %p73 = scmp.eq.s32.totalorder %s13, 15
    %p74 = por %p72, %p73
    %p75 = scmp.ne.s32.totalorder %s67, %s70
    %p76 = scmp.eq.s32.totalorder %s13, 0
    %p77 = por %p75, %p76
    %p78 = scmp.ne.s32.totalorder %s67, %s70
    %p79 = scmp.eq.s32.totalorder %s18, 15
    %p80 = por %p78, %p79
    %p81 = scmp.ne.s32.totalorder %s70, %s71
    %p82 = scmp.eq.s32.totalorder %s18, 0
    %p83 = por %p81, %p82
    %p84 = scmp.ne.s32.totalorder %s70, %s71
    %p85 = scmp.eq.s32.totalorder %s19, 15
    %p86 = por %p84, %p85
    %p88 = scmp.ne.s32.totalorder %s71, %s87
    %p89 = scmp.eq.s32.totalorder %s19, 0
    %p90 = por %p88, %p89
    %s91 = sadd.s32 %s20, 2
    %s92 = sadd.s32 %s32, 2
    %s93 = ssub.s32 %s21, %s28
    %s94 = ssub.s32 %s91, %s92
    %s95 = sor.u32 %s93, %s94
    %p96 = scmp.eq.s32.totalorder %s95, 0
    %s98 = sadd.s32 %s97, 1
    %s99 = scalar_select %p96, %s97, %s98
    %p102 = pneg %p96
    %p103 = scmp.eq.s32.totalorder %s13, 15
    %p104 = por %p102, %p103
    %p105 = scmp.ne.s32.totalorder %s97, %s100
    %p106 = scmp.eq.s32.totalorder %s13, 0
    %p107 = por %p105, %p106
    %p108 = scmp.ne.s32.totalorder %s97, %s100
    %p109 = scmp.eq.s32.totalorder %s18, 15
    %p110 = por %p108, %p109
    %p111 = scmp.ne.s32.totalorder %s100, %s101
    %p112 = scmp.eq.s32.totalorder %s18, 0
    %p113 = por %p111, %p112
    %p114 = scmp.ne.s32.totalorder %s100, %s101
    %p115 = scmp.eq.s32.totalorder %s19, 15
    %p116 = por %p114, %p115
    %p118 = scmp.ne.s32.totalorder %s101, %s117
    %p119 = scmp.eq.s32.totalorder %s19, 0
    %p120 = por %p118, %p119
    %s122 = sadd.s32 %s121, 1
    %p125 = scmp.eq.s32.totalorder %s13, 15
    %p126 = scmp.ne.s32.totalorder %s121, %s123
    %p127 = scmp.eq.s32.totalorder %s13, 0
    %p128 = por %p126, %p127
    %p129 = scmp.ne.s32.totalorder %s121, %s123
    %p130 = scmp.eq.s32.totalorder %s18, 15
    %p131 = por %p129, %p130
    %p132 = scmp.ne.s32.totalorder %s123, %s124
    %p133 = scmp.eq.s32.totalorder %s18, 0
    %p134 = por %p132, %p133
    %p135 = scmp.ne.s32.totalorder %s123, %s124
    %p136 = scmp.eq.s32.totalorder %s19, 15
    %p137 = por %p135, %p136
    %p139 = scmp.ne.s32.totalorder %s124, %s138
    %p140 = scmp.eq.s32.totalorder %s19, 0
    %p141 = por %p139, %p140
    %s142 = ssub.s32 %s21, %s28
    %s143 = ssub.s32 %s20, %s32
    %s144 = sor.u32 %s142, %s143
    %p145 = scmp.eq.s32.totalorder %s144, 0
    %s147 = sadd.s32 %s146, 1
    %s148 = scalar_select %p145, %s146, %s147
    %p151 = pneg %p145
    %p152 = scmp.eq.s32.totalorder %s13, 15
    %p153 = por %p151, %p152
    %p154 = scmp.ne.s32.totalorder %s146, %s149
    %p155 = scmp.eq.s32.totalorder %s13, 0
    %p156 = por %p154, %p155
    %p157 = scmp.ne.s32.totalorder %s146, %s149
    %p158 = scmp.eq.s32.totalorder %s18, 15
    %p159 = por %p157, %p158
    %p160 = scmp.ne.s32.totalorder %s149, %s150
    %p161 = scmp.eq.s32.totalorder %s18, 0
    %p162 = por %p160, %p161
    %p163 = scmp.ne.s32.totalorder %s149, %s150
    %p164 = scmp.eq.s32.totalorder %s19, 15
    %p165 = por %p163, %p164
    %p167 = scmp.ne.s32.totalorder %s150, %s166
    %p168 = scmp.eq.s32.totalorder %s19, 0
    %p169 = por %p167, %p168
    %s170 = ssub.s32 %s21, %s28
    %s171 = ssub.s32 %s20, %s32
    %s172 = sor.u32 %s170, %s171
    %p173 = scmp.eq.s32.totalorder %s172, 0
    %s175 = sadd.s32 %s174, 1
    %s176 = scalar_select %p173, %s174, %s175
    %p179 = pneg %p173
    %p180 = scmp.eq.s32.totalorder %s13, 15
    %p181 = por %p179, %p180
    %p182 = scmp.ne.s32.totalorder %s174, %s177
    %p183 = scmp.eq.s32.totalorder %s13, 0
    %p184 = por %p182, %p183
    %p185 = scmp.ne.s32.totalorder %s174, %s177
    %p186 = scmp.eq.s32.totalorder %s18, 15
    %p187 = por %p185, %p186
    %p188 = scmp.ne.s32.totalorder %s177, %s178
    %p189 = scmp.eq.s32.totalorder %s18, 0
    %p190 = por %p188, %p189
    %p191 = scmp.ne.s32.totalorder %s177, %s178
    %p192 = scmp.eq.s32.totalorder %s19, 15
    %p193 = por %p191, %p192
    %p195 = scmp.ne.s32.totalorder %s178, %s194
    %p196 = scmp.eq.s32.totalorder %s19, 0
    %p197 = por %p195, %p196
    %s198 = ssub.s32 %s21, %s28
    %s199 = ssub.s32 %s20, %s32
    %s200 = sor.u32 %s198, %s199
    %p201 = scmp.eq.s32.totalorder %s200, 0
    %s203 = sadd.s32 %s202, 1
    %s204 = scalar_select %p201, %s202, %s203
    %p207 = pneg %p201
    %p208 = scmp.eq.s32.totalorder %s13, 15
    %p209 = por %p207, %p208
    %p210 = scmp.ne.s32.totalorder %s202, %s205
    %p211 = scmp.eq.s32.totalorder %s13, 0
    %p212 = por %p210, %p211
    %p213 = scmp.ne.s32.totalorder %s202, %s205
    %p214 = scmp.eq.s32.totalorder %s18, 15
    %p215 = por %p213, %p214
    %p216 = scmp.ne.s32.totalorder %s205, %s206
    %p217 = scmp.eq.s32.totalorder %s18, 0
    %p218 = por %p216, %p217
    %p219 = scmp.ne.s32.totalorder %s205, %s206
    %p220 = scmp.eq.s32.totalorder %s19, 15
    %p221 = por %p219, %p220
    %p223 = scmp.ne.s32.totalorder %s206, %s222
    %p224 = scmp.eq.s32.totalorder %s19, 0
    %p225 = por %p223, %p224
    %p226 = scmp.le.s32.totalorder 1, %s13
    %p227 = scmp.lt.s32.totalorder %s13, 17
    %p228 = pnand %p226, %p227
    %p229 = pneg %p228
    // Predicated region
    $region9: #{bridge_block.4} parent=5 // pred_check
      _
    $region10: #{bridge_block.4} parent=5 // pred_check_branch
      %231 = sbr.rel (%p228) target = $region12
    $region11: #{bridge_block.4} parent=5 // pred_region
      %s232 = ssub.s32 %s13, 1
      // Predicated region
      $region13: #{bridge_block.4} parent=11 // pred_check
        %p233 = pneg %p134
      $region14: #{bridge_block.4} parent=11 // pred_check_branch
        %235 = sbr.rel (%p233) target = $region16
      $region15: #{bridge_block.4} parent=11 // pred_region
        _
      $region16: #{bridge_block.4} parent=11 // pred_fallthru
        _
    $region12: #{bridge_block.4} parent=5 // pred_fallthru
      _
    %p236 = scmp.lt.s32.totalorder %s13, 16
    // Predicated region
    $region17: #{bridge_block.4} parent=5 // pred_check
      %p237 = pneg %p236
    $region18: #{bridge_block.4} parent=5 // pred_check_branch
      %239 = sbr.rel (%p237) target = $region20
    $region19: #{bridge_block.4} parent=5 // pred_region
      // Predicated region
      $region21: #{bridge_block.4} parent=19 // pred_check
        %p240 = pneg %p47
      $region22: #{bridge_block.4} parent=19 // pred_check_branch
        %242 = sbr.rel (%p240) target = $region24
      $region23: #{bridge_block.4} parent=19 // pred_region
        %p243 = scmp.lt.s32.totalorder %s21, 1
        %s244 = scalar_select %p243, %s21, 1
        %p245 = scmp.lt.s32.totalorder %s20, 9
        %s246 = scalar_select %p245, %s20, 9
        %s247 = smul.addr %s246, 20
        %s248 = smul.addr %s244, 200
        %s249 = sadd.s32 %s247, %s248
        %s250 = smul.addr %s249, 4
        %s251 = scalar_lea.vmem %s0, %s250
      $region24: #{bridge_block.4} parent=19 // pred_fallthru
        _
      // Predicated region
      $region25: #{bridge_block.4} parent=19 // pred_check
        %p252 = pneg %p77
      $region26: #{bridge_block.4} parent=19 // pred_check_branch
        %254 = sbr.rel (%p252) target = $region28
      $region27: #{bridge_block.4} parent=19 // pred_region
        %s255 = sadd.s32 %s20, 1
        %p256 = scmp.lt.s32.totalorder %s21, 1
        %s257 = scalar_select %p256, %s21, 1
        %p258 = scmp.lt.s32.totalorder %s255, 9
        %s259 = scalar_select %p258, %s255, 9
        %s260 = smul.addr %s259, 20
        %s261 = smul.addr %s257, 200
        %s262 = sadd.s32 %s260, %s261
        %s263 = smul.addr %s262, 4
        %s264 = scalar_lea.vmem %s1, %s263
        %s265 = sadd.s32 %s20, 1
      $region28: #{bridge_block.4} parent=19 // pred_fallthru
        _
      // Predicated region
      $region29: #{bridge_block.4} parent=19 // pred_check
        %p266 = pneg %p107
      $region30: #{bridge_block.4} parent=19 // pred_check_branch
        %268 = sbr.rel (%p266) target = $region32
      $region31: #{bridge_block.4} parent=19 // pred_region
        %s269 = sadd.s32 %s20, 2
        %p270 = scmp.lt.s32.totalorder %s21, 1
        %s271 = scalar_select %p270, %s21, 1
        %p272 = scmp.lt.s32.totalorder %s269, 9
        %s273 = scalar_select %p272, %s269, 9
        %s274 = smul.addr %s273, 20
        %s275 = smul.addr %s271, 200
        %s276 = sadd.s32 %s274, %s275
        %s277 = smul.addr %s276, 4
        %s278 = scalar_lea.vmem %s2, %s277
        %s279 = sadd.s32 %s20, 2
      $region32: #{bridge_block.4} parent=19 // pred_fallthru
        _
    $region20: #{bridge_block.4} parent=5 // pred_fallthru
      _
    %p280 = scmp.le.s32.totalorder 1, %s13
    %p281 = scmp.lt.s32.totalorder %s13, 17
    %p282 = pnand %p280, %p281
    %p283 = pneg %p282
    // Predicated region
    $region33: #{bridge_block.4} parent=5 // pred_check
      _
    $region34: #{bridge_block.4} parent=5 // pred_check_branch
      %285 = sbr.rel (%p282) target = $region36
    $region35: #{bridge_block.4} parent=5 // pred_region
      %s286 = ssub.s32 %s13, 1
      %p287 = scmp.lt.s32.totalorder %s23, 1
      %s288 = scalar_select %p287, %s23, 1
      %p289 = scmp.lt.s32.totalorder %s22, 9
      %s290 = scalar_select %p289, %s22, 9
      %s291 = smul.addr %s290, 20
      %s292 = smul.addr %s288, 200
      %s293 = sadd.s32 %s291, %s292
      %s294 = smul.addr %s293, 4
      %s295 = scalar_lea.vmem %s0, %s294
      %p296 = pneg %p53
      %p297 = pneg %p50
      %s298 = sadd.s32 %s22, 1
      %p299 = scmp.lt.s32.totalorder %s23, 1
      %s300 = scalar_select %p299, %s23, 1
      %p301 = scmp.lt.s32.totalorder %s298, 9
      %s302 = scalar_select %p301, %s298, 9
      %s303 = smul.addr %s302, 20
      %s304 = smul.addr %s300, 200
      %s305 = sadd.s32 %s303, %s304
      %s306 = smul.addr %s305, 4
      %s307 = scalar_lea.vmem %s1, %s306
      %p308 = pneg %p83
      %p309 = pneg %p80
      %s310 = sadd.s32 %s22, 2
      %p311 = scmp.lt.s32.totalorder %s23, 1
      %s312 = scalar_select %p311, %s23, 1
      %p313 = scmp.lt.s32.totalorder %s310, 9
      %s314 = scalar_select %p313, %s310, 9
      %s315 = smul.addr %s314, 20
      %s316 = smul.addr %s312, 200
      %s317 = sadd.s32 %s315, %s316
      %s318 = smul.addr %s317, 4
      %s319 = scalar_lea.vmem %s2, %s318
      %p320 = pneg %p113
      %p321 = pneg %p110
      %p322 = pneg %p134
      %p323 = pneg %p131
      %p324 = pneg %p162
      %p325 = pneg %p159
      %p326 = scmp.lt.s32.totalorder %s23, 1
      %s327 = scalar_select %p326, %s23, 1
      %p328 = scmp.lt.s32.totalorder %s22, 7
      %s329 = scalar_select %p328, %s22, 7
      %s330 = smul.addr %s329, 8
      %s331 = smul.addr %s327, 64
      %s332 = sadd.s32 %s330, %s331
      %s333 = smul.addr %s332, 4
      %s334 = scalar_lea.vmem %s4, %s333
      %p335 = pneg %p190
      %p336 = pneg %p187
      %p337 = scmp.lt.s32.totalorder %s23, 1
      %s338 = scalar_select %p337, %s23, 1
      %p339 = scmp.lt.s32.totalorder %s22, 7
      %s340 = scalar_select %p339, %s22, 7
      %s341 = smul.addr %s338, 8
      %s342 = sadd.s32 %s340, %s341
      %s343 = scalar_lea.vmem %s5, %s342
      %p344 = pneg %p218
      %p345 = pneg %p215
      %p346 = scmp.lt.s32.totalorder %s23, 1
      %s347 = scalar_select %p346, %s23, 1
      %p348 = scmp.lt.s32.totalorder %s22, 7
      %s349 = scalar_select %p348, %s22, 7
      %s350 = smul.addr %s347, 8
      %s351 = sadd.s32 %s349, %s350
      %s352 = scalar_lea.vmem %s6, %s351
      %p353 = scmp.lt.s32.totalorder %s23, 1
      %s354 = scalar_select %p353, %s23, 1
      %p355 = scmp.lt.s32.totalorder %s22, 9
      %s356 = scalar_select %p355, %s22, 9
      %s357 = smul.addr %s356, 20
      %s358 = smul.addr %s354, 200
      %s359 = sadd.s32 %s357, %s358
      %s360 = smul.addr %s359, 4
      %s361 = scalar_lea.vmem %s0, %s360
      %s362 = sadd.s32 %s22, 1
      %p363 = scmp.lt.s32.totalorder %s23, 1
      %s364 = scalar_select %p363, %s23, 1
      %p365 = scmp.lt.s32.totalorder %s362, 9
      %s366 = scalar_select %p365, %s362, 9
      %s367 = smul.addr %s366, 20
      %s368 = smul.addr %s364, 200
      %s369 = sadd.s32 %s367, %s368
      %s370 = smul.addr %s369, 4
      %s371 = scalar_lea.vmem %s1, %s370
      %s372 = sadd.s32 %s22, 1
      %s373 = sadd.s32 %s22, 2
      %p374 = scmp.lt.s32.totalorder %s23, 1
      %s375 = scalar_select %p374, %s23, 1
      %p376 = scmp.lt.s32.totalorder %s373, 9
      %s377 = scalar_select %p376, %s373, 9
      %s378 = smul.addr %s377, 20
      %s379 = smul.addr %s375, 200
      %s380 = sadd.s32 %s378, %s379
      %s381 = smul.addr %s380, 4
      %s382 = scalar_lea.vmem %s2, %s381
      %s383 = sadd.s32 %s22, 2
      %p384 = scmp.lt.s32.totalorder %s23, 1
      %s385 = scalar_select %p384, %s23, 1
      %p386 = scmp.lt.s32.totalorder %s22, 7
      %s387 = scalar_select %p386, %s22, 7
      %s388 = smul.addr %s387, 8
      %s389 = smul.addr %s385, 64
      %s390 = sadd.s32 %s388, %s389
      %s391 = smul.addr %s390, 4
      %s392 = scalar_lea.vmem %s4, %s391
      %p393 = scmp.lt.s32.totalorder %s23, 1
      %s394 = scalar_select %p393, %s23, 1
      %p395 = scmp.lt.s32.totalorder %s22, 7
      %s396 = scalar_select %p395, %s22, 7
      %s397 = smul.addr %s394, 8
      %s398 = sadd.s32 %s396, %s397
      %s399 = scalar_lea.vmem %s5, %s398
      %p400 = scmp.lt.s32.totalorder %s23, 1
      %s401 = scalar_select %p400, %s23, 1
      %p402 = scmp.lt.s32.totalorder %s22, 7
      %s403 = scalar_select %p402, %s22, 7
      %s404 = smul.addr %s401, 8
      %s405 = sadd.s32 %s403, %s404
      %s406 = scalar_lea.vmem %s6, %s405
      %v407 = vld [vmem:[%s361] sm:$0xf]
      %v408 = vld [vmem:[%s361 + $0x4] sm:$0x1]
      %v409 = vld [vmem:[%s361 + $0x8] sm:$0xf]
      %v410 = vld [vmem:[%s361 + $0xc] sm:$0x1]
      %v411 = vld [vmem:[%s361 + $0x10] sm:$0xf]
      %v412 = vld [vmem:[%s361 + $0x14] sm:$0x1]
      %v413 = vld [vmem:[%s361 + $0x18] sm:$0xf]
      %v414 = vld [vmem:[%s361 + $0x1c] sm:$0x1]
      %v415 = vld [vmem:[%s361 + $0x20] sm:$0xf]
      %v416 = vld [vmem:[%s361 + $0x24] sm:$0x1]
      %v417 = vld [vmem:[%s361 + $0x28] sm:$0xf]
      %v418 = vld [vmem:[%s361 + $0x2c] sm:$0x1]
      %v419 = vld [vmem:[%s361 + $0x30] sm:$0xf]
      %v420 = vld [vmem:[%s361 + $0x34] sm:$0x1]
      %v421 = vld [vmem:[%s361 + $0x38] sm:$0xf]
      %v422 = vld [vmem:[%s361 + $0x3c] sm:$0x1]
      %v423 = vld [vmem:[%s361 + $0x40] sm:$0xf]
      %v424 = vld [vmem:[%s361 + $0x44] sm:$0x1]
      %v425 = vld [vmem:[%s361 + $0x48] sm:$0xf]
      %v426 = vld [vmem:[%s361 + $0x4c] sm:$0x1]
      %v427 = vunpack.c.l.bf16 %v407
      %v428 = vunpack.c.l.bf16 %v408
      %v429 = vunpack.c.l.bf16 %v409
      %v430 = vunpack.c.l.bf16 %v410
      %v431 = vunpack.c.l.bf16 %v411
      %v432 = vunpack.c.l.bf16 %v412
      %v433 = vunpack.c.l.bf16 %v413
      %v434 = vunpack.c.l.bf16 %v414
      %v435 = vunpack.c.l.bf16 %v415
      %v436 = vunpack.c.l.bf16 %v416
      %v437 = vunpack.c.l.bf16 %v417
      %v438 = vunpack.c.l.bf16 %v418
      %v439 = vunpack.c.l.bf16 %v419
      %v440 = vunpack.c.l.bf16 %v420
      %v441 = vunpack.c.l.bf16 %v421
      %v442 = vunpack.c.l.bf16 %v422
      %v443 = vunpack.c.l.bf16 %v423
      %v444 = vunpack.c.l.bf16 %v424
      %v445 = vunpack.c.l.bf16 %v425
      %v446 = vunpack.c.l.bf16 %v426
      %v447 = vld [vmem:[%s371] sm:$0xf]
      %v448 = vld [vmem:[%s371 + $0x4] sm:$0x1]
      %v449 = vld [vmem:[%s371 + $0x8] sm:$0xf]
      %v450 = vld [vmem:[%s371 + $0xc] sm:$0x1]
      %v451 = vld [vmem:[%s371 + $0x10] sm:$0xf]
      %v452 = vld [vmem:[%s371 + $0x14] sm:$0x1]
      %v453 = vld [vmem:[%s371 + $0x18] sm:$0xf]
      %v454 = vld [vmem:[%s371 + $0x1c] sm:$0x1]
      %v455 = vld [vmem:[%s371 + $0x20] sm:$0xf]
      %v456 = vld [vmem:[%s371 + $0x24] sm:$0x1]
      %v457 = vld [vmem:[%s371 + $0x28] sm:$0xf]
      %v458 = vld [vmem:[%s371 + $0x2c] sm:$0x1]
      %v459 = vld [vmem:[%s371 + $0x30] sm:$0xf]
      %v460 = vld [vmem:[%s371 + $0x34] sm:$0x1]
      %v461 = vld [vmem:[%s371 + $0x38] sm:$0xf]
      %v462 = vld [vmem:[%s371 + $0x3c] sm:$0x1]
      %v463 = vld [vmem:[%s371 + $0x40] sm:$0xf]
      %v464 = vld [vmem:[%s371 + $0x44] sm:$0x1]
      %v465 = vld [vmem:[%s371 + $0x48] sm:$0xf]
      %v466 = vld [vmem:[%s371 + $0x4c] sm:$0x1]
      %v467 = vunpack.c.l.bf16 %v447
      %v468 = vunpack.c.l.bf16 %v448
      %v469 = vunpack.c.l.bf16 %v449
      %v470 = vunpack.c.l.bf16 %v450
      %v471 = vunpack.c.l.bf16 %v451
      %v472 = vunpack.c.l.bf16 %v452
      %v473 = vunpack.c.l.bf16 %v453
      %v474 = vunpack.c.l.bf16 %v454
      %v475 = vunpack.c.l.bf16 %v455
      %v476 = vunpack.c.l.bf16 %v456
      %v477 = vunpack.c.l.bf16 %v457
      %v478 = vunpack.c.l.bf16 %v458
      %v479 = vunpack.c.l.bf16 %v459
      %v480 = vunpack.c.l.bf16 %v460
      %v481 = vunpack.c.l.bf16 %v461
      %v482 = vunpack.c.l.bf16 %v462
      %v483 = vunpack.c.l.bf16 %v463
      %v484 = vunpack.c.l.bf16 %v464
      %v485 = vunpack.c.l.bf16 %v465
      %v486 = vunpack.c.l.bf16 %v466
      %v487 = vld [vmem:[%s382] sm:$0xf]
      %v488 = vld [vmem:[%s382 + $0x4] sm:$0x1]
      %v489 = vld [vmem:[%s382 + $0x8] sm:$0xf]
      %v490 = vld [vmem:[%s382 + $0xc] sm:$0x1]
      %v491 = vld [vmem:[%s382 + $0x10] sm:$0xf]
      %v492 = vld [vmem:[%s382 + $0x14] sm:$0x1]
      %v493 = vld [vmem:[%s382 + $0x18] sm:$0xf]
      %v494 = vld [vmem:[%s382 + $0x1c] sm:$0x1]
      %v495 = vld [vmem:[%s382 + $0x20] sm:$0xf]
      %v496 = vld [vmem:[%s382 + $0x24] sm:$0x1]
      %v497 = vld [vmem:[%s382 + $0x28] sm:$0xf]
      %v498 = vld [vmem:[%s382 + $0x2c] sm:$0x1]
      %v499 = vld [vmem:[%s382 + $0x30] sm:$0xf]
      %v500 = vld [vmem:[%s382 + $0x34] sm:$0x1]
      %v501 = vld [vmem:[%s382 + $0x38] sm:$0xf]
      %v502 = vld [vmem:[%s382 + $0x3c] sm:$0x1]
      %v503 = vld [vmem:[%s382 + $0x40] sm:$0xf]
      %v504 = vld [vmem:[%s382 + $0x44] sm:$0x1]
      %v505 = vld [vmem:[%s382 + $0x48] sm:$0xf]
      %v506 = vld [vmem:[%s382 + $0x4c] sm:$0x1]
      %v507 = vunpack.c.l.bf16 %v487
      %v508 = vunpack.c.l.bf16 %v488
      %v509 = vunpack.c.l.bf16 %v489
      %v510 = vunpack.c.l.bf16 %v490
      %v511 = vunpack.c.l.bf16 %v491
      %v512 = vunpack.c.l.bf16 %v492
      %v513 = vunpack.c.l.bf16 %v493
      %v514 = vunpack.c.l.bf16 %v494
      %v515 = vunpack.c.l.bf16 %v495
      %v516 = vunpack.c.l.bf16 %v496
      %v517 = vunpack.c.l.bf16 %v497
      %v518 = vunpack.c.l.bf16 %v498
      %v519 = vunpack.c.l.bf16 %v499
      %v520 = vunpack.c.l.bf16 %v500
      %v521 = vunpack.c.l.bf16 %v501
      %v522 = vunpack.c.l.bf16 %v502
      %v523 = vunpack.c.l.bf16 %v503
      %v524 = vunpack.c.l.bf16 %v504
      %v525 = vunpack.c.l.bf16 %v505
      %v526 = vunpack.c.l.bf16 %v506
      %v527 = vld [vmem:[%s3] sm:$0xf]
      %vm544 = vcmask 1046528
      %v545 = vrot.slane %v427, 1
      %v546 = vrot.slane %v428, 1
      %v547 = vsel %vm544, %v545, %v546
      %v548 = vrot.slane %v429, 1
      %v549 = vrot.slane %v430, 1
      %v550 = vsel %vm544, %v548, %v549
      %v551 = vrot.slane %v431, 1
      %v552 = vrot.slane %v432, 1
      %v553 = vsel %vm544, %v551, %v552
      %v554 = vrot.slane %v433, 1
      %v555 = vrot.slane %v434, 1
      %v556 = vsel %vm544, %v554, %v555
      %v557 = vrot.slane %v435, 1
      %v558 = vrot.slane %v436, 1
      %v559 = vsel %vm544, %v557, %v558
      %v560 = vrot.slane %v437, 1
      %v561 = vrot.slane %v438, 1
      %v562 = vsel %vm544, %v560, %v561
      %v563 = vrot.slane %v439, 1
      %v564 = vrot.slane %v440, 1
      %v565 = vsel %vm544, %v563, %v564
      %v566 = vrot.slane %v441, 1
      %v567 = vrot.slane %v442, 1
      %v568 = vsel %vm544, %v566, %v567
      %s569 = scalar_lea.vmem %s3, 4
      %v570 = vld [vmem:[%s569] sm:$0xf]
      %vm571 = vcmask 31744
      %v572 = vsel %vm571, %v547, 0
      %v574 = vsel %vm571, %v550, 0
      %v576 = vsel %vm571, %v553, 0
      %v578 = vsel %vm571, %v556, 0
      %v580 = vsel %vm571, %v559, 0
      %v582 = vsel %vm571, %v562, 0
      %v584 = vsel %vm571, %v565, 0
      %v586 = vsel %vm571, %v568, 0
      %vm588 = vcmask 1043456
      %v590 = vsel %vm588, %v570, 0
      %592 = vmatprep.subr.mxu0 0.0
      %593 = vmatpush1.msra.mxu0 %v590
      %594 = vmatprep.subr.mxu0 0.0
      %595 = vmatpush1.msra.mxu0 0.0
      %596 = vmatprep.subr.mxu0 0.0
      %597 = vmatpush1.msra.mxu0 0.0
      %598 = vmatprep.subr.mxu0 0.0
      %599 = vmatpush1.msra.mxu0 0.0
      %600 = vmatprep.subr.mxu0 0.0
      %601 = vmatpush1.msra.mxu0 0.0
      %602 = vmatprep.subr.mxu0 0.0
      %603 = vmatpush1.msra.mxu0 0.0
      %604 = vmatprep.subr.mxu0 0.0
      %605 = vmatpush1.msra.mxu0 0.0
      %606 = vmatprep.subr.mxu0 0.0
      %607 = vmatpush1.msra.mxu0 0.0
      %608 = vmatprep.subr.mxu0 0.0
      %609 = vmatpush1.msra.mxu0 0.0
      %610 = vmatprep.subr.mxu0 0.0
      %611 = vmatpush1.msra.mxu0 0.0
      %612 = vmatprep.subr.mxu0 0.0
      %613 = vmatpush1.msra.mxu0 0.0
      %614 = vmatprep.subr.mxu0 0.0
      %615 = vmatpush1.msra.mxu0 0.0
      %616 = vmatprep.subr.mxu0 0.0
      %617 = vmatpush1.msra.mxu0 0.0
      %618 = vmatprep.subr.mxu0 0.0
      %619 = vmatpush1.msra.mxu0 0.0
      %620 = vmatprep.subr.mxu0 0.0
      %621 = vmatpush1.msra.mxu0 0.0
      %622 = vmatprep.subr.mxu0 0.0
      %623 = vmatpush1.msra.mxu0 0.0
      %624 = vmatprep.subr.mxu0 0.0
      %625 = vmatpush1.msra.mxu0 0.0
      %626 = vmatprep.subr.mxu0 0.0
      %627 = vmatpush1.msra.mxu0 0.0
      %628 = vmatprep.subr.mxu0 0.0
      %629 = vmatpush1.msra.mxu0 0.0
      %630 = vmatprep.subr.mxu0 0.0
      %631 = vmatpush1.msra.mxu0 0.0
      %632 = vmatprep.subr.mxu0 0.0
      %633 = vmatpush1.msra.mxu0 0.0
      %634 = vmatprep.subr.mxu0 0.0
      %635 = vmatpush1.msra.mxu0 0.0
      %636 = vmatprep.subr.mxu0 0.0
      %637 = vmatpush1.msra.mxu0 0.0
      %638 = vmatprep.subr.mxu0 0.0
      %639 = vmatpush1.msra.mxu0 0.0
      %640 = vmatprep.subr.mxu0 0.0
      %641 = vmatpush1.msra.mxu0 0.0
      %642 = vmatprep.subr.mxu0 0.0
      %643 = vmatpush1.msra.mxu0 0.0
      %644 = vmatprep.subr.mxu0 0.0
      %645 = vmatpush1.msra.mxu0 0.0
      %646 = vmatprep.subr.mxu0 0.0
      %647 = vmatpush1.msra.mxu0 0.0
      %648 = vmatprep.subr.mxu0 0.0
      %649 = vmatpush1.msra.mxu0 0.0
      %650 = vmatprep.subr.mxu0 0.0
      %651 = vmatpush1.msra.mxu0 0.0
      %652 = vmatprep.subr.mxu0 0.0
      %653 = vmatpush1.msra.mxu0 0.0
      %654 = vmatprep.subr.mxu0 0.0
      %655 = vmatpush1.msra.mxu0 0.0
      %656 = vmatprep.mubr.f32.mxu0 0.0
      %657 = vmatmul.mubr.f32.gmra.mrb[0].mxu0 %v572
      %v658 = vpop.f32.mrb[0].mxu0
      %v659 = vadd.f32 0.0, %v658
      %v660 = vpop.f32.mrb[0].mxu0
      %661 = vmatprep.mubr.f32.mxu0 0.0
      %662 = vmatmul.mubr.f32.gmra.mrb[0].mxu0 %v574
      %v663 = vpop.f32.mrb[0].mxu0
      %v664 = vadd.f32 0.0, %v663
      %v665 = vpop.f32.mrb[0].mxu0
      %666 = vmatprep.mubr.f32.mxu0 0.0
      %667 = vmatmul.mubr.f32.gmra.mrb[0].mxu0 %v576
      %v668 = vpop.f32.mrb[0].mxu0
      %v669 = vadd.f32 0.0, %v668
      %v670 = vpop.f32.mrb[0].mxu0
      %671 = vmatprep.mubr.f32.mxu0 0.0
      %672 = vmatmul.mubr.f32.gmra.mrb[0].mxu0 %v578
      %v673 = vpop.f32.mrb[0].mxu0
      %v674 = vadd.f32 0.0, %v673
      %v675 = vpop.f32.mrb[0].mxu0
      %676 = vmatprep.mubr.f32.mxu0 0.0
      %677 = vmatmul.mubr.f32.gmra.mrb[0].mxu0 %v580
      %v678 = vpop.f32.mrb[0].mxu0
      %v679 = vadd.f32 0.0, %v678
      %v680 = vpop.f32.mrb[0].mxu0
      %681 = vmatprep.mubr.f32.mxu0 0.0
      %682 = vmatmul.mubr.f32.gmra.mrb[0].mxu0 %v582
      %v683 = vpop.f32.mrb[0].mxu0
      %v684 = vadd.f32 0.0, %v683
      %v685 = vpop.f32.mrb[0].mxu0
      %686 = vmatprep.mubr.f32.mxu0 0.0
      %687 = vmatmul.mubr.f32.gmra.mrb[0].mxu0 %v584
      %v688 = vpop.f32.mrb[0].mxu0
      %v689 = vadd.f32 0.0, %v688
      %v690 = vpop.f32.mrb[0].mxu0
      %691 = vmatprep.mubr.f32.mxu0 0.0
      %692 = vmatmul.mubr.f32.gmra.mrb[0].mxu0 %v586
      %v693 = vpop.f32.mrb[0].mxu0
      %v694 = vadd.f32 0.0, %v693
      %v695 = vpop.f32.mrb[0].mxu0
      %696 = vdwg.mxu0
      %v697 = vsel %vm571, %v427, 0
      %v699 = vsel %vm571, %v429, 0
      %v701 = vsel %vm571, %v431, 0
      %v703 = vsel %vm571, %v433, 0
      %v705 = vsel %vm571, %v435, 0
      %v707 = vsel %vm571, %v437, 0
      %v709 = vsel %vm571, %v439, 0
      %v711 = vsel %vm571, %v441, 0
      %v714 = vsel %vm588, %v527, 0
      %716 = vmatprep.subr.mxu0 0.0
      %717 = vmatpush1.msra.mxu0 %v714
      %718 = vmatprep.subr.mxu0 0.0
      %719 = vmatpush1.msra.mxu0 0.0
      %720 = vmatprep.subr.mxu0 0.0
      %721 = vmatpush1.msra.mxu0 0.0
      %722 = vmatprep.subr.mxu0 0.0
      %723 = vmatpush1.msra.mxu0 0.0
      %724 = vmatprep.subr.mxu0 0.0
      %725 = vmatpush1.msra.mxu0 0.0
      %726 = vmatprep.subr.mxu0 0.0
      %727 = vmatpush1.msra.mxu0 0.0
      %728 = vmatprep.subr.mxu0 0.0
      %729 = vmatpush1.msra.mxu0 0.0
      %730 = vmatprep.subr.mxu0 0.0
      %731 = vmatpush1.msra.mxu0 0.0
      %732 = vmatprep.subr.mxu0 0.0
      %733 = vmatpush1.msra.mxu0 0.0
      %734 = vmatprep.subr.mxu0 0.0
      %735 = vmatpush1.msra.mxu0 0.0
      %736 = vmatprep.subr.mxu0 0.0
      %737 = vmatpush1.msra.mxu0 0.0
      %738 = vmatprep.subr.mxu0 0.0
      %739 = vmatpush1.msra.mxu0 0.0
      %740 = vmatprep.subr.mxu0 0.0
      %741 = vmatpush1.msra.mxu0 0.0
      %742 = vmatprep.subr.mxu0 0.0
      %743 = vmatpush1.msra.mxu0 0.0
      %744 = vmatprep.subr.mxu0 0.0
      %745 = vmatpush1.msra.mxu0 0.0
      %746 = vmatprep.subr.mxu0 0.0
      %747 = vmatpush1.msra.mxu0 0.0
      %748 = vmatprep.subr.mxu0 0.0
      %749 = vmatpush1.msra.mxu0 0.0
      %750 = vmatprep.subr.mxu0 0.0
      %751 = vmatpush1.msra.mxu0 0.0
      %752 = vmatprep.subr.mxu0 0.0
      %753 = vmatpush1.msra.mxu0 0.0
      %754 = vmatprep.subr.mxu0 0.0
      %755 = vmatpush1.msra.mxu0 0.0
      %756 = vmatprep.subr.mxu0 0.0
      %757 = vmatpush1.msra.mxu0 0.0
      %758 = vmatprep.subr.mxu0 0.0
      %759 = vmatpush1.msra.mxu0 0.0
      %760 = vmatprep.subr.mxu0 0.0
      %761 = vmatpush1.msra.mxu0 0.0
      %762 = vmatprep.subr.mxu0 0.0
      %763 = vmatpush1.msra.mxu0 0.0
      %764 = vmatprep.subr.mxu0 0.0
      %765 = vmatpush1.msra.mxu0 0.0
      %766 = vmatprep.subr.mxu0 0.0
      %767 = vmatpush1.msra.mxu0 0.0
      %768 = vmatprep.subr.mxu0 0.0
      %769 = vmatpush1.msra.mxu0 0.0
      %770 = vmatprep.subr.mxu0 0.0
      %771 = vmatpush1.msra.mxu0 0.0
      %772 = vmatprep.subr.mxu0 0.0
      %773 = vmatpush1.msra.mxu0 0.0
      %774 = vmatprep.subr.mxu0 0.0
      %775 = vmatpush1.msra.mxu0 0.0
      %776 = vmatprep.subr.mxu0 0.0
      %777 = vmatpush1.msra.mxu0 0.0
      %778 = vmatprep.subr.mxu0 0.0
      %779 = vmatpush1.msra.mxu0 0.0
      %780 = vmatprep.mubr.f32.mxu0 0.0
      %781 = vmatmul.mubr.f32.gmra.mrb[0].mxu0 %v697
      %v782 = vpop.f32.mrb[0].mxu0
      %v783 = vadd.f32 %v659, %v782
      %v784 = vpop.f32.mrb[0].mxu0
      %785 = vmatprep.mubr.f32.mxu0 0.0
      %786 = vmatmul.mubr.f32.gmra.mrb[0].mxu0 %v699
      %v787 = vpop.f32.mrb[0].mxu0
      %v788 = vadd.f32 %v664, %v787
      %v789 = vpop.f32.mrb[0].mxu0
      %790 = vmatprep.mubr.f32.mxu0 0.0
      %791 = vmatmul.mubr.f32.gmra.mrb[0].mxu0 %v701
      %v792 = vpop.f32.mrb[0].mxu0
      %v793 = vadd.f32 %v669, %v792
      %v794 = vpop.f32.mrb[0].mxu0
      %795 = vmatprep.mubr.f32.mxu0 0.0
      %796 = vmatmul.mubr.f32.gmra.mrb[0].mxu0 %v703
      %v797 = vpop.f32.mrb[0].mxu0
      %v798 = vadd.f32 %v674, %v797
      %v799 = vpop.f32.mrb[0].mxu0
      %800 = vmatprep.mubr.f32.mxu0 0.0
      %801 = vmatmul.mubr.f32.gmra.mrb[0].mxu0 %v705
      %v802 = vpop.f32.mrb[0].mxu0
      %v803 = vadd.f32 %v679, %v802
      %v804 = vpop.f32.mrb[0].mxu0
      %805 = vmatprep.mubr.f32.mxu0 0.0
      %806 = vmatmul.mubr.f32.gmra.mrb[0].mxu0 %v707
      %v807 = vpop.f32.mrb[0].mxu0
      %v808 = vadd.f32 %v684, %v807
      %v809 = vpop.f32.mrb[0].mxu0
      %810 = vmatprep.mubr.f32.mxu0 0.0
      %811 = vmatmul.mubr.f32.gmra.mrb[0].mxu0 %v709
      %v812 = vpop.f32.mrb[0].mxu0
      %v813 = vadd.f32 %v689, %v812
      %v814 = vpop.f32.mrb[0].mxu0
      %815 = vmatprep.mubr.f32.mxu0 0.0
      %816 = vmatmul.mubr.f32.gmra.mrb[0].mxu0 %v711
      %v817 = vpop.f32.mrb[0].mxu0
      %v818 = vadd.f32 %v694, %v817
      %v819 = vpop.f32.mrb[0].mxu0
      %820 = vdwg.mxu0
      %vm821 = vcmask 1045504
      %v822 = vrot.slane %v427, 2
      %v823 = vrot.slane %v428, 2
      %v824 = vsel %vm821, %v822, %v823
      %v825 = vrot.slane %v429, 2
      %v826 = vrot.slane %v430, 2
      %v827 = vsel %vm821, %v825, %v826
      %v828 = vrot.slane %v431, 2
      %v829 = vrot.slane %v432, 2
      %v830 = vsel %vm821, %v828, %v829
      %v831 = vrot.slane %v433, 2
      %v832 = vrot.slane %v434, 2
      %v833 = vsel %vm821, %v831, %v832
      %v834 = vrot.slane %v435, 2
      %v835 = vrot.slane %v436, 2
      %v836 = vsel %vm821, %v834, %v835
      %v837 = vrot.slane %v437, 2
      %v838 = vrot.slane %v438, 2
      %v839 = vsel %vm821, %v837, %v838
      %v840 = vrot.slane %v439, 2
      %v841 = vrot.slane %v440, 2
      %v842 = vsel %vm821, %v840, %v841
      %v843 = vrot.slane %v441, 2
      %v844 = vrot.slane %v442, 2
      %v845 = vsel %vm821, %v843, %v844
      %s846 = scalar_lea.vmem %s3, 8
      %v847 = vld [vmem:[%s846] sm:$0xf]
      %v848 = vsel %vm571, %v824, 0
      %v850 = vsel %vm571, %v827, 0
      %v852 = vsel %vm571, %v830, 0
      %v854 = vsel %vm571, %v833, 0
      %v856 = vsel %vm571, %v836, 0
      %v858 = vsel %vm571, %v839, 0
      %v860 = vsel %vm571, %v842, 0
      %v862 = vsel %vm571, %v845, 0
      %v865 = vsel %vm588, %v847, 0
      %867 = vmatprep.subr.mxu0 0.0
      %868 = vmatpush1.msra.mxu0 %v865
      %869 = vmatprep.subr.mxu0 0.0
      %870 = vmatpush1.msra.mxu0 0.0
      %871 = vmatprep.subr.mxu0 0.0
      %872 = vmatpush1.msra.mxu0 0.0
      %873 = vmatprep.subr.mxu0 0.0
      %874 = vmatpush1.msra.mxu0 0.0
      %875 = vmatprep.subr.mxu0 0.0
      %876 = vmatpush1.msra.mxu0 0.0
      %877 = vmatprep.subr.mxu0 0.0
      %878 = vmatpush1.msra.mxu0 0.0
      %879 = vmatprep.subr.mxu0 0.0
      %880 = vmatpush1.msra.mxu0 0.0
      %881 = vmatprep.subr.mxu0 0.0
      %882 = vmatpush1.msra.mxu0 0.0
      %883 = vmatprep.subr.mxu0 0.0
      %884 = vmatpush1.msra.mxu0 0.0
      %885 = vmatprep.subr.mxu0 0.0
      %886 = vmatpush1.msra.mxu0 0.0
      %887 = vmatprep.subr.mxu0 0.0
      %888 = vmatpush1.msra.mxu0 0.0
      %889 = vmatprep.subr.mxu0 0.0
      %890 = vmatpush1.msra.mxu0 0.0
      %891 = vmatprep.subr.mxu0 0.0
      %892 = vmatpush1.msra.mxu0 0.0
      %893 = vmatprep.subr.mxu0 0.0
      %894 = vmatpush1.msra.mxu0 0.0
      %895 = vmatprep.subr.mxu0 0.0
      %896 = vmatpush1.msra.mxu0 0.0
      %897 = vmatprep.subr.mxu0 0.0
      %898 = vmatpush1.msra.mxu0 0.0
      %899 = vmatprep.subr.mxu0 0.0
      %900 = vmatpush1.msra.mxu0 0.0
      %901 = vmatprep.subr.mxu0 0.0
      %902 = vmatpush1.msra.mxu0 0.0
      %903 = vmatprep.subr.mxu0 0.0
      %904 = vmatpush1.msra.mxu0 0.0
      %905 = vmatprep.subr.mxu0 0.0
      %906 = vmatpush1.msra.mxu0 0.0
      %907 = vmatprep.subr.mxu0 0.0
      %908 = vmatpush1.msra.mxu0 0.0
      %909 = vmatprep.subr.mxu0 0.0
      %910 = vmatpush1.msra.mxu0 0.0
      %911 = vmatprep.subr.mxu0 0.0
      %912 = vmatpush1.msra.mxu0 0.0
      %913 = vmatprep.subr.mxu0 0.0
      %914 = vmatpush1.msra.mxu0 0.0
      %915 = vmatprep.subr.mxu0 0.0
      %916 = vmatpush1.msra.mxu0 0.0
      %917 = vmatprep.subr.mxu0 0.0
      %918 = vmatpush1.msra.mxu0 0.0
      %919 = vmatprep.subr.mxu0 0.0
      %920 = vmatpush1.msra.mxu0 0.0
      %921 = vmatprep.subr.mxu0 0.0
      %922 = vmatpush1.msra.mxu0 0.0
      %923 = vmatprep.subr.mxu0 0.0
      %924 = vmatpush1.msra.mxu0 0.0
      %925 = vmatprep.subr.mxu0 0.0
      %926 = vmatpush1.msra.mxu0 0.0
      %927 = vmatprep.subr.mxu0 0.0
      %928 = vmatpush1.msra.mxu0 0.0
      %929 = vmatprep.subr.mxu0 0.0
      %930 = vmatpush1.msra.mxu0 0.0
      %931 = vmatprep.mubr.f32.mxu0 0.0
      %932 = vmatmul.mubr.f32.gmra.mrb[0].mxu0 %v848
      %v933 = vpop.f32.mrb[0].mxu0
      %v934 = vadd.f32 0.0, %v933
      %v935 = vpop.f32.mrb[0].mxu0
      %936 = vmatprep.mubr.f32.mxu0 0.0
      %937 = vmatmul.mubr.f32.gmra.mrb[0].mxu0 %v850
      %v938 = vpop.f32.mrb[0].mxu0
      %v939 = vadd.f32 0.0, %v938
      %v940 = vpop.f32.mrb[0].mxu0
      %941 = vmatprep.mubr.f32.mxu0 0.0
      %942 = vmatmul.mubr.f32.gmra.mrb[0].mxu0 %v852
      %v943 = vpop.f32.mrb[0].mxu0
      %v944 = vadd.f32 0.0, %v943
      %v945 = vpop.f32.mrb[0].mxu0
      %946 = vmatprep.mubr.f32.mxu0 0.0
      %947 = vmatmul.mubr.f32.gmra.mrb[0].mxu0 %v854
      %v948 = vpop.f32.mrb[0].mxu0
      %v949 = vadd.f32 0.0, %v948
      %v950 = vpop.f32.mrb[0].mxu0
      %951 = vmatprep.mubr.f32.mxu0 0.0
      %952 = vmatmul.mubr.f32.gmra.mrb[0].mxu0 %v856
      %v953 = vpop.f32.mrb[0].mxu0
      %v954 = vadd.f32 0.0, %v953
      %v955 = vpop.f32.mrb[0].mxu0
      %956 = vmatprep.mubr.f32.mxu0 0.0
      %957 = vmatmul.mubr.f32.gmra.mrb[0].mxu0 %v858
      %v958 = vpop.f32.mrb[0].mxu0
      %v959 = vadd.f32 0.0, %v958
      %v960 = vpop.f32.mrb[0].mxu0
      %961 = vmatprep.mubr.f32.mxu0 0.0
      %962 = vmatmul.mubr.f32.gmra.mrb[0].mxu0 %v860
      %v963 = vpop.f32.mrb[0].mxu0
      %v964 = vadd.f32 0.0, %v963
      %v965 = vpop.f32.mrb[0].mxu0
      %966 = vmatprep.mubr.f32.mxu0 0.0
      %967 = vmatmul.mubr.f32.gmra.mrb[0].mxu0 %v862
      %v968 = vpop.f32.mrb[0].mxu0
      %v969 = vadd.f32 0.0, %v968
      %v970 = vpop.f32.mrb[0].mxu0
      %971 = vdwg.mxu0
      %v972 = vadd.f32 %v783, %v934
      %v973 = vadd.f32 %v788, %v939
      %v974 = vadd.f32 %v793, %v944
      %v975 = vadd.f32 %v798, %v949
      %v976 = vadd.f32 %v803, %v954
      %v977 = vadd.f32 %v808, %v959
      %v978 = vadd.f32 %v813, %v964
      %v979 = vadd.f32 %v818, %v969
      %s980 = scalar_lea.vmem %s3, 12
      %v981 = vld [vmem:[%s980] sm:$0xf]
      %v983 = vsel %vm571, %v443, 0
      %v986 = vsel %vm588, %v981, 0
      %988 = vmatprep.subr.mxu0 0.0
      %989 = vmatpush1.msra.mxu0 %v986
      %990 = vmatprep.subr.mxu0 0.0
      %991 = vmatpush1.msra.mxu0 0.0
      %992 = vmatprep.subr.mxu0 0.0
      %993 = vmatpush1.msra.mxu0 0.0
      %994 = vmatprep.subr.mxu0 0.0
      %995 = vmatpush1.msra.mxu0 0.0
      %996 = vmatprep.subr.mxu0 0.0
      %997 = vmatpush1.msra.mxu0 0.0
      %998 = vmatprep.subr.mxu0 0.0
      %999 = vmatpush1.msra.mxu0 0.0
      %1000 = vmatprep.subr.mxu0 0.0
      %1001 = vmatpush1.msra.mxu0 0.0
      %1002 = vmatprep.subr.mxu0 0.0
      %1003 = vmatpush1.msra.mxu0 0.0
      %1004 = vmatprep.subr.mxu0 0.0
      %1005 = vmatpush1.msra.mxu0 0.0
      %1006 = vmatprep.subr.mxu0 0.0
      %1007 = vmatpush1.msra.mxu0 0.0
      %1008 = vmatprep.subr.mxu0 0.0
      %1009 = vmatpush1.msra.mxu0 0.0
      %1010 = vmatprep.subr.mxu0 0.0
      %1011 = vmatpush1.msra.mxu0 0.0
      %1012 = vmatprep.subr.mxu0 0.0
      %1013 = vmatpush1.msra.mxu0 0.0
      %1014 = vmatprep.subr.mxu0 0.0
      %1015 = vmatpush1.msra.mxu0 0.0
      %1016 = vmatprep.subr.mxu0 0.0
      %1017 = vmatpush1.msra.mxu0 0.0
      %1018 = vmatprep.subr.mxu0 0.0
      %1019 = vmatpush1.msra.mxu0 0.0
      %1020 = vmatprep.subr.mxu0 0.0
      %1021 = vmatpush1.msra.mxu0 0.0
      %1022 = vmatprep.subr.mxu0 0.0
      %1023 = vmatpush1.msra.mxu0 0.0
      %1024 = vmatprep.subr.mxu0 0.0
      %1025 = vmatpush1.msra.mxu0 0.0
      %1026 = vmatprep.subr.mxu0 0.0
      %1027 = vmatpush1.msra.mxu0 0.0
      %1028 = vmatprep.subr.mxu0 0.0
      %1029 = vmatpush1.msra.mxu0 0.0
      %1030 = vmatprep.subr.mxu0 0.0
      %1031 = vmatpush1.msra.mxu0 0.0
      %1032 = vmatprep.subr.mxu0 0.0
      %1033 = vmatpush1.msra.mxu0 0.0
      %1034 = vmatprep.subr.mxu0 0.0
      %1035 = vmatpush1.msra.mxu0 0.0
      %1036 = vmatprep.subr.mxu0 0.0
      %1037 = vmatpush1.msra.mxu0 0.0
      %1038 = vmatprep.subr.mxu0 0.0
      %1039 = vmatpush1.msra.mxu0 0.0
      %1040 = vmatprep.subr.mxu0 0.0
      %1041 = vmatpush1.msra.mxu0 0.0
      %1042 = vmatprep.subr.mxu0 0.0
      %1043 = vmatpush1.msra.mxu0 0.0
      %1044 = vmatprep.subr.mxu0 0.0
      %1045 = vmatpush1.msra.mxu0 0.0
      %1046 = vmatprep.subr.mxu0 0.0
      %1047 = vmatpush1.msra.mxu0 0.0
      %1048 = vmatprep.subr.mxu0 0.0
      %1049 = vmatpush1.msra.mxu0 0.0
      %1050 = vmatprep.subr.mxu0 0.0
      %1051 = vmatpush1.msra.mxu0 0.0
      %1052 = vmatprep.mubr.f32.mxu0 0.0
      %1053 = vmatmul.mubr.f32.gmra.mrb[0].mxu0 %v699
      %v1054 = vpop.f32.mrb[0].mxu0
      %v1055 = vadd.f32 0.0, %v1054
      %v1056 = vpop.f32.mrb[0].mxu0
      %1057 = vmatprep.mubr.f32.mxu0 0.0
      %1058 = vmatmul.mubr.f32.gmra.mrb[0].mxu0 %v701
      %v1059 = vpop.f32.mrb[0].mxu0
      %v1060 = vadd.f32 0.0, %v1059
      %v1061 = vpop.f32.mrb[0].mxu0
      %1062 = vmatprep.mubr.f32.mxu0 0.0
      %1063 = vmatmul.mubr.f32.gmra.mrb[0].mxu0 %v703
      %v1064 = vpop.f32.mrb[0].mxu0
      %v1065 = vadd.f32 0.0, %v1064
      %v1066 = vpop.f32.mrb[0].mxu0
      %1067 = vmatprep.mubr.f32.mxu0 0.0
      %1068 = vmatmul.mubr.f32.gmra.mrb[0].mxu0 %v705
      %v1069 = vpop.f32.mrb[0].mxu0
      %v1070 = vadd.f32 0.0, %v1069
      %v1071 = vpop.f32.mrb[0].mxu0
      %1072 = vmatprep.mubr.f32.mxu0 0.0
      %1073 = vmatmul.mubr.f32.gmra.mrb[0].mxu0 %v707
      %v1074 = vpop.f32.mrb[0].mxu0
      %v1075 = vadd.f32 0.0, %v1074
      %v1076 = vpop.f32.mrb[0].mxu0
      %1077 = vmatprep.mubr.f32.mxu0 0.0
      %1078 = vmatmul.mubr.f32.gmra.mrb[0].mxu0 %v709
      %v1079 = vpop.f32.mrb[0].mxu0
      %v1080 = vadd.f32 0.0, %v1079
      %v1081 = vpop.f32.mrb[0].mxu0
      %1082 = vmatprep.mubr.f32.mxu0 0.0
      %1083 = vmatmul.mubr.f32.gmra.mrb[0].mxu0 %v711
      %v1084 = vpop.f32.mrb[0].mxu0
      %v1085 = vadd.f32 0.0, %v1084
      %v1086 = vpop.f32.mrb[0].mxu0
      %1087 = vmatprep.mubr.f32.mxu0 0.0
      %1088 = vmatmul.mubr.f32.gmra.mrb[0].mxu0 %v983
      %v1089 = vpop.f32.mrb[0].mxu0
      %v1090 = vadd.f32 0.0, %v1089
      %v1091 = vpop.f32.mrb[0].mxu0
      %1092 = vdwg.mxu0
      %v1093 = vadd.f32 %v972, %v1055
      %v1094 = vadd.f32 %v973, %v1060
      %v1095 = vadd.f32 %v974, %v1065
      %v1096 = vadd.f32 %v975, %v1070
      %v1097 = vadd.f32 %v976, %v1075
      %v1098 = vadd.f32 %v977, %v1080
      %v1099 = vadd.f32 %v978, %v1085
      %v1100 = vadd.f32 %v979, %v1090
      %v1102 = vrot.slane %v443, 1
      %v1103 = vrot.slane %v444, 1
      %v1104 = vsel %vm544, %v1102, %v1103
      %s1105 = scalar_lea.vmem %s3, 16
      %v1106 = vld [vmem:[%s1105] sm:$0xf]
      %v1107 = vsel %vm571, %v1104, 0
      %v1110 = vsel %vm588, %v1106, 0
      %1112 = vmatprep.subr.mxu0 0.0
      %1113 = vmatpush1.msra.mxu0 %v1110
      %1114 = vmatprep.subr.mxu0 0.0
      %1115 = vmatpush1.msra.mxu0 0.0
      %1116 = vmatprep.subr.mxu0 0.0
      %1117 = vmatpush1.msra.mxu0 0.0
      %1118 = vmatprep.subr.mxu0 0.0
      %1119 = vmatpush1.msra.mxu0 0.0
      %1120 = vmatprep.subr.mxu0 0.0
      %1121 = vmatpush1.msra.mxu0 0.0
      %1122 = vmatprep.subr.mxu0 0.0
      %1123 = vmatpush1.msra.mxu0 0.0
      %1124 = vmatprep.subr.mxu0 0.0
      %1125 = vmatpush1.msra.mxu0 0.0
      %1126 = vmatprep.subr.mxu0 0.0
      %1127 = vmatpush1.msra.mxu0 0.0
      %1128 = vmatprep.subr.mxu0 0.0
      %1129 = vmatpush1.msra.mxu0 0.0
      %1130 = vmatprep.subr.mxu0 0.0
      %1131 = vmatpush1.msra.mxu0 0.0
      %1132 = vmatprep.subr.mxu0 0.0
      %1133 = vmatpush1.msra.mxu0 0.0
      %1134 = vmatprep.subr.mxu0 0.0
      %1135 = vmatpush1.msra.mxu0 0.0
      %1136 = vmatprep.subr.mxu0 0.0
      %1137 = vmatpush1.msra.mxu0 0.0
      %1138 = vmatprep.subr.mxu0 0.0
      %1139 = vmatpush1.msra.mxu0 0.0
      %1140 = vmatprep.subr.mxu0 0.0
      %1141 = vmatpush1.msra.mxu0 0.0
      %1142 = vmatprep.subr.mxu0 0.0
      %1143 = vmatpush1.msra.mxu0 0.0
      %1144 = vmatprep.subr.mxu0 0.0
      %1145 = vmatpush1.msra.mxu0 0.0
      %1146 = vmatprep.subr.mxu0 0.0
      %1147 = vmatpush1.msra.mxu0 0.0
      %1148 = vmatprep.subr.mxu0 0.0
      %1149 = vmatpush1.msra.mxu0 0.0
      %1150 = vmatprep.subr.mxu0 0.0
      %1151 = vmatpush1.msra.mxu0 0.0
      %1152 = vmatprep.subr.mxu0 0.0
      %1153 = vmatpush1.msra.mxu0 0.0
      %1154 = vmatprep.subr.mxu0 0.0
      %1155 = vmatpush1.msra.mxu0 0.0
      %1156 = vmatprep.subr.mxu0 0.0
      %1157 = vmatpush1.msra.mxu0 0.0
      %1158 = vmatprep.subr.mxu0 0.0
      %1159 = vmatpush1.msra.mxu0 0.0
      %1160 = vmatprep.subr.mxu0 0.0
      %1161 = vmatpush1.msra.mxu0 0.0
      %1162 = vmatprep.subr.mxu0 0.0
      %1163 = vmatpush1.msra.mxu0 0.0
      %1164 = vmatprep.subr.mxu0 0.0
      %1165 = vmatpush1.msra.mxu0 0.0
      %1166 = vmatprep.subr.mxu0 0.0
      %1167 = vmatpush1.msra.mxu0 0.0
      %1168 = vmatprep.subr.mxu0 0.0
      %1169 = vmatpush1.msra.mxu0 0.0
      %1170 = vmatprep.subr.mxu0 0.0
      %1171 = vmatpush1.msra.mxu0 0.0
      %1172 = vmatprep.subr.mxu0 0.0
      %1173 = vmatpush1.msra.mxu0 0.0
      %1174 = vmatprep.subr.mxu0 0.0
      %1175 = vmatpush1.msra.mxu0 0.0
      %1176 = vmatprep.mubr.f32.mxu0 0.0
      %1177 = vmatmul.mubr.f32.gmra.mrb[0].mxu0 %v574
      %v1178 = vpop.f32.mrb[0].mxu0
      %v1179 = vadd.f32 0.0, %v1178
      %v1180 = vpop.f32.mrb[0].mxu0
      %1181 = vmatprep.mubr.f32.mxu0 0.0
      %1182 = vmatmul.mubr.f32.gmra.mrb[0].mxu0 %v576
      %v1183 = vpop.f32.mrb[0].mxu0
      %v1184 = vadd.f32 0.0, %v1183
      %v1185 = vpop.f32.mrb[0].mxu0
      %1186 = vmatprep.mubr.f32.mxu0 0.0
      %1187 = vmatmul.mubr.f32.gmra.mrb[0].mxu0 %v578
      %v1188 = vpop.f32.mrb[0].mxu0
      %v1189 = vadd.f32 0.0, %v1188
      %v1190 = vpop.f32.mrb[0].mxu0
      %1191 = vmatprep.mubr.f32.mxu0 0.0
      %1192 = vmatmul.mubr.f32.gmra.mrb[0].mxu0 %v580
      %v1193 = vpop.f32.mrb[0].mxu0
      %v1194 = vadd.f32 0.0, %v1193
      %v1195 = vpop.f32.mrb[0].mxu0
      %1196 = vmatprep.mubr.f32.mxu0 0.0
      %1197 = vmatmul.mubr.f32.gmra.mrb[0].mxu0 %v582
      %v1198 = vpop.f32.mrb[0].mxu0
      %v1199 = vadd.f32 0.0, %v1198
      %v1200 = vpop.f32.mrb[0].mxu0
      %1201 = vmatprep.mubr.f32.mxu0 0.0
      %1202 = vmatmul.mubr.f32.gmra.mrb[0].mxu0 %v584
      %v1203 = vpop.f32.mrb[0].mxu0
      %v1204 = vadd.f32 0.0, %v1203
      %v1205 = vpop.f32.mrb[0].mxu0
      %1206 = vmatprep.mubr.f32.mxu0 0.0
      %1207 = vmatmul.mubr.f32.gmra.mrb[0].mxu0 %v586
      %v1208 = vpop.f32.mrb[0].mxu0
      %v1209 = vadd.f32 0.0, %v1208
      %v1210 = vpop.f32.mrb[0].mxu0
      %1211 = vmatprep.mubr.f32.mxu0 0.0
      %1212 = vmatmul.mubr.f32.gmra.mrb[0].mxu0 %v1107
      %v1213 = vpop.f32.mrb[0].mxu0
      %v1214 = vadd.f32 0.0, %v1213
      %v1215 = vpop.f32.mrb[0].mxu0
      %1216 = vdwg.mxu0
      %v1217 = vadd.f32 %v1093, %v1179
      %v1218 = vadd.f32 %v1094, %v1184
      %v1219 = vadd.f32 %v1095, %v1189
      %v1220 = vadd.f32 %v1096, %v1194
      %v1221 = vadd.f32 %v1097, %v1199
      %v1222 = vadd.f32 %v1098, %v1204
      %v1223 = vadd.f32 %v1099, %v1209
      %v1224 = vadd.f32 %v1100, %v1214
      %v1225 = vrot.slane %v443, 2
      %v1226 = vrot.slane %v444, 2
      %v1227 = vsel %vm821, %v1225, %v1226
      %s1228 = scalar_lea.vmem %s3, 20
      %v1229 = vld [vmem:[%s1228] sm:$0xf]
      %v1230 = vsel %vm571, %v1227, 0
      %v1233 = vsel %vm588, %v1229, 0
      %1235 = vmatprep.subr.mxu0 0.0
      %1236 = vmatpush1.msra.mxu0 %v1233
      %1237 = vmatprep.subr.mxu0 0.0
      %1238 = vmatpush1.msra.mxu0 0.0
      %1239 = vmatprep.subr.mxu0 0.0
      %1240 = vmatpush1.msra.mxu0 0.0
      %1241 = vmatprep.subr.mxu0 0.0
      %1242 = vmatpush1.msra.mxu0 0.0
      %1243 = vmatprep.subr.mxu0 0.0
      %1244 = vmatpush1.msra.mxu0 0.0
      %1245 = vmatprep.subr.mxu0 0.0
      %1246 = vmatpush1.msra.mxu0 0.0
      %1247 = vmatprep.subr.mxu0 0.0
      %1248 = vmatpush1.msra.mxu0 0.0
      %1249 = vmatprep.subr.mxu0 0.0
      %1250 = vmatpush1.msra.mxu0 0.0
      %1251 = vmatprep.subr.mxu0 0.0
      %1252 = vmatpush1.msra.mxu0 0.0
      %1253 = vmatprep.subr.mxu0 0.0
      %1254 = vmatpush1.msra.mxu0 0.0
      %1255 = vmatprep.subr.mxu0 0.0
      %1256 = vmatpush1.msra.mxu0 0.0
      %1257 = vmatprep.subr.mxu0 0.0
      %1258 = vmatpush1.msra.mxu0 0.0
      %1259 = vmatprep.subr.mxu0 0.0
      %1260 = vmatpush1.msra.mxu0 0.0
      %1261 = vmatprep.subr.mxu0 0.0
      %1262 = vmatpush1.msra.mxu0 0.0
      %1263 = vmatprep.subr.mxu0 0.0
      %1264 = vmatpush1.msra.mxu0 0.0
      %1265 = vmatprep.subr.mxu0 0.0
      %1266 = vmatpush1.msra.mxu0 0.0
      %1267 = vmatprep.subr.mxu0 0.0
      %1268 = vmatpush1.msra.mxu0 0.0
      %1269 = vmatprep.subr.mxu0 0.0
      %1270 = vmatpush1.msra.mxu0 0.0
      %1271 = vmatprep.subr.mxu0 0.0
      %1272 = vmatpush1.msra.mxu0 0.0
      %1273 = vmatprep.subr.mxu0 0.0
      %1274 = vmatpush1.msra.mxu0 0.0
      %1275 = vmatprep.subr.mxu0 0.0
      %1276 = vmatpush1.msra.mxu0 0.0
      %1277 = vmatprep.subr.mxu0 0.0
      %1278 = vmatpush1.msra.mxu0 0.0
      %1279 = vmatprep.subr.mxu0 0.0
      %1280 = vmatpush1.msra.mxu0 0.0
      %1281 = vmatprep.subr.mxu0 0.0
      %1282 = vmatpush1.msra.mxu0 0.0
      %1283 = vmatprep.subr.mxu0 0.0
      %1284 = vmatpush1.msra.mxu0 0.0
      %1285 = vmatprep.subr.mxu0 0.0
      %1286 = vmatpush1.msra.mxu0 0.0
      %1287 = vmatprep.subr.mxu0 0.0
      %1288 = vmatpush1.msra.mxu0 0.0
      %1289 = vmatprep.subr.mxu0 0.0
      %1290 = vmatpush1.msra.mxu0 0.0
      %1291 = vmatprep.subr.mxu0 0.0
      %1292 = vmatpush1.msra.mxu0 0.0
      %1293 = vmatprep.subr.mxu0 0.0
      %1294 = vmatpush1.msra.mxu0 0.0
      %1295 = vmatprep.subr.mxu0 0.0
      %1296 = vmatpush1.msra.mxu0 0.0
      %1297 = vmatprep.subr.mxu0 0.0
      %1298 = vmatpush1.msra.mxu0 0.0
      %1299 = vmatprep.mubr.f32.mxu0 0.0
      %1300 = vmatmul.mubr.f32.gmra.mrb[0].mxu0 %v850
      %v1301 = vpop.f32.mrb[0].mxu0
      %v1302 = vadd.f32 0.0, %v1301
      %v1303 = vpop.f32.mrb[0].mxu0
      %1304 = vmatprep.mubr.f32.mxu0 0.0
      %1305 = vmatmul.mubr.f32.gmra.mrb[0].mxu0 %v852
      %v1306 = vpop.f32.mrb[0].mxu0
      %v1307 = vadd.f32 0.0, %v1306
      %v1308 = vpop.f32.mrb[0].mxu0
      %1309 = vmatprep.mubr.f32.mxu0 0.0
      %1310 = vmatmul.mubr.f32.gmra.mrb[0].mxu0 %v854
      %v1311 = vpop.f32.mrb[0].mxu0
      %v1312 = vadd.f32 0.0, %v1311
      %v1313 = vpop.f32.mrb[0].mxu0
      %1314 = vmatprep.mubr.f32.mxu0 0.0
      %1315 = vmatmul.mubr.f32.gmra.mrb[0].mxu0 %v856
      %v1316 = vpop.f32.mrb[0].mxu0
      %v1317 = vadd.f32 0.0, %v1316
      %v1318 = vpop.f32.mrb[0].mxu0
      %1319 = vmatprep.mubr.f32.mxu0 0.0
      %1320 = vmatmul.mubr.f32.gmra.mrb[0].mxu0 %v858
      %v1321 = vpop.f32.mrb[0].mxu0
      %v1322 = vadd.f32 0.0, %v1321
      %v1323 = vpop.f32.mrb[0].mxu0
      %1324 = vmatprep.mubr.f32.mxu0 0.0
      %1325 = vmatmul.mubr.f32.gmra.mrb[0].mxu0 %v860
      %v1326 = vpop.f32.mrb[0].mxu0
      %v1327 = vadd.f32 0.0, %v1326
      %v1328 = vpop.f32.mrb[0].mxu0
      %1329 = vmatprep.mubr.f32.mxu0 0.0
      %1330 = vmatmul.mubr.f32.gmra.mrb[0].mxu0 %v862
      %v1331 = vpop.f32.mrb[0].mxu0
      %v1332 = vadd.f32 0.0, %v1331
      %v1333 = vpop.f32.mrb[0].mxu0
      %1334 = vmatprep.mubr.f32.mxu0 0.0
      %1335 = vmatmul.mubr.f32.gmra.mrb[0].mxu0 %v1230
      %v1336 = vpop.f32.mrb[0].mxu0
      %v1337 = vadd.f32 0.0, %v1336
      %v1338 = vpop.f32.mrb[0].mxu0
      %1339 = vdwg.mxu0
      %v1340 = vadd.f32 %v1217, %v1302
      %v1341 = vadd.f32 %v1218, %v1307
      %v1342 = vadd.f32 %v1219, %v1312
      %v1343 = vadd.f32 %v1220, %v1317
      %v1344 = vadd.f32 %v1221, %v1322
      %v1345 = vadd.f32 %v1222, %v1327
      %v1346 = vadd.f32 %v1223, %v1332
      %v1347 = vadd.f32 %v1224, %v1337
      %s1348 = scalar_lea.vmem %s3, 24
      %v1349 = vld [vmem:[%s1348] sm:$0xf]
      %v1351 = vsel %vm571, %v445, 0
      %v1354 = vsel %vm588, %v1349, 0
      %1356 = vmatprep.subr.mxu0 0.0
      %1357 = vmatpush1.msra.mxu0 %v1354
      %1358 = vmatprep.subr.mxu0 0.0
      %1359 = vmatpush1.msra.mxu0 0.0
      %1360 = vmatprep.subr.mxu0 0.0
      %1361 = vmatpush1.msra.mxu0 0.0
      %1362 = vmatprep.subr.mxu0 0.0
      %1363 = vmatpush1.msra.mxu0 0.0
      %1364 = vmatprep.subr.mxu0 0.0
      %1365 = vmatpush1.msra.mxu0 0.0
      %1366 = vmatprep.subr.mxu0 0.0
      %1367 = vmatpush1.msra.mxu0 0.0
      %1368 = vmatprep.subr.mxu0 0.0
      %1369 = vmatpush1.msra.mxu0 0.0
      %1370 = vmatprep.subr.mxu0 0.0
      %1371 = vmatpush1.msra.mxu0 0.0
      %1372 = vmatprep.subr.mxu0 0.0
      %1373 = vmatpush1.msra.mxu0 0.0
      %1374 = vmatprep.subr.mxu0 0.0
      %1375 = vmatpush1.msra.mxu0 0.0
      %1376 = vmatprep.subr.mxu0 0.0
      %1377 = vmatpush1.msra.mxu0 0.0
      %1378 = vmatprep.subr.mxu0 0.0
      %1379 = vmatpush1.msra.mxu0 0.0
      %1380 = vmatprep.subr.mxu0 0.0
      %1381 = vmatpush1.msra.mxu0 0.0
      %1382 = vmatprep.subr.mxu0 0.0
      %1383 = vmatpush1.msra.mxu0 0.0
      %1384 = vmatprep.subr.mxu0 0.0
      %1385 = vmatpush1.msra.mxu0 0.0
      %1386 = vmatprep.subr.mxu0 0.0
      %1387 = vmatpush1.msra.mxu0 0.0
      %1388 = vmatprep.subr.mxu0 0.0
      %1389 = vmatpush1.msra.mxu0 0.0
      %1390 = vmatprep.subr.mxu0 0.0
      %1391 = vmatpush1.msra.mxu0 0.0
      %1392 = vmatprep.subr.mxu0 0.0
      %1393 = vmatpush1.msra.mxu0 0.0
      %1394 = vmatprep.subr.mxu0 0.0
      %1395 = vmatpush1.msra.mxu0 0.0
      %1396 = vmatprep.subr.mxu0 0.0
      %1397 = vmatpush1.msra.mxu0 0.0
      %1398 = vmatprep.subr.mxu0 0.0
      %1399 = vmatpush1.msra.mxu0 0.0
      %1400 = vmatprep.subr.mxu0 0.0
      %1401 = vmatpush1.msra.mxu0 0.0
      %1402 = vmatprep.subr.mxu0 0.0
      %1403 = vmatpush1.msra.mxu0 0.0
      %1404 = vmatprep.subr.mxu0 0.0
      %1405 = vmatpush1.msra.mxu0 0.0
      %1406 = vmatprep.subr.mxu0 0.0
      %1407 = vmatpush1.msra.mxu0 0.0
      %1408 = vmatprep.subr.mxu0 0.0
      %1409 = vmatpush1.msra.mxu0 0.0
      %1410 = vmatprep.subr.mxu0 0.0
      %1411 = vmatpush1.msra.mxu0 0.0
      %1412 = vmatprep.subr.mxu0 0.0
      %1413 = vmatpush1.msra.mxu0 0.0
      %1414 = vmatprep.subr.mxu0 0.0
      %1415 = vmatpush1.msra.mxu0 0.0
      %1416 = vmatprep.subr.mxu0 0.0
      %1417 = vmatpush1.msra.mxu0 0.0
      %1418 = vmatprep.subr.mxu0 0.0
      %1419 = vmatpush1.msra.mxu0 0.0
      %1420 = vmatprep.mubr.f32.mxu0 0.0
      %1421 = vmatmul.mubr.f32.gmra.mrb[0].mxu0 %v701
      %v1422 = vpop.f32.mrb[0].mxu0
      %v1423 = vadd.f32 0.0, %v1422
      %v1424 = vpop.f32.mrb[0].mxu0
      %1425 = vmatprep.mubr.f32.mxu0 0.0
      %1426 = vmatmul.mubr.f32.gmra.mrb[0].mxu0 %v703
      %v1427 = vpop.f32.mrb[0].mxu0
      %v1428 = vadd.f32 0.0, %v1427
      %v1429 = vpop.f32.mrb[0].mxu0
      %1430 = vmatprep.mubr.f32.mxu0 0.0
      %1431 = vmatmul.mubr.f32.gmra.mrb[0].mxu0 %v705
      %v1432 = vpop.f32.mrb[0].mxu0
      %v1433 = vadd.f32 0.0, %v1432
      %v1434 = vpop.f32.mrb[0].mxu0
      %1435 = vmatprep.mubr.f32.mxu0 0.0
      %1436 = vmatmul.mubr.f32.gmra.mrb[0].mxu0 %v707
      %v1437 = vpop.f32.mrb[0].mxu0
      %v1438 = vadd.f32 0.0, %v1437
      %v1439 = vpop.f32.mrb[0].mxu0
      %1440 = vmatprep.mubr.f32.mxu0 0.0
      %1441 = vmatmul.mubr.f32.gmra.mrb[0].mxu0 %v709
      %v1442 = vpop.f32.mrb[0].mxu0
      %v1443 = vadd.f32 0.0, %v1442
      %v1444 = vpop.f32.mrb[0].mxu0
      %1445 = vmatprep.mubr.f32.mxu0 0.0
      %1446 = vmatmul.mubr.f32.gmra.mrb[0].mxu0 %v711
      %v1447 = vpop.f32.mrb[0].mxu0
      %v1448 = vadd.f32 0.0, %v1447
      %v1449 = vpop.f32.mrb[0].mxu0
      %1450 = vmatprep.mubr.f32.mxu0 0.0
      %1451 = vmatmul.mubr.f32.gmra.mrb[0].mxu0 %v983
      %v1452 = vpop.f32.mrb[0].mxu0
      %v1453 = vadd.f32 0.0, %v1452
      %v1454 = vpop.f32.mrb[0].mxu0
      %1455 = vmatprep.mubr.f32.mxu0 0.0
      %1456 = vmatmul.mubr.f32.gmra.mrb[0].mxu0 %v1351
      %v1457 = vpop.f32.mrb[0].mxu0
      %v1458 = vadd.f32 0.0, %v1457
      %v1459 = vpop.f32.mrb[0].mxu0
      %1460 = vdwg.mxu0
      %v1461 = vadd.f32 %v1340, %v1423
      %v1462 = vadd.f32 %v1341, %v1428
      %v1463 = vadd.f32 %v1342, %v1433
      %v1464 = vadd.f32 %v1343, %v1438
      %v1465 = vadd.f32 %v1344, %v1443
      %v1466 = vadd.f32 %v1345, %v1448
      %v1467 = vadd.f32 %v1346, %v1453
      %v1468 = vadd.f32 %v1347, %v1458
      %v1470 = vrot.slane %v445, 1
      %v1471 = vrot.slane %v446, 1
      %v1472 = vsel %vm544, %v1470, %v1471
      %s1473 = scalar_lea.vmem %s3, 28
      %v1474 = vld [vmem:[%s1473] sm:$0xf]
      %v1475 = vsel %vm571, %v1472, 0
      %v1478 = vsel %vm588, %v1474, 0
      %1480 = vmatprep.subr.mxu0 0.0
      %1481 = vmatpush1.msra.mxu0 %v1478
      %1482 = vmatprep.subr.mxu0 0.0
      %1483 = vmatpush1.msra.mxu0 0.0
      %1484 = vmatprep.subr.mxu0 0.0
      %1485 = vmatpush1.msra.mxu0 0.0
      %1486 = vmatprep.subr.mxu0 0.0
      %1487 = vmatpush1.msra.mxu0 0.0
      %1488 = vmatprep.subr.mxu0 0.0
      %1489 = vmatpush1.msra.mxu0 0.0
      %1490 = vmatprep.subr.mxu0 0.0
      %1491 = vmatpush1.msra.mxu0 0.0
      %1492 = vmatprep.subr.mxu0 0.0
      %1493 = vmatpush1.msra.mxu0 0.0
      %1494 = vmatprep.subr.mxu0 0.0
      %1495 = vmatpush1.msra.mxu0 0.0
      %1496 = vmatprep.subr.mxu0 0.0
      %1497 = vmatpush1.msra.mxu0 0.0
      %1498 = vmatprep.subr.mxu0 0.0
      %1499 = vmatpush1.msra.mxu0 0.0
      %1500 = vmatprep.subr.mxu0 0.0
      %1501 = vmatpush1.msra.mxu0 0.0
      %1502 = vmatprep.subr.mxu0 0.0
      %1503 = vmatpush1.msra.mxu0 0.0
      %1504 = vmatprep.subr.mxu0 0.0
      %1505 = vmatpush1.msra.mxu0 0.0
      %1506 = vmatprep.subr.mxu0 0.0
      %1507 = vmatpush1.msra.mxu0 0.0
      %1508 = vmatprep.subr.mxu0 0.0
      %1509 = vmatpush1.msra.mxu0 0.0
      %1510 = vmatprep.subr.mxu0 0.0
      %1511 = vmatpush1.msra.mxu0 0.0
      %1512 = vmatprep.subr.mxu0 0.0
      %1513 = vmatpush1.msra.mxu0 0.0
      %1514 = vmatprep.subr.mxu0 0.0
      %1515 = vmatpush1.msra.mxu0 0.0
      %1516 = vmatprep.subr.mxu0 0.0
      %1517 = vmatpush1.msra.mxu0 0.0
      %1518 = vmatprep.subr.mxu0 0.0
      %1519 = vmatpush1.msra.mxu0 0.0
      %1520 = vmatprep.subr.mxu0 0.0
      %1521 = vmatpush1.msra.mxu0 0.0
      %1522 = vmatprep.subr.mxu0 0.0
      %1523 = vmatpush1.msra.mxu0 0.0
      %1524 = vmatprep.subr.mxu0 0.0
      %1525 = vmatpush1.msra.mxu0 0.0
      %1526 = vmatprep.subr.mxu0 0.0
      %1527 = vmatpush1.msra.mxu0 0.0
      %1528 = vmatprep.subr.mxu0 0.0
      %1529 = vmatpush1.msra.mxu0 0.0
      %1530 = vmatprep.subr.mxu0 0.0
      %1531 = vmatpush1.msra.mxu0 0.0
      %1532 = vmatprep.subr.mxu0 0.0
      %1533 = vmatpush1.msra.mxu0 0.0
      %1534 = vmatprep.subr.mxu0 0.0
      %1535 = vmatpush1.msra.mxu0 0.0
      %1536 = vmatprep.subr.mxu0 0.0
      %1537 = vmatpush1.msra.mxu0 0.0
      %1538 = vmatprep.subr.mxu0 0.0
      %1539 = vmatpush1.msra.mxu0 0.0
      %1540 = vmatprep.subr.mxu0 0.0
      %1541 = vmatpush1.msra.mxu0 0.0
      %1542 = vmatprep.subr.mxu0 0.0
      %1543 = vmatpush1.msra.mxu0 0.0
      %1544 = vmatprep.mubr.f32.mxu0 0.0
      %1545 = vmatmul.mubr.f32.gmra.mrb[0].mxu0 %v576
      %v1546 = vpop.f32.mrb[0].mxu0
      %v1547 = vadd.f32 0.0, %v1546
      %v1548 = vpop.f32.mrb[0].mxu0
      %1549 = vmatprep.mubr.f32.mxu0 0.0
      %1550 = vmatmul.mubr.f32.gmra.mrb[0].mxu0 %v578
      %v1551 = vpop.f32.mrb[0].mxu0
      %v1552 = vadd.f32 0.0, %v1551
      %v1553 = vpop.f32.mrb[0].mxu0
      %1554 = vmatprep.mubr.f32.mxu0 0.0
      %1555 = vmatmul.mubr.f32.gmra.mrb[0].mxu0 %v580
      %v1556 = vpop.f32.mrb[0].mxu0
      %v1557 = vadd.f32 0.0, %v1556
      %v1558 = vpop.f32.mrb[0].mxu0
      %1559 = vmatprep.mubr.f32.mxu0 0.0
      %1560 = vmatmul.mubr.f32.gmra.mrb[0].mxu0 %v582
      %v1561 = vpop.f32.mrb[0].mxu0
      %v1562 = vadd.f32 0.0, %v1561
      %v1563 = vpop.f32.mrb[0].mxu0
      %1564 = vmatprep.mubr.f32.mxu0 0.0
      %1565 = vmatmul.mubr.f32.gmra.mrb[0].mxu0 %v584
      %v1566 = vpop.f32.mrb[0].mxu0
      %v1567 = vadd.f32 0.0, %v1566
      %v1568 = vpop.f32.mrb[0].mxu0
      %1569 = vmatprep.mubr.f32.mxu0 0.0
      %1570 = vmatmul.mubr.f32.gmra.mrb[0].mxu0 %v586
      %v1571 = vpop.f32.mrb[0].mxu0
      %v1572 = vadd.f32 0.0, %v1571
      %v1573 = vpop.f32.mrb[0].mxu0
      %1574 = vmatprep.mubr.f32.mxu0 0.0
      %1575 = vmatmul.mubr.f32.gmra.mrb[0].mxu0 %v1107
      %v1576 = vpop.f32.mrb[0].mxu0
      %v1577 = vadd.f32 0.0, %v1576
      %v1578 = vpop.f32.mrb[0].mxu0
      %1579 = vmatprep.mubr.f32.mxu0 0.0
      %1580 = vmatmul.mubr.f32.gmra.mrb[0].mxu0 %v1475
      %v1581 = vpop.f32.mrb[0].mxu0
      %v1582 = vadd.f32 0.0, %v1581
      %v1583 = vpop.f32.mrb[0].mxu0
      %1584 = vdwg.mxu0
      %v1585 = vadd.f32 %v1461, %v1547
      %v1586 = vadd.f32 %v1462, %v1552
      %v1587 = vadd.f32 %v1463, %v1557
      %v1588 = vadd.f32 %v1464, %v1562
      %v1589 = vadd.f32 %v1465, %v1567
      %v1590 = vadd.f32 %v1466, %v1572
      %v1591 = vadd.f32 %v1467, %v1577
      %v1592 = vadd.f32 %v1468, %v1582
      %v1593 = vrot.slane %v445, 2
      %v1594 = vrot.slane %v446, 2
      %v1595 = vsel %vm821, %v1593, %v1594
      %s1596 = scalar_lea.vmem %s3, 32
      %v1597 = vld [vmem:[%s1596] sm:$0xf]
      %v1598 = vsel %vm571, %v1595, 0
      %v1601 = vsel %vm588, %v1597, 0
      %1603 = vmatprep.subr.mxu0 0.0
      %1604 = vmatpush1.msra.mxu0 %v1601
      %1605 = vmatprep.subr.mxu0 0.0
      %1606 = vmatpush1.msra.mxu0 0.0
      %1607 = vmatprep.subr.mxu0 0.0
      %1608 = vmatpush1.msra.mxu0 0.0
      %1609 = vmatprep.subr.mxu0 0.0
      %1610 = vmatpush1.msra.mxu0 0.0
      %1611 = vmatprep.subr.mxu0 0.0
      %1612 = vmatpush1.msra.mxu0 0.0
      %1613 = vmatprep.subr.mxu0 0.0
      %1614 = vmatpush1.msra.mxu0 0.0
      %1615 = vmatprep.subr.mxu0 0.0
      %1616 = vmatpush1.msra.mxu0 0.0
      %1617 = vmatprep.subr.mxu0 0.0
      %1618 = vmatpush1.msra.mxu0 0.0
      %1619 = vmatprep.subr.mxu0 0.0
      %1620 = vmatpush1.msra.mxu0 0.0
      %1621 = vmatprep.subr.mxu0 0.0
      %1622 = vmatpush1.msra.mxu0 0.0
      %1623 = vmatprep.subr.mxu0 0.0
      %1624 = vmatpush1.msra.mxu0 0.0
      %1625 = vmatprep.subr.mxu0 0.0
      %1626 = vmatpush1.msra.mxu0 0.0
      %1627 = vmatprep.subr.mxu0 0.0
      %1628 = vmatpush1.msra.mxu0 0.0
      %1629 = vmatprep.subr.mxu0 0.0
      %1630 = vmatpush1.msra.mxu0 0.0
      %1631 = vmatprep.subr.mxu0 0.0
      %1632 = vmatpush1.msra.mxu0 0.0
      %1633 = vmatprep.subr.mxu0 0.0
      %1634 = vmatpush1.msra.mxu0 0.0
      %1635 = vmatprep.subr.mxu0 0.0
      %1636 = vmatpush1.msra.mxu0 0.0
      %1637 = vmatprep.subr.mxu0 0.0
      %1638 = vmatpush1.msra.mxu0 0.0
      %1639 = vmatprep.subr.mxu0 0.0
      %1640 = vmatpush1.msra.mxu0 0.0
      %1641 = vmatprep.subr.mxu0 0.0
      %1642 = vmatpush1.msra.mxu0 0.0
      %1643 = vmatprep.subr.mxu0 0.0
      %1644 = vmatpush1.msra.mxu0 0.0
      %1645 = vmatprep.subr.mxu0 0.0
      %1646 = vmatpush1.msra.mxu0 0.0
      %1647 = vmatprep.subr.mxu0 0.0
      %1648 = vmatpush1.msra.mxu0 0.0
      %1649 = vmatprep.subr.mxu0 0.0
      %1650 = vmatpush1.msra.mxu0 0.0
      %1651 = vmatprep.subr.mxu0 0.0
      %1652 = vmatpush1.msra.mxu0 0.0
      %1653 = vmatprep.subr.mxu0 0.0
      %1654 = vmatpush1.msra.mxu0 0.0
      %1655 = vmatprep.subr.mxu0 0.0
      %1656 = vmatpush1.msra.mxu0 0.0
      %1657 = vmatprep.subr.mxu0 0.0
      %1658 = vmatpush1.msra.mxu0 0.0
      %1659 = vmatprep.subr.mxu0 0.0
      %1660 = vmatpush1.msra.mxu0 0.0
      %1661 = vmatprep.subr.mxu0 0.0
      %1662 = vmatpush1.msra.mxu0 0.0
      %1663 = vmatprep.subr.mxu0 0.0
      %1664 = vmatpush1.msra.mxu0 0.0
      %1665 = vmatprep.subr.mxu0 0.0
      %1666 = vmatpush1.msra.mxu0 0.0
      %1667 = vmatprep.mubr.f32.mxu0 0.0
      %1668 = vmatmul.mubr.f32.gmra.mrb[0].mxu0 %v852
      %v1669 = vpop.f32.mrb[0].mxu0
      %v1670 = vadd.f32 0.0, %v1669
      %v1671 = vpop.f32.mrb[0].mxu0
      %1672 = vmatprep.mubr.f32.mxu0 0.0
      %1673 = vmatmul.mubr.f32.gmra.mrb[0].mxu0 %v854
      %v1674 = vpop.f32.mrb[0].mxu0
      %v1675 = vadd.f32 0.0, %v1674
      %v1676 = vpop.f32.mrb[0].mxu0
      %1677 = vmatprep.mubr.f32.mxu0 0.0
      %1678 = vmatmul.mubr.f32.gmra.mrb[0].mxu0 %v856
      %v1679 = vpop.f32.mrb[0].mxu0
      %v1680 = vadd.f32 0.0, %v1679
      %v1681 = vpop.f32.mrb[0].mxu0
      %1682 = vmatprep.mubr.f32.mxu0 0.0
      %1683 = vmatmul.mubr.f32.gmra.mrb[0].mxu0 %v858
      %v1684 = vpop.f32.mrb[0].mxu0
      %v1685 = vadd.f32 0.0, %v1684
      %v1686 = vpop.f32.mrb[0].mxu0
      %1687 = vmatprep.mubr.f32.mxu0 0.0
      %1688 = vmatmul.mubr.f32.gmra.mrb[0].mxu0 %v860
      %v1689 = vpop.f32.mrb[0].mxu0
      %v1690 = vadd.f32 0.0, %v1689
      %v1691 = vpop.f32.mrb[0].mxu0
      %1692 = vmatprep.mubr.f32.mxu0 0.0
      %1693 = vmatmul.mubr.f32.gmra.mrb[0].mxu0 %v862
      %v1694 = vpop.f32.mrb[0].mxu0
      %v1695 = vadd.f32 0.0, %v1694
      %v1696 = vpop.f32.mrb[0].mxu0
      %1697 = vmatprep.mubr.f32.mxu0 0.0
      %1698 = vmatmul.mubr.f32.gmra.mrb[0].mxu0 %v1230
      %v1699 = vpop.f32.mrb[0].mxu0
      %v1700 = vadd.f32 0.0, %v1699
      %v1701 = vpop.f32.mrb[0].mxu0
      %1702 = vmatprep.mubr.f32.mxu0 0.0
      %1703 = vmatmul.mubr.f32.gmra.mrb[0].mxu0 %v1598
      %v1704 = vpop.f32.mrb[0].mxu0
      %v1705 = vadd.f32 0.0, %v1704
      %v1706 = vpop.f32.mrb[0].mxu0
      %1707 = vdwg.mxu0
      %v1708 = vadd.f32 %v1585, %v1670
      %v1709 = vadd.f32 %v1586, %v1675
      %v1710 = vadd.f32 %v1587, %v1680
      %v1711 = vadd.f32 %v1588, %v1685
      %v1712 = vadd.f32 %v1589, %v1690
      %v1713 = vadd.f32 %v1590, %v1695
      %v1714 = vadd.f32 %v1591, %v1700
      %v1715 = vadd.f32 %v1592, %v1705
      %s1716 = scalar_lea.vmem %s3, 36
      %v1717 = vld [vmem:[%s1716] sm:$0xf]
      %v1719 = vsel %vm571, %v467, 0
      %v1722 = vsel %vm571, %v469, 0
      %v1725 = vsel %vm571, %v471, 0
      %v1728 = vsel %vm571, %v473, 0
      %v1731 = vsel %vm571, %v475, 0
      %v1734 = vsel %vm571, %v477, 0
      %v1737 = vsel %vm571, %v479, 0
      %v1740 = vsel %vm571, %v481, 0
      %v1743 = vsel %vm588, %v1717, 0
      %1745 = vmatprep.subr.mxu0 0.0
      %1746 = vmatpush1.msra.mxu0 %v1743
      %1747 = vmatprep.subr.mxu0 0.0
      %1748 = vmatpush1.msra.mxu0 0.0
      %1749 = vmatprep.subr.mxu0 0.0
      %1750 = vmatpush1.msra.mxu0 0.0
      %1751 = vmatprep.subr.mxu0 0.0
      %1752 = vmatpush1.msra.mxu0 0.0
      %1753 = vmatprep.subr.mxu0 0.0
      %1754 = vmatpush1.msra.mxu0 0.0
      %1755 = vmatprep.subr.mxu0 0.0
      %1756 = vmatpush1.msra.mxu0 0.0
      %1757 = vmatprep.subr.mxu0 0.0
      %1758 = vmatpush1.msra.mxu0 0.0
      %1759 = vmatprep.subr.mxu0 0.0
      %1760 = vmatpush1.msra.mxu0 0.0
      %1761 = vmatprep.subr.mxu0 0.0
      %1762 = vmatpush1.msra.mxu0 0.0
      %1763 = vmatprep.subr.mxu0 0.0
      %1764 = vmatpush1.msra.mxu0 0.0
      %1765 = vmatprep.subr.mxu0 0.0
      %1766 = vmatpush1.msra.mxu0 0.0
      %1767 = vmatprep.subr.mxu0 0.0
      %1768 = vmatpush1.msra.mxu0 0.0
      %1769 = vmatprep.subr.mxu0 0.0
      %1770 = vmatpush1.msra.mxu0 0.0
      %1771 = vmatprep.subr.mxu0 0.0
      %1772 = vmatpush1.msra.mxu0 0.0
      %1773 = vmatprep.subr.mxu0 0.0
      %1774 = vmatpush1.msra.mxu0 0.0
      %1775 = vmatprep.subr.mxu0 0.0
      %1776 = vmatpush1.msra.mxu0 0.0
      %1777 = vmatprep.subr.mxu0 0.0
      %1778 = vmatpush1.msra.mxu0 0.0
      %1779 = vmatprep.subr.mxu0 0.0
      %1780 = vmatpush1.msra.mxu0 0.0
      %1781 = vmatprep.subr.mxu0 0.0
      %1782 = vmatpush1.msra.mxu0 0.0
      %1783 = vmatprep.subr.mxu0 0.0
      %1784 = vmatpush1.msra.mxu0 0.0
      %1785 = vmatprep.subr.mxu0 0.0
      %1786 = vmatpush1.msra.mxu0 0.0
      %1787 = vmatprep.subr.mxu0 0.0
      %1788 = vmatpush1.msra.mxu0 0.0
      %1789 = vmatprep.subr.mxu0 0.0
      %1790 = vmatpush1.msra.mxu0 0.0
      %1791 = vmatprep.subr.mxu0 0.0
      %1792 = vmatpush1.msra.mxu0 0.0
      %1793 = vmatprep.subr.mxu0 0.0
      %1794 = vmatpush1.msra.mxu0 0.0
      %1795 = vmatprep.subr.mxu0 0.0
      %1796 = vmatpush1.msra.mxu0 0.0
      %1797 = vmatprep.subr.mxu0 0.0
      %1798 = vmatpush1.msra.mxu0 0.0
      %1799 = vmatprep.subr.mxu0 0.0
      %1800 = vmatpush1.msra.mxu0 0.0
      %1801 = vmatprep.subr.mxu0 0.0
      %1802 = vmatpush1.msra.mxu0 0.0
      %1803 = vmatprep.subr.mxu0 0.0
      %1804 = vmatpush1.msra.mxu0 0.0
      %1805 = vmatprep.subr.mxu0 0.0
      %1806 = vmatpush1.msra.mxu0 0.0
      %1807 = vmatprep.subr.mxu0 0.0
      %1808 = vmatpush1.msra.mxu0 0.0
      %1809 = vmatprep.mubr.f32.mxu0 0.0
      %1810 = vmatmul.mubr.f32.gmra.mrb[0].mxu0 %v1719
      %v1811 = vpop.f32.mrb[0].mxu0
      %v1812 = vadd.f32 0.0, %v1811
      %v1813 = vpop.f32.mrb[0].mxu0
      %1814 = vmatprep.mubr.f32.mxu0 0.0
      %1815 = vmatmul.mubr.f32.gmra.mrb[0].mxu0 %v1722
      %v1816 = vpop.f32.mrb[0].mxu0
      %v1817 = vadd.f32 0.0, %v1816
      %v1818 = vpop.f32.mrb[0].mxu0
      %1819 = vmatprep.mubr.f32.mxu0 0.0
      %1820 = vmatmul.mubr.f32.gmra.mrb[0].mxu0 %v1725
      %v1821 = vpop.f32.mrb[0].mxu0
      %v1822 = vadd.f32 0.0, %v1821
      %v1823 = vpop.f32.mrb[0].mxu0
      %1824 = vmatprep.mubr.f32.mxu0 0.0
      %1825 = vmatmul.mubr.f32.gmra.mrb[0].mxu0 %v1728
      %v1826 = vpop.f32.mrb[0].mxu0
      %v1827 = vadd.f32 0.0, %v1826
      %v1828 = vpop.f32.mrb[0].mxu0
      %1829 = vmatprep.mubr.f32.mxu0 0.0
      %1830 = vmatmul.mubr.f32.gmra.mrb[0].mxu0 %v1731
      %v1831 = vpop.f32.mrb[0].mxu0
      %v1832 = vadd.f32 0.0, %v1831
      %v1833 = vpop.f32.mrb[0].mxu0
      %1834 = vmatprep.mubr.f32.mxu0 0.0
      %1835 = vmatmul.mubr.f32.gmra.mrb[0].mxu0 %v1734
      %v1836 = vpop.f32.mrb[0].mxu0
      %v1837 = vadd.f32 0.0, %v1836
      %v1838 = vpop.f32.mrb[0].mxu0
      %1839 = vmatprep.mubr.f32.mxu0 0.0
      %1840 = vmatmul.mubr.f32.gmra.mrb[0].mxu0 %v1737
      %v1841 = vpop.f32.mrb[0].mxu0
      %v1842 = vadd.f32 0.0, %v1841
      %v1843 = vpop.f32.mrb[0].mxu0
      %1844 = vmatprep.mubr.f32.mxu0 0.0
      %1845 = vmatmul.mubr.f32.gmra.mrb[0].mxu0 %v1740
      %v1846 = vpop.f32.mrb[0].mxu0
      %v1847 = vadd.f32 0.0, %v1846
      %v1848 = vpop.f32.mrb[0].mxu0
      %1849 = vdwg.mxu0
      %v1850 = vadd.f32 %v1708, %v1812
      %v1851 = vadd.f32 %v1709, %v1817
      %v1852 = vadd.f32 %v1710, %v1822
      %v1853 = vadd.f32 %v1711, %v1827
      %v1854 = vadd.f32 %v1712, %v1832
      %v1855 = vadd.f32 %v1713, %v1837
      %v1856 = vadd.f32 %v1714, %v1842
      %v1857 = vadd.f32 %v1715, %v1847
      %v1866 = vrot.slane %v467, 1
      %v1867 = vrot.slane %v468, 1
      %v1868 = vsel %vm544, %v1866, %v1867
      %v1869 = vrot.slane %v469, 1
      %v1870 = vrot.slane %v470, 1
      %v1871 = vsel %vm544, %v1869, %v1870
      %v1872 = vrot.slane %v471, 1
      %v1873 = vrot.slane %v472, 1
      %v1874 = vsel %vm544, %v1872, %v1873
      %v1875 = vrot.slane %v473, 1
      %v1876 = vrot.slane %v474, 1
      %v1877 = vsel %vm544, %v1875, %v1876
      %v1878 = vrot.slane %v475, 1
      %v1879 = vrot.slane %v476, 1
      %v1880 = vsel %vm544, %v1878, %v1879
      %v1881 = vrot.slane %v477, 1
      %v1882 = vrot.slane %v478, 1
      %v1883 = vsel %vm544, %v1881, %v1882
      %v1884 = vrot.slane %v479, 1
      %v1885 = vrot.slane %v480, 1
      %v1886 = vsel %vm544, %v1884, %v1885
      %v1887 = vrot.slane %v481, 1
      %v1888 = vrot.slane %v482, 1
      %v1889 = vsel %vm544, %v1887, %v1888
      %s1890 = scalar_lea.vmem %s3, 40
      %v1891 = vld [vmem:[%s1890] sm:$0xf]
      %v1892 = vsel %vm571, %v1868, 0
      %v1894 = vsel %vm571, %v1871, 0
      %v1896 = vsel %vm571, %v1874, 0
      %v1898 = vsel %vm571, %v1877, 0
      %v1900 = vsel %vm571, %v1880, 0
      %v1902 = vsel %vm571, %v1883, 0
      %v1904 = vsel %vm571, %v1886, 0
      %v1906 = vsel %vm571, %v1889, 0
      %v1909 = vsel %vm588, %v1891, 0
      %1911 = vmatprep.subr.mxu0 0.0
      %1912 = vmatpush1.msra.mxu0 %v1909
      %1913 = vmatprep.subr.mxu0 0.0
      %1914 = vmatpush1.msra.mxu0 0.0
      %1915 = vmatprep.subr.mxu0 0.0
      %1916 = vmatpush1.msra.mxu0 0.0
      %1917 = vmatprep.subr.mxu0 0.0
      %1918 = vmatpush1.msra.mxu0 0.0
      %1919 = vmatprep.subr.mxu0 0.0
      %1920 = vmatpush1.msra.mxu0 0.0
      %1921 = vmatprep.subr.mxu0 0.0
      %1922 = vmatpush1.msra.mxu0 0.0
      %1923 = vmatprep.subr.mxu0 0.0
      %1924 = vmatpush1.msra.mxu0 0.0
      %1925 = vmatprep.subr.mxu0 0.0
      %1926 = vmatpush1.msra.mxu0 0.0
      %1927 = vmatprep.subr.mxu0 0.0
      %1928 = vmatpush1.msra.mxu0 0.0
      %1929 = vmatprep.subr.mxu0 0.0
      %1930 = vmatpush1.msra.mxu0 0.0
      %1931 = vmatprep.subr.mxu0 0.0
      %1932 = vmatpush1.msra.mxu0 0.0
      %1933 = vmatprep.subr.mxu0 0.0
      %1934 = vmatpush1.msra.mxu0 0.0
      %1935 = vmatprep.subr.mxu0 0.0
      %1936 = vmatpush1.msra.mxu0 0.0
      %1937 = vmatprep.subr.mxu0 0.0
      %1938 = vmatpush1.msra.mxu0 0.0
      %1939 = vmatprep.subr.mxu0 0.0
      %1940 = vmatpush1.msra.mxu0 0.0
      %1941 = vmatprep.subr.mxu0 0.0
      %1942 = vmatpush1.msra.mxu0 0.0
      %1943 = vmatprep.subr.mxu0 0.0
      %1944 = vmatpush1.msra.mxu0 0.0
      %1945 = vmatprep.subr.mxu0 0.0
      %1946 = vmatpush1.msra.mxu0 0.0
      %1947 = vmatprep.subr.mxu0 0.0
      %1948 = vmatpush1.msra.mxu0 0.0
      %1949 = vmatprep.subr.mxu0 0.0
      %1950 = vmatpush1.msra.mxu0 0.0
      %1951 = vmatprep.subr.mxu0 0.0
      %1952 = vmatpush1.msra.mxu0 0.0
      %1953 = vmatprep.subr.mxu0 0.0
      %1954 = vmatpush1.msra.mxu0 0.0
      %1955 = vmatprep.subr.mxu0 0.0
      %1956 = vmatpush1.msra.mxu0 0.0
      %1957 = vmatprep.subr.mxu0 0.0
      %1958 = vmatpush1.msra.mxu0 0.0
      %1959 = vmatprep.subr.mxu0 0.0
      %1960 = vmatpush1.msra.mxu0 0.0
      %1961 = vmatprep.subr.mxu0 0.0
      %1962 = vmatpush1.msra.mxu0 0.0
      %1963 = vmatprep.subr.mxu0 0.0
      %1964 = vmatpush1.msra.mxu0 0.0
      %1965 = vmatprep.subr.mxu0 0.0
      %1966 = vmatpush1.msra.mxu0 0.0
      %1967 = vmatprep.subr.mxu0 0.0
      %1968 = vmatpush1.msra.mxu0 0.0
      %1969 = vmatprep.subr.mxu0 0.0
      %1970 = vmatpush1.msra.mxu0 0.0
      %1971 = vmatprep.subr.mxu0 0.0
      %1972 = vmatpush1.msra.mxu0 0.0
      %1973 = vmatprep.subr.mxu0 0.0
      %1974 = vmatpush1.msra.mxu0 0.0
      %1975 = vmatprep.mubr.f32.mxu0 0.0
      %1976 = vmatmul.mubr.f32.gmra.mrb[0].mxu0 %v1892
      %v1977 = vpop.f32.mrb[0].mxu0
      %v1978 = vadd.f32 0.0, %v1977
      %v1979 = vpop.f32.mrb[0].mxu0
      %1980 = vmatprep.mubr.f32.mxu0 0.0
      %1981 = vmatmul.mubr.f32.gmra.mrb[0].mxu0 %v1894
      %v1982 = vpop.f32.mrb[0].mxu0
      %v1983 = vadd.f32 0.0, %v1982
      %v1984 = vpop.f32.mrb[0].mxu0
      %1985 = vmatprep.mubr.f32.mxu0 0.0
      %1986 = vmatmul.mubr.f32.gmra.mrb[0].mxu0 %v1896
      %v1987 = vpop.f32.mrb[0].mxu0
      %v1988 = vadd.f32 0.0, %v1987
      %v1989 = vpop.f32.mrb[0].mxu0
      %1990 = vmatprep.mubr.f32.mxu0 0.0
      %1991 = vmatmul.mubr.f32.gmra.mrb[0].mxu0 %v1898
      %v1992 = vpop.f32.mrb[0].mxu0
      %v1993 = vadd.f32 0.0, %v1992
      %v1994 = vpop.f32.mrb[0].mxu0
      %1995 = vmatprep.mubr.f32.mxu0 0.0
      %1996 = vmatmul.mubr.f32.gmra.mrb[0].mxu0 %v1900
      %v1997 = vpop.f32.mrb[0].mxu0
      %v1998 = vadd.f32 0.0, %v1997
      %v1999 = vpop.f32.mrb[0].mxu0
      %2000 = vmatprep.mubr.f32.mxu0 0.0
      %2001 = vmatmul.mubr.f32.gmra.mrb[0].mxu0 %v1902
      %v2002 = vpop.f32.mrb[0].mxu0
      %v2003 = vadd.f32 0.0, %v2002
      %v2004 = vpop.f32.mrb[0].mxu0
      %2005 = vmatprep.mubr.f32.mxu0 0.0
      %2006 = vmatmul.mubr.f32.gmra.mrb[0].mxu0 %v1904
      %v2007 = vpop.f32.mrb[0].mxu0
      %v2008 = vadd.f32 0.0, %v2007
      %v2009 = vpop.f32.mrb[0].mxu0
      %2010 = vmatprep.mubr.f32.mxu0 0.0
      %2011 = vmatmul.mubr.f32.gmra.mrb[0].mxu0 %v1906
      %v2012 = vpop.f32.mrb[0].mxu0
      %v2013 = vadd.f32 0.0, %v2012
      %v2014 = vpop.f32.mrb[0].mxu0
      %2015 = vdwg.mxu0
      %v2016 = vadd.f32 %v1850, %v1978
      %v2017 = vadd.f32 %v1851, %v1983
      %v2018 = vadd.f32 %v1852, %v1988
      %v2019 = vadd.f32 %v1853, %v1993
      %v2020 = vadd.f32 %v1854, %v1998
      %v2021 = vadd.f32 %v1855, %v2003
      %v2022 = vadd.f32 %v1856, %v2008
      %v2023 = vadd.f32 %v1857, %v2013
      %v2024 = vrot.slane %v467, 2
      %v2025 = vrot.slane %v468, 2
      %v2026 = vsel %vm821, %v2024, %v2025
      %v2027 = vrot.slane %v469, 2
      %v2028 = vrot.slane %v470, 2
      %v2029 = vsel %vm821, %v2027, %v2028
      %v2030 = vrot.slane %v471, 2
      %v2031 = vrot.slane %v472, 2
      %v2032 = vsel %vm821, %v2030, %v2031
      %v2033 = vrot.slane %v473, 2
      %v2034 = vrot.slane %v474, 2
      %v2035 = vsel %vm821, %v2033, %v2034
      %v2036 = vrot.slane %v475, 2
      %v2037 = vrot.slane %v476, 2
      %v2038 = vsel %vm821, %v2036, %v2037
      %v2039 = vrot.slane %v477, 2
      %v2040 = vrot.slane %v478, 2
      %v2041 = vsel %vm821, %v2039, %v2040
      %v2042 = vrot.slane %v479, 2
      %v2043 = vrot.slane %v480, 2
      %v2044 = vsel %vm821, %v2042, %v2043
      %v2045 = vrot.slane %v481, 2
      %v2046 = vrot.slane %v482, 2
      %v2047 = vsel %vm821, %v2045, %v2046
      %s2048 = scalar_lea.vmem %s3, 44
      %v2049 = vld [vmem:[%s2048] sm:$0xf]
      %v2050 = vsel %vm571, %v2026, 0
      %v2052 = vsel %vm571, %v2029, 0
      %v2054 = vsel %vm571, %v2032, 0
      %v2056 = vsel %vm571, %v2035, 0
      %v2058 = vsel %vm571, %v2038, 0
      %v2060 = vsel %vm571, %v2041, 0
      %v2062 = vsel %vm571, %v2044, 0
      %v2064 = vsel %vm571, %v2047, 0
      %v2067 = vsel %vm588, %v2049, 0
      %2069 = vmatprep.subr.mxu0 0.0
      %2070 = vmatpush1.msra.mxu0 %v2067
      %2071 = vmatprep.subr.mxu0 0.0
      %2072 = vmatpush1.msra.mxu0 0.0
      %2073 = vmatprep.subr.mxu0 0.0
      %2074 = vmatpush1.msra.mxu0 0.0
      %2075 = vmatprep.subr.mxu0 0.0
      %2076 = vmatpush1.msra.mxu0 0.0
      %2077 = vmatprep.subr.mxu0 0.0
      %2078 = vmatpush1.msra.mxu0 0.0
      %2079 = vmatprep.subr.mxu0 0.0
      %2080 = vmatpush1.msra.mxu0 0.0
      %2081 = vmatprep.subr.mxu0 0.0
      %2082 = vmatpush1.msra.mxu0 0.0
      %2083 = vmatprep.subr.mxu0 0.0
      %2084 = vmatpush1.msra.mxu0 0.0
      %2085 = vmatprep.subr.mxu0 0.0
      %2086 = vmatpush1.msra.mxu0 0.0
      %2087 = vmatprep.subr.mxu0 0.0
      %2088 = vmatpush1.msra.mxu0 0.0
      %2089 = vmatprep.subr.mxu0 0.0
      %2090 = vmatpush1.msra.mxu0 0.0
      %2091 = vmatprep.subr.mxu0 0.0
      %2092 = vmatpush1.msra.mxu0 0.0
      %2093 = vmatprep.subr.mxu0 0.0
      %2094 = vmatpush1.msra.mxu0 0.0
      %2095 = vmatprep.subr.mxu0 0.0
      %2096 = vmatpush1.msra.mxu0 0.0
      %2097 = vmatprep.subr.mxu0 0.0
      %2098 = vmatpush1.msra.mxu0 0.0
      %2099 = vmatprep.subr.mxu0 0.0
      %2100 = vmatpush1.msra.mxu0 0.0
      %2101 = vmatprep.subr.mxu0 0.0
      %2102 = vmatpush1.msra.mxu0 0.0
      %2103 = vmatprep.subr.mxu0 0.0
      %2104 = vmatpush1.msra.mxu0 0.0
      %2105 = vmatprep.subr.mxu0 0.0
      %2106 = vmatpush1.msra.mxu0 0.0
      %2107 = vmatprep.subr.mxu0 0.0
      %2108 = vmatpush1.msra.mxu0 0.0
      %2109 = vmatprep.subr.mxu0 0.0
      %2110 = vmatpush1.msra.mxu0 0.0
      %2111 = vmatprep.subr.mxu0 0.0
      %2112 = vmatpush1.msra.mxu0 0.0
      %2113 = vmatprep.subr.mxu0 0.0
      %2114 = vmatpush1.msra.mxu0 0.0
      %2115 = vmatprep.subr.mxu0 0.0
      %2116 = vmatpush1.msra.mxu0 0.0
      %2117 = vmatprep.subr.mxu0 0.0
      %2118 = vmatpush1.msra.mxu0 0.0
      %2119 = vmatprep.subr.mxu0 0.0
      %2120 = vmatpush1.msra.mxu0 0.0
      %2121 = vmatprep.subr.mxu0 0.0
      %2122 = vmatpush1.msra.mxu0 0.0
      %2123 = vmatprep.subr.mxu0 0.0
      %2124 = vmatpush1.msra.mxu0 0.0
      %2125 = vmatprep.subr.mxu0 0.0
      %2126 = vmatpush1.msra.mxu0 0.0
      %2127 = vmatprep.subr.mxu0 0.0
      %2128 = vmatpush1.msra.mxu0 0.0
      %2129 = vmatprep.subr.mxu0 0.0
      %2130 = vmatpush1.msra.mxu0 0.0
      %2131 = vmatprep.subr.mxu0 0.0
      %2132 = vmatpush1.msra.mxu0 0.0
      %2133 = vmatprep.mubr.f32.mxu0 0.0
      %2134 = vmatmul.mubr.f32.gmra.mrb[0].mxu0 %v2050
      %v2135 = vpop.f32.mrb[0].mxu0
      %v2136 = vadd.f32 0.0, %v2135
      %v2137 = vpop.f32.mrb[0].mxu0
      %2138 = vmatprep.mubr.f32.mxu0 0.0
      %2139 = vmatmul.mubr.f32.gmra.mrb[0].mxu0 %v2052
      %v2140 = vpop.f32.mrb[0].mxu0
      %v2141 = vadd.f32 0.0, %v2140
      %v2142 = vpop.f32.mrb[0].mxu0
      %2143 = vmatprep.mubr.f32.mxu0 0.0
      %2144 = vmatmul.mubr.f32.gmra.mrb[0].mxu0 %v2054
      %v2145 = vpop.f32.mrb[0].mxu0
      %v2146 = vadd.f32 0.0, %v2145
      %v2147 = vpop.f32.mrb[0].mxu0
      %2148 = vmatprep.mubr.f32.mxu0 0.0
      %2149 = vmatmul.mubr.f32.gmra.mrb[0].mxu0 %v2056
      %v2150 = vpop.f32.mrb[0].mxu0
      %v2151 = vadd.f32 0.0, %v2150
      %v2152 = vpop.f32.mrb[0].mxu0
      %2153 = vmatprep.mubr.f32.mxu0 0.0
      %2154 = vmatmul.mubr.f32.gmra.mrb[0].mxu0 %v2058
      %v2155 = vpop.f32.mrb[0].mxu0
      %v2156 = vadd.f32 0.0, %v2155
      %v2157 = vpop.f32.mrb[0].mxu0
      %2158 = vmatprep.mubr.f32.mxu0 0.0
      %2159 = vmatmul.mubr.f32.gmra.mrb[0].mxu0 %v2060
      %v2160 = vpop.f32.mrb[0].mxu0
      %v2161 = vadd.f32 0.0, %v2160
      %v2162 = vpop.f32.mrb[0].mxu0
      %2163 = vmatprep.mubr.f32.mxu0 0.0
      %2164 = vmatmul.mubr.f32.gmra.mrb[0].mxu0 %v2062
      %v2165 = vpop.f32.mrb[0].mxu0
      %v2166 = vadd.f32 0.0, %v2165
      %v2167 = vpop.f32.mrb[0].mxu0
      %2168 = vmatprep.mubr.f32.mxu0 0.0
      %2169 = vmatmul.mubr.f32.gmra.mrb[0].mxu0 %v2064
      %v2170 = vpop.f32.mrb[0].mxu0
      %v2171 = vadd.f32 0.0, %v2170
      %v2172 = vpop.f32.mrb[0].mxu0
      %2173 = vdwg.mxu0
      %v2174 = vadd.f32 %v2016, %v2136
      %v2175 = vadd.f32 %v2017, %v2141
      %v2176 = vadd.f32 %v2018, %v2146
      %v2177 = vadd.f32 %v2019, %v2151
      %v2178 = vadd.f32 %v2020, %v2156
      %v2179 = vadd.f32 %v2021, %v2161
      %v2180 = vadd.f32 %v2022, %v2166
      %v2181 = vadd.f32 %v2023, %v2171
      %s2182 = scalar_lea.vmem %s3, 48
      %v2183 = vld [vmem:[%s2182] sm:$0xf]
      %v2185 = vsel %vm571, %v483, 0
      %v2188 = vsel %vm588, %v2183, 0
      %2190 = vmatprep.subr.mxu0 0.0
      %2191 = vmatpush1.msra.mxu0 %v2188
      %2192 = vmatprep.subr.mxu0 0.0
      %2193 = vmatpush1.msra.mxu0 0.0
      %2194 = vmatprep.subr.mxu0 0.0
      %2195 = vmatpush1.msra.mxu0 0.0
      %2196 = vmatprep.subr.mxu0 0.0
      %2197 = vmatpush1.msra.mxu0 0.0
      %2198 = vmatprep.subr.mxu0 0.0
      %2199 = vmatpush1.msra.mxu0 0.0
      %2200 = vmatprep.subr.mxu0 0.0
      %2201 = vmatpush1.msra.mxu0 0.0
      %2202 = vmatprep.subr.mxu0 0.0
      %2203 = vmatpush1.msra.mxu0 0.0
      %2204 = vmatprep.subr.mxu0 0.0
      %2205 = vmatpush1.msra.mxu0 0.0
      %2206 = vmatprep.subr.mxu0 0.0
      %2207 = vmatpush1.msra.mxu0 0.0
      %2208 = vmatprep.subr.mxu0 0.0
      %2209 = vmatpush1.msra.mxu0 0.0
      %2210 = vmatprep.subr.mxu0 0.0
      %2211 = vmatpush1.msra.mxu0 0.0
      %2212 = vmatprep.subr.mxu0 0.0
      %2213 = vmatpush1.msra.mxu0 0.0
      %2214 = vmatprep.subr.mxu0 0.0
      %2215 = vmatpush1.msra.mxu0 0.0
      %2216 = vmatprep.subr.mxu0 0.0
      %2217 = vmatpush1.msra.mxu0 0.0
      %2218 = vmatprep.subr.mxu0 0.0
      %2219 = vmatpush1.msra.mxu0 0.0
      %2220 = vmatprep.subr.mxu0 0.0
      %2221 = vmatpush1.msra.mxu0 0.0
      %2222 = vmatprep.subr.mxu0 0.0
      %2223 = vmatpush1.msra.mxu0 0.0
      %2224 = vmatprep.subr.mxu0 0.0
      %2225 = vmatpush1.msra.mxu0 0.0
      %2226 = vmatprep.subr.mxu0 0.0
      %2227 = vmatpush1.msra.mxu0 0.0
      %2228 = vmatprep.subr.mxu0 0.0
      %2229 = vmatpush1.msra.mxu0 0.0
      %2230 = vmatprep.subr.mxu0 0.0
      %2231 = vmatpush1.msra.mxu0 0.0
      %2232 = vmatprep.subr.mxu0 0.0
      %2233 = vmatpush1.msra.mxu0 0.0
      %2234 = vmatprep.subr.mxu0 0.0
      %2235 = vmatpush1.msra.mxu0 0.0
      %2236 = vmatprep.subr.mxu0 0.0
      %2237 = vmatpush1.msra.mxu0 0.0
      %2238 = vmatprep.subr.mxu0 0.0
      %2239 = vmatpush1.msra.mxu0 0.0
      %2240 = vmatprep.subr.mxu0 0.0
      %2241 = vmatpush1.msra.mxu0 0.0
      %2242 = vmatprep.subr.mxu0 0.0
      %2243 = vmatpush1.msra.mxu0 0.0
      %2244 = vmatprep.subr.mxu0 0.0
      %2245 = vmatpush1.msra.mxu0 0.0
      %2246 = vmatprep.subr.mxu0 0.0
      %2247 = vmatpush1.msra.mxu0 0.0
      %2248 = vmatprep.subr.mxu0 0.0
      %2249 = vmatpush1.msra.mxu0 0.0
      %2250 = vmatprep.subr.mxu0 0.0
      %2251 = vmatpush1.msra.mxu0 0.0
      %2252 = vmatprep.subr.mxu0 0.0
      %2253 = vmatpush1.msra.mxu0 0.0
      %2254 = vmatprep.mubr.f32.mxu0 0.0
      %2255 = vmatmul.mubr.f32.gmra.mrb[0].mxu0 %v1722
      %v2256 = vpop.f32.mrb[0].mxu0
      %v2257 = vadd.f32 0.0, %v2256
      %v2258 = vpop.f32.mrb[0].mxu0
      %2259 = vmatprep.mubr.f32.mxu0 0.0
      %2260 = vmatmul.mubr.f32.gmra.mrb[0].mxu0 %v1725
      %v2261 = vpop.f32.mrb[0].mxu0
      %v2262 = vadd.f32 0.0, %v2261
      %v2263 = vpop.f32.mrb[0].mxu0
      %2264 = vmatprep.mubr.f32.mxu0 0.0
      %2265 = vmatmul.mubr.f32.gmra.mrb[0].mxu0 %v1728
      %v2266 = vpop.f32.mrb[0].mxu0
      %v2267 = vadd.f32 0.0, %v2266
      %v2268 = vpop.f32.mrb[0].mxu0
      %2269 = vmatprep.mubr.f32.mxu0 0.0
      %2270 = vmatmul.mubr.f32.gmra.mrb[0].mxu0 %v1731
      %v2271 = vpop.f32.mrb[0].mxu0
      %v2272 = vadd.f32 0.0, %v2271
      %v2273 = vpop.f32.mrb[0].mxu0
      %2274 = vmatprep.mubr.f32.mxu0 0.0
      %2275 = vmatmul.mubr.f32.gmra.mrb[0].mxu0 %v1734
      %v2276 = vpop.f32.mrb[0].mxu0
      %v2277 = vadd.f32 0.0, %v2276
      %v2278 = vpop.f32.mrb[0].mxu0
      %2279 = vmatprep.mubr.f32.mxu0 0.0
      %2280 = vmatmul.mubr.f32.gmra.mrb[0].mxu0 %v1737
      %v2281 = vpop.f32.mrb[0].mxu0
      %v2282 = vadd.f32 0.0, %v2281
      %v2283 = vpop.f32.mrb[0].mxu0
      %2284 = vmatprep.mubr.f32.mxu0 0.0
      %2285 = vmatmul.mubr.f32.gmra.mrb[0].mxu0 %v1740
      %v2286 = vpop.f32.mrb[0].mxu0
      %v2287 = vadd.f32 0.0, %v2286
      %v2288 = vpop.f32.mrb[0].mxu0
      %2289 = vmatprep.mubr.f32.mxu0 0.0
      %2290 = vmatmul.mubr.f32.gmra.mrb[0].mxu0 %v2185
      %v2291 = vpop.f32.mrb[0].mxu0
      %v2292 = vadd.f32 0.0, %v2291
      %v2293 = vpop.f32.mrb[0].mxu0
      %2294 = vdwg.mxu0
      %v2295 = vadd.f32 %v2174, %v2257
      %v2296 = vadd.f32 %v2175, %v2262
      %v2297 = vadd.f32 %v2176, %v2267
      %v2298 = vadd.f32 %v2177, %v2272
      %v2299 = vadd.f32 %v2178, %v2277
      %v2300 = vadd.f32 %v2179, %v2282
      %v2301 = vadd.f32 %v2180, %v2287
      %v2302 = vadd.f32 %v2181, %v2292
      %v2304 = vrot.slane %v483, 1
      %v2305 = vrot.slane %v484, 1
      %v2306 = vsel %vm544, %v2304, %v2305
      %s2307 = scalar_lea.vmem %s3, 52
      %v2308 = vld [vmem:[%s2307] sm:$0xf]
      %v2309 = vsel %vm571, %v2306, 0
      %v2312 = vsel %vm588, %v2308, 0
      %2314 = vmatprep.subr.mxu0 0.0
      %2315 = vmatpush1.msra.mxu0 %v2312
      %2316 = vmatprep.subr.mxu0 0.0
      %2317 = vmatpush1.msra.mxu0 0.0
      %2318 = vmatprep.subr.mxu0 0.0
      %2319 = vmatpush1.msra.mxu0 0.0
      %2320 = vmatprep.subr.mxu0 0.0
      %2321 = vmatpush1.msra.mxu0 0.0
      %2322 = vmatprep.subr.mxu0 0.0
      %2323 = vmatpush1.msra.mxu0 0.0
      %2324 = vmatprep.subr.mxu0 0.0
      %2325 = vmatpush1.msra.mxu0 0.0
      %2326 = vmatprep.subr.mxu0 0.0
      %2327 = vmatpush1.msra.mxu0 0.0
      %2328 = vmatprep.subr.mxu0 0.0
      %2329 = vmatpush1.msra.mxu0 0.0
      %2330 = vmatprep.subr.mxu0 0.0
      %2331 = vmatpush1.msra.mxu0 0.0
      %2332 = vmatprep.subr.mxu0 0.0
      %2333 = vmatpush1.msra.mxu0 0.0
      %2334 = vmatprep.subr.mxu0 0.0
      %2335 = vmatpush1.msra.mxu0 0.0
      %2336 = vmatprep.subr.mxu0 0.0
      %2337 = vmatpush1.msra.mxu0 0.0
      %2338 = vmatprep.subr.mxu0 0.0
      %2339 = vmatpush1.msra.mxu0 0.0
      %2340 = vmatprep.subr.mxu0 0.0
      %2341 = vmatpush1.msra.mxu0 0.0
      %2342 = vmatprep.subr.mxu0 0.0
      %2343 = vmatpush1.msra.mxu0 0.0
      %2344 = vmatprep.subr.mxu0 0.0
      %2345 = vmatpush1.msra.mxu0 0.0
      %2346 = vmatprep.subr.mxu0 0.0
      %2347 = vmatpush1.msra.mxu0 0.0
      %2348 = vmatprep.subr.mxu0 0.0
      %2349 = vmatpush1.msra.mxu0 0.0
      %2350 = vmatprep.subr.mxu0 0.0
      %2351 = vmatpush1.msra.mxu0 0.0
      %2352 = vmatprep.subr.mxu0 0.0
      %2353 = vmatpush1.msra.mxu0 0.0
      %2354 = vmatprep.subr.mxu0 0.0
      %2355 = vmatpush1.msra.mxu0 0.0
      %2356 = vmatprep.subr.mxu0 0.0
      %2357 = vmatpush1.msra.mxu0 0.0
      %2358 = vmatprep.subr.mxu0 0.0
      %2359 = vmatpush1.msra.mxu0 0.0
      %2360 = vmatprep.subr.mxu0 0.0
      %2361 = vmatpush1.msra.mxu0 0.0
      %2362 = vmatprep.subr.mxu0 0.0
      %2363 = vmatpush1.msra.mxu0 0.0
      %2364 = vmatprep.subr.mxu0 0.0
      %2365 = vmatpush1.msra.mxu0 0.0
      %2366 = vmatprep.subr.mxu0 0.0
      %2367 = vmatpush1.msra.mxu0 0.0
      %2368 = vmatprep.subr.mxu0 0.0
      %2369 = vmatpush1.msra.mxu0 0.0
      %2370 = vmatprep.subr.mxu0 0.0
      %2371 = vmatpush1.msra.mxu0 0.0
      %2372 = vmatprep.subr.mxu0 0.0
      %2373 = vmatpush1.msra.mxu0 0.0
      %2374 = vmatprep.subr.mxu0 0.0
      %2375 = vmatpush1.msra.mxu0 0.0
      %2376 = vmatprep.subr.mxu0 0.0
      %2377 = vmatpush1.msra.mxu0 0.0
      %2378 = vmatprep.mubr.f32.mxu0 0.0
      %2379 = vmatmul.mubr.f32.gmra.mrb[0].mxu0 %v1894
      %v2380 = vpop.f32.mrb[0].mxu0
      %v2381 = vadd.f32 0.0, %v2380
      %v2382 = vpop.f32.mrb[0].mxu0
      %2383 = vmatprep.mubr.f32.mxu0 0.0
      %2384 = vmatmul.mubr.f32.gmra.mrb[0].mxu0 %v1896
      %v2385 = vpop.f32.mrb[0].mxu0
      %v2386 = vadd.f32 0.0, %v2385
      %v2387 = vpop.f32.mrb[0].mxu0
      %2388 = vmatprep.mubr.f32.mxu0 0.0
      %2389 = vmatmul.mubr.f32.gmra.mrb[0].mxu0 %v1898
      %v2390 = vpop.f32.mrb[0].mxu0
      %v2391 = vadd.f32 0.0, %v2390
      %v2392 = vpop.f32.mrb[0].mxu0
      %2393 = vmatprep.mubr.f32.mxu0 0.0
      %2394 = vmatmul.mubr.f32.gmra.mrb[0].mxu0 %v1900
      %v2395 = vpop.f32.mrb[0].mxu0
      %v2396 = vadd.f32 0.0, %v2395
      %v2397 = vpop.f32.mrb[0].mxu0
      %2398 = vmatprep.mubr.f32.mxu0 0.0
      %2399 = vmatmul.mubr.f32.gmra.mrb[0].mxu0 %v1902
      %v2400 = vpop.f32.mrb[0].mxu0
      %v2401 = vadd.f32 0.0, %v2400
      %v2402 = vpop.f32.mrb[0].mxu0
      %2403 = vmatprep.mubr.f32.mxu0 0.0
      %2404 = vmatmul.mubr.f32.gmra.mrb[0].mxu0 %v1904
      %v2405 = vpop.f32.mrb[0].mxu0
      %v2406 = vadd.f32 0.0, %v2405
      %v2407 = vpop.f32.mrb[0].mxu0
      %2408 = vmatprep.mubr.f32.mxu0 0.0
      %2409 = vmatmul.mubr.f32.gmra.mrb[0].mxu0 %v1906
      %v2410 = vpop.f32.mrb[0].mxu0
      %v2411 = vadd.f32 0.0, %v2410
      %v2412 = vpop.f32.mrb[0].mxu0
      %2413 = vmatprep.mubr.f32.mxu0 0.0
      %2414 = vmatmul.mubr.f32.gmra.mrb[0].mxu0 %v2309
      %v2415 = vpop.f32.mrb[0].mxu0
      %v2416 = vadd.f32 0.0, %v2415
      %v2417 = vpop.f32.mrb[0].mxu0
      %2418 = vdwg.mxu0
      %v2419 = vadd.f32 %v2295, %v2381
      %v2420 = vadd.f32 %v2296, %v2386
      %v2421 = vadd.f32 %v2297, %v2391
      %v2422 = vadd.f32 %v2298, %v2396
      %v2423 = vadd.f32 %v2299, %v2401
      %v2424 = vadd.f32 %v2300, %v2406
      %v2425 = vadd.f32 %v2301, %v2411
      %v2426 = vadd.f32 %v2302, %v2416
      %v2427 = vrot.slane %v483, 2
      %v2428 = vrot.slane %v484, 2
      %v2429 = vsel %vm821, %v2427, %v2428
      %s2430 = scalar_lea.vmem %s3, 56
      %v2431 = vld [vmem:[%s2430] sm:$0xf]
      %v2432 = vsel %vm571, %v2429, 0
      %v2435 = vsel %vm588, %v2431, 0
      %2437 = vmatprep.subr.mxu0 0.0
      %2438 = vmatpush1.msra.mxu0 %v2435
      %2439 = vmatprep.subr.mxu0 0.0
      %2440 = vmatpush1.msra.mxu0 0.0
      %2441 = vmatprep.subr.mxu0 0.0
      %2442 = vmatpush1.msra.mxu0 0.0
      %2443 = vmatprep.subr.mxu0 0.0
      %2444 = vmatpush1.msra.mxu0 0.0
      %2445 = vmatprep.subr.mxu0 0.0
      %2446 = vmatpush1.msra.mxu0 0.0
      %2447 = vmatprep.subr.mxu0 0.0
      %2448 = vmatpush1.msra.mxu0 0.0
      %2449 = vmatprep.subr.mxu0 0.0
      %2450 = vmatpush1.msra.mxu0 0.0
      %2451 = vmatprep.subr.mxu0 0.0
      %2452 = vmatpush1.msra.mxu0 0.0
      %2453 = vmatprep.subr.mxu0 0.0
      %2454 = vmatpush1.msra.mxu0 0.0
      %2455 = vmatprep.subr.mxu0 0.0
      %2456 = vmatpush1.msra.mxu0 0.0
      %2457 = vmatprep.subr.mxu0 0.0
      %2458 = vmatpush1.msra.mxu0 0.0
      %2459 = vmatprep.subr.mxu0 0.0
      %2460 = vmatpush1.msra.mxu0 0.0
      %2461 = vmatprep.subr.mxu0 0.0
      %2462 = vmatpush1.msra.mxu0 0.0
      %2463 = vmatprep.subr.mxu0 0.0
      %2464 = vmatpush1.msra.mxu0 0.0
      %2465 = vmatprep.subr.mxu0 0.0
      %2466 = vmatpush1.msra.mxu0 0.0
      %2467 = vmatprep.subr.mxu0 0.0
      %2468 = vmatpush1.msra.mxu0 0.0
      %2469 = vmatprep.subr.mxu0 0.0
      %2470 = vmatpush1.msra.mxu0 0.0
      %2471 = vmatprep.subr.mxu0 0.0
      %2472 = vmatpush1.msra.mxu0 0.0
      %2473 = vmatprep.subr.mxu0 0.0
      %2474 = vmatpush1.msra.mxu0 0.0
      %2475 = vmatprep.subr.mxu0 0.0
      %2476 = vmatpush1.msra.mxu0 0.0
      %2477 = vmatprep.subr.mxu0 0.0
      %2478 = vmatpush1.msra.mxu0 0.0
      %2479 = vmatprep.subr.mxu0 0.0
      %2480 = vmatpush1.msra.mxu0 0.0
      %2481 = vmatprep.subr.mxu0 0.0
      %2482 = vmatpush1.msra.mxu0 0.0
      %2483 = vmatprep.subr.mxu0 0.0
      %2484 = vmatpush1.msra.mxu0 0.0
      %2485 = vmatprep.subr.mxu0 0.0
      %2486 = vmatpush1.msra.mxu0 0.0
      %2487 = vmatprep.subr.mxu0 0.0
      %2488 = vmatpush1.msra.mxu0 0.0
      %2489 = vmatprep.subr.mxu0 0.0
      %2490 = vmatpush1.msra.mxu0 0.0
      %2491 = vmatprep.subr.mxu0 0.0
      %2492 = vmatpush1.msra.mxu0 0.0
      %2493 = vmatprep.subr.mxu0 0.0
      %2494 = vmatpush1.msra.mxu0 0.0
      %2495 = vmatprep.subr.mxu0 0.0
      %2496 = vmatpush1.msra.mxu0 0.0
      %2497 = vmatprep.subr.mxu0 0.0
      %2498 = vmatpush1.msra.mxu0 0.0
      %2499 = vmatprep.subr.mxu0 0.0
      %2500 = vmatpush1.msra.mxu0 0.0
      %2501 = vmatprep.mubr.f32.mxu0 0.0
      %2502 = vmatmul.mubr.f32.gmra.mrb[0].mxu0 %v2052
      %v2503 = vpop.f32.mrb[0].mxu0
      %v2504 = vadd.f32 0.0, %v2503
      %v2505 = vpop.f32.mrb[0].mxu0
      %2506 = vmatprep.mubr.f32.mxu0 0.0
      %2507 = vmatmul.mubr.f32.gmra.mrb[0].mxu0 %v2054
      %v2508 = vpop.f32.mrb[0].mxu0
      %v2509 = vadd.f32 0.0, %v2508
      %v2510 = vpop.f32.mrb[0].mxu0
      %2511 = vmatprep.mubr.f32.mxu0 0.0
      %2512 = vmatmul.mubr.f32.gmra.mrb[0].mxu0 %v2056
      %v2513 = vpop.f32.mrb[0].mxu0
      %v2514 = vadd.f32 0.0, %v2513
      %v2515 = vpop.f32.mrb[0].mxu0
      %2516 = vmatprep.mubr.f32.mxu0 0.0
      %2517 = vmatmul.mubr.f32.gmra.mrb[0].mxu0 %v2058
      %v2518 = vpop.f32.mrb[0].mxu0
      %v2519 = vadd.f32 0.0, %v2518
      %v2520 = vpop.f32.mrb[0].mxu0
      %2521 = vmatprep.mubr.f32.mxu0 0.0
      %2522 = vmatmul.mubr.f32.gmra.mrb[0].mxu0 %v2060
      %v2523 = vpop.f32.mrb[0].mxu0
      %v2524 = vadd.f32 0.0, %v2523
      %v2525 = vpop.f32.mrb[0].mxu0
      %2526 = vmatprep.mubr.f32.mxu0 0.0
      %2527 = vmatmul.mubr.f32.gmra.mrb[0].mxu0 %v2062
      %v2528 = vpop.f32.mrb[0].mxu0
      %v2529 = vadd.f32 0.0, %v2528
      %v2530 = vpop.f32.mrb[0].mxu0
      %2531 = vmatprep.mubr.f32.mxu0 0.0
      %2532 = vmatmul.mubr.f32.gmra.mrb[0].mxu0 %v2064
      %v2533 = vpop.f32.mrb[0].mxu0
      %v2534 = vadd.f32 0.0, %v2533
      %v2535 = vpop.f32.mrb[0].mxu0
      %2536 = vmatprep.mubr.f32.mxu0 0.0
      %2537 = vmatmul.mubr.f32.gmra.mrb[0].mxu0 %v2432
      %v2538 = vpop.f32.mrb[0].mxu0
      %v2539 = vadd.f32 0.0, %v2538
      %v2540 = vpop.f32.mrb[0].mxu0
      %2541 = vdwg.mxu0
      %v2542 = vadd.f32 %v2419, %v2504
      %v2543 = vadd.f32 %v2420, %v2509
      %v2544 = vadd.f32 %v2421, %v2514
      %v2545 = vadd.f32 %v2422, %v2519
      %v2546 = vadd.f32 %v2423, %v2524
      %v2547 = vadd.f32 %v2424, %v2529
      %v2548 = vadd.f32 %v2425, %v2534
      %v2549 = vadd.f32 %v2426, %v2539
      %s2550 = scalar_lea.vmem %s3, 60
      %v2551 = vld [vmem:[%s2550] sm:$0xf]
      %v2553 = vsel %vm571, %v485, 0
      %v2556 = vsel %vm588, %v2551, 0
      %2558 = vmatprep.subr.mxu0 0.0
      %2559 = vmatpush1.msra.mxu0 %v2556
      %2560 = vmatprep.subr.mxu0 0.0
      %2561 = vmatpush1.msra.mxu0 0.0
      %2562 = vmatprep.subr.mxu0 0.0
      %2563 = vmatpush1.msra.mxu0 0.0
      %2564 = vmatprep.subr.mxu0 0.0
      %2565 = vmatpush1.msra.mxu0 0.0
      %2566 = vmatprep.subr.mxu0 0.0
      %2567 = vmatpush1.msra.mxu0 0.0
      %2568 = vmatprep.subr.mxu0 0.0
      %2569 = vmatpush1.msra.mxu0 0.0
      %2570 = vmatprep.subr.mxu0 0.0
      %2571 = vmatpush1.msra.mxu0 0.0
      %2572 = vmatprep.subr.mxu0 0.0
      %2573 = vmatpush1.msra.mxu0 0.0
      %2574 = vmatprep.subr.mxu0 0.0
      %2575 = vmatpush1.msra.mxu0 0.0
      %2576 = vmatprep.subr.mxu0 0.0
      %2577 = vmatpush1.msra.mxu0 0.0
      %2578 = vmatprep.subr.mxu0 0.0
      %2579 = vmatpush1.msra.mxu0 0.0
      %2580 = vmatprep.subr.mxu0 0.0
      %2581 = vmatpush1.msra.mxu0 0.0
      %2582 = vmatprep.subr.mxu0 0.0
      %2583 = vmatpush1.msra.mxu0 0.0
      %2584 = vmatprep.subr.mxu0 0.0
      %2585 = vmatpush1.msra.mxu0 0.0
      %2586 = vmatprep.subr.mxu0 0.0
      %2587 = vmatpush1.msra.mxu0 0.0
      %2588 = vmatprep.subr.mxu0 0.0
      %2589 = vmatpush1.msra.mxu0 0.0
      %2590 = vmatprep.subr.mxu0 0.0
      %2591 = vmatpush1.msra.mxu0 0.0
      %2592 = vmatprep.subr.mxu0 0.0
      %2593 = vmatpush1.msra.mxu0 0.0
      %2594 = vmatprep.subr.mxu0 0.0
      %2595 = vmatpush1.msra.mxu0 0.0
      %2596 = vmatprep.subr.mxu0 0.0
      %2597 = vmatpush1.msra.mxu0 0.0
      %2598 = vmatprep.subr.mxu0 0.0
      %2599 = vmatpush1.msra.mxu0 0.0
      %2600 = vmatprep.subr.mxu0 0.0
      %2601 = vmatpush1.msra.mxu0 0.0
      %2602 = vmatprep.subr.mxu0 0.0
      %2603 = vmatpush1.msra.mxu0 0.0
      %2604 = vmatprep.subr.mxu0 0.0
      %2605 = vmatpush1.msra.mxu0 0.0
      %2606 = vmatprep.subr.mxu0 0.0
      %2607 = vmatpush1.msra.mxu0 0.0
      %2608 = vmatprep.subr.mxu0 0.0
      %2609 = vmatpush1.msra.mxu0 0.0
      %2610 = vmatprep.subr.mxu0 0.0
      %2611 = vmatpush1.msra.mxu0 0.0
      %2612 = vmatprep.subr.mxu0 0.0
      %2613 = vmatpush1.msra.mxu0 0.0
      %2614 = vmatprep.subr.mxu0 0.0
      %2615 = vmatpush1.msra.mxu0 0.0
      %2616 = vmatprep.subr.mxu0 0.0
      %2617 = vmatpush1.msra.mxu0 0.0
      %2618 = vmatprep.subr.mxu0 0.0
      %2619 = vmatpush1.msra.mxu0 0.0
      %2620 = vmatprep.subr.mxu0 0.0
      %2621 = vmatpush1.msra.mxu0 0.0
      %2622 = vmatprep.mubr.f32.mxu0 0.0
      %2623 = vmatmul.mubr.f32.gmra.mrb[0].mxu0 %v1725
      %v2624 = vpop.f32.mrb[0].mxu0
      %v2625 = vadd.f32 0.0, %v2624
      %v2626 = vpop.f32.mrb[0].mxu0
      %2627 = vmatprep.mubr.f32.mxu0 0.0
      %2628 = vmatmul.mubr.f32.gmra.mrb[0].mxu0 %v1728
      %v2629 = vpop.f32.mrb[0].mxu0
      %v2630 = vadd.f32 0.0, %v2629
      %v2631 = vpop.f32.mrb[0].mxu0
      %2632 = vmatprep.mubr.f32.mxu0 0.0
      %2633 = vmatmul.mubr.f32.gmra.mrb[0].mxu0 %v1731
      %v2634 = vpop.f32.mrb[0].mxu0
      %v2635 = vadd.f32 0.0, %v2634
      %v2636 = vpop.f32.mrb[0].mxu0
      %2637 = vmatprep.mubr.f32.mxu0 0.0
      %2638 = vmatmul.mubr.f32.gmra.mrb[0].mxu0 %v1734
      %v2639 = vpop.f32.mrb[0].mxu0
      %v2640 = vadd.f32 0.0, %v2639
      %v2641 = vpop.f32.mrb[0].mxu0
      %2642 = vmatprep.mubr.f32.mxu0 0.0
      %2643 = vmatmul.mubr.f32.gmra.mrb[0].mxu0 %v1737
      %v2644 = vpop.f32.mrb[0].mxu0
      %v2645 = vadd.f32 0.0, %v2644
      %v2646 = vpop.f32.mrb[0].mxu0
      %2647 = vmatprep.mubr.f32.mxu0 0.0
      %2648 = vmatmul.mubr.f32.gmra.mrb[0].mxu0 %v1740
      %v2649 = vpop.f32.mrb[0].mxu0
      %v2650 = vadd.f32 0.0, %v2649
      %v2651 = vpop.f32.mrb[0].mxu0
      %2652 = vmatprep.mubr.f32.mxu0 0.0
      %2653 = vmatmul.mubr.f32.gmra.mrb[0].mxu0 %v2185
      %v2654 = vpop.f32.mrb[0].mxu0
      %v2655 = vadd.f32 0.0, %v2654
      %v2656 = vpop.f32.mrb[0].mxu0
      %2657 = vmatprep.mubr.f32.mxu0 0.0
      %2658 = vmatmul.mubr.f32.gmra.mrb[0].mxu0 %v2553
      %v2659 = vpop.f32.mrb[0].mxu0
      %v2660 = vadd.f32 0.0, %v2659
      %v2661 = vpop.f32.mrb[0].mxu0
      %2662 = vdwg.mxu0
      %v2663 = vadd.f32 %v2542, %v2625
      %v2664 = vadd.f32 %v2543, %v2630
      %v2665 = vadd.f32 %v2544, %v2635
      %v2666 = vadd.f32 %v2545, %v2640
      %v2667 = vadd.f32 %v2546, %v2645
      %v2668 = vadd.f32 %v2547, %v2650
      %v2669 = vadd.f32 %v2548, %v2655
      %v2670 = vadd.f32 %v2549, %v2660
      %v2672 = vrot.slane %v485, 1
      %v2673 = vrot.slane %v486, 1
      %v2674 = vsel %vm544, %v2672, %v2673
      %s2675 = scalar_lea.vmem %s3, 64
      %v2676 = vld [vmem:[%s2675] sm:$0xf]
      %v2677 = vsel %vm571, %v2674, 0
      %v2680 = vsel %vm588, %v2676, 0
      %2682 = vmatprep.subr.mxu0 0.0
      %2683 = vmatpush1.msra.mxu0 %v2680
      %2684 = vmatprep.subr.mxu0 0.0
      %2685 = vmatpush1.msra.mxu0 0.0
      %2686 = vmatprep.subr.mxu0 0.0
      %2687 = vmatpush1.msra.mxu0 0.0
      %2688 = vmatprep.subr.mxu0 0.0
      %2689 = vmatpush1.msra.mxu0 0.0
      %2690 = vmatprep.subr.mxu0 0.0
      %2691 = vmatpush1.msra.mxu0 0.0
      %2692 = vmatprep.subr.mxu0 0.0
      %2693 = vmatpush1.msra.mxu0 0.0
      %2694 = vmatprep.subr.mxu0 0.0
      %2695 = vmatpush1.msra.mxu0 0.0
      %2696 = vmatprep.subr.mxu0 0.0
      %2697 = vmatpush1.msra.mxu0 0.0
      %2698 = vmatprep.subr.mxu0 0.0
      %2699 = vmatpush1.msra.mxu0 0.0
      %2700 = vmatprep.subr.mxu0 0.0
      %2701 = vmatpush1.msra.mxu0 0.0
      %2702 = vmatprep.subr.mxu0 0.0
      %2703 = vmatpush1.msra.mxu0 0.0
      %2704 = vmatprep.subr.mxu0 0.0
      %2705 = vmatpush1.msra.mxu0 0.0
      %2706 = vmatprep.subr.mxu0 0.0
      %2707 = vmatpush1.msra.mxu0 0.0
      %2708 = vmatprep.subr.mxu0 0.0
      %2709 = vmatpush1.msra.mxu0 0.0
      %2710 = vmatprep.subr.mxu0 0.0
      %2711 = vmatpush1.msra.mxu0 0.0
      %2712 = vmatprep.subr.mxu0 0.0
      %2713 = vmatpush1.msra.mxu0 0.0
      %2714 = vmatprep.subr.mxu0 0.0
      %2715 = vmatpush1.msra.mxu0 0.0
      %2716 = vmatprep.subr.mxu0 0.0
      %2717 = vmatpush1.msra.mxu0 0.0
      %2718 = vmatprep.subr.mxu0 0.0
      %2719 = vmatpush1.msra.mxu0 0.0
      %2720 = vmatprep.subr.mxu0 0.0
      %2721 = vmatpush1.msra.mxu0 0.0
      %2722 = vmatprep.subr.mxu0 0.0
      %2723 = vmatpush1.msra.mxu0 0.0
      %2724 = vmatprep.subr.mxu0 0.0
      %2725 = vmatpush1.msra.mxu0 0.0
      %2726 = vmatprep.subr.mxu0 0.0
      %2727 = vmatpush1.msra.mxu0 0.0
      %2728 = vmatprep.subr.mxu0 0.0
      %2729 = vmatpush1.msra.mxu0 0.0
      %2730 = vmatprep.subr.mxu0 0.0
      %2731 = vmatpush1.msra.mxu0 0.0
      %2732 = vmatprep.subr.mxu0 0.0
      %2733 = vmatpush1.msra.mxu0 0.0
      %2734 = vmatprep.subr.mxu0 0.0
      %2735 = vmatpush1.msra.mxu0 0.0
      %2736 = vmatprep.subr.mxu0 0.0
      %2737 = vmatpush1.msra.mxu0 0.0
      %2738 = vmatprep.subr.mxu0 0.0
      %2739 = vmatpush1.msra.mxu0 0.0
      %2740 = vmatprep.subr.mxu0 0.0
      %2741 = vmatpush1.msra.mxu0 0.0
      %2742 = vmatprep.subr.mxu0 0.0
      %2743 = vmatpush1.msra.mxu0 0.0
      %2744 = vmatprep.subr.mxu0 0.0
      %2745 = vmatpush1.msra.mxu0 0.0
      %2746 = vmatprep.mubr.f32.mxu0 0.0
      %2747 = vmatmul.mubr.f32.gmra.mrb[0].mxu0 %v1896
      %v2748 = vpop.f32.mrb[0].mxu0
      %v2749 = vadd.f32 0.0, %v2748
      %v2750 = vpop.f32.mrb[0].mxu0
      %2751 = vmatprep.mubr.f32.mxu0 0.0
      %2752 = vmatmul.mubr.f32.gmra.mrb[0].mxu0 %v1898
      %v2753 = vpop.f32.mrb[0].mxu0
      %v2754 = vadd.f32 0.0, %v2753
      %v2755 = vpop.f32.mrb[0].mxu0
      %2756 = vmatprep.mubr.f32.mxu0 0.0
      %2757 = vmatmul.mubr.f32.gmra.mrb[0].mxu0 %v1900
      %v2758 = vpop.f32.mrb[0].mxu0
      %v2759 = vadd.f32 0.0, %v2758
      %v2760 = vpop.f32.mrb[0].mxu0
      %2761 = vmatprep.mubr.f32.mxu0 0.0
      %2762 = vmatmul.mubr.f32.gmra.mrb[0].mxu0 %v1902
      %v2763 = vpop.f32.mrb[0].mxu0
      %v2764 = vadd.f32 0.0, %v2763
      %v2765 = vpop.f32.mrb[0].mxu0
      %2766 = vmatprep.mubr.f32.mxu0 0.0
      %2767 = vmatmul.mubr.f32.gmra.mrb[0].mxu0 %v1904
      %v2768 = vpop.f32.mrb[0].mxu0
      %v2769 = vadd.f32 0.0, %v2768
      %v2770 = vpop.f32.mrb[0].mxu0
      %2771 = vmatprep.mubr.f32.mxu0 0.0
      %2772 = vmatmul.mubr.f32.gmra.mrb[0].mxu0 %v1906
      %v2773 = vpop.f32.mrb[0].mxu0
      %v2774 = vadd.f32 0.0, %v2773
      %v2775 = vpop.f32.mrb[0].mxu0
      %2776 = vmatprep.mubr.f32.mxu0 0.0
      %2777 = vmatmul.mubr.f32.gmra.mrb[0].mxu0 %v2309
      %v2778 = vpop.f32.mrb[0].mxu0
      %v2779 = vadd.f32 0.0, %v2778
      %v2780 = vpop.f32.mrb[0].mxu0
      %2781 = vmatprep.mubr.f32.mxu0 0.0
      %2782 = vmatmul.mubr.f32.gmra.mrb[0].mxu0 %v2677
      %v2783 = vpop.f32.mrb[0].mxu0
      %v2784 = vadd.f32 0.0, %v2783
      %v2785 = vpop.f32.mrb[0].mxu0
      %2786 = vdwg.mxu0
      %v2787 = vadd.f32 %v2663, %v2749
      %v2788 = vadd.f32 %v2664, %v2754
      %v2789 = vadd.f32 %v2665, %v2759
      %v2790 = vadd.f32 %v2666, %v2764
      %v2791 = vadd.f32 %v2667, %v2769
      %v2792 = vadd.f32 %v2668, %v2774
      %v2793 = vadd.f32 %v2669, %v2779
      %v2794 = vadd.f32 %v2670, %v2784
      %v2795 = vrot.slane %v485, 2
      %v2796 = vrot.slane %v486, 2
      %v2797 = vsel %vm821, %v2795, %v2796
      %s2798 = scalar_lea.vmem %s3, 68
      %v2799 = vld [vmem:[%s2798] sm:$0xf]
      %v2800 = vsel %vm571, %v2797, 0
      %v2803 = vsel %vm588, %v2799, 0
      %2805 = vmatprep.subr.mxu0 0.0
      %2806 = vmatpush1.msra.mxu0 %v2803
      %2807 = vmatprep.subr.mxu0 0.0
      %2808 = vmatpush1.msra.mxu0 0.0
      %2809 = vmatprep.subr.mxu0 0.0
      %2810 = vmatpush1.msra.mxu0 0.0
      %2811 = vmatprep.subr.mxu0 0.0
      %2812 = vmatpush1.msra.mxu0 0.0
      %2813 = vmatprep.subr.mxu0 0.0
      %2814 = vmatpush1.msra.mxu0 0.0
      %2815 = vmatprep.subr.mxu0 0.0
      %2816 = vmatpush1.msra.mxu0 0.0
      %2817 = vmatprep.subr.mxu0 0.0
      %2818 = vmatpush1.msra.mxu0 0.0
      %2819 = vmatprep.subr.mxu0 0.0
      %2820 = vmatpush1.msra.mxu0 0.0
      %2821 = vmatprep.subr.mxu0 0.0
      %2822 = vmatpush1.msra.mxu0 0.0
      %2823 = vmatprep.subr.mxu0 0.0
      %2824 = vmatpush1.msra.mxu0 0.0
      %2825 = vmatprep.subr.mxu0 0.0
      %2826 = vmatpush1.msra.mxu0 0.0
      %2827 = vmatprep.subr.mxu0 0.0
      %2828 = vmatpush1.msra.mxu0 0.0
      %2829 = vmatprep.subr.mxu0 0.0
      %2830 = vmatpush1.msra.mxu0 0.0
      %2831 = vmatprep.subr.mxu0 0.0
      %2832 = vmatpush1.msra.mxu0 0.0
      %2833 = vmatprep.subr.mxu0 0.0
      %2834 = vmatpush1.msra.mxu0 0.0
      %2835 = vmatprep.subr.mxu0 0.0
      %2836 = vmatpush1.msra.mxu0 0.0
      %2837 = vmatprep.subr.mxu0 0.0
      %2838 = vmatpush1.msra.mxu0 0.0
      %2839 = vmatprep.subr.mxu0 0.0
      %2840 = vmatpush1.msra.mxu0 0.0
      %2841 = vmatprep.subr.mxu0 0.0
      %2842 = vmatpush1.msra.mxu0 0.0
      %2843 = vmatprep.subr.mxu0 0.0
      %2844 = vmatpush1.msra.mxu0 0.0
      %2845 = vmatprep.subr.mxu0 0.0
      %2846 = vmatpush1.msra.mxu0 0.0
      %2847 = vmatprep.subr.mxu0 0.0
      %2848 = vmatpush1.msra.mxu0 0.0
      %2849 = vmatprep.subr.mxu0 0.0
      %2850 = vmatpush1.msra.mxu0 0.0
      %2851 = vmatprep.subr.mxu0 0.0
      %2852 = vmatpush1.msra.mxu0 0.0
      %2853 = vmatprep.subr.mxu0 0.0
      %2854 = vmatpush1.msra.mxu0 0.0
      %2855 = vmatprep.subr.mxu0 0.0
      %2856 = vmatpush1.msra.mxu0 0.0
      %2857 = vmatprep.subr.mxu0 0.0
      %2858 = vmatpush1.msra.mxu0 0.0
      %2859 = vmatprep.subr.mxu0 0.0
      %2860 = vmatpush1.msra.mxu0 0.0
      %2861 = vmatprep.subr.mxu0 0.0
      %2862 = vmatpush1.msra.mxu0 0.0
      %2863 = vmatprep.subr.mxu0 0.0
      %2864 = vmatpush1.msra.mxu0 0.0
      %2865 = vmatprep.subr.mxu0 0.0
      %2866 = vmatpush1.msra.mxu0 0.0
      %2867 = vmatprep.subr.mxu0 0.0
      %2868 = vmatpush1.msra.mxu0 0.0
      %2869 = vmatprep.mubr.f32.mxu0 0.0
      %2870 = vmatmul.mubr.f32.gmra.mrb[0].mxu0 %v2054
      %v2871 = vpop.f32.mrb[0].mxu0
      %v2872 = vadd.f32 0.0, %v2871
      %v2873 = vpop.f32.mrb[0].mxu0
      %2874 = vmatprep.mubr.f32.mxu0 0.0
      %2875 = vmatmul.mubr.f32.gmra.mrb[0].mxu0 %v2056
      %v2876 = vpop.f32.mrb[0].mxu0
      %v2877 = vadd.f32 0.0, %v2876
      %v2878 = vpop.f32.mrb[0].mxu0
      %2879 = vmatprep.mubr.f32.mxu0 0.0
      %2880 = vmatmul.mubr.f32.gmra.mrb[0].mxu0 %v2058
      %v2881 = vpop.f32.mrb[0].mxu0
      %v2882 = vadd.f32 0.0, %v2881
      %v2883 = vpop.f32.mrb[0].mxu0
      %2884 = vmatprep.mubr.f32.mxu0 0.0
      %2885 = vmatmul.mubr.f32.gmra.mrb[0].mxu0 %v2060
      %v2886 = vpop.f32.mrb[0].mxu0
      %v2887 = vadd.f32 0.0, %v2886
      %v2888 = vpop.f32.mrb[0].mxu0
      %2889 = vmatprep.mubr.f32.mxu0 0.0
      %2890 = vmatmul.mubr.f32.gmra.mrb[0].mxu0 %v2062
      %v2891 = vpop.f32.mrb[0].mxu0
      %v2892 = vadd.f32 0.0, %v2891
      %v2893 = vpop.f32.mrb[0].mxu0
      %2894 = vmatprep.mubr.f32.mxu0 0.0
      %2895 = vmatmul.mubr.f32.gmra.mrb[0].mxu0 %v2064
      %v2896 = vpop.f32.mrb[0].mxu0
      %v2897 = vadd.f32 0.0, %v2896
      %v2898 = vpop.f32.mrb[0].mxu0
      %2899 = vmatprep.mubr.f32.mxu0 0.0
      %2900 = vmatmul.mubr.f32.gmra.mrb[0].mxu0 %v2432
      %v2901 = vpop.f32.mrb[0].mxu0
      %v2902 = vadd.f32 0.0, %v2901
      %v2903 = vpop.f32.mrb[0].mxu0
      %2904 = vmatprep.mubr.f32.mxu0 0.0
      %2905 = vmatmul.mubr.f32.gmra.mrb[0].mxu0 %v2800
      %v2906 = vpop.f32.mrb[0].mxu0
      %v2907 = vadd.f32 0.0, %v2906
      %v2908 = vpop.f32.mrb[0].mxu0
      %2909 = vdwg.mxu0
      %v2910 = vadd.f32 %v2787, %v2872
      %v2911 = vadd.f32 %v2788, %v2877
      %v2912 = vadd.f32 %v2789, %v2882
      %v2913 = vadd.f32 %v2790, %v2887
      %v2914 = vadd.f32 %v2791, %v2892
      %v2915 = vadd.f32 %v2792, %v2897
      %v2916 = vadd.f32 %v2793, %v2902
      %v2917 = vadd.f32 %v2794, %v2907
      %s2918 = scalar_lea.vmem %s3, 72
      %v2919 = vld [vmem:[%s2918] sm:$0xf]
      %v2921 = vsel %vm571, %v507, 0
      %v2924 = vsel %vm571, %v509, 0
      %v2927 = vsel %vm571, %v511, 0
      %v2930 = vsel %vm571, %v513, 0
      %v2933 = vsel %vm571, %v515, 0
      %v2936 = vsel %vm571, %v517, 0
      %v2939 = vsel %vm571, %v519, 0
      %v2942 = vsel %vm571, %v521, 0
      %v2945 = vsel %vm588, %v2919, 0
      %2947 = vmatprep.subr.mxu0 0.0
      %2948 = vmatpush1.msra.mxu0 %v2945
      %2949 = vmatprep.subr.mxu0 0.0
      %2950 = vmatpush1.msra.mxu0 0.0
      %2951 = vmatprep.subr.mxu0 0.0
      %2952 = vmatpush1.msra.mxu0 0.0
      %2953 = vmatprep.subr.mxu0 0.0
      %2954 = vmatpush1.msra.mxu0 0.0
      %2955 = vmatprep.subr.mxu0 0.0
      %2956 = vmatpush1.msra.mxu0 0.0
      %2957 = vmatprep.subr.mxu0 0.0
      %2958 = vmatpush1.msra.mxu0 0.0
      %2959 = vmatprep.subr.mxu0 0.0
      %2960 = vmatpush1.msra.mxu0 0.0
      %2961 = vmatprep.subr.mxu0 0.0
      %2962 = vmatpush1.msra.mxu0 0.0
      %2963 = vmatprep.subr.mxu0 0.0
      %2964 = vmatpush1.msra.mxu0 0.0
      %2965 = vmatprep.subr.mxu0 0.0
      %2966 = vmatpush1.msra.mxu0 0.0
      %2967 = vmatprep.subr.mxu0 0.0
      %2968 = vmatpush1.msra.mxu0 0.0
      %2969 = vmatprep.subr.mxu0 0.0
      %2970 = vmatpush1.msra.mxu0 0.0
      %2971 = vmatprep.subr.mxu0 0.0
      %2972 = vmatpush1.msra.mxu0 0.0
      %2973 = vmatprep.subr.mxu0 0.0
      %2974 = vmatpush1.msra.mxu0 0.0
      %2975 = vmatprep.subr.mxu0 0.0
      %2976 = vmatpush1.msra.mxu0 0.0
      %2977 = vmatprep.subr.mxu0 0.0
      %2978 = vmatpush1.msra.mxu0 0.0
      %2979 = vmatprep.subr.mxu0 0.0
      %2980 = vmatpush1.msra.mxu0 0.0
      %2981 = vmatprep.subr.mxu0 0.0
      %2982 = vmatpush1.msra.mxu0 0.0
      %2983 = vmatprep.subr.mxu0 0.0
      %2984 = vmatpush1.msra.mxu0 0.0
      %2985 = vmatprep.subr.mxu0 0.0
      %2986 = vmatpush1.msra.mxu0 0.0
      %2987 = vmatprep.subr.mxu0 0.0
      %2988 = vmatpush1.msra.mxu0 0.0
      %2989 = vmatprep.subr.mxu0 0.0
      %2990 = vmatpush1.msra.mxu0 0.0
      %2991 = vmatprep.subr.mxu0 0.0
      %2992 = vmatpush1.msra.mxu0 0.0
      %2993 = vmatprep.subr.mxu0 0.0
      %2994 = vmatpush1.msra.mxu0 0.0
      %2995 = vmatprep.subr.mxu0 0.0
      %2996 = vmatpush1.msra.mxu0 0.0
      %2997 = vmatprep.subr.mxu0 0.0
      %2998 = vmatpush1.msra.mxu0 0.0
      %2999 = vmatprep.subr.mxu0 0.0
      %3000 = vmatpush1.msra.mxu0 0.0
      %3001 = vmatprep.subr.mxu0 0.0
      %3002 = vmatpush1.msra.mxu0 0.0
      %3003 = vmatprep.subr.mxu0 0.0
      %3004 = vmatpush1.msra.mxu0 0.0
      %3005 = vmatprep.subr.mxu0 0.0
      %3006 = vmatpush1.msra.mxu0 0.0
      %3007 = vmatprep.subr.mxu0 0.0
      %3008 = vmatpush1.msra.mxu0 0.0
      %3009 = vmatprep.subr.mxu0 0.0
      %3010 = vmatpush1.msra.mxu0 0.0
      %3011 = vmatprep.mubr.f32.mxu0 0.0
      %3012 = vmatmul.mubr.f32.gmra.mrb[0].mxu0 %v2921
      %v3013 = vpop.f32.mrb[0].mxu0
      %v3014 = vadd.f32 0.0, %v3013
      %v3015 = vpop.f32.mrb[0].mxu0
      %3016 = vmatprep.mubr.f32.mxu0 0.0
      %3017 = vmatmul.mubr.f32.gmra.mrb[0].mxu0 %v2924
      %v3018 = vpop.f32.mrb[0].mxu0
      %v3019 = vadd.f32 0.0, %v3018
      %v3020 = vpop.f32.mrb[0].mxu0
      %3021 = vmatprep.mubr.f32.mxu0 0.0
      %3022 = vmatmul.mubr.f32.gmra.mrb[0].mxu0 %v2927
      %v3023 = vpop.f32.mrb[0].mxu0
      %v3024 = vadd.f32 0.0, %v3023
      %v3025 = vpop.f32.mrb[0].mxu0
      %3026 = vmatprep.mubr.f32.mxu0 0.0
      %3027 = vmatmul.mubr.f32.gmra.mrb[0].mxu0 %v2930
      %v3028 = vpop.f32.mrb[0].mxu0
      %v3029 = vadd.f32 0.0, %v3028
      %v3030 = vpop.f32.mrb[0].mxu0
      %3031 = vmatprep.mubr.f32.mxu0 0.0
      %3032 = vmatmul.mubr.f32.gmra.mrb[0].mxu0 %v2933
      %v3033 = vpop.f32.mrb[0].mxu0
      %v3034 = vadd.f32 0.0, %v3033
      %v3035 = vpop.f32.mrb[0].mxu0
      %3036 = vmatprep.mubr.f32.mxu0 0.0
      %3037 = vmatmul.mubr.f32.gmra.mrb[0].mxu0 %v2936
      %v3038 = vpop.f32.mrb[0].mxu0
      %v3039 = vadd.f32 0.0, %v3038
      %v3040 = vpop.f32.mrb[0].mxu0
      %3041 = vmatprep.mubr.f32.mxu0 0.0
      %3042 = vmatmul.mubr.f32.gmra.mrb[0].mxu0 %v2939
      %v3043 = vpop.f32.mrb[0].mxu0
      %v3044 = vadd.f32 0.0, %v3043
      %v3045 = vpop.f32.mrb[0].mxu0
      %3046 = vmatprep.mubr.f32.mxu0 0.0
      %3047 = vmatmul.mubr.f32.gmra.mrb[0].mxu0 %v2942
      %v3048 = vpop.f32.mrb[0].mxu0
      %v3049 = vadd.f32 0.0, %v3048
      %v3050 = vpop.f32.mrb[0].mxu0
      %3051 = vdwg.mxu0
      %v3052 = vadd.f32 %v2910, %v3014
      %v3053 = vadd.f32 %v2911, %v3019
      %v3054 = vadd.f32 %v2912, %v3024
      %v3055 = vadd.f32 %v2913, %v3029
      %v3056 = vadd.f32 %v2914, %v3034
      %v3057 = vadd.f32 %v2915, %v3039
      %v3058 = vadd.f32 %v2916, %v3044
      %v3059 = vadd.f32 %v2917, %v3049
      %v3068 = vrot.slane %v507, 1
      %v3069 = vrot.slane %v508, 1
      %v3070 = vsel %vm544, %v3068, %v3069
      %v3071 = vrot.slane %v509, 1
      %v3072 = vrot.slane %v510, 1
      %v3073 = vsel %vm544, %v3071, %v3072
      %v3074 = vrot.slane %v511, 1
      %v3075 = vrot.slane %v512, 1
      %v3076 = vsel %vm544, %v3074, %v3075
      %v3077 = vrot.slane %v513, 1
      %v3078 = vrot.slane %v514, 1
      %v3079 = vsel %vm544, %v3077, %v3078
      %v3080 = vrot.slane %v515, 1
      %v3081 = vrot.slane %v516, 1
      %v3082 = vsel %vm544, %v3080, %v3081
      %v3083 = vrot.slane %v517, 1
      %v3084 = vrot.slane %v518, 1
      %v3085 = vsel %vm544, %v3083, %v3084
      %v3086 = vrot.slane %v519, 1
      %v3087 = vrot.slane %v520, 1
      %v3088 = vsel %vm544, %v3086, %v3087
      %v3089 = vrot.slane %v521, 1
      %v3090 = vrot.slane %v522, 1
      %v3091 = vsel %vm544, %v3089, %v3090
      %s3092 = scalar_lea.vmem %s3, 76
      %v3093 = vld [vmem:[%s3092] sm:$0xf]
      %v3094 = vsel %vm571, %v3070, 0
      %v3096 = vsel %vm571, %v3073, 0
      %v3098 = vsel %vm571, %v3076, 0
      %v3100 = vsel %vm571, %v3079, 0
      %v3102 = vsel %vm571, %v3082, 0
      %v3104 = vsel %vm571, %v3085, 0
      %v3106 = vsel %vm571, %v3088, 0
      %v3108 = vsel %vm571, %v3091, 0
      %v3111 = vsel %vm588, %v3093, 0
      %3113 = vmatprep.subr.mxu0 0.0
      %3114 = vmatpush1.msra.mxu0 %v3111
      %3115 = vmatprep.subr.mxu0 0.0
      %3116 = vmatpush1.msra.mxu0 0.0
      %3117 = vmatprep.subr.mxu0 0.0
      %3118 = vmatpush1.msra.mxu0 0.0
      %3119 = vmatprep.subr.mxu0 0.0
      %3120 = vmatpush1.msra.mxu0 0.0
      %3121 = vmatprep.subr.mxu0 0.0
      %3122 = vmatpush1.msra.mxu0 0.0
      %3123 = vmatprep.subr.mxu0 0.0
      %3124 = vmatpush1.msra.mxu0 0.0
      %3125 = vmatprep.subr.mxu0 0.0
      %3126 = vmatpush1.msra.mxu0 0.0
      %3127 = vmatprep.subr.mxu0 0.0
      %3128 = vmatpush1.msra.mxu0 0.0
      %3129 = vmatprep.subr.mxu0 0.0
      %3130 = vmatpush1.msra.mxu0 0.0
      %3131 = vmatprep.subr.mxu0 0.0
      %3132 = vmatpush1.msra.mxu0 0.0
      %3133 = vmatprep.subr.mxu0 0.0
      %3134 = vmatpush1.msra.mxu0 0.0
      %3135 = vmatprep.subr.mxu0 0.0
      %3136 = vmatpush1.msra.mxu0 0.0
      %3137 = vmatprep.subr.mxu0 0.0
      %3138 = vmatpush1.msra.mxu0 0.0
      %3139 = vmatprep.subr.mxu0 0.0
      %3140 = vmatpush1.msra.mxu0 0.0
      %3141 = vmatprep.subr.mxu0 0.0
      %3142 = vmatpush1.msra.mxu0 0.0
      %3143 = vmatprep.subr.mxu0 0.0
      %3144 = vmatpush1.msra.mxu0 0.0
      %3145 = vmatprep.subr.mxu0 0.0
      %3146 = vmatpush1.msra.mxu0 0.0
      %3147 = vmatprep.subr.mxu0 0.0
      %3148 = vmatpush1.msra.mxu0 0.0
      %3149 = vmatprep.subr.mxu0 0.0
      %3150 = vmatpush1.msra.mxu0 0.0
      %3151 = vmatprep.subr.mxu0 0.0
      %3152 = vmatpush1.msra.mxu0 0.0
      %3153 = vmatprep.subr.mxu0 0.0
      %3154 = vmatpush1.msra.mxu0 0.0
      %3155 = vmatprep.subr.mxu0 0.0
      %3156 = vmatpush1.msra.mxu0 0.0
      %3157 = vmatprep.subr.mxu0 0.0
      %3158 = vmatpush1.msra.mxu0 0.0
      %3159 = vmatprep.subr.mxu0 0.0
      %3160 = vmatpush1.msra.mxu0 0.0
      %3161 = vmatprep.subr.mxu0 0.0
      %3162 = vmatpush1.msra.mxu0 0.0
      %3163 = vmatprep.subr.mxu0 0.0
      %3164 = vmatpush1.msra.mxu0 0.0
      %3165 = vmatprep.subr.mxu0 0.0
      %3166 = vmatpush1.msra.mxu0 0.0
      %3167 = vmatprep.subr.mxu0 0.0
      %3168 = vmatpush1.msra.mxu0 0.0
      %3169 = vmatprep.subr.mxu0 0.0
      %3170 = vmatpush1.msra.mxu0 0.0
      %3171 = vmatprep.subr.mxu0 0.0
      %3172 = vmatpush1.msra.mxu0 0.0
      %3173 = vmatprep.subr.mxu0 0.0
      %3174 = vmatpush1.msra.mxu0 0.0
      %3175 = vmatprep.subr.mxu0 0.0
      %3176 = vmatpush1.msra.mxu0 0.0
      %3177 = vmatprep.mubr.f32.mxu0 0.0
      %3178 = vmatmul.mubr.f32.gmra.mrb[0].mxu0 %v3094
      %v3179 = vpop.f32.mrb[0].mxu0
      %v3180 = vadd.f32 0.0, %v3179
      %v3181 = vpop.f32.mrb[0].mxu0
      %3182 = vmatprep.mubr.f32.mxu0 0.0
      %3183 = vmatmul.mubr.f32.gmra.mrb[0].mxu0 %v3096
      %v3184 = vpop.f32.mrb[0].mxu0
      %v3185 = vadd.f32 0.0, %v3184
      %v3186 = vpop.f32.mrb[0].mxu0
      %3187 = vmatprep.mubr.f32.mxu0 0.0
      %3188 = vmatmul.mubr.f32.gmra.mrb[0].mxu0 %v3098
      %v3189 = vpop.f32.mrb[0].mxu0
      %v3190 = vadd.f32 0.0, %v3189
      %v3191 = vpop.f32.mrb[0].mxu0
      %3192 = vmatprep.mubr.f32.mxu0 0.0
      %3193 = vmatmul.mubr.f32.gmra.mrb[0].mxu0 %v3100
      %v3194 = vpop.f32.mrb[0].mxu0
      %v3195 = vadd.f32 0.0, %v3194
      %v3196 = vpop.f32.mrb[0].mxu0
      %3197 = vmatprep.mubr.f32.mxu0 0.0
      %3198 = vmatmul.mubr.f32.gmra.mrb[0].mxu0 %v3102
      %v3199 = vpop.f32.mrb[0].mxu0
      %v3200 = vadd.f32 0.0, %v3199
      %v3201 = vpop.f32.mrb[0].mxu0
      %3202 = vmatprep.mubr.f32.mxu0 0.0
      %3203 = vmatmul.mubr.f32.gmra.mrb[0].mxu0 %v3104
      %v3204 = vpop.f32.mrb[0].mxu0
      %v3205 = vadd.f32 0.0, %v3204
      %v3206 = vpop.f32.mrb[0].mxu0
      %3207 = vmatprep.mubr.f32.mxu0 0.0
      %3208 = vmatmul.mubr.f32.gmra.mrb[0].mxu0 %v3106
      %v3209 = vpop.f32.mrb[0].mxu0
      %v3210 = vadd.f32 0.0, %v3209
      %v3211 = vpop.f32.mrb[0].mxu0
      %3212 = vmatprep.mubr.f32.mxu0 0.0
      %3213 = vmatmul.mubr.f32.gmra.mrb[0].mxu0 %v3108
      %v3214 = vpop.f32.mrb[0].mxu0
      %v3215 = vadd.f32 0.0, %v3214
      %v3216 = vpop.f32.mrb[0].mxu0
      %3217 = vdwg.mxu0
      %v3218 = vadd.f32 %v3052, %v3180
      %v3219 = vadd.f32 %v3053, %v3185
      %v3220 = vadd.f32 %v3054, %v3190
      %v3221 = vadd.f32 %v3055, %v3195
      %v3222 = vadd.f32 %v3056, %v3200
      %v3223 = vadd.f32 %v3057, %v3205
      %v3224 = vadd.f32 %v3058, %v3210
      %v3225 = vadd.f32 %v3059, %v3215
      %v3226 = vrot.slane %v507, 2
      %v3227 = vrot.slane %v508, 2
      %v3228 = vsel %vm821, %v3226, %v3227
      %v3229 = vrot.slane %v509, 2
      %v3230 = vrot.slane %v510, 2
      %v3231 = vsel %vm821, %v3229, %v3230
      %v3232 = vrot.slane %v511, 2
      %v3233 = vrot.slane %v512, 2
      %v3234 = vsel %vm821, %v3232, %v3233
      %v3235 = vrot.slane %v513, 2
      %v3236 = vrot.slane %v514, 2
      %v3237 = vsel %vm821, %v3235, %v3236
      %v3238 = vrot.slane %v515, 2
      %v3239 = vrot.slane %v516, 2
      %v3240 = vsel %vm821, %v3238, %v3239
      %v3241 = vrot.slane %v517, 2
      %v3242 = vrot.slane %v518, 2
      %v3243 = vsel %vm821, %v3241, %v3242
      %v3244 = vrot.slane %v519, 2
      %v3245 = vrot.slane %v520, 2
      %v3246 = vsel %vm821, %v3244, %v3245
      %v3247 = vrot.slane %v521, 2
      %v3248 = vrot.slane %v522, 2
      %v3249 = vsel %vm821, %v3247, %v3248
      %s3250 = scalar_lea.vmem %s3, 80
      %v3251 = vld [vmem:[%s3250] sm:$0xf]
      %v3252 = vsel %vm571, %v3228, 0
      %v3254 = vsel %vm571, %v3231, 0
      %v3256 = vsel %vm571, %v3234, 0
      %v3258 = vsel %vm571, %v3237, 0
      %v3260 = vsel %vm571, %v3240, 0
      %v3262 = vsel %vm571, %v3243, 0
      %v3264 = vsel %vm571, %v3246, 0
      %v3266 = vsel %vm571, %v3249, 0
      %v3269 = vsel %vm588, %v3251, 0
      %3271 = vmatprep.subr.mxu0 0.0
      %3272 = vmatpush1.msra.mxu0 %v3269
      %3273 = vmatprep.subr.mxu0 0.0
      %3274 = vmatpush1.msra.mxu0 0.0
      %3275 = vmatprep.subr.mxu0 0.0
      %3276 = vmatpush1.msra.mxu0 0.0
      %3277 = vmatprep.subr.mxu0 0.0
      %3278 = vmatpush1.msra.mxu0 0.0
      %3279 = vmatprep.subr.mxu0 0.0
      %3280 = vmatpush1.msra.mxu0 0.0
      %3281 = vmatprep.subr.mxu0 0.0
      %3282 = vmatpush1.msra.mxu0 0.0
      %3283 = vmatprep.subr.mxu0 0.0
      %3284 = vmatpush1.msra.mxu0 0.0
      %3285 = vmatprep.subr.mxu0 0.0
      %3286 = vmatpush1.msra.mxu0 0.0
      %3287 = vmatprep.subr.mxu0 0.0
      %3288 = vmatpush1.msra.mxu0 0.0
      %3289 = vmatprep.subr.mxu0 0.0
      %3290 = vmatpush1.msra.mxu0 0.0
      %3291 = vmatprep.subr.mxu0 0.0
      %3292 = vmatpush1.msra.mxu0 0.0
      %3293 = vmatprep.subr.mxu0 0.0
      %3294 = vmatpush1.msra.mxu0 0.0
      %3295 = vmatprep.subr.mxu0 0.0
      %3296 = vmatpush1.msra.mxu0 0.0
      %3297 = vmatprep.subr.mxu0 0.0
      %3298 = vmatpush1.msra.mxu0 0.0
      %3299 = vmatprep.subr.mxu0 0.0
      %3300 = vmatpush1.msra.mxu0 0.0
      %3301 = vmatprep.subr.mxu0 0.0
      %3302 = vmatpush1.msra.mxu0 0.0
      %3303 = vmatprep.subr.mxu0 0.0
      %3304 = vmatpush1.msra.mxu0 0.0
      %3305 = vmatprep.subr.mxu0 0.0
      %3306 = vmatpush1.msra.mxu0 0.0
      %3307 = vmatprep.subr.mxu0 0.0
      %3308 = vmatpush1.msra.mxu0 0.0
      %3309 = vmatprep.subr.mxu0 0.0
      %3310 = vmatpush1.msra.mxu0 0.0
      %3311 = vmatprep.subr.mxu0 0.0
      %3312 = vmatpush1.msra.mxu0 0.0
      %3313 = vmatprep.subr.mxu0 0.0
      %3314 = vmatpush1.msra.mxu0 0.0
      %3315 = vmatprep.subr.mxu0 0.0
      %3316 = vmatpush1.msra.mxu0 0.0
      %3317 = vmatprep.subr.mxu0 0.0
      %3318 = vmatpush1.msra.mxu0 0.0
      %3319 = vmatprep.subr.mxu0 0.0
      %3320 = vmatpush1.msra.mxu0 0.0
      %3321 = vmatprep.subr.mxu0 0.0
      %3322 = vmatpush1.msra.mxu0 0.0
      %3323 = vmatprep.subr.mxu0 0.0
      %3324 = vmatpush1.msra.mxu0 0.0
      %3325 = vmatprep.subr.mxu0 0.0
      %3326 = vmatpush1.msra.mxu0 0.0
      %3327 = vmatprep.subr.mxu0 0.0
      %3328 = vmatpush1.msra.mxu0 0.0
      %3329 = vmatprep.subr.mxu0 0.0
      %3330 = vmatpush1.msra.mxu0 0.0
      %3331 = vmatprep.subr.mxu0 0.0
      %3332 = vmatpush1.msra.mxu0 0.0
      %3333 = vmatprep.subr.mxu0 0.0
      %3334 = vmatpush1.msra.mxu0 0.0
      %3335 = vmatprep.mubr.f32.mxu0 0.0
      %3336 = vmatmul.mubr.f32.gmra.mrb[0].mxu0 %v3252
      %v3337 = vpop.f32.mrb[0].mxu0
      %v3338 = vadd.f32 0.0, %v3337
      %v3339 = vpop.f32.mrb[0].mxu0
      %3340 = vmatprep.mubr.f32.mxu0 0.0
      %3341 = vmatmul.mubr.f32.gmra.mrb[0].mxu0 %v3254
      %v3342 = vpop.f32.mrb[0].mxu0
      %v3343 = vadd.f32 0.0, %v3342
      %v3344 = vpop.f32.mrb[0].mxu0
      %3345 = vmatprep.mubr.f32.mxu0 0.0
      %3346 = vmatmul.mubr.f32.gmra.mrb[0].mxu0 %v3256
      %v3347 = vpop.f32.mrb[0].mxu0
      %v3348 = vadd.f32 0.0, %v3347
      %v3349 = vpop.f32.mrb[0].mxu0
      %3350 = vmatprep.mubr.f32.mxu0 0.0
      %3351 = vmatmul.mubr.f32.gmra.mrb[0].mxu0 %v3258
      %v3352 = vpop.f32.mrb[0].mxu0
      %v3353 = vadd.f32 0.0, %v3352
      %v3354 = vpop.f32.mrb[0].mxu0
      %3355 = vmatprep.mubr.f32.mxu0 0.0
      %3356 = vmatmul.mubr.f32.gmra.mrb[0].mxu0 %v3260
      %v3357 = vpop.f32.mrb[0].mxu0
      %v3358 = vadd.f32 0.0, %v3357
      %v3359 = vpop.f32.mrb[0].mxu0
      %3360 = vmatprep.mubr.f32.mxu0 0.0
      %3361 = vmatmul.mubr.f32.gmra.mrb[0].mxu0 %v3262
      %v3362 = vpop.f32.mrb[0].mxu0
      %v3363 = vadd.f32 0.0, %v3362
      %v3364 = vpop.f32.mrb[0].mxu0
      %3365 = vmatprep.mubr.f32.mxu0 0.0
      %3366 = vmatmul.mubr.f32.gmra.mrb[0].mxu0 %v3264
      %v3367 = vpop.f32.mrb[0].mxu0
      %v3368 = vadd.f32 0.0, %v3367
      %v3369 = vpop.f32.mrb[0].mxu0
      %3370 = vmatprep.mubr.f32.mxu0 0.0
      %3371 = vmatmul.mubr.f32.gmra.mrb[0].mxu0 %v3266
      %v3372 = vpop.f32.mrb[0].mxu0
      %v3373 = vadd.f32 0.0, %v3372
      %v3374 = vpop.f32.mrb[0].mxu0
      %3375 = vdwg.mxu0
      %v3376 = vadd.f32 %v3218, %v3338
      %v3377 = vadd.f32 %v3219, %v3343
      %v3378 = vadd.f32 %v3220, %v3348
      %v3379 = vadd.f32 %v3221, %v3353
      %v3380 = vadd.f32 %v3222, %v3358
      %v3381 = vadd.f32 %v3223, %v3363
      %v3382 = vadd.f32 %v3224, %v3368
      %v3383 = vadd.f32 %v3225, %v3373
      %s3384 = scalar_lea.vmem %s3, 84
      %v3385 = vld [vmem:[%s3384] sm:$0xf]
      %v3387 = vsel %vm571, %v523, 0
      %v3390 = vsel %vm588, %v3385, 0
      %3392 = vmatprep.subr.mxu0 0.0
      %3393 = vmatpush1.msra.mxu0 %v3390
      %3394 = vmatprep.subr.mxu0 0.0
      %3395 = vmatpush1.msra.mxu0 0.0
      %3396 = vmatprep.subr.mxu0 0.0
      %3397 = vmatpush1.msra.mxu0 0.0
      %3398 = vmatprep.subr.mxu0 0.0
      %3399 = vmatpush1.msra.mxu0 0.0
      %3400 = vmatprep.subr.mxu0 0.0
      %3401 = vmatpush1.msra.mxu0 0.0
      %3402 = vmatprep.subr.mxu0 0.0
      %3403 = vmatpush1.msra.mxu0 0.0
      %3404 = vmatprep.subr.mxu0 0.0
      %3405 = vmatpush1.msra.mxu0 0.0
      %3406 = vmatprep.subr.mxu0 0.0
      %3407 = vmatpush1.msra.mxu0 0.0
      %3408 = vmatprep.subr.mxu0 0.0
      %3409 = vmatpush1.msra.mxu0 0.0
      %3410 = vmatprep.subr.mxu0 0.0
      %3411 = vmatpush1.msra.mxu0 0.0
      %3412 = vmatprep.subr.mxu0 0.0
      %3413 = vmatpush1.msra.mxu0 0.0
      %3414 = vmatprep.subr.mxu0 0.0
      %3415 = vmatpush1.msra.mxu0 0.0
      %3416 = vmatprep.subr.mxu0 0.0
      %3417 = vmatpush1.msra.mxu0 0.0
      %3418 = vmatprep.subr.mxu0 0.0
      %3419 = vmatpush1.msra.mxu0 0.0
      %3420 = vmatprep.subr.mxu0 0.0
      %3421 = vmatpush1.msra.mxu0 0.0
      %3422 = vmatprep.subr.mxu0 0.0
      %3423 = vmatpush1.msra.mxu0 0.0
      %3424 = vmatprep.subr.mxu0 0.0
      %3425 = vmatpush1.msra.mxu0 0.0
      %3426 = vmatprep.subr.mxu0 0.0
      %3427 = vmatpush1.msra.mxu0 0.0
      %3428 = vmatprep.subr.mxu0 0.0
      %3429 = vmatpush1.msra.mxu0 0.0
      %3430 = vmatprep.subr.mxu0 0.0
      %3431 = vmatpush1.msra.mxu0 0.0
      %3432 = vmatprep.subr.mxu0 0.0
      %3433 = vmatpush1.msra.mxu0 0.0
      %3434 = vmatprep.subr.mxu0 0.0
      %3435 = vmatpush1.msra.mxu0 0.0
      %3436 = vmatprep.subr.mxu0 0.0
      %3437 = vmatpush1.msra.mxu0 0.0
      %3438 = vmatprep.subr.mxu0 0.0
      %3439 = vmatpush1.msra.mxu0 0.0
      %3440 = vmatprep.subr.mxu0 0.0
      %3441 = vmatpush1.msra.mxu0 0.0
      %3442 = vmatprep.subr.mxu0 0.0
      %3443 = vmatpush1.msra.mxu0 0.0
      %3444 = vmatprep.subr.mxu0 0.0
      %3445 = vmatpush1.msra.mxu0 0.0
      %3446 = vmatprep.subr.mxu0 0.0
      %3447 = vmatpush1.msra.mxu0 0.0
      %3448 = vmatprep.subr.mxu0 0.0
      %3449 = vmatpush1.msra.mxu0 0.0
      %3450 = vmatprep.subr.mxu0 0.0
      %3451 = vmatpush1.msra.mxu0 0.0
      %3452 = vmatprep.subr.mxu0 0.0
      %3453 = vmatpush1.msra.mxu0 0.0
      %3454 = vmatprep.subr.mxu0 0.0
      %3455 = vmatpush1.msra.mxu0 0.0
      %3456 = vmatprep.mubr.f32.mxu0 0.0
      %3457 = vmatmul.mubr.f32.gmra.mrb[0].mxu0 %v2924
      %v3458 = vpop.f32.mrb[0].mxu0
      %v3459 = vadd.f32 0.0, %v3458
      %v3460 = vpop.f32.mrb[0].mxu0
      %3461 = vmatprep.mubr.f32.mxu0 0.0
      %3462 = vmatmul.mubr.f32.gmra.mrb[0].mxu0 %v2927
      %v3463 = vpop.f32.mrb[0].mxu0
      %v3464 = vadd.f32 0.0, %v3463
      %v3465 = vpop.f32.mrb[0].mxu0
      %3466 = vmatprep.mubr.f32.mxu0 0.0
      %3467 = vmatmul.mubr.f32.gmra.mrb[0].mxu0 %v2930
      %v3468 = vpop.f32.mrb[0].mxu0
      %v3469 = vadd.f32 0.0, %v3468
      %v3470 = vpop.f32.mrb[0].mxu0
      %3471 = vmatprep.mubr.f32.mxu0 0.0
      %3472 = vmatmul.mubr.f32.gmra.mrb[0].mxu0 %v2933
      %v3473 = vpop.f32.mrb[0].mxu0
      %v3474 = vadd.f32 0.0, %v3473
      %v3475 = vpop.f32.mrb[0].mxu0
      %3476 = vmatprep.mubr.f32.mxu0 0.0
      %3477 = vmatmul.mubr.f32.gmra.mrb[0].mxu0 %v2936
      %v3478 = vpop.f32.mrb[0].mxu0
      %v3479 = vadd.f32 0.0, %v3478
      %v3480 = vpop.f32.mrb[0].mxu0
      %3481 = vmatprep.mubr.f32.mxu0 0.0
      %3482 = vmatmul.mubr.f32.gmra.mrb[0].mxu0 %v2939
      %v3483 = vpop.f32.mrb[0].mxu0
      %v3484 = vadd.f32 0.0, %v3483
      %v3485 = vpop.f32.mrb[0].mxu0
      %3486 = vmatprep.mubr.f32.mxu0 0.0
      %3487 = vmatmul.mubr.f32.gmra.mrb[0].mxu0 %v2942
      %v3488 = vpop.f32.mrb[0].mxu0
      %v3489 = vadd.f32 0.0, %v3488
      %v3490 = vpop.f32.mrb[0].mxu0
      %3491 = vmatprep.mubr.f32.mxu0 0.0
      %3492 = vmatmul.mubr.f32.gmra.mrb[0].mxu0 %v3387
      %v3493 = vpop.f32.mrb[0].mxu0
      %v3494 = vadd.f32 0.0, %v3493
      %v3495 = vpop.f32.mrb[0].mxu0
      %3496 = vdwg.mxu0
      %v3497 = vadd.f32 %v3376, %v3459
      %v3498 = vadd.f32 %v3377, %v3464
      %v3499 = vadd.f32 %v3378, %v3469
      %v3500 = vadd.f32 %v3379, %v3474
      %v3501 = vadd.f32 %v3380, %v3479
      %v3502 = vadd.f32 %v3381, %v3484
      %v3503 = vadd.f32 %v3382, %v3489
      %v3504 = vadd.f32 %v3383, %v3494
      %v3506 = vrot.slane %v523, 1
      %v3507 = vrot.slane %v524, 1
      %v3508 = vsel %vm544, %v3506, %v3507
      %s3509 = scalar_lea.vmem %s3, 88
      %v3510 = vld [vmem:[%s3509] sm:$0xf]
      %v3511 = vsel %vm571, %v3508, 0
      %v3514 = vsel %vm588, %v3510, 0
      %3516 = vmatprep.subr.mxu0 0.0
      %3517 = vmatpush1.msra.mxu0 %v3514
      %3518 = vmatprep.subr.mxu0 0.0
      %3519 = vmatpush1.msra.mxu0 0.0
      %3520 = vmatprep.subr.mxu0 0.0
      %3521 = vmatpush1.msra.mxu0 0.0
      %3522 = vmatprep.subr.mxu0 0.0
      %3523 = vmatpush1.msra.mxu0 0.0
      %3524 = vmatprep.subr.mxu0 0.0
      %3525 = vmatpush1.msra.mxu0 0.0
      %3526 = vmatprep.subr.mxu0 0.0
      %3527 = vmatpush1.msra.mxu0 0.0
      %3528 = vmatprep.subr.mxu0 0.0
      %3529 = vmatpush1.msra.mxu0 0.0
      %3530 = vmatprep.subr.mxu0 0.0
      %3531 = vmatpush1.msra.mxu0 0.0
      %3532 = vmatprep.subr.mxu0 0.0
      %3533 = vmatpush1.msra.mxu0 0.0
      %3534 = vmatprep.subr.mxu0 0.0
      %3535 = vmatpush1.msra.mxu0 0.0
      %3536 = vmatprep.subr.mxu0 0.0
      %3537 = vmatpush1.msra.mxu0 0.0
      %3538 = vmatprep.subr.mxu0 0.0
      %3539 = vmatpush1.msra.mxu0 0.0
      %3540 = vmatprep.subr.mxu0 0.0
      %3541 = vmatpush1.msra.mxu0 0.0
      %3542 = vmatprep.subr.mxu0 0.0
      %3543 = vmatpush1.msra.mxu0 0.0
      %3544 = vmatprep.subr.mxu0 0.0
      %3545 = vmatpush1.msra.mxu0 0.0
      %3546 = vmatprep.subr.mxu0 0.0
      %3547 = vmatpush1.msra.mxu0 0.0
      %3548 = vmatprep.subr.mxu0 0.0
      %3549 = vmatpush1.msra.mxu0 0.0
      %3550 = vmatprep.subr.mxu0 0.0
      %3551 = vmatpush1.msra.mxu0 0.0
      %3552 = vmatprep.subr.mxu0 0.0
      %3553 = vmatpush1.msra.mxu0 0.0
      %3554 = vmatprep.subr.mxu0 0.0
      %3555 = vmatpush1.msra.mxu0 0.0
      %3556 = vmatprep.subr.mxu0 0.0
      %3557 = vmatpush1.msra.mxu0 0.0
      %3558 = vmatprep.subr.mxu0 0.0
      %3559 = vmatpush1.msra.mxu0 0.0
      %3560 = vmatprep.subr.mxu0 0.0
      %3561 = vmatpush1.msra.mxu0 0.0
      %3562 = vmatprep.subr.mxu0 0.0
      %3563 = vmatpush1.msra.mxu0 0.0
      %3564 = vmatprep.subr.mxu0 0.0
      %3565 = vmatpush1.msra.mxu0 0.0
      %3566 = vmatprep.subr.mxu0 0.0
      %3567 = vmatpush1.msra.mxu0 0.0
      %3568 = vmatprep.subr.mxu0 0.0
      %3569 = vmatpush1.msra.mxu0 0.0
      %3570 = vmatprep.subr.mxu0 0.0
      %3571 = vmatpush1.msra.mxu0 0.0
      %3572 = vmatprep.subr.mxu0 0.0
      %3573 = vmatpush1.msra.mxu0 0.0
      %3574 = vmatprep.subr.mxu0 0.0
      %3575 = vmatpush1.msra.mxu0 0.0
      %3576 = vmatprep.subr.mxu0 0.0
      %3577 = vmatpush1.msra.mxu0 0.0
      %3578 = vmatprep.subr.mxu0 0.0
      %3579 = vmatpush1.msra.mxu0 0.0
      %3580 = vmatprep.mubr.f32.mxu0 0.0
      %3581 = vmatmul.mubr.f32.gmra.mrb[0].mxu0 %v3096
      %v3582 = vpop.f32.mrb[0].mxu0
      %v3583 = vadd.f32 0.0, %v3582
      %v3584 = vpop.f32.mrb[0].mxu0
      %3585 = vmatprep.mubr.f32.mxu0 0.0
      %3586 = vmatmul.mubr.f32.gmra.mrb[0].mxu0 %v3098
      %v3587 = vpop.f32.mrb[0].mxu0
      %v3588 = vadd.f32 0.0, %v3587
      %v3589 = vpop.f32.mrb[0].mxu0
      %3590 = vmatprep.mubr.f32.mxu0 0.0
      %3591 = vmatmul.mubr.f32.gmra.mrb[0].mxu0 %v3100
      %v3592 = vpop.f32.mrb[0].mxu0
      %v3593 = vadd.f32 0.0, %v3592
      %v3594 = vpop.f32.mrb[0].mxu0
      %3595 = vmatprep.mubr.f32.mxu0 0.0
      %3596 = vmatmul.mubr.f32.gmra.mrb[0].mxu0 %v3102
      %v3597 = vpop.f32.mrb[0].mxu0
      %v3598 = vadd.f32 0.0, %v3597
      %v3599 = vpop.f32.mrb[0].mxu0
      %3600 = vmatprep.mubr.f32.mxu0 0.0
      %3601 = vmatmul.mubr.f32.gmra.mrb[0].mxu0 %v3104
      %v3602 = vpop.f32.mrb[0].mxu0
      %v3603 = vadd.f32 0.0, %v3602
      %v3604 = vpop.f32.mrb[0].mxu0
      %3605 = vmatprep.mubr.f32.mxu0 0.0
      %3606 = vmatmul.mubr.f32.gmra.mrb[0].mxu0 %v3106
      %v3607 = vpop.f32.mrb[0].mxu0
      %v3608 = vadd.f32 0.0, %v3607
      %v3609 = vpop.f32.mrb[0].mxu0
      %3610 = vmatprep.mubr.f32.mxu0 0.0
      %3611 = vmatmul.mubr.f32.gmra.mrb[0].mxu0 %v3108
      %v3612 = vpop.f32.mrb[0].mxu0
      %v3613 = vadd.f32 0.0, %v3612
      %v3614 = vpop.f32.mrb[0].mxu0
      %3615 = vmatprep.mubr.f32.mxu0 0.0
      %3616 = vmatmul.mubr.f32.gmra.mrb[0].mxu0 %v3511
      %v3617 = vpop.f32.mrb[0].mxu0
      %v3618 = vadd.f32 0.0, %v3617
      %v3619 = vpop.f32.mrb[0].mxu0
      %3620 = vdwg.mxu0
      %v3621 = vadd.f32 %v3497, %v3583
      %v3622 = vadd.f32 %v3498, %v3588
      %v3623 = vadd.f32 %v3499, %v3593
      %v3624 = vadd.f32 %v3500, %v3598
      %v3625 = vadd.f32 %v3501, %v3603
      %v3626 = vadd.f32 %v3502, %v3608
      %v3627 = vadd.f32 %v3503, %v3613
      %v3628 = vadd.f32 %v3504, %v3618
      %v3629 = vrot.slane %v523, 2
      %v3630 = vrot.slane %v524, 2
      %v3631 = vsel %vm821, %v3629, %v3630
      %s3632 = scalar_lea.vmem %s3, 92
      %v3633 = vld [vmem:[%s3632] sm:$0xf]
      %v3634 = vsel %vm571, %v3631, 0
      %v3637 = vsel %vm588, %v3633, 0
      %3639 = vmatprep.subr.mxu0 0.0
      %3640 = vmatpush1.msra.mxu0 %v3637
      %3641 = vmatprep.subr.mxu0 0.0
      %3642 = vmatpush1.msra.mxu0 0.0
      %3643 = vmatprep.subr.mxu0 0.0
      %3644 = vmatpush1.msra.mxu0 0.0
      %3645 = vmatprep.subr.mxu0 0.0
      %3646 = vmatpush1.msra.mxu0 0.0
      %3647 = vmatprep.subr.mxu0 0.0
      %3648 = vmatpush1.msra.mxu0 0.0
      %3649 = vmatprep.subr.mxu0 0.0
      %3650 = vmatpush1.msra.mxu0 0.0
      %3651 = vmatprep.subr.mxu0 0.0
      %3652 = vmatpush1.msra.mxu0 0.0
      %3653 = vmatprep.subr.mxu0 0.0
      %3654 = vmatpush1.msra.mxu0 0.0
      %3655 = vmatprep.subr.mxu0 0.0
      %3656 = vmatpush1.msra.mxu0 0.0
      %3657 = vmatprep.subr.mxu0 0.0
      %3658 = vmatpush1.msra.mxu0 0.0
      %3659 = vmatprep.subr.mxu0 0.0
      %3660 = vmatpush1.msra.mxu0 0.0
      %3661 = vmatprep.subr.mxu0 0.0
      %3662 = vmatpush1.msra.mxu0 0.0
      %3663 = vmatprep.subr.mxu0 0.0
      %3664 = vmatpush1.msra.mxu0 0.0
      %3665 = vmatprep.subr.mxu0 0.0
      %3666 = vmatpush1.msra.mxu0 0.0
      %3667 = vmatprep.subr.mxu0 0.0
      %3668 = vmatpush1.msra.mxu0 0.0
      %3669 = vmatprep.subr.mxu0 0.0
      %3670 = vmatpush1.msra.mxu0 0.0
      %3671 = vmatprep.subr.mxu0 0.0
      %3672 = vmatpush1.msra.mxu0 0.0
      %3673 = vmatprep.subr.mxu0 0.0
      %3674 = vmatpush1.msra.mxu0 0.0
      %3675 = vmatprep.subr.mxu0 0.0
      %3676 = vmatpush1.msra.mxu0 0.0
      %3677 = vmatprep.subr.mxu0 0.0
      %3678 = vmatpush1.msra.mxu0 0.0
      %3679 = vmatprep.subr.mxu0 0.0
      %3680 = vmatpush1.msra.mxu0 0.0
      %3681 = vmatprep.subr.mxu0 0.0
      %3682 = vmatpush1.msra.mxu0 0.0
      %3683 = vmatprep.subr.mxu0 0.0
      %3684 = vmatpush1.msra.mxu0 0.0
      %3685 = vmatprep.subr.mxu0 0.0
      %3686 = vmatpush1.msra.mxu0 0.0
      %3687 = vmatprep.subr.mxu0 0.0
      %3688 = vmatpush1.msra.mxu0 0.0
      %3689 = vmatprep.subr.mxu0 0.0
      %3690 = vmatpush1.msra.mxu0 0.0
      %3691 = vmatprep.subr.mxu0 0.0
      %3692 = vmatpush1.msra.mxu0 0.0
      %3693 = vmatprep.subr.mxu0 0.0
      %3694 = vmatpush1.msra.mxu0 0.0
      %3695 = vmatprep.subr.mxu0 0.0
      %3696 = vmatpush1.msra.mxu0 0.0
      %3697 = vmatprep.subr.mxu0 0.0
      %3698 = vmatpush1.msra.mxu0 0.0
      %3699 = vmatprep.subr.mxu0 0.0
      %3700 = vmatpush1.msra.mxu0 0.0
      %3701 = vmatprep.subr.mxu0 0.0
      %3702 = vmatpush1.msra.mxu0 0.0
      %3703 = vmatprep.mubr.f32.mxu0 0.0
      %3704 = vmatmul.mubr.f32.gmra.mrb[0].mxu0 %v3254
      %v3705 = vpop.f32.mrb[0].mxu0
      %v3706 = vadd.f32 0.0, %v3705
      %v3707 = vpop.f32.mrb[0].mxu0
      %3708 = vmatprep.mubr.f32.mxu0 0.0
      %3709 = vmatmul.mubr.f32.gmra.mrb[0].mxu0 %v3256
      %v3710 = vpop.f32.mrb[0].mxu0
      %v3711 = vadd.f32 0.0, %v3710
      %v3712 = vpop.f32.mrb[0].mxu0
      %3713 = vmatprep.mubr.f32.mxu0 0.0
      %3714 = vmatmul.mubr.f32.gmra.mrb[0].mxu0 %v3258
      %v3715 = vpop.f32.mrb[0].mxu0
      %v3716 = vadd.f32 0.0, %v3715
      %v3717 = vpop.f32.mrb[0].mxu0
      %3718 = vmatprep.mubr.f32.mxu0 0.0
      %3719 = vmatmul.mubr.f32.gmra.mrb[0].mxu0 %v3260
      %v3720 = vpop.f32.mrb[0].mxu0
      %v3721 = vadd.f32 0.0, %v3720
      %v3722 = vpop.f32.mrb[0].mxu0
      %3723 = vmatprep.mubr.f32.mxu0 0.0
      %3724 = vmatmul.mubr.f32.gmra.mrb[0].mxu0 %v3262
      %v3725 = vpop.f32.mrb[0].mxu0
      %v3726 = vadd.f32 0.0, %v3725
      %v3727 = vpop.f32.mrb[0].mxu0
      %3728 = vmatprep.mubr.f32.mxu0 0.0
      %3729 = vmatmul.mubr.f32.gmra.mrb[0].mxu0 %v3264
      %v3730 = vpop.f32.mrb[0].mxu0
      %v3731 = vadd.f32 0.0, %v3730
      %v3732 = vpop.f32.mrb[0].mxu0
      %3733 = vmatprep.mubr.f32.mxu0 0.0
      %3734 = vmatmul.mubr.f32.gmra.mrb[0].mxu0 %v3266
      %v3735 = vpop.f32.mrb[0].mxu0
      %v3736 = vadd.f32 0.0, %v3735
      %v3737 = vpop.f32.mrb[0].mxu0
      %3738 = vmatprep.mubr.f32.mxu0 0.0
      %3739 = vmatmul.mubr.f32.gmra.mrb[0].mxu0 %v3634
      %v3740 = vpop.f32.mrb[0].mxu0
      %v3741 = vadd.f32 0.0, %v3740
      %v3742 = vpop.f32.mrb[0].mxu0
      %3743 = vdwg.mxu0
      %v3744 = vadd.f32 %v3621, %v3706
      %v3745 = vadd.f32 %v3622, %v3711
      %v3746 = vadd.f32 %v3623, %v3716
      %v3747 = vadd.f32 %v3624, %v3721
      %v3748 = vadd.f32 %v3625, %v3726
      %v3749 = vadd.f32 %v3626, %v3731
      %v3750 = vadd.f32 %v3627, %v3736
      %v3751 = vadd.f32 %v3628, %v3741
      %s3752 = scalar_lea.vmem %s3, 96
      %v3753 = vld [vmem:[%s3752] sm:$0xf]
      %v3755 = vsel %vm571, %v525, 0
      %v3758 = vsel %vm588, %v3753, 0
      %3760 = vmatprep.subr.mxu0 0.0
      %3761 = vmatpush1.msra.mxu0 %v3758
      %3762 = vmatprep.subr.mxu0 0.0
      %3763 = vmatpush1.msra.mxu0 0.0
      %3764 = vmatprep.subr.mxu0 0.0
      %3765 = vmatpush1.msra.mxu0 0.0
      %3766 = vmatprep.subr.mxu0 0.0
      %3767 = vmatpush1.msra.mxu0 0.0
      %3768 = vmatprep.subr.mxu0 0.0
      %3769 = vmatpush1.msra.mxu0 0.0
      %3770 = vmatprep.subr.mxu0 0.0
      %3771 = vmatpush1.msra.mxu0 0.0
      %3772 = vmatprep.subr.mxu0 0.0
      %3773 = vmatpush1.msra.mxu0 0.0
      %3774 = vmatprep.subr.mxu0 0.0
      %3775 = vmatpush1.msra.mxu0 0.0
      %3776 = vmatprep.subr.mxu0 0.0
      %3777 = vmatpush1.msra.mxu0 0.0
      %3778 = vmatprep.subr.mxu0 0.0
      %3779 = vmatpush1.msra.mxu0 0.0
      %3780 = vmatprep.subr.mxu0 0.0
      %3781 = vmatpush1.msra.mxu0 0.0
      %3782 = vmatprep.subr.mxu0 0.0
      %3783 = vmatpush1.msra.mxu0 0.0
      %3784 = vmatprep.subr.mxu0 0.0
      %3785 = vmatpush1.msra.mxu0 0.0
      %3786 = vmatprep.subr.mxu0 0.0
      %3787 = vmatpush1.msra.mxu0 0.0
      %3788 = vmatprep.subr.mxu0 0.0
      %3789 = vmatpush1.msra.mxu0 0.0
      %3790 = vmatprep.subr.mxu0 0.0
      %3791 = vmatpush1.msra.mxu0 0.0
      %3792 = vmatprep.subr.mxu0 0.0
      %3793 = vmatpush1.msra.mxu0 0.0
      %3794 = vmatprep.subr.mxu0 0.0
      %3795 = vmatpush1.msra.mxu0 0.0
      %3796 = vmatprep.subr.mxu0 0.0
      %3797 = vmatpush1.msra.mxu0 0.0
      %3798 = vmatprep.subr.mxu0 0.0
      %3799 = vmatpush1.msra.mxu0 0.0
      %3800 = vmatprep.subr.mxu0 0.0
      %3801 = vmatpush1.msra.mxu0 0.0
      %3802 = vmatprep.subr.mxu0 0.0
      %3803 = vmatpush1.msra.mxu0 0.0
      %3804 = vmatprep.subr.mxu0 0.0
      %3805 = vmatpush1.msra.mxu0 0.0
      %3806 = vmatprep.subr.mxu0 0.0
      %3807 = vmatpush1.msra.mxu0 0.0
      %3808 = vmatprep.subr.mxu0 0.0
      %3809 = vmatpush1.msra.mxu0 0.0
      %3810 = vmatprep.subr.mxu0 0.0
      %3811 = vmatpush1.msra.mxu0 0.0
      %3812 = vmatprep.subr.mxu0 0.0
      %3813 = vmatpush1.msra.mxu0 0.0
      %3814 = vmatprep.subr.mxu0 0.0
      %3815 = vmatpush1.msra.mxu0 0.0
      %3816 = vmatprep.subr.mxu0 0.0
      %3817 = vmatpush1.msra.mxu0 0.0
      %3818 = vmatprep.subr.mxu0 0.0
      %3819 = vmatpush1.msra.mxu0 0.0
      %3820 = vmatprep.subr.mxu0 0.0
      %3821 = vmatpush1.msra.mxu0 0.0
      %3822 = vmatprep.subr.mxu0 0.0
      %3823 = vmatpush1.msra.mxu0 0.0
      %3824 = vmatprep.mubr.f32.mxu0 0.0
      %3825 = vmatmul.mubr.f32.gmra.mrb[0].mxu0 %v2927
      %v3826 = vpop.f32.mrb[0].mxu0
      %v3827 = vadd.f32 0.0, %v3826
      %v3828 = vpop.f32.mrb[0].mxu0
      %3829 = vmatprep.mubr.f32.mxu0 0.0
      %3830 = vmatmul.mubr.f32.gmra.mrb[0].mxu0 %v2930
      %v3831 = vpop.f32.mrb[0].mxu0
      %v3832 = vadd.f32 0.0, %v3831
      %v3833 = vpop.f32.mrb[0].mxu0
      %3834 = vmatprep.mubr.f32.mxu0 0.0
      %3835 = vmatmul.mubr.f32.gmra.mrb[0].mxu0 %v2933
      %v3836 = vpop.f32.mrb[0].mxu0
      %v3837 = vadd.f32 0.0, %v3836
      %v3838 = vpop.f32.mrb[0].mxu0
      %3839 = vmatprep.mubr.f32.mxu0 0.0
      %3840 = vmatmul.mubr.f32.gmra.mrb[0].mxu0 %v2936
      %v3841 = vpop.f32.mrb[0].mxu0
      %v3842 = vadd.f32 0.0, %v3841
      %v3843 = vpop.f32.mrb[0].mxu0
      %3844 = vmatprep.mubr.f32.mxu0 0.0
      %3845 = vmatmul.mubr.f32.gmra.mrb[0].mxu0 %v2939
      %v3846 = vpop.f32.mrb[0].mxu0
      %v3847 = vadd.f32 0.0, %v3846
      %v3848 = vpop.f32.mrb[0].mxu0
      %3849 = vmatprep.mubr.f32.mxu0 0.0
      %3850 = vmatmul.mubr.f32.gmra.mrb[0].mxu0 %v2942
      %v3851 = vpop.f32.mrb[0].mxu0
      %v3852 = vadd.f32 0.0, %v3851
      %v3853 = vpop.f32.mrb[0].mxu0
      %3854 = vmatprep.mubr.f32.mxu0 0.0
      %3855 = vmatmul.mubr.f32.gmra.mrb[0].mxu0 %v3387
      %v3856 = vpop.f32.mrb[0].mxu0
      %v3857 = vadd.f32 0.0, %v3856
      %v3858 = vpop.f32.mrb[0].mxu0
      %3859 = vmatprep.mubr.f32.mxu0 0.0
      %3860 = vmatmul.mubr.f32.gmra.mrb[0].mxu0 %v3755
      %v3861 = vpop.f32.mrb[0].mxu0
      %v3862 = vadd.f32 0.0, %v3861
      %v3863 = vpop.f32.mrb[0].mxu0
      %3864 = vdwg.mxu0
      %v3865 = vadd.f32 %v3744, %v3827
      %v3866 = vadd.f32 %v3745, %v3832
      %v3867 = vadd.f32 %v3746, %v3837
      %v3868 = vadd.f32 %v3747, %v3842
      %v3869 = vadd.f32 %v3748, %v3847
      %v3870 = vadd.f32 %v3749, %v3852
      %v3871 = vadd.f32 %v3750, %v3857
      %v3872 = vadd.f32 %v3751, %v3862
      %v3874 = vrot.slane %v525, 1
      %v3875 = vrot.slane %v526, 1
      %v3876 = vsel %vm544, %v3874, %v3875
      %s3877 = scalar_lea.vmem %s3, 100
      %v3878 = vld [vmem:[%s3877] sm:$0xf]
      %v3879 = vsel %vm571, %v3876, 0
      %v3882 = vsel %vm588, %v3878, 0
      %3884 = vmatprep.subr.mxu0 0.0
      %3885 = vmatpush1.msra.mxu0 %v3882
      %3886 = vmatprep.subr.mxu0 0.0
      %3887 = vmatpush1.msra.mxu0 0.0
      %3888 = vmatprep.subr.mxu0 0.0
      %3889 = vmatpush1.msra.mxu0 0.0
      %3890 = vmatprep.subr.mxu0 0.0
      %3891 = vmatpush1.msra.mxu0 0.0
      %3892 = vmatprep.subr.mxu0 0.0
      %3893 = vmatpush1.msra.mxu0 0.0
      %3894 = vmatprep.subr.mxu0 0.0
      %3895 = vmatpush1.msra.mxu0 0.0
      %3896 = vmatprep.subr.mxu0 0.0
      %3897 = vmatpush1.msra.mxu0 0.0
      %3898 = vmatprep.subr.mxu0 0.0
      %3899 = vmatpush1.msra.mxu0 0.0
      %3900 = vmatprep.subr.mxu0 0.0
      %3901 = vmatpush1.msra.mxu0 0.0
      %3902 = vmatprep.subr.mxu0 0.0
      %3903 = vmatpush1.msra.mxu0 0.0
      %3904 = vmatprep.subr.mxu0 0.0
      %3905 = vmatpush1.msra.mxu0 0.0
      %3906 = vmatprep.subr.mxu0 0.0
      %3907 = vmatpush1.msra.mxu0 0.0
      %3908 = vmatprep.subr.mxu0 0.0
      %3909 = vmatpush1.msra.mxu0 0.0
      %3910 = vmatprep.subr.mxu0 0.0
      %3911 = vmatpush1.msra.mxu0 0.0
      %3912 = vmatprep.subr.mxu0 0.0
      %3913 = vmatpush1.msra.mxu0 0.0
      %3914 = vmatprep.subr.mxu0 0.0
      %3915 = vmatpush1.msra.mxu0 0.0
      %3916 = vmatprep.subr.mxu0 0.0
      %3917 = vmatpush1.msra.mxu0 0.0
      %3918 = vmatprep.subr.mxu0 0.0
      %3919 = vmatpush1.msra.mxu0 0.0
      %3920 = vmatprep.subr.mxu0 0.0
      %3921 = vmatpush1.msra.mxu0 0.0
      %3922 = vmatprep.subr.mxu0 0.0
      %3923 = vmatpush1.msra.mxu0 0.0
      %3924 = vmatprep.subr.mxu0 0.0
      %3925 = vmatpush1.msra.mxu0 0.0
      %3926 = vmatprep.subr.mxu0 0.0
      %3927 = vmatpush1.msra.mxu0 0.0
      %3928 = vmatprep.subr.mxu0 0.0
      %3929 = vmatpush1.msra.mxu0 0.0
      %3930 = vmatprep.subr.mxu0 0.0
      %3931 = vmatpush1.msra.mxu0 0.0
      %3932 = vmatprep.subr.mxu0 0.0
      %3933 = vmatpush1.msra.mxu0 0.0
      %3934 = vmatprep.subr.mxu0 0.0
      %3935 = vmatpush1.msra.mxu0 0.0
      %3936 = vmatprep.subr.mxu0 0.0
      %3937 = vmatpush1.msra.mxu0 0.0
      %3938 = vmatprep.subr.mxu0 0.0
      %3939 = vmatpush1.msra.mxu0 0.0
      %3940 = vmatprep.subr.mxu0 0.0
      %3941 = vmatpush1.msra.mxu0 0.0
      %3942 = vmatprep.subr.mxu0 0.0
      %3943 = vmatpush1.msra.mxu0 0.0
      %3944 = vmatprep.subr.mxu0 0.0
      %3945 = vmatpush1.msra.mxu0 0.0
      %3946 = vmatprep.subr.mxu0 0.0
      %3947 = vmatpush1.msra.mxu0 0.0
      %3948 = vmatprep.mubr.f32.mxu0 0.0
      %3949 = vmatmul.mubr.f32.gmra.mrb[0].mxu0 %v3098
      %v3950 = vpop.f32.mrb[0].mxu0
      %v3951 = vadd.f32 0.0, %v3950
      %v3952 = vpop.f32.mrb[0].mxu0
      %3953 = vmatprep.mubr.f32.mxu0 0.0
      %3954 = vmatmul.mubr.f32.gmra.mrb[0].mxu0 %v3100
      %v3955 = vpop.f32.mrb[0].mxu0
      %v3956 = vadd.f32 0.0, %v3955
      %v3957 = vpop.f32.mrb[0].mxu0
      %3958 = vmatprep.mubr.f32.mxu0 0.0
      %3959 = vmatmul.mubr.f32.gmra.mrb[0].mxu0 %v3102
      %v3960 = vpop.f32.mrb[0].mxu0
      %v3961 = vadd.f32 0.0, %v3960
      %v3962 = vpop.f32.mrb[0].mxu0
      %3963 = vmatprep.mubr.f32.mxu0 0.0
      %3964 = vmatmul.mubr.f32.gmra.mrb[0].mxu0 %v3104
      %v3965 = vpop.f32.mrb[0].mxu0
      %v3966 = vadd.f32 0.0, %v3965
      %v3967 = vpop.f32.mrb[0].mxu0
      %3968 = vmatprep.mubr.f32.mxu0 0.0
      %3969 = vmatmul.mubr.f32.gmra.mrb[0].mxu0 %v3106
      %v3970 = vpop.f32.mrb[0].mxu0
      %v3971 = vadd.f32 0.0, %v3970
      %v3972 = vpop.f32.mrb[0].mxu0
      %3973 = vmatprep.mubr.f32.mxu0 0.0
      %3974 = vmatmul.mubr.f32.gmra.mrb[0].mxu0 %v3108
      %v3975 = vpop.f32.mrb[0].mxu0
      %v3976 = vadd.f32 0.0, %v3975
      %v3977 = vpop.f32.mrb[0].mxu0
      %3978 = vmatprep.mubr.f32.mxu0 0.0
      %3979 = vmatmul.mubr.f32.gmra.mrb[0].mxu0 %v3511
      %v3980 = vpop.f32.mrb[0].mxu0
      %v3981 = vadd.f32 0.0, %v3980
      %v3982 = vpop.f32.mrb[0].mxu0
      %3983 = vmatprep.mubr.f32.mxu0 0.0
      %3984 = vmatmul.mubr.f32.gmra.mrb[0].mxu0 %v3879
      %v3985 = vpop.f32.mrb[0].mxu0
      %v3986 = vadd.f32 0.0, %v3985
      %v3987 = vpop.f32.mrb[0].mxu0
      %3988 = vdwg.mxu0
      %v3989 = vadd.f32 %v3865, %v3951
      %v3990 = vadd.f32 %v3866, %v3956
      %v3991 = vadd.f32 %v3867, %v3961
      %v3992 = vadd.f32 %v3868, %v3966
      %v3993 = vadd.f32 %v3869, %v3971
      %v3994 = vadd.f32 %v3870, %v3976
      %v3995 = vadd.f32 %v3871, %v3981
      %v3996 = vadd.f32 %v3872, %v3986
      %v3997 = vrot.slane %v525, 2
      %v3998 = vrot.slane %v526, 2
      %v3999 = vsel %vm821, %v3997, %v3998
      %s4000 = scalar_lea.vmem %s3, 104
      %v4001 = vld [vmem:[%s4000] sm:$0xf]
      %v4002 = vsel %vm571, %v3999, 0
      %v4005 = vsel %vm588, %v4001, 0
      %4007 = vmatprep.subr.mxu0 0.0
      %4008 = vmatpush1.msra.mxu0 %v4005
      %4009 = vmatprep.subr.mxu0 0.0
      %4010 = vmatpush1.msra.mxu0 0.0
      %4011 = vmatprep.subr.mxu0 0.0
      %4012 = vmatpush1.msra.mxu0 0.0
      %4013 = vmatprep.subr.mxu0 0.0
      %4014 = vmatpush1.msra.mxu0 0.0
      %4015 = vmatprep.subr.mxu0 0.0
      %4016 = vmatpush1.msra.mxu0 0.0
      %4017 = vmatprep.subr.mxu0 0.0
      %4018 = vmatpush1.msra.mxu0 0.0
      %4019 = vmatprep.subr.mxu0 0.0
      %4020 = vmatpush1.msra.mxu0 0.0
      %4021 = vmatprep.subr.mxu0 0.0
      %4022 = vmatpush1.msra.mxu0 0.0
      %4023 = vmatprep.subr.mxu0 0.0
      %4024 = vmatpush1.msra.mxu0 0.0
      %4025 = vmatprep.subr.mxu0 0.0
      %4026 = vmatpush1.msra.mxu0 0.0
      %4027 = vmatprep.subr.mxu0 0.0
      %4028 = vmatpush1.msra.mxu0 0.0
      %4029 = vmatprep.subr.mxu0 0.0
      %4030 = vmatpush1.msra.mxu0 0.0
      %4031 = vmatprep.subr.mxu0 0.0
      %4032 = vmatpush1.msra.mxu0 0.0
      %4033 = vmatprep.subr.mxu0 0.0
      %4034 = vmatpush1.msra.mxu0 0.0
      %4035 = vmatprep.subr.mxu0 0.0
      %4036 = vmatpush1.msra.mxu0 0.0
      %4037 = vmatprep.subr.mxu0 0.0
      %4038 = vmatpush1.msra.mxu0 0.0
      %4039 = vmatprep.subr.mxu0 0.0
      %4040 = vmatpush1.msra.mxu0 0.0
      %4041 = vmatprep.subr.mxu0 0.0
      %4042 = vmatpush1.msra.mxu0 0.0
      %4043 = vmatprep.subr.mxu0 0.0
      %4044 = vmatpush1.msra.mxu0 0.0
      %4045 = vmatprep.subr.mxu0 0.0
      %4046 = vmatpush1.msra.mxu0 0.0
      %4047 = vmatprep.subr.mxu0 0.0
      %4048 = vmatpush1.msra.mxu0 0.0
      %4049 = vmatprep.subr.mxu0 0.0
      %4050 = vmatpush1.msra.mxu0 0.0
      %4051 = vmatprep.subr.mxu0 0.0
      %4052 = vmatpush1.msra.mxu0 0.0
      %4053 = vmatprep.subr.mxu0 0.0
      %4054 = vmatpush1.msra.mxu0 0.0
      %4055 = vmatprep.subr.mxu0 0.0
      %4056 = vmatpush1.msra.mxu0 0.0
      %4057 = vmatprep.subr.mxu0 0.0
      %4058 = vmatpush1.msra.mxu0 0.0
      %4059 = vmatprep.subr.mxu0 0.0
      %4060 = vmatpush1.msra.mxu0 0.0
      %4061 = vmatprep.subr.mxu0 0.0
      %4062 = vmatpush1.msra.mxu0 0.0
      %4063 = vmatprep.subr.mxu0 0.0
      %4064 = vmatpush1.msra.mxu0 0.0
      %4065 = vmatprep.subr.mxu0 0.0
      %4066 = vmatpush1.msra.mxu0 0.0
      %4067 = vmatprep.subr.mxu0 0.0
      %4068 = vmatpush1.msra.mxu0 0.0
      %4069 = vmatprep.subr.mxu0 0.0
      %4070 = vmatpush1.msra.mxu0 0.0
      %4071 = vmatprep.mubr.f32.mxu0 0.0
      %4072 = vmatmul.mubr.f32.gmra.mrb[0].mxu0 %v3256
      %v4073 = vpop.f32.mrb[0].mxu0
      %v4074 = vadd.f32 0.0, %v4073
      %v4075 = vpop.f32.mrb[0].mxu0
      %4076 = vmatprep.mubr.f32.mxu0 0.0
      %4077 = vmatmul.mubr.f32.gmra.mrb[0].mxu0 %v3258
      %v4078 = vpop.f32.mrb[0].mxu0
      %v4079 = vadd.f32 0.0, %v4078
      %v4080 = vpop.f32.mrb[0].mxu0
      %4081 = vmatprep.mubr.f32.mxu0 0.0
      %4082 = vmatmul.mubr.f32.gmra.mrb[0].mxu0 %v3260
      %v4083 = vpop.f32.mrb[0].mxu0
      %v4084 = vadd.f32 0.0, %v4083
      %v4085 = vpop.f32.mrb[0].mxu0
      %4086 = vmatprep.mubr.f32.mxu0 0.0
      %4087 = vmatmul.mubr.f32.gmra.mrb[0].mxu0 %v3262
      %v4088 = vpop.f32.mrb[0].mxu0
      %v4089 = vadd.f32 0.0, %v4088
      %v4090 = vpop.f32.mrb[0].mxu0
      %4091 = vmatprep.mubr.f32.mxu0 0.0
      %4092 = vmatmul.mubr.f32.gmra.mrb[0].mxu0 %v3264
      %v4093 = vpop.f32.mrb[0].mxu0
      %v4094 = vadd.f32 0.0, %v4093
      %v4095 = vpop.f32.mrb[0].mxu0
      %4096 = vmatprep.mubr.f32.mxu0 0.0
      %4097 = vmatmul.mubr.f32.gmra.mrb[0].mxu0 %v3266
      %v4098 = vpop.f32.mrb[0].mxu0
      %v4099 = vadd.f32 0.0, %v4098
      %v4100 = vpop.f32.mrb[0].mxu0
      %4101 = vmatprep.mubr.f32.mxu0 0.0
      %4102 = vmatmul.mubr.f32.gmra.mrb[0].mxu0 %v3634
      %v4103 = vpop.f32.mrb[0].mxu0
      %v4104 = vadd.f32 0.0, %v4103
      %v4105 = vpop.f32.mrb[0].mxu0
      %4106 = vmatprep.mubr.f32.mxu0 0.0
      %4107 = vmatmul.mubr.f32.gmra.mrb[0].mxu0 %v4002
      %v4108 = vpop.f32.mrb[0].mxu0
      %v4109 = vadd.f32 0.0, %v4108
      %v4110 = vpop.f32.mrb[0].mxu0
      %4111 = vdwg.mxu0
      %v4112 = vadd.f32 %v3989, %v4074
      %v4113 = vadd.f32 %v3990, %v4079
      %v4114 = vadd.f32 %v3991, %v4084
      %v4115 = vadd.f32 %v3992, %v4089
      %v4116 = vadd.f32 %v3993, %v4094
      %v4117 = vadd.f32 %v3994, %v4099
      %v4118 = vadd.f32 %v3995, %v4104
      %v4119 = vadd.f32 %v3996, %v4109
      %v4120 = vpack.c.bf16 %v4113, %v4112
      %v4121 = vpack.c.bf16 %v4115, %v4114
      %v4122 = vpack.c.bf16 %v4117, %v4116
      %v4123 = vpack.c.bf16 %v4119, %v4118
      %v4128 = vunpack.c.l.b16 %v4120
      %v4129 = vunpack.c.h.b16 %v4120
      %v4130 = vunpack.c.l.b16 %v4121
      %v4131 = vunpack.c.h.b16 %v4121
      %v4132 = vunpack.c.l.b16 %v4122
      %v4133 = vunpack.c.h.b16 %v4122
      %v4134 = vunpack.c.l.b16 %v4123
      %v4135 = vunpack.c.h.b16 %v4123
      %v4136 = vpack.c.b16 %v4128, %v4128
      %v4137 = vpack.c.b16 %v4129, %v4129
      %v4138 = vpack.c.b16 %v4130, %v4130
      %v4139 = vpack.c.b16 %v4131, %v4131
      %v4140 = vpack.c.b16 %v4132, %v4132
      %v4141 = vpack.c.b16 %v4133, %v4133
      %v4142 = vpack.c.b16 %v4134, %v4134
      %v4143 = vpack.c.b16 %v4135, %v4135
      %vm4152 = vcmask 60416
      %4153 = vst.msk [vmem:[%s392] sm:$0xf] %vm4152, %v4136
      %4154 = vst.msk [vmem:[%s392 + $0x4] sm:$0xf] %vm4152, %v4137
      %4155 = vst.msk [vmem:[%s392 + $0x8] sm:$0xf] %vm4152, %v4138
      %4156 = vst.msk [vmem:[%s392 + $0xc] sm:$0xf] %vm4152, %v4139
      %4157 = vst.msk [vmem:[%s392 + $0x10] sm:$0xf] %vm4152, %v4140
      %4158 = vst.msk [vmem:[%s392 + $0x14] sm:$0xf] %vm4152, %v4141
      %4159 = vst.msk [vmem:[%s392 + $0x18] sm:$0xf] %vm4152, %v4142
      %4160 = vst.msk [vmem:[%s392 + $0x1c] sm:$0xf] %vm4152, %v4143
      %vm4161 = vcmask 64512
      %v4162 = vsel %vm4161, %v4112, 0.0
      %v4163 = vsel %vm4161, %v4113, 0.0
      %v4164 = vadd.f32 %v4162, %v4163
      %v4165 = vsel %vm4161, %v4114, 0.0
      %v4166 = vadd.f32 %v4164, %v4165
      %v4167 = vsel %vm4161, %v4115, 0.0
      %v4168 = vadd.f32 %v4166, %v4167
      %v4169 = vsel %vm4161, %v4116, 0.0
      %v4170 = vadd.f32 %v4168, %v4169
      %v4171 = vsel %vm4161, %v4117, 0.0
      %v4172 = vadd.f32 %v4170, %v4171
      %v4173 = vsel %vm4161, %v4118, 0.0
      %v4174 = vadd.f32 %v4172, %v4173
      %v4175 = vsel %vm4161, %v4119, 0.0
      %v4176 = vadd.f32 %v4174, %v4175
      %v4177 = vrot.slane %v4176, 4
      %v4178 = vadd.f32 %v4176, %v4177
      %v4179 = vrot.slane %v4178, 2
      %v4180 = vadd.f32 %v4178, %v4179
      %v4181 = vrot.slane %v4180, 1
      %v4182 = vadd.f32 %v4180, %v4181
      %vm4183 = vcmask 57344
      %4184 = vst.msk [vmem:[%s399] sm:$0x1] %vm4183, %v4182
      %v4185 = vmul.f32 %v4112, %v4112
      %v4186 = vmul.f32 %v4113, %v4113
      %v4187 = vmul.f32 %v4114, %v4114
      %v4188 = vmul.f32 %v4115, %v4115
      %v4189 = vmul.f32 %v4116, %v4116
      %v4190 = vmul.f32 %v4117, %v4117
      %v4191 = vmul.f32 %v4118, %v4118
      %v4192 = vmul.f32 %v4119, %v4119
      %v4193 = vsel %vm4161, %v4185, 0.0
      %v4194 = vsel %vm4161, %v4186, 0.0
      %v4195 = vadd.f32 %v4193, %v4194
      %v4196 = vsel %vm4161, %v4187, 0.0
      %v4197 = vadd.f32 %v4195, %v4196
      %v4198 = vsel %vm4161, %v4188, 0.0
      %v4199 = vadd.f32 %v4197, %v4198
      %v4200 = vsel %vm4161, %v4189, 0.0
      %v4201 = vadd.f32 %v4199, %v4200
      %v4202 = vsel %vm4161, %v4190, 0.0
      %v4203 = vadd.f32 %v4201, %v4202
      %v4204 = vsel %vm4161, %v4191, 0.0
      %v4205 = vadd.f32 %v4203, %v4204
      %v4206 = vsel %vm4161, %v4192, 0.0
      %v4207 = vadd.f32 %v4205, %v4206
      %v4208 = vrot.slane %v4207, 4
      %v4209 = vadd.f32 %v4207, %v4208
      %v4210 = vrot.slane %v4209, 2
      %v4211 = vadd.f32 %v4209, %v4210
      %v4212 = vrot.slane %v4211, 1
      %v4213 = vadd.f32 %v4211, %v4212
      %4214 = vst.msk [vmem:[%s406] sm:$0x1] %vm4183, %v4213
      %p4215 = scmp.lt.s32.totalorder %s23, 1
      %s4216 = scalar_select %p4215, %s23, 1
      %p4217 = scmp.lt.s32.totalorder %s22, 7
      %s4218 = scalar_select %p4217, %s22, 7
      %s4219 = smul.addr %s4218, 8
      %s4220 = smul.addr %s4216, 64
      %s4221 = sadd.s32 %s4219, %s4220
      %s4222 = smul.addr %s4221, 4
      %s4223 = scalar_lea.vmem %s4, %s4222
      %p4224 = scmp.lt.s32.totalorder %s23, 1
      %s4225 = scalar_select %p4224, %s23, 1
      %p4226 = scmp.lt.s32.totalorder %s22, 7
      %s4227 = scalar_select %p4226, %s22, 7
      %s4228 = smul.addr %s4225, 8
      %s4229 = sadd.s32 %s4227, %s4228
      %s4230 = scalar_lea.vmem %s5, %s4229
      %p4231 = scmp.lt.s32.totalorder %s23, 1
      %s4232 = scalar_select %p4231, %s23, 1
      %p4233 = scmp.lt.s32.totalorder %s22, 7
      %s4234 = scalar_select %p4233, %s22, 7
      %s4235 = smul.addr %s4232, 8
      %s4236 = sadd.s32 %s4234, %s4235
      %s4237 = scalar_lea.vmem %s6, %s4236
      // Predicated region
      $region37: #{bridge_block.4} parent=35 // pred_check
        %p4238 = pneg %p159
      $region38: #{bridge_block.4} parent=35 // pred_check_branch
        %4240 = sbr.rel (%p4238) target = $region40
      $region39: #{bridge_block.4} parent=35 // pred_region
        _
      $region40: #{bridge_block.4} parent=35 // pred_fallthru
        _
      // Predicated region
      $region41: #{bridge_block.4} parent=35 // pred_check
        %p4241 = pneg %p187
      $region42: #{bridge_block.4} parent=35 // pred_check_branch
        %4243 = sbr.rel (%p4241) target = $region44
      $region43: #{bridge_block.4} parent=35 // pred_region
        _
      $region44: #{bridge_block.4} parent=35 // pred_fallthru
        _
      // Predicated region
      $region45: #{bridge_block.4} parent=35 // pred_check
        %p4244 = pneg %p215
      $region46: #{bridge_block.4} parent=35 // pred_check_branch
        %4246 = sbr.rel (%p4244) target = $region48
      $region47: #{bridge_block.4} parent=35 // pred_region
        _
      $region48: #{bridge_block.4} parent=35 // pred_fallthru
        _
    $region36: #{bridge_block.4} parent=5 // pred_fallthru
      _
    %p4247 = scmp.le.s32.totalorder 2, %s13
    // Predicated region
    $region49: #{bridge_block.4} parent=5 // pred_check
      %p4248 = pneg %p4247
    $region50: #{bridge_block.4} parent=5 // pred_check_branch
      %4250 = sbr.rel (%p4248) target = $region52
    $region51: #{bridge_block.4} parent=5 // pred_region
      %s4251 = ssub.s32 %s13, 2
      // Predicated region
      $region53: #{bridge_block.4} parent=51 // pred_check
        %p4252 = pneg %p165
      $region54: #{bridge_block.4} parent=51 // pred_check_branch
        %4254 = sbr.rel (%p4252) target = $region56
      $region55: #{bridge_block.4} parent=51 // pred_region
        %p4255 = scmp.lt.s32.totalorder %s25, 1
        %s4256 = scalar_select %p4255, %s25, 1
        %p4257 = scmp.lt.s32.totalorder %s24, 7
        %s4258 = scalar_select %p4257, %s24, 7
        %s4259 = smul.addr %s4258, 8
        %s4260 = smul.addr %s4256, 64
        %s4261 = sadd.s32 %s4259, %s4260
        %s4262 = smul.addr %s4261, 4
        %s4263 = scalar_lea.vmem %s4, %s4262
      $region56: #{bridge_block.4} parent=51 // pred_fallthru
        _
      // Predicated region
      $region57: #{bridge_block.4} parent=51 // pred_check
        %p4264 = pneg %p193
      $region58: #{bridge_block.4} parent=51 // pred_check_branch
        %4266 = sbr.rel (%p4264) target = $region60
      $region59: #{bridge_block.4} parent=51 // pred_region
        %p4267 = scmp.lt.s32.totalorder %s25, 1
        %s4268 = scalar_select %p4267, %s25, 1
        %p4269 = scmp.lt.s32.totalorder %s24, 7
        %s4270 = scalar_select %p4269, %s24, 7
        %s4271 = smul.addr %s4268, 8
        %s4272 = sadd.s32 %s4270, %s4271
        %s4273 = scalar_lea.vmem %s5, %s4272
      $region60: #{bridge_block.4} parent=51 // pred_fallthru
        _
      // Predicated region
      $region61: #{bridge_block.4} parent=51 // pred_check
        %p4274 = pneg %p221
      $region62: #{bridge_block.4} parent=51 // pred_check_branch
        %4276 = sbr.rel (%p4274) target = $region64
      $region63: #{bridge_block.4} parent=51 // pred_region
        %p4277 = scmp.lt.s32.totalorder %s25, 1
        %s4278 = scalar_select %p4277, %s25, 1
        %p4279 = scmp.lt.s32.totalorder %s24, 7
        %s4280 = scalar_select %p4279, %s24, 7
        %s4281 = smul.addr %s4278, 8
        %s4282 = sadd.s32 %s4280, %s4281
        %s4283 = scalar_lea.vmem %s6, %s4282
      $region64: #{bridge_block.4} parent=51 // pred_fallthru
        _
    $region52: #{bridge_block.4} parent=5 // pred_fallthru
      _
  $region6: #{bridge_block.4} parent=0 // loop_footer
    %s17 = sadd.s32 1, %s13
  $region7: #{bridge_block.4} parent=0 // loop_footer_branch
    %12 = sbr.rel target = $region3
  $region8: #{bridge_block.4} parent=0 // loop_exit
    _

// kernel: bridge_block.7
$region0: #{bridge_block.7}
  #allocation0 [shape = 'u32[]', space=smem, size = 0x4, offset = 0x4, fixed_abs, tag = 'smem constant byte address 0x4 - core index']
  #allocation1 [shape = 'u32[144,128]{1,0:T(1,128)}', space=vmem, size = 0x12000, scoped, tag = 'internal scratch']
  %s0 = inlined_call_operand.vmem [shape: bf16[2,8,64,4], index: 0, kind: input, shape index: {}]
  %s1 = inlined_call_operand.vmem [shape: f32[1,1,1,4], index: 1, kind: input, shape index: {}]
  %s2 = inlined_call_operand.vmem [shape: f32[1,1,1,4], index: 2, kind: input, shape index: {}]
  %s3 = inlined_call_operand.vmem [shape: f32[2,8,64,4], index: 3, kind: output, shape index: {}]
  %s4 = sld [smem:[#allocation0]]
  $region45: #{bridge_block.7} parent=0
    _
  %s6 = ssub.s32 1, %s4
  %s7 = scalar_select 0, %s6, %s4
  loop: start=0, step=1, limit=18
  $region2: #{bridge_block.7} parent=0 // loop_pre_header
    _
  $region3: #{bridge_block.7} parent=0 // loop_header
    %s9 = sphi 0, %s13
    %p10 = scmp.ge.s32.totalorder %s9, 18
    %s16 = sphi 0, %s28
    %s17 = sphi 0, %s24
    %s18 = sphi 0, %s16
    %s19 = sphi 0, %s17
    %s20 = sphi 0, %s18
    %s21 = sphi 0, %s19
    %s33 = sphi 0, %s35
    %s36 = sphi 0, %s33
    %s37 = sphi 0, %s36
    %s53 = sphi 0, %s37
    %s57 = sphi 0, %s57
    %s59 = sphi 0, %s57
    %s60 = sphi 0, %s59
    %s74 = sphi 0, %s60
    %s78 = sphi 0, %s78
    %s80 = sphi 0, %s78
    %s81 = sphi 0, %s80
    %s95 = sphi 0, %s81
    %s103 = sphi 0, %s105
    %s106 = sphi 0, %s103
    %s107 = sphi 0, %s106
    %s123 = sphi 0, %s107
  $region4: #{bridge_block.7} parent=0 // loop_header_branch
    %12 = sbr.rel (%p10) target = $region8
  $region5: #{bridge_block.7} parent=0 // loop_body
    %s14 = ssub.s32 %s9, 1
    %s15 = ssub.s32 %s9, 2
    %s22 = sadd.s32 1, %s17
    %p23 = scmp.ge.s32.totalorder %s22, 2
    %s24 = scalar_select %p23, 0, %s22
    %s25 = sadd.s32 1, %s16
    %s26 = scalar_select %p23, %s25, %s16
    %p27 = scmp.ge.s32.totalorder %s26, 8
    %s28 = scalar_select %p27, 0, %s26
    %s29 = ssub.s32 %s17, %s24
    %s30 = ssub.s32 %s16, %s28
    %s31 = sor.u32 %s29, %s30
    %p32 = scmp.eq.s32.totalorder %s31, 0
    %s34 = sadd.s32 %s33, 1
    %s35 = scalar_select %p32, %s33, %s34
    %p38 = pneg %p32
    %p39 = scmp.eq.s32.totalorder %s9, 15
    %p40 = por %p38, %p39
    %p41 = scmp.ne.s32.totalorder %s33, %s36
    %p42 = scmp.eq.s32.totalorder %s9, 0
    %p43 = por %p41, %p42
    %p44 = scmp.ne.s32.totalorder %s33, %s36
    %p45 = scmp.eq.s32.totalorder %s14, 15
    %p46 = por %p44, %p45
    %p47 = scmp.ne.s32.totalorder %s36, %s37
    %p48 = scmp.eq.s32.totalorder %s14, 0
    %p49 = por %p47, %p48
    %p50 = scmp.ne.s32.totalorder %s36, %s37
    %p51 = scmp.eq.s32.totalorder %s15, 15
    %p52 = por %p50, %p51
    %p54 = scmp.ne.s32.totalorder %s37, %s53
    %p55 = scmp.eq.s32.totalorder %s15, 0
    %p56 = por %p54, %p55
    %s58 = sadd.s32 %s57, 1
    %p61 = scmp.eq.s32.totalorder %s9, 15
    %p62 = scmp.ne.s32.totalorder %s57, %s59
    %p63 = scmp.eq.s32.totalorder %s9, 0
    %p64 = por %p62, %p63
    %p65 = scmp.ne.s32.totalorder %s57, %s59
    %p66 = scmp.eq.s32.totalorder %s14, 15
    %p67 = por %p65, %p66
    %p68 = scmp.ne.s32.totalorder %s59, %s60
    %p69 = scmp.eq.s32.totalorder %s14, 0
    %p70 = por %p68, %p69
    %p71 = scmp.ne.s32.totalorder %s59, %s60
    %p72 = scmp.eq.s32.totalorder %s15, 15
    %p73 = por %p71, %p72
    %p75 = scmp.ne.s32.totalorder %s60, %s74
    %p76 = scmp.eq.s32.totalorder %s15, 0
    %p77 = por %p75, %p76
    %s79 = sadd.s32 %s78, 1
    %p82 = scmp.eq.s32.totalorder %s9, 15
    %p83 = scmp.ne.s32.totalorder %s78, %s80
    %p84 = scmp.eq.s32.totalorder %s9, 0
    %p85 = por %p83, %p84
    %p86 = scmp.ne.s32.totalorder %s78, %s80
    %p87 = scmp.eq.s32.totalorder %s14, 15
    %p88 = por %p86, %p87
    %p89 = scmp.ne.s32.totalorder %s80, %s81
    %p90 = scmp.eq.s32.totalorder %s14, 0
    %p91 = por %p89, %p90
    %p92 = scmp.ne.s32.totalorder %s80, %s81
    %p93 = scmp.eq.s32.totalorder %s15, 15
    %p94 = por %p92, %p93
    %p96 = scmp.ne.s32.totalorder %s81, %s95
    %p97 = scmp.eq.s32.totalorder %s15, 0
    %p98 = por %p96, %p97
    %s99 = ssub.s32 %s17, %s24
    %s100 = ssub.s32 %s16, %s28
    %s101 = sor.u32 %s99, %s100
    %p102 = scmp.eq.s32.totalorder %s101, 0
    %s104 = sadd.s32 %s103, 1
    %s105 = scalar_select %p102, %s103, %s104
    %p108 = pneg %p102
    %p109 = scmp.eq.s32.totalorder %s9, 15
    %p110 = por %p108, %p109
    %p111 = scmp.ne.s32.totalorder %s103, %s106
    %p112 = scmp.eq.s32.totalorder %s9, 0
    %p113 = por %p111, %p112
    %p114 = scmp.ne.s32.totalorder %s103, %s106
    %p115 = scmp.eq.s32.totalorder %s14, 15
    %p116 = por %p114, %p115
    %p117 = scmp.ne.s32.totalorder %s106, %s107
    %p118 = scmp.eq.s32.totalorder %s14, 0
    %p119 = por %p117, %p118
    %p120 = scmp.ne.s32.totalorder %s106, %s107
    %p121 = scmp.eq.s32.totalorder %s15, 15
    %p122 = por %p120, %p121
    %p124 = scmp.ne.s32.totalorder %s107, %s123
    %p125 = scmp.eq.s32.totalorder %s15, 0
    %p126 = por %p124, %p125
    %p127 = scmp.le.s32.totalorder 1, %s9
    %p128 = scmp.lt.s32.totalorder %s9, 17
    %p129 = pnand %p127, %p128
    %p130 = pneg %p129
    // Predicated region
    $region9: #{bridge_block.7} parent=5 // pred_check
      _
    $region10: #{bridge_block.7} parent=5 // pred_check_branch
      %132 = sbr.rel (%p129) target = $region12
    $region11: #{bridge_block.7} parent=5 // pred_region
      %s133 = ssub.s32 %s9, 1
      // Predicated region
      $region13: #{bridge_block.7} parent=11 // pred_check
        %p134 = pneg %p70
      $region14: #{bridge_block.7} parent=11 // pred_check_branch
        %136 = sbr.rel (%p134) target = $region16
      $region15: #{bridge_block.7} parent=11 // pred_region
        _
      $region16: #{bridge_block.7} parent=11 // pred_fallthru
        _
      // Predicated region
      $region17: #{bridge_block.7} parent=11 // pred_check
        %p137 = pneg %p91
      $region18: #{bridge_block.7} parent=11 // pred_check_branch
        %139 = sbr.rel (%p137) target = $region20
      $region19: #{bridge_block.7} parent=11 // pred_region
        _
      $region20: #{bridge_block.7} parent=11 // pred_fallthru
        _
    $region12: #{bridge_block.7} parent=5 // pred_fallthru
      _
    %p140 = scmp.lt.s32.totalorder %s9, 16
    // Predicated region
    $region21: #{bridge_block.7} parent=5 // pred_check
      %p141 = pneg %p140
    $region22: #{bridge_block.7} parent=5 // pred_check_branch
      %143 = sbr.rel (%p141) target = $region24
    $region23: #{bridge_block.7} parent=5 // pred_region
      // Predicated region
      $region25: #{bridge_block.7} parent=23 // pred_check
        %p144 = pneg %p43
      $region26: #{bridge_block.7} parent=23 // pred_check_branch
        %146 = sbr.rel (%p144) target = $region28
      $region27: #{bridge_block.7} parent=23 // pred_region
        %p147 = scmp.lt.s32.totalorder %s17, 1
        %s148 = scalar_select %p147, %s17, 1
        %p149 = scmp.lt.s32.totalorder %s16, 7
        %s150 = scalar_select %p149, %s16, 7
        %s151 = smul.addr %s150, 8
        %s152 = smul.addr %s148, 64
        %s153 = sadd.s32 %s151, %s152
        %s154 = smul.addr %s153, 4
        %s155 = scalar_lea.vmem %s0, %s154
      $region28: #{bridge_block.7} parent=23 // pred_fallthru
        _
    $region24: #{bridge_block.7} parent=5 // pred_fallthru
      _
    %p156 = scmp.le.s32.totalorder 1, %s9
    %p157 = scmp.lt.s32.totalorder %s9, 17
    %p158 = pnand %p156, %p157
    %p159 = pneg %p158
    // Predicated region
    $region29: #{bridge_block.7} parent=5 // pred_check
      _
    $region30: #{bridge_block.7} parent=5 // pred_check_branch
      %161 = sbr.rel (%p158) target = $region32
    $region31: #{bridge_block.7} parent=5 // pred_region
      %s162 = ssub.s32 %s9, 1
      %p163 = scmp.lt.s32.totalorder %s19, 1
      %s164 = scalar_select %p163, %s19, 1
      %p165 = scmp.lt.s32.totalorder %s18, 7
      %s166 = scalar_select %p165, %s18, 7
      %s167 = smul.addr %s166, 8
      %s168 = smul.addr %s164, 64
      %s169 = sadd.s32 %s167, %s168
      %s170 = smul.addr %s169, 4
      %s171 = scalar_lea.vmem %s0, %s170
      %p172 = pneg %p49
      %p173 = pneg %p46
      %p174 = pneg %p70
      %p175 = pneg %p67
      %p176 = pneg %p91
      %p177 = pneg %p88
      %p178 = pneg %p119
      %p179 = pneg %p116
      %p180 = scmp.lt.s32.totalorder %s19, 1
      %s181 = scalar_select %p180, %s19, 1
      %p182 = scmp.lt.s32.totalorder %s18, 7
      %s183 = scalar_select %p182, %s18, 7
      %s184 = smul.addr %s183, 8
      %s185 = smul.addr %s181, 64
      %s186 = sadd.s32 %s184, %s185
      %s187 = smul.addr %s186, 8
      %s188 = scalar_lea.vmem %s3, %s187
      %p189 = scmp.lt.s32.totalorder %s19, 1
      %s190 = scalar_select %p189, %s19, 1
      %p191 = scmp.lt.s32.totalorder %s18, 7
      %s192 = scalar_select %p191, %s18, 7
      %s193 = smul.addr %s192, 8
      %s194 = smul.addr %s190, 64
      %s195 = sadd.s32 %s193, %s194
      %s196 = smul.addr %s195, 4
      %s197 = scalar_lea.vmem %s0, %s196
      %p198 = scmp.lt.s32.totalorder %s19, 1
      %s199 = scalar_select %p198, %s19, 1
      %p200 = scmp.lt.s32.totalorder %s18, 7
      %s201 = scalar_select %p200, %s18, 7
      %s202 = smul.addr %s201, 8
      %s203 = smul.addr %s199, 64
      %s204 = sadd.s32 %s202, %s203
      %s205 = smul.addr %s204, 8
      %s206 = scalar_lea.vmem %s3, %s205
      %v207 = vld [vmem:[%s197] sm:$0xf]
      %v208 = vld [vmem:[%s197 + $0x4] sm:$0xf]
      %v209 = vld [vmem:[%s197 + $0x8] sm:$0xf]
      %v210 = vld [vmem:[%s197 + $0xc] sm:$0xf]
      %v211 = vld [vmem:[%s197 + $0x10] sm:$0xf]
      %v212 = vld [vmem:[%s197 + $0x14] sm:$0xf]
      %v213 = vld [vmem:[%s197 + $0x18] sm:$0xf]
      %v214 = vld [vmem:[%s197 + $0x1c] sm:$0xf]
      %v215 = vunpack.c.l.bf16 %v207
      %v216 = vunpack.c.l.bf16 %v208
      %v217 = vunpack.c.l.bf16 %v209
      %v218 = vunpack.c.l.bf16 %v210
      %v219 = vunpack.c.l.bf16 %v211
      %v220 = vunpack.c.l.bf16 %v212
      %v221 = vunpack.c.l.bf16 %v213
      %v222 = vunpack.c.l.bf16 %v214
      %v223 = vld [vmem:[%s1] sm:$0x1]
      %v225 = vlaneseq
      %v226 = vshrl.u32 %v225, 7
      %v227 = vsub.s32 0, %v226
      %v228 = vrot.slane %v223, %v227
      %v230 = vmul.f32 %v215, %v228
      %v231 = vmul.f32 %v216, %v228
      %v232 = vmul.f32 %v217, %v228
      %v233 = vmul.f32 %v218, %v228
      %v234 = vmul.f32 %v219, %v228
      %v235 = vmul.f32 %v220, %v228
      %v236 = vmul.f32 %v221, %v228
      %v237 = vmul.f32 %v222, %v228
      %v238 = vld [vmem:[%s2] sm:$0x1]
      %v240 = vlaneseq
      %v241 = vshrl.u32 %v240, 7
      %v242 = vsub.s32 0, %v241
      %v243 = vrot.slane %v238, %v242
      %v245 = vadd.f32 %v230, %v243
      %v246 = vadd.f32 %v231, %v243
      %v247 = vadd.f32 %v232, %v243
      %v248 = vadd.f32 %v233, %v243
      %v249 = vadd.f32 %v234, %v243
      %v250 = vadd.f32 %v235, %v243
      %v251 = vadd.f32 %v236, %v243
      %v252 = vadd.f32 %v237, %v243
      %v253 = vmul.f32 %v245, 0.01
      %v254 = vmul.f32 %v246, 0.01
      %v255 = vmul.f32 %v247, 0.01
      %v256 = vmul.f32 %v248, 0.01
      %v257 = vmul.f32 %v249, 0.01
      %v258 = vmul.f32 %v250, 0.01
      %v259 = vmul.f32 %v251, 0.01
      %v260 = vmul.f32 %v252, 0.01
      %v261 = vmax.f32 %v245, %v253
      %v262 = vmax.f32 %v246, %v254
      %v263 = vmax.f32 %v247, %v255
      %v264 = vmax.f32 %v248, %v256
      %v265 = vmax.f32 %v249, %v257
      %v266 = vmax.f32 %v250, %v258
      %v267 = vmax.f32 %v251, %v259
      %v268 = vmax.f32 %v252, %v260
      %vm269 = vcmask 31744
      %270 = vst.msk [vmem:[%s206] sm:$0xff] %vm269, %v261
      %271 = vst.msk [vmem:[%s206 + $0x8] sm:$0xff] %vm269, %v262
      %272 = vst.msk [vmem:[%s206 + $0x10] sm:$0xff] %vm269, %v263
      %273 = vst.msk [vmem:[%s206 + $0x18] sm:$0xff] %vm269, %v264
      %274 = vst.msk [vmem:[%s206 + $0x20] sm:$0xff] %vm269, %v265
      %275 = vst.msk [vmem:[%s206 + $0x28] sm:$0xff] %vm269, %v266
      %276 = vst.msk [vmem:[%s206 + $0x30] sm:$0xff] %vm269, %v267
      %277 = vst.msk [vmem:[%s206 + $0x38] sm:$0xff] %vm269, %v268
      %p278 = scmp.lt.s32.totalorder %s19, 1
      %s279 = scalar_select %p278, %s19, 1
      %p280 = scmp.lt.s32.totalorder %s18, 7
      %s281 = scalar_select %p280, %s18, 7
      %s282 = smul.addr %s281, 8
      %s283 = smul.addr %s279, 64
      %s284 = sadd.s32 %s282, %s283
      %s285 = smul.addr %s284, 8
      %s286 = scalar_lea.vmem %s3, %s285
      // Predicated region
      $region33: #{bridge_block.7} parent=31 // pred_check
        %p287 = pneg %p116
      $region34: #{bridge_block.7} parent=31 // pred_check_branch
        %289 = sbr.rel (%p287) target = $region36
      $region35: #{bridge_block.7} parent=31 // pred_region
        _
      $region36: #{bridge_block.7} parent=31 // pred_fallthru
        _
    $region32: #{bridge_block.7} parent=5 // pred_fallthru
      _
    %p290 = scmp.le.s32.totalorder 2, %s9
    // Predicated region
    $region37: #{bridge_block.7} parent=5 // pred_check
      %p291 = pneg %p290
    $region38: #{bridge_block.7} parent=5 // pred_check_branch
      %293 = sbr.rel (%p291) target = $region40
    $region39: #{bridge_block.7} parent=5 // pred_region
      %s294 = ssub.s32 %s9, 2
      // Predicated region
      $region41: #{bridge_block.7} parent=39 // pred_check
        %p295 = pneg %p122
      $region42: #{bridge_block.7} parent=39 // pred_check_branch
        %297 = sbr.rel (%p295) target = $region44
      $region43: #{bridge_block.7} parent=39 // pred_region
        %p298 = scmp.lt.s32.totalorder %s21, 1
        %s299 = scalar_select %p298, %s21, 1
        %p300 = scmp.lt.s32.totalorder %s20, 7
        %s301 = scalar_select %p300, %s20, 7
        %s302 = smul.addr %s301, 8
        %s303 = smul.addr %s299, 64
        %s304 = sadd.s32 %s302, %s303
        %s305 = smul.addr %s304, 8
        %s306 = scalar_lea.vmem %s3, %s305
      $region44: #{bridge_block.7} parent=39 // pred_fallthru
        _
    $region40: #{bridge_block.7} parent=5 // pred_fallthru
      _
  $region6: #{bridge_block.7} parent=0 // loop_footer
    %s13 = sadd.s32 1, %s9
  $region7: #{bridge_block.7} parent=0 // loop_footer_branch
    %8 = sbr.rel target = $region3
  $region8: #{bridge_block.7} parent=0 // loop_exit
    _

// kernel: bridge_block.6
$region0: #{bridge_block.6}
  #allocation0 [shape = 'u32[]', space=smem, size = 0x4, offset = 0x4, fixed_abs, tag = 'smem constant byte address 0x4 - core index']
  #allocation1 [shape = 'u32[144,128]{1,0:T(1,128)}', space=vmem, size = 0x12000, scoped, tag = 'internal scratch']
  %s0 = inlined_call_operand.vmem [shape: bf16[2,10,10,10,8], index: 0, kind: input, shape index: {}, may-alias: {0,1,2}]
  %s1 = inlined_call_operand.vmem [shape: bf16[2,10,10,10,8], index: 1, kind: input, shape index: {}, may-alias: {0,1,2}]
  %s2 = inlined_call_operand.vmem [shape: bf16[2,10,10,10,8], index: 2, kind: input, shape index: {}, may-alias: {0,1,2}]
  %s3 = inlined_call_operand.vmem [shape: f32[3,3,3,8,4], index: 3, kind: input, shape index: {}]
  %s4 = inlined_call_operand.vmem [shape: bf16[2,8,64,4], index: 4, kind: output, shape index: {0}]
  %s5 = inlined_call_operand.vmem [shape: f32[2,8,1,4], index: 5, kind: output, shape index: {1}]
  %s6 = inlined_call_operand.vmem [shape: f32[2,8,1,4], index: 6, kind: output, shape index: {2}]
  %7 = xla_tuple %s4, %s5, %s6
  %s8 = sld [smem:[#allocation0]]
  $region65: #{bridge_block.6} parent=0
    _
  %s10 = ssub.s32 1, %s8
  %s11 = scalar_select 0, %s10, %s8
  loop: start=0, step=1, limit=18
  $region2: #{bridge_block.6} parent=0 // loop_pre_header
    _
  $region3: #{bridge_block.6} parent=0 // loop_header
    %s13 = sphi 0, %s17
    %p14 = scmp.ge.s32.totalorder %s13, 18
    %s20 = sphi 0, %s32
    %s21 = sphi 0, %s28
    %s22 = sphi 0, %s20
    %s23 = sphi 0, %s21
    %s24 = sphi 0, %s22
    %s25 = sphi 0, %s23
    %s37 = sphi 0, %s39
    %s40 = sphi 0, %s37
    %s41 = sphi 0, %s40
    %s57 = sphi 0, %s41
    %s67 = sphi 0, %s69
    %s70 = sphi 0, %s67
    %s71 = sphi 0, %s70
    %s87 = sphi 0, %s71
    %s97 = sphi 0, %s99
    %s100 = sphi 0, %s97
    %s101 = sphi 0, %s100
    %s117 = sphi 0, %s101
    %s121 = sphi 0, %s121
    %s123 = sphi 0, %s121
    %s124 = sphi 0, %s123
    %s138 = sphi 0, %s124
    %s146 = sphi 0, %s148
    %s149 = sphi 0, %s146
    %s150 = sphi 0, %s149
    %s166 = sphi 0, %s150
    %s174 = sphi 0, %s176
    %s177 = sphi 0, %s174
    %s178 = sphi 0, %s177
    %s194 = sphi 0, %s178
    %s202 = sphi 0, %s204
    %s205 = sphi 0, %s202
    %s206 = sphi 0, %s205
    %s222 = sphi 0, %s206
  $region4: #{bridge_block.6} parent=0 // loop_header_branch
    %16 = sbr.rel (%p14) target = $region8
  $region5: #{bridge_block.6} parent=0 // loop_body
    %s18 = ssub.s32 %s13, 1
    %s19 = ssub.s32 %s13, 2
    %s26 = sadd.s32 1, %s21
    %p27 = scmp.ge.s32.totalorder %s26, 2
    %s28 = scalar_select %p27, 0, %s26
    %s29 = sadd.s32 1, %s20
    %s30 = scalar_select %p27, %s29, %s20
    %p31 = scmp.ge.s32.totalorder %s30, 8
    %s32 = scalar_select %p31, 0, %s30
    %s33 = ssub.s32 %s21, %s28
    %s34 = ssub.s32 %s20, %s32
    %s35 = sor.u32 %s33, %s34
    %p36 = scmp.eq.s32.totalorder %s35, 0
    %s38 = sadd.s32 %s37, 1
    %s39 = scalar_select %p36, %s37, %s38
    %p42 = pneg %p36
    %p43 = scmp.eq.s32.totalorder %s13, 15
    %p44 = por %p42, %p43
    %p45 = scmp.ne.s32.totalorder %s37, %s40
    %p46 = scmp.eq.s32.totalorder %s13, 0
    %p47 = por %p45, %p46
    %p48 = scmp.ne.s32.totalorder %s37, %s40
    %p49 = scmp.eq.s32.totalorder %s18, 15
    %p50 = por %p48, %p49
    %p51 = scmp.ne.s32.totalorder %s40, %s41
    %p52 = scmp.eq.s32.totalorder %s18, 0
    %p53 = por %p51, %p52
    %p54 = scmp.ne.s32.totalorder %s40, %s41
    %p55 = scmp.eq.s32.totalorder %s19, 15
    %p56 = por %p54, %p55
    %p58 = scmp.ne.s32.totalorder %s41, %s57
    %p59 = scmp.eq.s32.totalorder %s19, 0
    %p60 = por %p58, %p59
    %s61 = sadd.s32 %s20, 1
    %s62 = sadd.s32 %s32, 1
    %s63 = ssub.s32 %s21, %s28
    %s64 = ssub.s32 %s61, %s62
    %s65 = sor.u32 %s63, %s64
    %p66 = scmp.eq.s32.totalorder %s65, 0
    %s68 = sadd.s32 %s67, 1
    %s69 = scalar_select %p66, %s67, %s68
    %p72 = pneg %p66
    %p73 = scmp.eq.s32.totalorder %s13, 15
    %p74 = por %p72, %p73
    %p75 = scmp.ne.s32.totalorder %s67, %s70
    %p76 = scmp.eq.s32.totalorder %s13, 0
    %p77 = por %p75, %p76
    %p78 = scmp.ne.s32.totalorder %s67, %s70
    %p79 = scmp.eq.s32.totalorder %s18, 15
    %p80 = por %p78, %p79
    %p81 = scmp.ne.s32.totalorder %s70, %s71
    %p82 = scmp.eq.s32.totalorder %s18, 0
    %p83 = por %p81, %p82
    %p84 = scmp.ne.s32.totalorder %s70, %s71
    %p85 = scmp.eq.s32.totalorder %s19, 15
    %p86 = por %p84, %p85
    %p88 = scmp.ne.s32.totalorder %s71, %s87
    %p89 = scmp.eq.s32.totalorder %s19, 0
    %p90 = por %p88, %p89
    %s91 = sadd.s32 %s20, 2
    %s92 = sadd.s32 %s32, 2
    %s93 = ssub.s32 %s21, %s28
    %s94 = ssub.s32 %s91, %s92
    %s95 = sor.u32 %s93, %s94
    %p96 = scmp.eq.s32.totalorder %s95, 0
    %s98 = sadd.s32 %s97, 1
    %s99 = scalar_select %p96, %s97, %s98
    %p102 = pneg %p96
    %p103 = scmp.eq.s32.totalorder %s13, 15
    %p104 = por %p102, %p103
    %p105 = scmp.ne.s32.totalorder %s97, %s100
    %p106 = scmp.eq.s32.totalorder %s13, 0
    %p107 = por %p105, %p106
    %p108 = scmp.ne.s32.totalorder %s97, %s100
    %p109 = scmp.eq.s32.totalorder %s18, 15
    %p110 = por %p108, %p109
    %p111 = scmp.ne.s32.totalorder %s100, %s101
    %p112 = scmp.eq.s32.totalorder %s18, 0
    %p113 = por %p111, %p112
    %p114 = scmp.ne.s32.totalorder %s100, %s101
    %p115 = scmp.eq.s32.totalorder %s19, 15
    %p116 = por %p114, %p115
    %p118 = scmp.ne.s32.totalorder %s101, %s117
    %p119 = scmp.eq.s32.totalorder %s19, 0
    %p120 = por %p118, %p119
    %s122 = sadd.s32 %s121, 1
    %p125 = scmp.eq.s32.totalorder %s13, 15
    %p126 = scmp.ne.s32.totalorder %s121, %s123
    %p127 = scmp.eq.s32.totalorder %s13, 0
    %p128 = por %p126, %p127
    %p129 = scmp.ne.s32.totalorder %s121, %s123
    %p130 = scmp.eq.s32.totalorder %s18, 15
    %p131 = por %p129, %p130
    %p132 = scmp.ne.s32.totalorder %s123, %s124
    %p133 = scmp.eq.s32.totalorder %s18, 0
    %p134 = por %p132, %p133
    %p135 = scmp.ne.s32.totalorder %s123, %s124
    %p136 = scmp.eq.s32.totalorder %s19, 15
    %p137 = por %p135, %p136
    %p139 = scmp.ne.s32.totalorder %s124, %s138
    %p140 = scmp.eq.s32.totalorder %s19, 0
    %p141 = por %p139, %p140
    %s142 = ssub.s32 %s21, %s28
    %s143 = ssub.s32 %s20, %s32
    %s144 = sor.u32 %s142, %s143
    %p145 = scmp.eq.s32.totalorder %s144, 0
    %s147 = sadd.s32 %s146, 1
    %s148 = scalar_select %p145, %s146, %s147
    %p151 = pneg %p145
    %p152 = scmp.eq.s32.totalorder %s13, 15
    %p153 = por %p151, %p152
    %p154 = scmp.ne.s32.totalorder %s146, %s149
    %p155 = scmp.eq.s32.totalorder %s13, 0
    %p156 = por %p154, %p155
    %p157 = scmp.ne.s32.totalorder %s146, %s149
    %p158 = scmp.eq.s32.totalorder %s18, 15
    %p159 = por %p157, %p158
    %p160 = scmp.ne.s32.totalorder %s149, %s150
    %p161 = scmp.eq.s32.totalorder %s18, 0
    %p162 = por %p160, %p161
    %p163 = scmp.ne.s32.totalorder %s149, %s150
    %p164 = scmp.eq.s32.totalorder %s19, 15
    %p165 = por %p163, %p164
    %p167 = scmp.ne.s32.totalorder %s150, %s166
    %p168 = scmp.eq.s32.totalorder %s19, 0
    %p169 = por %p167, %p168
    %s170 = ssub.s32 %s21, %s28
    %s171 = ssub.s32 %s20, %s32
    %s172 = sor.u32 %s170, %s171
    %p173 = scmp.eq.s32.totalorder %s172, 0
    %s175 = sadd.s32 %s174, 1
    %s176 = scalar_select %p173, %s174, %s175
    %p179 = pneg %p173
    %p180 = scmp.eq.s32.totalorder %s13, 15
    %p181 = por %p179, %p180
    %p182 = scmp.ne.s32.totalorder %s174, %s177
    %p183 = scmp.eq.s32.totalorder %s13, 0
    %p184 = por %p182, %p183
    %p185 = scmp.ne.s32.totalorder %s174, %s177
    %p186 = scmp.eq.s32.totalorder %s18, 15
    %p187 = por %p185, %p186
    %p188 = scmp.ne.s32.totalorder %s177, %s178
    %p189 = scmp.eq.s32.totalorder %s18, 0
    %p190 = por %p188, %p189
    %p191 = scmp.ne.s32.totalorder %s177, %s178
    %p192 = scmp.eq.s32.totalorder %s19, 15
    %p193 = por %p191, %p192
    %p195 = scmp.ne.s32.totalorder %s178, %s194
    %p196 = scmp.eq.s32.totalorder %s19, 0
    %p197 = por %p195, %p196
    %s198 = ssub.s32 %s21, %s28
    %s199 = ssub.s32 %s20, %s32
    %s200 = sor.u32 %s198, %s199
    %p201 = scmp.eq.s32.totalorder %s200, 0
    %s203 = sadd.s32 %s202, 1
    %s204 = scalar_select %p201, %s202, %s203
    %p207 = pneg %p201
    %p208 = scmp.eq.s32.totalorder %s13, 15
    %p209 = por %p207, %p208
    %p210 = scmp.ne.s32.totalorder %s202, %s205
    %p211 = scmp.eq.s32.totalorder %s13, 0
    %p212 = por %p210, %p211
    %p213 = scmp.ne.s32.totalorder %s202, %s205
    %p214 = scmp.eq.s32.totalorder %s18, 15
    %p215 = por %p213, %p214
    %p216 = scmp.ne.s32.totalorder %s205, %s206
    %p217 = scmp.eq.s32.totalorder %s18, 0
    %p218 = por %p216, %p217
    %p219 = scmp.ne.s32.totalorder %s205, %s206
    %p220 = scmp.eq.s32.totalorder %s19, 15
    %p221 = por %p219, %p220
    %p223 = scmp.ne.s32.totalorder %s206, %s222
    %p224 = scmp.eq.s32.totalorder %s19, 0
    %p225 = por %p223, %p224
    %p226 = scmp.le.s32.totalorder 1, %s13
    %p227 = scmp.lt.s32.totalorder %s13, 17
    %p228 = pnand %p226, %p227
    %p229 = pneg %p228
    // Predicated region
    $region9: #{bridge_block.6} parent=5 // pred_check
      _
    $region10: #{bridge_block.6} parent=5 // pred_check_branch
      %231 = sbr.rel (%p228) target = $region12
    $region11: #{bridge_block.6} parent=5 // pred_region
      %s232 = ssub.s32 %s13, 1
      // Predicated region
      $region13: #{bridge_block.6} parent=11 // pred_check
        %p233 = pneg %p134
      $region14: #{bridge_block.6} parent=11 // pred_check_branch
        %235 = sbr.rel (%p233) target = $region16
      $region15: #{bridge_block.6} parent=11 // pred_region
        _
      $region16: #{bridge_block.6} parent=11 // pred_fallthru
        _
    $region12: #{bridge_block.6} parent=5 // pred_fallthru
      _
    %p236 = scmp.lt.s32.totalorder %s13, 16
    // Predicated region
    $region17: #{bridge_block.6} parent=5 // pred_check
      %p237 = pneg %p236
    $region18: #{bridge_block.6} parent=5 // pred_check_branch
      %239 = sbr.rel (%p237) target = $region20
    $region19: #{bridge_block.6} parent=5 // pred_region
      // Predicated region
      $region21: #{bridge_block.6} parent=19 // pred_check
        %p240 = pneg %p47
      $region22: #{bridge_block.6} parent=19 // pred_check_branch
        %242 = sbr.rel (%p240) target = $region24
      $region23: #{bridge_block.6} parent=19 // pred_region
        %p243 = scmp.lt.s32.totalorder %s21, 1
        %s244 = scalar_select %p243, %s21, 1
        %p245 = scmp.lt.s32.totalorder %s20, 9
        %s246 = scalar_select %p245, %s20, 9
        %s247 = smul.addr %s246, 20
        %s248 = smul.addr %s244, 200
        %s249 = sadd.s32 %s247, %s248
        %s250 = smul.addr %s249, 4
        %s251 = scalar_lea.vmem %s0, %s250
      $region24: #{bridge_block.6} parent=19 // pred_fallthru
        _
      // Predicated region
      $region25: #{bridge_block.6} parent=19 // pred_check
        %p252 = pneg %p77
      $region26: #{bridge_block.6} parent=19 // pred_check_branch
        %254 = sbr.rel (%p252) target = $region28
      $region27: #{bridge_block.6} parent=19 // pred_region
        %s255 = sadd.s32 %s20, 1
        %p256 = scmp.lt.s32.totalorder %s21, 1
        %s257 = scalar_select %p256, %s21, 1
        %p258 = scmp.lt.s32.totalorder %s255, 9
        %s259 = scalar_select %p258, %s255, 9
        %s260 = smul.addr %s259, 20
        %s261 = smul.addr %s257, 200
        %s262 = sadd.s32 %s260, %s261
        %s263 = smul.addr %s262, 4
        %s264 = scalar_lea.vmem %s1, %s263
        %s265 = sadd.s32 %s20, 1
      $region28: #{bridge_block.6} parent=19 // pred_fallthru
        _
      // Predicated region
      $region29: #{bridge_block.6} parent=19 // pred_check
        %p266 = pneg %p107
      $region30: #{bridge_block.6} parent=19 // pred_check_branch
        %268 = sbr.rel (%p266) target = $region32
      $region31: #{bridge_block.6} parent=19 // pred_region
        %s269 = sadd.s32 %s20, 2
        %p270 = scmp.lt.s32.totalorder %s21, 1
        %s271 = scalar_select %p270, %s21, 1
        %p272 = scmp.lt.s32.totalorder %s269, 9
        %s273 = scalar_select %p272, %s269, 9
        %s274 = smul.addr %s273, 20
        %s275 = smul.addr %s271, 200
        %s276 = sadd.s32 %s274, %s275
        %s277 = smul.addr %s276, 4
        %s278 = scalar_lea.vmem %s2, %s277
        %s279 = sadd.s32 %s20, 2
      $region32: #{bridge_block.6} parent=19 // pred_fallthru
        _
    $region20: #{bridge_block.6} parent=5 // pred_fallthru
      _
    %p280 = scmp.le.s32.totalorder 1, %s13
    %p281 = scmp.lt.s32.totalorder %s13, 17
    %p282 = pnand %p280, %p281
    %p283 = pneg %p282
    // Predicated region
    $region33: #{bridge_block.6} parent=5 // pred_check
      _
    $region34: #{bridge_block.6} parent=5 // pred_check_branch
      %285 = sbr.rel (%p282) target = $region36
    $region35: #{bridge_block.6} parent=5 // pred_region
      %s286 = ssub.s32 %s13, 1
      %p287 = scmp.lt.s32.totalorder %s23, 1
      %s288 = scalar_select %p287, %s23, 1
      %p289 = scmp.lt.s32.totalorder %s22, 9
      %s290 = scalar_select %p289, %s22, 9
      %s291 = smul.addr %s290, 20
      %s292 = smul.addr %s288, 200
      %s293 = sadd.s32 %s291, %s292
      %s294 = smul.addr %s293, 4
      %s295 = scalar_lea.vmem %s0, %s294
      %p296 = pneg %p53
      %p297 = pneg %p50
      %s298 = sadd.s32 %s22, 1
      %p299 = scmp.lt.s32.totalorder %s23, 1
      %s300 = scalar_select %p299, %s23, 1
      %p301 = scmp.lt.s32.totalorder %s298, 9
      %s302 = scalar_select %p301, %s298, 9
      %s303 = smul.addr %s302, 20
      %s304 = smul.addr %s300, 200
      %s305 = sadd.s32 %s303, %s304
      %s306 = smul.addr %s305, 4
      %s307 = scalar_lea.vmem %s1, %s306
      %p308 = pneg %p83
      %p309 = pneg %p80
      %s310 = sadd.s32 %s22, 2
      %p311 = scmp.lt.s32.totalorder %s23, 1
      %s312 = scalar_select %p311, %s23, 1
      %p313 = scmp.lt.s32.totalorder %s310, 9
      %s314 = scalar_select %p313, %s310, 9
      %s315 = smul.addr %s314, 20
      %s316 = smul.addr %s312, 200
      %s317 = sadd.s32 %s315, %s316
      %s318 = smul.addr %s317, 4
      %s319 = scalar_lea.vmem %s2, %s318
      %p320 = pneg %p113
      %p321 = pneg %p110
      %p322 = pneg %p134
      %p323 = pneg %p131
      %p324 = pneg %p162
      %p325 = pneg %p159
      %p326 = scmp.lt.s32.totalorder %s23, 1
      %s327 = scalar_select %p326, %s23, 1
      %p328 = scmp.lt.s32.totalorder %s22, 7
      %s329 = scalar_select %p328, %s22, 7
      %s330 = smul.addr %s329, 8
      %s331 = smul.addr %s327, 64
      %s332 = sadd.s32 %s330, %s331
      %s333 = smul.addr %s332, 4
      %s334 = scalar_lea.vmem %s4, %s333
      %p335 = pneg %p190
      %p336 = pneg %p187
      %p337 = scmp.lt.s32.totalorder %s23, 1
      %s338 = scalar_select %p337, %s23, 1
      %p339 = scmp.lt.s32.totalorder %s22, 7
      %s340 = scalar_select %p339, %s22, 7
      %s341 = smul.addr %s338, 8
      %s342 = sadd.s32 %s340, %s341
      %s343 = scalar_lea.vmem %s5, %s342
      %p344 = pneg %p218
      %p345 = pneg %p215
      %p346 = scmp.lt.s32.totalorder %s23, 1
      %s347 = scalar_select %p346, %s23, 1
      %p348 = scmp.lt.s32.totalorder %s22, 7
      %s349 = scalar_select %p348, %s22, 7
      %s350 = smul.addr %s347, 8
      %s351 = sadd.s32 %s349, %s350
      %s352 = scalar_lea.vmem %s6, %s351
      %p353 = scmp.lt.s32.totalorder %s23, 1
      %s354 = scalar_select %p353, %s23, 1
      %p355 = scmp.lt.s32.totalorder %s22, 9
      %s356 = scalar_select %p355, %s22, 9
      %s357 = smul.addr %s356, 20
      %s358 = smul.addr %s354, 200
      %s359 = sadd.s32 %s357, %s358
      %s360 = smul.addr %s359, 4
      %s361 = scalar_lea.vmem %s0, %s360
      %s362 = sadd.s32 %s22, 1
      %p363 = scmp.lt.s32.totalorder %s23, 1
      %s364 = scalar_select %p363, %s23, 1
      %p365 = scmp.lt.s32.totalorder %s362, 9
      %s366 = scalar_select %p365, %s362, 9
      %s367 = smul.addr %s366, 20
      %s368 = smul.addr %s364, 200
      %s369 = sadd.s32 %s367, %s368
      %s370 = smul.addr %s369, 4
      %s371 = scalar_lea.vmem %s1, %s370
      %s372 = sadd.s32 %s22, 1
      %s373 = sadd.s32 %s22, 2
      %p374 = scmp.lt.s32.totalorder %s23, 1
      %s375 = scalar_select %p374, %s23, 1
      %p376 = scmp.lt.s32.totalorder %s373, 9
      %s377 = scalar_select %p376, %s373, 9
      %s378 = smul.addr %s377, 20
      %s379 = smul.addr %s375, 200
      %s380 = sadd.s32 %s378, %s379
      %s381 = smul.addr %s380, 4
      %s382 = scalar_lea.vmem %s2, %s381
      %s383 = sadd.s32 %s22, 2
      %p384 = scmp.lt.s32.totalorder %s23, 1
      %s385 = scalar_select %p384, %s23, 1
      %p386 = scmp.lt.s32.totalorder %s22, 7
      %s387 = scalar_select %p386, %s22, 7
      %s388 = smul.addr %s387, 8
      %s389 = smul.addr %s385, 64
      %s390 = sadd.s32 %s388, %s389
      %s391 = smul.addr %s390, 4
      %s392 = scalar_lea.vmem %s4, %s391
      %p393 = scmp.lt.s32.totalorder %s23, 1
      %s394 = scalar_select %p393, %s23, 1
      %p395 = scmp.lt.s32.totalorder %s22, 7
      %s396 = scalar_select %p395, %s22, 7
      %s397 = smul.addr %s394, 8
      %s398 = sadd.s32 %s396, %s397
      %s399 = scalar_lea.vmem %s5, %s398
      %p400 = scmp.lt.s32.totalorder %s23, 1
      %s401 = scalar_select %p400, %s23, 1
      %p402 = scmp.lt.s32.totalorder %s22, 7
      %s403 = scalar_select %p402, %s22, 7
      %s404 = smul.addr %s401, 8
      %s405 = sadd.s32 %s403, %s404
      %s406 = scalar_lea.vmem %s6, %s405
      %v407 = vld [vmem:[%s361] sm:$0xf]
      %v408 = vld [vmem:[%s361 + $0x4] sm:$0x1]
      %v409 = vld [vmem:[%s361 + $0x8] sm:$0xf]
      %v410 = vld [vmem:[%s361 + $0xc] sm:$0x1]
      %v411 = vld [vmem:[%s361 + $0x10] sm:$0xf]
      %v412 = vld [vmem:[%s361 + $0x14] sm:$0x1]
      %v413 = vld [vmem:[%s361 + $0x18] sm:$0xf]
      %v414 = vld [vmem:[%s361 + $0x1c] sm:$0x1]
      %v415 = vld [vmem:[%s361 + $0x20] sm:$0xf]
      %v416 = vld [vmem:[%s361 + $0x24] sm:$0x1]
      %v417 = vld [vmem:[%s361 + $0x28] sm:$0xf]
      %v418 = vld [vmem:[%s361 + $0x2c] sm:$0x1]
      %v419 = vld [vmem:[%s361 + $0x30] sm:$0xf]
      %v420 = vld [vmem:[%s361 + $0x34] sm:$0x1]
      %v421 = vld [vmem:[%s361 + $0x38] sm:$0xf]
      %v422 = vld [vmem:[%s361 + $0x3c] sm:$0x1]
      %v423 = vld [vmem:[%s361 + $0x40] sm:$0xf]
      %v424 = vld [vmem:[%s361 + $0x44] sm:$0x1]
      %v425 = vld [vmem:[%s361 + $0x48] sm:$0xf]
      %v426 = vld [vmem:[%s361 + $0x4c] sm:$0x1]
      %v427 = vunpack.c.l.bf16 %v407
      %v428 = vunpack.c.l.bf16 %v408
      %v429 = vunpack.c.l.bf16 %v409
      %v430 = vunpack.c.l.bf16 %v410
      %v431 = vunpack.c.l.bf16 %v411
      %v432 = vunpack.c.l.bf16 %v412
      %v433 = vunpack.c.l.bf16 %v413
      %v434 = vunpack.c.l.bf16 %v414
      %v435 = vunpack.c.l.bf16 %v415
      %v436 = vunpack.c.l.bf16 %v416
      %v437 = vunpack.c.l.bf16 %v417
      %v438 = vunpack.c.l.bf16 %v418
      %v439 = vunpack.c.l.bf16 %v419
      %v440 = vunpack.c.l.bf16 %v420
      %v441 = vunpack.c.l.bf16 %v421
      %v442 = vunpack.c.l.bf16 %v422
      %v443 = vunpack.c.l.bf16 %v423
      %v444 = vunpack.c.l.bf16 %v424
      %v445 = vunpack.c.l.bf16 %v425
      %v446 = vunpack.c.l.bf16 %v426
      %v447 = vld [vmem:[%s371] sm:$0xf]
      %v448 = vld [vmem:[%s371 + $0x4] sm:$0x1]
      %v449 = vld [vmem:[%s371 + $0x8] sm:$0xf]
      %v450 = vld [vmem:[%s371 + $0xc] sm:$0x1]
      %v451 = vld [vmem:[%s371 + $0x10] sm:$0xf]
      %v452 = vld [vmem:[%s371 + $0x14] sm:$0x1]
      %v453 = vld [vmem:[%s371 + $0x18] sm:$0xf]
      %v454 = vld [vmem:[%s371 + $0x1c] sm:$0x1]
      %v455 = vld [vmem:[%s371 + $0x20] sm:$0xf]
      %v456 = vld [vmem:[%s371 + $0x24] sm:$0x1]
      %v457 = vld [vmem:[%s371 + $0x28] sm:$0xf]
      %v458 = vld [vmem:[%s371 + $0x2c] sm:$0x1]
      %v459 = vld [vmem:[%s371 + $0x30] sm:$0xf]
      %v460 = vld [vmem:[%s371 + $0x34] sm:$0x1]
      %v461 = vld [vmem:[%s371 + $0x38] sm:$0xf]
      %v462 = vld [vmem:[%s371 + $0x3c] sm:$0x1]
      %v463 = vld [vmem:[%s371 + $0x40] sm:$0xf]
      %v464 = vld [vmem:[%s371 + $0x44] sm:$0x1]
      %v465 = vld [vmem:[%s371 + $0x48] sm:$0xf]
      %v466 = vld [vmem:[%s371 + $0x4c] sm:$0x1]
      %v467 = vunpack.c.l.bf16 %v447
      %v468 = vunpack.c.l.bf16 %v448
      %v469 = vunpack.c.l.bf16 %v449
      %v470 = vunpack.c.l.bf16 %v450
      %v471 = vunpack.c.l.bf16 %v451
      %v472 = vunpack.c.l.bf16 %v452
      %v473 = vunpack.c.l.bf16 %v453
      %v474 = vunpack.c.l.bf16 %v454
      %v475 = vunpack.c.l.bf16 %v455
      %v476 = vunpack.c.l.bf16 %v456
      %v477 = vunpack.c.l.bf16 %v457
      %v478 = vunpack.c.l.bf16 %v458
      %v479 = vunpack.c.l.bf16 %v459
      %v480 = vunpack.c.l.bf16 %v460
      %v481 = vunpack.c.l.bf16 %v461
      %v482 = vunpack.c.l.bf16 %v462
      %v483 = vunpack.c.l.bf16 %v463
      %v484 = vunpack.c.l.bf16 %v464
      %v485 = vunpack.c.l.bf16 %v465
      %v486 = vunpack.c.l.bf16 %v466
      %v487 = vld [vmem:[%s382] sm:$0xf]
      %v488 = vld [vmem:[%s382 + $0x4] sm:$0x1]
      %v489 = vld [vmem:[%s382 + $0x8] sm:$0xf]
      %v490 = vld [vmem:[%s382 + $0xc] sm:$0x1]
      %v491 = vld [vmem:[%s382 + $0x10] sm:$0xf]
      %v492 = vld [vmem:[%s382 + $0x14] sm:$0x1]
      %v493 = vld [vmem:[%s382 + $0x18] sm:$0xf]
      %v494 = vld [vmem:[%s382 + $0x1c] sm:$0x1]
      %v495 = vld [vmem:[%s382 + $0x20] sm:$0xf]
      %v496 = vld [vmem:[%s382 + $0x24] sm:$0x1]
      %v497 = vld [vmem:[%s382 + $0x28] sm:$0xf]
      %v498 = vld [vmem:[%s382 + $0x2c] sm:$0x1]
      %v499 = vld [vmem:[%s382 + $0x30] sm:$0xf]
      %v500 = vld [vmem:[%s382 + $0x34] sm:$0x1]
      %v501 = vld [vmem:[%s382 + $0x38] sm:$0xf]
      %v502 = vld [vmem:[%s382 + $0x3c] sm:$0x1]
      %v503 = vld [vmem:[%s382 + $0x40] sm:$0xf]
      %v504 = vld [vmem:[%s382 + $0x44] sm:$0x1]
      %v505 = vld [vmem:[%s382 + $0x48] sm:$0xf]
      %v506 = vld [vmem:[%s382 + $0x4c] sm:$0x1]
      %v507 = vunpack.c.l.bf16 %v487
      %v508 = vunpack.c.l.bf16 %v488
      %v509 = vunpack.c.l.bf16 %v489
      %v510 = vunpack.c.l.bf16 %v490
      %v511 = vunpack.c.l.bf16 %v491
      %v512 = vunpack.c.l.bf16 %v492
      %v513 = vunpack.c.l.bf16 %v493
      %v514 = vunpack.c.l.bf16 %v494
      %v515 = vunpack.c.l.bf16 %v495
      %v516 = vunpack.c.l.bf16 %v496
      %v517 = vunpack.c.l.bf16 %v497
      %v518 = vunpack.c.l.bf16 %v498
      %v519 = vunpack.c.l.bf16 %v499
      %v520 = vunpack.c.l.bf16 %v500
      %v521 = vunpack.c.l.bf16 %v501
      %v522 = vunpack.c.l.bf16 %v502
      %v523 = vunpack.c.l.bf16 %v503
      %v524 = vunpack.c.l.bf16 %v504
      %v525 = vunpack.c.l.bf16 %v505
      %v526 = vunpack.c.l.bf16 %v506
      %v527 = vld [vmem:[%s3] sm:$0xff]
      %vm544 = vcmask 1046528
      %v545 = vrot.slane %v427, 1
      %v546 = vrot.slane %v428, 1
      %v547 = vsel %vm544, %v545, %v546
      %v548 = vrot.slane %v429, 1
      %v549 = vrot.slane %v430, 1
      %v550 = vsel %vm544, %v548, %v549
      %v551 = vrot.slane %v431, 1
      %v552 = vrot.slane %v432, 1
      %v553 = vsel %vm544, %v551, %v552
      %v554 = vrot.slane %v433, 1
      %v555 = vrot.slane %v434, 1
      %v556 = vsel %vm544, %v554, %v555
      %v557 = vrot.slane %v435, 1
      %v558 = vrot.slane %v436, 1
      %v559 = vsel %vm544, %v557, %v558
      %v560 = vrot.slane %v437, 1
      %v561 = vrot.slane %v438, 1
      %v562 = vsel %vm544, %v560, %v561
      %v563 = vrot.slane %v439, 1
      %v564 = vrot.slane %v440, 1
      %v565 = vsel %vm544, %v563, %v564
      %v566 = vrot.slane %v441, 1
      %v567 = vrot.slane %v442, 1
      %v568 = vsel %vm544, %v566, %v567
      %s569 = scalar_lea.vmem %s3, 8
      %v570 = vld [vmem:[%s569] sm:$0xff]
      %vm571 = vcmask 64512
      %v572 = vsel %vm571, %v547, 0
      %v574 = vsel %vm571, %v550, 0
      %v576 = vsel %vm571, %v553, 0
      %v578 = vsel %vm571, %v556, 0
      %v580 = vsel %vm571, %v559, 0
      %v582 = vsel %vm571, %v562, 0
      %v584 = vsel %vm571, %v565, 0
      %v586 = vsel %vm571, %v568, 0
      %588 = vmatprep.subr.mxu0 0.0
      %589 = vmatpush1.msra.mxu0 %v570
      %590 = vmatprep.subr.mxu0 0.0
      %591 = vmatpush1.msra.mxu0 0.0
      %592 = vmatprep.subr.mxu0 0.0
      %593 = vmatpush1.msra.mxu0 0.0
      %594 = vmatprep.subr.mxu0 0.0
      %595 = vmatpush1.msra.mxu0 0.0
      %596 = vmatprep.subr.mxu0 0.0
      %597 = vmatpush1.msra.mxu0 0.0
      %598 = vmatprep.subr.mxu0 0.0
      %599 = vmatpush1.msra.mxu0 0.0
      %600 = vmatprep.subr.mxu0 0.0
      %601 = vmatpush1.msra.mxu0 0.0
      %602 = vmatprep.subr.mxu0 0.0
      %603 = vmatpush1.msra.mxu0 0.0
      %604 = vmatprep.subr.mxu0 0.0
      %605 = vmatpush1.msra.mxu0 0.0
      %606 = vmatprep.subr.mxu0 0.0
      %607 = vmatpush1.msra.mxu0 0.0
      %608 = vmatprep.subr.mxu0 0.0
      %609 = vmatpush1.msra.mxu0 0.0
      %610 = vmatprep.subr.mxu0 0.0
      %611 = vmatpush1.msra.mxu0 0.0
      %612 = vmatprep.subr.mxu0 0.0
      %613 = vmatpush1.msra.mxu0 0.0
      %614 = vmatprep.subr.mxu0 0.0
      %615 = vmatpush1.msra.mxu0 0.0
      %616 = vmatprep.subr.mxu0 0.0
      %617 = vmatpush1.msra.mxu0 0.0
      %618 = vmatprep.subr.mxu0 0.0
      %619 = vmatpush1.msra.mxu0 0.0
      %620 = vmatprep.subr.mxu0 0.0
      %621 = vmatpush1.msra.mxu0 0.0
      %622 = vmatprep.subr.mxu0 0.0
      %623 = vmatpush1.msra.mxu0 0.0
      %624 = vmatprep.subr.mxu0 0.0
      %625 = vmatpush1.msra.mxu0 0.0
      %626 = vmatprep.subr.mxu0 0.0
      %627 = vmatpush1.msra.mxu0 0.0
      %628 = vmatprep.subr.mxu0 0.0
      %629 = vmatpush1.msra.mxu0 0.0
      %630 = vmatprep.subr.mxu0 0.0
      %631 = vmatpush1.msra.mxu0 0.0
      %632 = vmatprep.subr.mxu0 0.0
      %633 = vmatpush1.msra.mxu0 0.0
      %634 = vmatprep.subr.mxu0 0.0
      %635 = vmatpush1.msra.mxu0 0.0
      %636 = vmatprep.subr.mxu0 0.0
      %637 = vmatpush1.msra.mxu0 0.0
      %638 = vmatprep.subr.mxu0 0.0
      %639 = vmatpush1.msra.mxu0 0.0
      %640 = vmatprep.subr.mxu0 0.0
      %641 = vmatpush1.msra.mxu0 0.0
      %642 = vmatprep.subr.mxu0 0.0
      %643 = vmatpush1.msra.mxu0 0.0
      %644 = vmatprep.subr.mxu0 0.0
      %645 = vmatpush1.msra.mxu0 0.0
      %646 = vmatprep.subr.mxu0 0.0
      %647 = vmatpush1.msra.mxu0 0.0
      %648 = vmatprep.subr.mxu0 0.0
      %649 = vmatpush1.msra.mxu0 0.0
      %650 = vmatprep.subr.mxu0 0.0
      %651 = vmatpush1.msra.mxu0 0.0
      %652 = vmatprep.mubr.f32.mxu0 0.0
      %653 = vmatmul.mubr.f32.gmra.mrb[0].mxu0 %v572
      %v654 = vpop.f32.mrb[0].mxu0
      %v655 = vadd.f32 0.0, %v654
      %v656 = vpop.f32.mrb[0].mxu0
      %657 = vmatprep.mubr.f32.mxu0 0.0
      %658 = vmatmul.mubr.f32.gmra.mrb[0].mxu0 %v574
      %v659 = vpop.f32.mrb[0].mxu0
      %v660 = vadd.f32 0.0, %v659
      %v661 = vpop.f32.mrb[0].mxu0
      %662 = vmatprep.mubr.f32.mxu0 0.0
      %663 = vmatmul.mubr.f32.gmra.mrb[0].mxu0 %v576
      %v664 = vpop.f32.mrb[0].mxu0
      %v665 = vadd.f32 0.0, %v664
      %v666 = vpop.f32.mrb[0].mxu0
      %667 = vmatprep.mubr.f32.mxu0 0.0
      %668 = vmatmul.mubr.f32.gmra.mrb[0].mxu0 %v578
      %v669 = vpop.f32.mrb[0].mxu0
      %v670 = vadd.f32 0.0, %v669
      %v671 = vpop.f32.mrb[0].mxu0
      %672 = vmatprep.mubr.f32.mxu0 0.0
      %673 = vmatmul.mubr.f32.gmra.mrb[0].mxu0 %v580
      %v674 = vpop.f32.mrb[0].mxu0
      %v675 = vadd.f32 0.0, %v674
      %v676 = vpop.f32.mrb[0].mxu0
      %677 = vmatprep.mubr.f32.mxu0 0.0
      %678 = vmatmul.mubr.f32.gmra.mrb[0].mxu0 %v582
      %v679 = vpop.f32.mrb[0].mxu0
      %v680 = vadd.f32 0.0, %v679
      %v681 = vpop.f32.mrb[0].mxu0
      %682 = vmatprep.mubr.f32.mxu0 0.0
      %683 = vmatmul.mubr.f32.gmra.mrb[0].mxu0 %v584
      %v684 = vpop.f32.mrb[0].mxu0
      %v685 = vadd.f32 0.0, %v684
      %v686 = vpop.f32.mrb[0].mxu0
      %687 = vmatprep.mubr.f32.mxu0 0.0
      %688 = vmatmul.mubr.f32.gmra.mrb[0].mxu0 %v586
      %v689 = vpop.f32.mrb[0].mxu0
      %v690 = vadd.f32 0.0, %v689
      %v691 = vpop.f32.mrb[0].mxu0
      %692 = vdwg.mxu0
      %v693 = vsel %vm571, %v427, 0
      %v695 = vsel %vm571, %v429, 0
      %v697 = vsel %vm571, %v431, 0
      %v699 = vsel %vm571, %v433, 0
      %v701 = vsel %vm571, %v435, 0
      %v703 = vsel %vm571, %v437, 0
      %v705 = vsel %vm571, %v439, 0
      %v707 = vsel %vm571, %v441, 0
      %709 = vmatprep.subr.mxu0 0.0
      %710 = vmatpush1.msra.mxu0 %v527
      %711 = vmatprep.subr.mxu0 0.0
      %712 = vmatpush1.msra.mxu0 0.0
      %713 = vmatprep.subr.mxu0 0.0
      %714 = vmatpush1.msra.mxu0 0.0
      %715 = vmatprep.subr.mxu0 0.0
      %716 = vmatpush1.msra.mxu0 0.0
      %717 = vmatprep.subr.mxu0 0.0
      %718 = vmatpush1.msra.mxu0 0.0
      %719 = vmatprep.subr.mxu0 0.0
      %720 = vmatpush1.msra.mxu0 0.0
      %721 = vmatprep.subr.mxu0 0.0
      %722 = vmatpush1.msra.mxu0 0.0
      %723 = vmatprep.subr.mxu0 0.0
      %724 = vmatpush1.msra.mxu0 0.0
      %725 = vmatprep.subr.mxu0 0.0
      %726 = vmatpush1.msra.mxu0 0.0
      %727 = vmatprep.subr.mxu0 0.0
      %728 = vmatpush1.msra.mxu0 0.0
      %729 = vmatprep.subr.mxu0 0.0
      %730 = vmatpush1.msra.mxu0 0.0
      %731 = vmatprep.subr.mxu0 0.0
      %732 = vmatpush1.msra.mxu0 0.0
      %733 = vmatprep.subr.mxu0 0.0
      %734 = vmatpush1.msra.mxu0 0.0
      %735 = vmatprep.subr.mxu0 0.0
      %736 = vmatpush1.msra.mxu0 0.0
      %737 = vmatprep.subr.mxu0 0.0
      %738 = vmatpush1.msra.mxu0 0.0
      %739 = vmatprep.subr.mxu0 0.0
      %740 = vmatpush1.msra.mxu0 0.0
      %741 = vmatprep.subr.mxu0 0.0
      %742 = vmatpush1.msra.mxu0 0.0
      %743 = vmatprep.subr.mxu0 0.0
      %744 = vmatpush1.msra.mxu0 0.0
      %745 = vmatprep.subr.mxu0 0.0
      %746 = vmatpush1.msra.mxu0 0.0
      %747 = vmatprep.subr.mxu0 0.0
      %748 = vmatpush1.msra.mxu0 0.0
      %749 = vmatprep.subr.mxu0 0.0
      %750 = vmatpush1.msra.mxu0 0.0
      %751 = vmatprep.subr.mxu0 0.0
      %752 = vmatpush1.msra.mxu0 0.0
      %753 = vmatprep.subr.mxu0 0.0
      %754 = vmatpush1.msra.mxu0 0.0
      %755 = vmatprep.subr.mxu0 0.0
      %756 = vmatpush1.msra.mxu0 0.0
      %757 = vmatprep.subr.mxu0 0.0
      %758 = vmatpush1.msra.mxu0 0.0
      %759 = vmatprep.subr.mxu0 0.0
      %760 = vmatpush1.msra.mxu0 0.0
      %761 = vmatprep.subr.mxu0 0.0
      %762 = vmatpush1.msra.mxu0 0.0
      %763 = vmatprep.subr.mxu0 0.0
      %764 = vmatpush1.msra.mxu0 0.0
      %765 = vmatprep.subr.mxu0 0.0
      %766 = vmatpush1.msra.mxu0 0.0
      %767 = vmatprep.subr.mxu0 0.0
      %768 = vmatpush1.msra.mxu0 0.0
      %769 = vmatprep.subr.mxu0 0.0
      %770 = vmatpush1.msra.mxu0 0.0
      %771 = vmatprep.subr.mxu0 0.0
      %772 = vmatpush1.msra.mxu0 0.0
      %773 = vmatprep.mubr.f32.mxu0 0.0
      %774 = vmatmul.mubr.f32.gmra.mrb[0].mxu0 %v693
      %v775 = vpop.f32.mrb[0].mxu0
      %v776 = vadd.f32 %v655, %v775
      %v777 = vpop.f32.mrb[0].mxu0
      %778 = vmatprep.mubr.f32.mxu0 0.0
      %779 = vmatmul.mubr.f32.gmra.mrb[0].mxu0 %v695
      %v780 = vpop.f32.mrb[0].mxu0
      %v781 = vadd.f32 %v660, %v780
      %v782 = vpop.f32.mrb[0].mxu0
      %783 = vmatprep.mubr.f32.mxu0 0.0
      %784 = vmatmul.mubr.f32.gmra.mrb[0].mxu0 %v697
      %v785 = vpop.f32.mrb[0].mxu0
      %v786 = vadd.f32 %v665, %v785
      %v787 = vpop.f32.mrb[0].mxu0
      %788 = vmatprep.mubr.f32.mxu0 0.0
      %789 = vmatmul.mubr.f32.gmra.mrb[0].mxu0 %v699
      %v790 = vpop.f32.mrb[0].mxu0
      %v791 = vadd.f32 %v670, %v790
      %v792 = vpop.f32.mrb[0].mxu0
      %793 = vmatprep.mubr.f32.mxu0 0.0
      %794 = vmatmul.mubr.f32.gmra.mrb[0].mxu0 %v701
      %v795 = vpop.f32.mrb[0].mxu0
      %v796 = vadd.f32 %v675, %v795
      %v797 = vpop.f32.mrb[0].mxu0
      %798 = vmatprep.mubr.f32.mxu0 0.0
      %799 = vmatmul.mubr.f32.gmra.mrb[0].mxu0 %v703
      %v800 = vpop.f32.mrb[0].mxu0
      %v801 = vadd.f32 %v680, %v800
      %v802 = vpop.f32.mrb[0].mxu0
      %803 = vmatprep.mubr.f32.mxu0 0.0
      %804 = vmatmul.mubr.f32.gmra.mrb[0].mxu0 %v705
      %v805 = vpop.f32.mrb[0].mxu0
      %v806 = vadd.f32 %v685, %v805
      %v807 = vpop.f32.mrb[0].mxu0
      %808 = vmatprep.mubr.f32.mxu0 0.0
      %809 = vmatmul.mubr.f32.gmra.mrb[0].mxu0 %v707
      %v810 = vpop.f32.mrb[0].mxu0
      %v811 = vadd.f32 %v690, %v810
      %v812 = vpop.f32.mrb[0].mxu0
      %813 = vdwg.mxu0
      %vm814 = vcmask 1045504
      %v815 = vrot.slane %v427, 2
      %v816 = vrot.slane %v428, 2
      %v817 = vsel %vm814, %v815, %v816
      %v818 = vrot.slane %v429, 2
      %v819 = vrot.slane %v430, 2
      %v820 = vsel %vm814, %v818, %v819
      %v821 = vrot.slane %v431, 2
      %v822 = vrot.slane %v432, 2
      %v823 = vsel %vm814, %v821, %v822
      %v824 = vrot.slane %v433, 2
      %v825 = vrot.slane %v434, 2
      %v826 = vsel %vm814, %v824, %v825
      %v827 = vrot.slane %v435, 2
      %v828 = vrot.slane %v436, 2
      %v829 = vsel %vm814, %v827, %v828
      %v830 = vrot.slane %v437, 2
      %v831 = vrot.slane %v438, 2
      %v832 = vsel %vm814, %v830, %v831
      %v833 = vrot.slane %v439, 2
      %v834 = vrot.slane %v440, 2
      %v835 = vsel %vm814, %v833, %v834
      %v836 = vrot.slane %v441, 2
      %v837 = vrot.slane %v442, 2
      %v838 = vsel %vm814, %v836, %v837
      %s839 = scalar_lea.vmem %s3, 16
      %v840 = vld [vmem:[%s839] sm:$0xff]
      %v841 = vsel %vm571, %v817, 0
      %v843 = vsel %vm571, %v820, 0
      %v845 = vsel %vm571, %v823, 0
      %v847 = vsel %vm571, %v826, 0
      %v849 = vsel %vm571, %v829, 0
      %v851 = vsel %vm571, %v832, 0
      %v853 = vsel %vm571, %v835, 0
      %v855 = vsel %vm571, %v838, 0
      %857 = vmatprep.subr.mxu0 0.0
      %858 = vmatpush1.msra.mxu0 %v840
      %859 = vmatprep.subr.mxu0 0.0
      %860 = vmatpush1.msra.mxu0 0.0
      %861 = vmatprep.subr.mxu0 0.0
      %862 = vmatpush1.msra.mxu0 0.0
      %863 = vmatprep.subr.mxu0 0.0
      %864 = vmatpush1.msra.mxu0 0.0
      %865 = vmatprep.subr.mxu0 0.0
      %866 = vmatpush1.msra.mxu0 0.0
      %867 = vmatprep.subr.mxu0 0.0
      %868 = vmatpush1.msra.mxu0 0.0
      %869 = vmatprep.subr.mxu0 0.0
      %870 = vmatpush1.msra.mxu0 0.0
      %871 = vmatprep.subr.mxu0 0.0
      %872 = vmatpush1.msra.mxu0 0.0
      %873 = vmatprep.subr.mxu0 0.0
      %874 = vmatpush1.msra.mxu0 0.0
      %875 = vmatprep.subr.mxu0 0.0
      %876 = vmatpush1.msra.mxu0 0.0
      %877 = vmatprep.subr.mxu0 0.0
      %878 = vmatpush1.msra.mxu0 0.0
      %879 = vmatprep.subr.mxu0 0.0
      %880 = vmatpush1.msra.mxu0 0.0
      %881 = vmatprep.subr.mxu0 0.0
      %882 = vmatpush1.msra.mxu0 0.0
      %883 = vmatprep.subr.mxu0 0.0
      %884 = vmatpush1.msra.mxu0 0.0
      %885 = vmatprep.subr.mxu0 0.0
      %886 = vmatpush1.msra.mxu0 0.0
      %887 = vmatprep.subr.mxu0 0.0
      %888 = vmatpush1.msra.mxu0 0.0
      %889 = vmatprep.subr.mxu0 0.0
      %890 = vmatpush1.msra.mxu0 0.0
      %891 = vmatprep.subr.mxu0 0.0
      %892 = vmatpush1.msra.mxu0 0.0
      %893 = vmatprep.subr.mxu0 0.0
      %894 = vmatpush1.msra.mxu0 0.0
      %895 = vmatprep.subr.mxu0 0.0
      %896 = vmatpush1.msra.mxu0 0.0
      %897 = vmatprep.subr.mxu0 0.0
      %898 = vmatpush1.msra.mxu0 0.0
      %899 = vmatprep.subr.mxu0 0.0
      %900 = vmatpush1.msra.mxu0 0.0
      %901 = vmatprep.subr.mxu0 0.0
      %902 = vmatpush1.msra.mxu0 0.0
      %903 = vmatprep.subr.mxu0 0.0
      %904 = vmatpush1.msra.mxu0 0.0
      %905 = vmatprep.subr.mxu0 0.0
      %906 = vmatpush1.msra.mxu0 0.0
      %907 = vmatprep.subr.mxu0 0.0
      %908 = vmatpush1.msra.mxu0 0.0
      %909 = vmatprep.subr.mxu0 0.0
      %910 = vmatpush1.msra.mxu0 0.0
      %911 = vmatprep.subr.mxu0 0.0
      %912 = vmatpush1.msra.mxu0 0.0
      %913 = vmatprep.subr.mxu0 0.0
      %914 = vmatpush1.msra.mxu0 0.0
      %915 = vmatprep.subr.mxu0 0.0
      %916 = vmatpush1.msra.mxu0 0.0
      %917 = vmatprep.subr.mxu0 0.0
      %918 = vmatpush1.msra.mxu0 0.0
      %919 = vmatprep.subr.mxu0 0.0
      %920 = vmatpush1.msra.mxu0 0.0
      %921 = vmatprep.mubr.f32.mxu0 0.0
      %922 = vmatmul.mubr.f32.gmra.mrb[0].mxu0 %v841
      %v923 = vpop.f32.mrb[0].mxu0
      %v924 = vadd.f32 0.0, %v923
      %v925 = vpop.f32.mrb[0].mxu0
      %926 = vmatprep.mubr.f32.mxu0 0.0
      %927 = vmatmul.mubr.f32.gmra.mrb[0].mxu0 %v843
      %v928 = vpop.f32.mrb[0].mxu0
      %v929 = vadd.f32 0.0, %v928
      %v930 = vpop.f32.mrb[0].mxu0
      %931 = vmatprep.mubr.f32.mxu0 0.0
      %932 = vmatmul.mubr.f32.gmra.mrb[0].mxu0 %v845
      %v933 = vpop.f32.mrb[0].mxu0
      %v934 = vadd.f32 0.0, %v933
      %v935 = vpop.f32.mrb[0].mxu0
      %936 = vmatprep.mubr.f32.mxu0 0.0
      %937 = vmatmul.mubr.f32.gmra.mrb[0].mxu0 %v847
      %v938 = vpop.f32.mrb[0].mxu0
      %v939 = vadd.f32 0.0, %v938
      %v940 = vpop.f32.mrb[0].mxu0
      %941 = vmatprep.mubr.f32.mxu0 0.0
      %942 = vmatmul.mubr.f32.gmra.mrb[0].mxu0 %v849
      %v943 = vpop.f32.mrb[0].mxu0
      %v944 = vadd.f32 0.0, %v943
      %v945 = vpop.f32.mrb[0].mxu0
      %946 = vmatprep.mubr.f32.mxu0 0.0
      %947 = vmatmul.mubr.f32.gmra.mrb[0].mxu0 %v851
      %v948 = vpop.f32.mrb[0].mxu0
      %v949 = vadd.f32 0.0, %v948
      %v950 = vpop.f32.mrb[0].mxu0
      %951 = vmatprep.mubr.f32.mxu0 0.0
      %952 = vmatmul.mubr.f32.gmra.mrb[0].mxu0 %v853
      %v953 = vpop.f32.mrb[0].mxu0
      %v954 = vadd.f32 0.0, %v953
      %v955 = vpop.f32.mrb[0].mxu0
      %956 = vmatprep.mubr.f32.mxu0 0.0
      %957 = vmatmul.mubr.f32.gmra.mrb[0].mxu0 %v855
      %v958 = vpop.f32.mrb[0].mxu0
      %v959 = vadd.f32 0.0, %v958
      %v960 = vpop.f32.mrb[0].mxu0
      %961 = vdwg.mxu0
      %v962 = vadd.f32 %v776, %v924
      %v963 = vadd.f32 %v781, %v929
      %v964 = vadd.f32 %v786, %v934
      %v965 = vadd.f32 %v791, %v939
      %v966 = vadd.f32 %v796, %v944
      %v967 = vadd.f32 %v801, %v949
      %v968 = vadd.f32 %v806, %v954
      %v969 = vadd.f32 %v811, %v959
      %s970 = scalar_lea.vmem %s3, 24
      %v971 = vld [vmem:[%s970] sm:$0xff]
      %v973 = vsel %vm571, %v443, 0
      %975 = vmatprep.subr.mxu0 0.0
      %976 = vmatpush1.msra.mxu0 %v971
      %977 = vmatprep.subr.mxu0 0.0
      %978 = vmatpush1.msra.mxu0 0.0
      %979 = vmatprep.subr.mxu0 0.0
      %980 = vmatpush1.msra.mxu0 0.0
      %981 = vmatprep.subr.mxu0 0.0
      %982 = vmatpush1.msra.mxu0 0.0
      %983 = vmatprep.subr.mxu0 0.0
      %984 = vmatpush1.msra.mxu0 0.0
      %985 = vmatprep.subr.mxu0 0.0
      %986 = vmatpush1.msra.mxu0 0.0
      %987 = vmatprep.subr.mxu0 0.0
      %988 = vmatpush1.msra.mxu0 0.0
      %989 = vmatprep.subr.mxu0 0.0
      %990 = vmatpush1.msra.mxu0 0.0
      %991 = vmatprep.subr.mxu0 0.0
      %992 = vmatpush1.msra.mxu0 0.0
      %993 = vmatprep.subr.mxu0 0.0
      %994 = vmatpush1.msra.mxu0 0.0
      %995 = vmatprep.subr.mxu0 0.0
      %996 = vmatpush1.msra.mxu0 0.0
      %997 = vmatprep.subr.mxu0 0.0
      %998 = vmatpush1.msra.mxu0 0.0
      %999 = vmatprep.subr.mxu0 0.0
      %1000 = vmatpush1.msra.mxu0 0.0
      %1001 = vmatprep.subr.mxu0 0.0
      %1002 = vmatpush1.msra.mxu0 0.0
      %1003 = vmatprep.subr.mxu0 0.0
      %1004 = vmatpush1.msra.mxu0 0.0
      %1005 = vmatprep.subr.mxu0 0.0
      %1006 = vmatpush1.msra.mxu0 0.0
      %1007 = vmatprep.subr.mxu0 0.0
      %1008 = vmatpush1.msra.mxu0 0.0
      %1009 = vmatprep.subr.mxu0 0.0
      %1010 = vmatpush1.msra.mxu0 0.0
      %1011 = vmatprep.subr.mxu0 0.0
      %1012 = vmatpush1.msra.mxu0 0.0
      %1013 = vmatprep.subr.mxu0 0.0
      %1014 = vmatpush1.msra.mxu0 0.0
      %1015 = vmatprep.subr.mxu0 0.0
      %1016 = vmatpush1.msra.mxu0 0.0
      %1017 = vmatprep.subr.mxu0 0.0
      %1018 = vmatpush1.msra.mxu0 0.0
      %1019 = vmatprep.subr.mxu0 0.0
      %1020 = vmatpush1.msra.mxu0 0.0
      %1021 = vmatprep.subr.mxu0 0.0
      %1022 = vmatpush1.msra.mxu0 0.0
      %1023 = vmatprep.subr.mxu0 0.0
      %1024 = vmatpush1.msra.mxu0 0.0
      %1025 = vmatprep.subr.mxu0 0.0
      %1026 = vmatpush1.msra.mxu0 0.0
      %1027 = vmatprep.subr.mxu0 0.0
      %1028 = vmatpush1.msra.mxu0 0.0
      %1029 = vmatprep.subr.mxu0 0.0
      %1030 = vmatpush1.msra.mxu0 0.0
      %1031 = vmatprep.subr.mxu0 0.0
      %1032 = vmatpush1.msra.mxu0 0.0
      %1033 = vmatprep.subr.mxu0 0.0
      %1034 = vmatpush1.msra.mxu0 0.0
      %1035 = vmatprep.subr.mxu0 0.0
      %1036 = vmatpush1.msra.mxu0 0.0
      %1037 = vmatprep.subr.mxu0 0.0
      %1038 = vmatpush1.msra.mxu0 0.0
      %1039 = vmatprep.mubr.f32.mxu0 0.0
      %1040 = vmatmul.mubr.f32.gmra.mrb[0].mxu0 %v695
      %v1041 = vpop.f32.mrb[0].mxu0
      %v1042 = vadd.f32 0.0, %v1041
      %v1043 = vpop.f32.mrb[0].mxu0
      %1044 = vmatprep.mubr.f32.mxu0 0.0
      %1045 = vmatmul.mubr.f32.gmra.mrb[0].mxu0 %v697
      %v1046 = vpop.f32.mrb[0].mxu0
      %v1047 = vadd.f32 0.0, %v1046
      %v1048 = vpop.f32.mrb[0].mxu0
      %1049 = vmatprep.mubr.f32.mxu0 0.0
      %1050 = vmatmul.mubr.f32.gmra.mrb[0].mxu0 %v699
      %v1051 = vpop.f32.mrb[0].mxu0
      %v1052 = vadd.f32 0.0, %v1051
      %v1053 = vpop.f32.mrb[0].mxu0
      %1054 = vmatprep.mubr.f32.mxu0 0.0
      %1055 = vmatmul.mubr.f32.gmra.mrb[0].mxu0 %v701
      %v1056 = vpop.f32.mrb[0].mxu0
      %v1057 = vadd.f32 0.0, %v1056
      %v1058 = vpop.f32.mrb[0].mxu0
      %1059 = vmatprep.mubr.f32.mxu0 0.0
      %1060 = vmatmul.mubr.f32.gmra.mrb[0].mxu0 %v703
      %v1061 = vpop.f32.mrb[0].mxu0
      %v1062 = vadd.f32 0.0, %v1061
      %v1063 = vpop.f32.mrb[0].mxu0
      %1064 = vmatprep.mubr.f32.mxu0 0.0
      %1065 = vmatmul.mubr.f32.gmra.mrb[0].mxu0 %v705
      %v1066 = vpop.f32.mrb[0].mxu0
      %v1067 = vadd.f32 0.0, %v1066
      %v1068 = vpop.f32.mrb[0].mxu0
      %1069 = vmatprep.mubr.f32.mxu0 0.0
      %1070 = vmatmul.mubr.f32.gmra.mrb[0].mxu0 %v707
      %v1071 = vpop.f32.mrb[0].mxu0
      %v1072 = vadd.f32 0.0, %v1071
      %v1073 = vpop.f32.mrb[0].mxu0
      %1074 = vmatprep.mubr.f32.mxu0 0.0
      %1075 = vmatmul.mubr.f32.gmra.mrb[0].mxu0 %v973
      %v1076 = vpop.f32.mrb[0].mxu0
      %v1077 = vadd.f32 0.0, %v1076
      %v1078 = vpop.f32.mrb[0].mxu0
      %1079 = vdwg.mxu0
      %v1080 = vadd.f32 %v962, %v1042
      %v1081 = vadd.f32 %v963, %v1047
      %v1082 = vadd.f32 %v964, %v1052
      %v1083 = vadd.f32 %v965, %v1057
      %v1084 = vadd.f32 %v966, %v1062
      %v1085 = vadd.f32 %v967, %v1067
      %v1086 = vadd.f32 %v968, %v1072
      %v1087 = vadd.f32 %v969, %v1077
      %v1089 = vrot.slane %v443, 1
      %v1090 = vrot.slane %v444, 1
      %v1091 = vsel %vm544, %v1089, %v1090
      %s1092 = scalar_lea.vmem %s3, 32
      %v1093 = vld [vmem:[%s1092] sm:$0xff]
      %v1094 = vsel %vm571, %v1091, 0
      %1096 = vmatprep.subr.mxu0 0.0
      %1097 = vmatpush1.msra.mxu0 %v1093
      %1098 = vmatprep.subr.mxu0 0.0
      %1099 = vmatpush1.msra.mxu0 0.0
      %1100 = vmatprep.subr.mxu0 0.0
      %1101 = vmatpush1.msra.mxu0 0.0
      %1102 = vmatprep.subr.mxu0 0.0
      %1103 = vmatpush1.msra.mxu0 0.0
      %1104 = vmatprep.subr.mxu0 0.0
      %1105 = vmatpush1.msra.mxu0 0.0
      %1106 = vmatprep.subr.mxu0 0.0
      %1107 = vmatpush1.msra.mxu0 0.0
      %1108 = vmatprep.subr.mxu0 0.0
      %1109 = vmatpush1.msra.mxu0 0.0
      %1110 = vmatprep.subr.mxu0 0.0
      %1111 = vmatpush1.msra.mxu0 0.0
      %1112 = vmatprep.subr.mxu0 0.0
      %1113 = vmatpush1.msra.mxu0 0.0
      %1114 = vmatprep.subr.mxu0 0.0
      %1115 = vmatpush1.msra.mxu0 0.0
      %1116 = vmatprep.subr.mxu0 0.0
      %1117 = vmatpush1.msra.mxu0 0.0
      %1118 = vmatprep.subr.mxu0 0.0
      %1119 = vmatpush1.msra.mxu0 0.0
      %1120 = vmatprep.subr.mxu0 0.0
      %1121 = vmatpush1.msra.mxu0 0.0
      %1122 = vmatprep.subr.mxu0 0.0
      %1123 = vmatpush1.msra.mxu0 0.0
      %1124 = vmatprep.subr.mxu0 0.0
      %1125 = vmatpush1.msra.mxu0 0.0
      %1126 = vmatprep.subr.mxu0 0.0
      %1127 = vmatpush1.msra.mxu0 0.0
      %1128 = vmatprep.subr.mxu0 0.0
      %1129 = vmatpush1.msra.mxu0 0.0
      %1130 = vmatprep.subr.mxu0 0.0
      %1131 = vmatpush1.msra.mxu0 0.0
      %1132 = vmatprep.subr.mxu0 0.0
      %1133 = vmatpush1.msra.mxu0 0.0
      %1134 = vmatprep.subr.mxu0 0.0
      %1135 = vmatpush1.msra.mxu0 0.0
      %1136 = vmatprep.subr.mxu0 0.0
      %1137 = vmatpush1.msra.mxu0 0.0
      %1138 = vmatprep.subr.mxu0 0.0
      %1139 = vmatpush1.msra.mxu0 0.0
      %1140 = vmatprep.subr.mxu0 0.0
      %1141 = vmatpush1.msra.mxu0 0.0
      %1142 = vmatprep.subr.mxu0 0.0
      %1143 = vmatpush1.msra.mxu0 0.0
      %1144 = vmatprep.subr.mxu0 0.0
      %1145 = vmatpush1.msra.mxu0 0.0
      %1146 = vmatprep.subr.mxu0 0.0
      %1147 = vmatpush1.msra.mxu0 0.0
      %1148 = vmatprep.subr.mxu0 0.0
      %1149 = vmatpush1.msra.mxu0 0.0
      %1150 = vmatprep.subr.mxu0 0.0
      %1151 = vmatpush1.msra.mxu0 0.0
      %1152 = vmatprep.subr.mxu0 0.0
      %1153 = vmatpush1.msra.mxu0 0.0
      %1154 = vmatprep.subr.mxu0 0.0
      %1155 = vmatpush1.msra.mxu0 0.0
      %1156 = vmatprep.subr.mxu0 0.0
      %1157 = vmatpush1.msra.mxu0 0.0
      %1158 = vmatprep.subr.mxu0 0.0
      %1159 = vmatpush1.msra.mxu0 0.0
      %1160 = vmatprep.mubr.f32.mxu0 0.0
      %1161 = vmatmul.mubr.f32.gmra.mrb[0].mxu0 %v574
      %v1162 = vpop.f32.mrb[0].mxu0
      %v1163 = vadd.f32 0.0, %v1162
      %v1164 = vpop.f32.mrb[0].mxu0
      %1165 = vmatprep.mubr.f32.mxu0 0.0
      %1166 = vmatmul.mubr.f32.gmra.mrb[0].mxu0 %v576
      %v1167 = vpop.f32.mrb[0].mxu0
      %v1168 = vadd.f32 0.0, %v1167
      %v1169 = vpop.f32.mrb[0].mxu0
      %1170 = vmatprep.mubr.f32.mxu0 0.0
      %1171 = vmatmul.mubr.f32.gmra.mrb[0].mxu0 %v578
      %v1172 = vpop.f32.mrb[0].mxu0
      %v1173 = vadd.f32 0.0, %v1172
      %v1174 = vpop.f32.mrb[0].mxu0
      %1175 = vmatprep.mubr.f32.mxu0 0.0
      %1176 = vmatmul.mubr.f32.gmra.mrb[0].mxu0 %v580
      %v1177 = vpop.f32.mrb[0].mxu0
      %v1178 = vadd.f32 0.0, %v1177
      %v1179 = vpop.f32.mrb[0].mxu0
      %1180 = vmatprep.mubr.f32.mxu0 0.0
      %1181 = vmatmul.mubr.f32.gmra.mrb[0].mxu0 %v582
      %v1182 = vpop.f32.mrb[0].mxu0
      %v1183 = vadd.f32 0.0, %v1182
      %v1184 = vpop.f32.mrb[0].mxu0
      %1185 = vmatprep.mubr.f32.mxu0 0.0
      %1186 = vmatmul.mubr.f32.gmra.mrb[0].mxu0 %v584
      %v1187 = vpop.f32.mrb[0].mxu0
      %v1188 = vadd.f32 0.0, %v1187
      %v1189 = vpop.f32.mrb[0].mxu0
      %1190 = vmatprep.mubr.f32.mxu0 0.0
      %1191 = vmatmul.mubr.f32.gmra.mrb[0].mxu0 %v586
      %v1192 = vpop.f32.mrb[0].mxu0
      %v1193 = vadd.f32 0.0, %v1192
      %v1194 = vpop.f32.mrb[0].mxu0
      %1195 = vmatprep.mubr.f32.mxu0 0.0
      %1196 = vmatmul.mubr.f32.gmra.mrb[0].mxu0 %v1094
      %v1197 = vpop.f32.mrb[0].mxu0
      %v1198 = vadd.f32 0.0, %v1197
      %v1199 = vpop.f32.mrb[0].mxu0
      %1200 = vdwg.mxu0
      %v1201 = vadd.f32 %v1080, %v1163
      %v1202 = vadd.f32 %v1081, %v1168
      %v1203 = vadd.f32 %v1082, %v1173
      %v1204 = vadd.f32 %v1083, %v1178
      %v1205 = vadd.f32 %v1084, %v1183
      %v1206 = vadd.f32 %v1085, %v1188
      %v1207 = vadd.f32 %v1086, %v1193
      %v1208 = vadd.f32 %v1087, %v1198
      %v1209 = vrot.slane %v443, 2
      %v1210 = vrot.slane %v444, 2
      %v1211 = vsel %vm814, %v1209, %v1210
      %s1212 = scalar_lea.vmem %s3, 40
      %v1213 = vld [vmem:[%s1212] sm:$0xff]
      %v1214 = vsel %vm571, %v1211, 0
      %1216 = vmatprep.subr.mxu0 0.0
      %1217 = vmatpush1.msra.mxu0 %v1213
      %1218 = vmatprep.subr.mxu0 0.0
      %1219 = vmatpush1.msra.mxu0 0.0
      %1220 = vmatprep.subr.mxu0 0.0
      %1221 = vmatpush1.msra.mxu0 0.0
      %1222 = vmatprep.subr.mxu0 0.0
      %1223 = vmatpush1.msra.mxu0 0.0
      %1224 = vmatprep.subr.mxu0 0.0
      %1225 = vmatpush1.msra.mxu0 0.0
      %1226 = vmatprep.subr.mxu0 0.0
      %1227 = vmatpush1.msra.mxu0 0.0
      %1228 = vmatprep.subr.mxu0 0.0
      %1229 = vmatpush1.msra.mxu0 0.0
      %1230 = vmatprep.subr.mxu0 0.0
      %1231 = vmatpush1.msra.mxu0 0.0
      %1232 = vmatprep.subr.mxu0 0.0
      %1233 = vmatpush1.msra.mxu0 0.0
      %1234 = vmatprep.subr.mxu0 0.0
      %1235 = vmatpush1.msra.mxu0 0.0
      %1236 = vmatprep.subr.mxu0 0.0
      %1237 = vmatpush1.msra.mxu0 0.0
      %1238 = vmatprep.subr.mxu0 0.0
      %1239 = vmatpush1.msra.mxu0 0.0
      %1240 = vmatprep.subr.mxu0 0.0
      %1241 = vmatpush1.msra.mxu0 0.0
      %1242 = vmatprep.subr.mxu0 0.0
      %1243 = vmatpush1.msra.mxu0 0.0
      %1244 = vmatprep.subr.mxu0 0.0
      %1245 = vmatpush1.msra.mxu0 0.0
      %1246 = vmatprep.subr.mxu0 0.0
      %1247 = vmatpush1.msra.mxu0 0.0
      %1248 = vmatprep.subr.mxu0 0.0
      %1249 = vmatpush1.msra.mxu0 0.0
      %1250 = vmatprep.subr.mxu0 0.0
      %1251 = vmatpush1.msra.mxu0 0.0
      %1252 = vmatprep.subr.mxu0 0.0
      %1253 = vmatpush1.msra.mxu0 0.0
      %1254 = vmatprep.subr.mxu0 0.0
      %1255 = vmatpush1.msra.mxu0 0.0
      %1256 = vmatprep.subr.mxu0 0.0
      %1257 = vmatpush1.msra.mxu0 0.0
      %1258 = vmatprep.subr.mxu0 0.0
      %1259 = vmatpush1.msra.mxu0 0.0
      %1260 = vmatprep.subr.mxu0 0.0
      %1261 = vmatpush1.msra.mxu0 0.0
      %1262 = vmatprep.subr.mxu0 0.0
      %1263 = vmatpush1.msra.mxu0 0.0
      %1264 = vmatprep.subr.mxu0 0.0
      %1265 = vmatpush1.msra.mxu0 0.0
      %1266 = vmatprep.subr.mxu0 0.0
      %1267 = vmatpush1.msra.mxu0 0.0
      %1268 = vmatprep.subr.mxu0 0.0
      %1269 = vmatpush1.msra.mxu0 0.0
      %1270 = vmatprep.subr.mxu0 0.0
      %1271 = vmatpush1.msra.mxu0 0.0
      %1272 = vmatprep.subr.mxu0 0.0
      %1273 = vmatpush1.msra.mxu0 0.0
      %1274 = vmatprep.subr.mxu0 0.0
      %1275 = vmatpush1.msra.mxu0 0.0
      %1276 = vmatprep.subr.mxu0 0.0
      %1277 = vmatpush1.msra.mxu0 0.0
      %1278 = vmatprep.subr.mxu0 0.0
      %1279 = vmatpush1.msra.mxu0 0.0
      %1280 = vmatprep.mubr.f32.mxu0 0.0
      %1281 = vmatmul.mubr.f32.gmra.mrb[0].mxu0 %v843
      %v1282 = vpop.f32.mrb[0].mxu0
      %v1283 = vadd.f32 0.0, %v1282
      %v1284 = vpop.f32.mrb[0].mxu0
      %1285 = vmatprep.mubr.f32.mxu0 0.0
      %1286 = vmatmul.mubr.f32.gmra.mrb[0].mxu0 %v845
      %v1287 = vpop.f32.mrb[0].mxu0
      %v1288 = vadd.f32 0.0, %v1287
      %v1289 = vpop.f32.mrb[0].mxu0
      %1290 = vmatprep.mubr.f32.mxu0 0.0
      %1291 = vmatmul.mubr.f32.gmra.mrb[0].mxu0 %v847
      %v1292 = vpop.f32.mrb[0].mxu0
      %v1293 = vadd.f32 0.0, %v1292
      %v1294 = vpop.f32.mrb[0].mxu0
      %1295 = vmatprep.mubr.f32.mxu0 0.0
      %1296 = vmatmul.mubr.f32.gmra.mrb[0].mxu0 %v849
      %v1297 = vpop.f32.mrb[0].mxu0
      %v1298 = vadd.f32 0.0, %v1297
      %v1299 = vpop.f32.mrb[0].mxu0
      %1300 = vmatprep.mubr.f32.mxu0 0.0
      %1301 = vmatmul.mubr.f32.gmra.mrb[0].mxu0 %v851
      %v1302 = vpop.f32.mrb[0].mxu0
      %v1303 = vadd.f32 0.0, %v1302
      %v1304 = vpop.f32.mrb[0].mxu0
      %1305 = vmatprep.mubr.f32.mxu0 0.0
      %1306 = vmatmul.mubr.f32.gmra.mrb[0].mxu0 %v853
      %v1307 = vpop.f32.mrb[0].mxu0
      %v1308 = vadd.f32 0.0, %v1307
      %v1309 = vpop.f32.mrb[0].mxu0
      %1310 = vmatprep.mubr.f32.mxu0 0.0
      %1311 = vmatmul.mubr.f32.gmra.mrb[0].mxu0 %v855
      %v1312 = vpop.f32.mrb[0].mxu0
      %v1313 = vadd.f32 0.0, %v1312
      %v1314 = vpop.f32.mrb[0].mxu0
      %1315 = vmatprep.mubr.f32.mxu0 0.0
      %1316 = vmatmul.mubr.f32.gmra.mrb[0].mxu0 %v1214
      %v1317 = vpop.f32.mrb[0].mxu0
      %v1318 = vadd.f32 0.0, %v1317
      %v1319 = vpop.f32.mrb[0].mxu0
      %1320 = vdwg.mxu0
      %v1321 = vadd.f32 %v1201, %v1283
      %v1322 = vadd.f32 %v1202, %v1288
      %v1323 = vadd.f32 %v1203, %v1293
      %v1324 = vadd.f32 %v1204, %v1298
      %v1325 = vadd.f32 %v1205, %v1303
      %v1326 = vadd.f32 %v1206, %v1308
      %v1327 = vadd.f32 %v1207, %v1313
      %v1328 = vadd.f32 %v1208, %v1318
      %s1329 = scalar_lea.vmem %s3, 48
      %v1330 = vld [vmem:[%s1329] sm:$0xff]
      %v1332 = vsel %vm571, %v445, 0
      %1334 = vmatprep.subr.mxu0 0.0
      %1335 = vmatpush1.msra.mxu0 %v1330
      %1336 = vmatprep.subr.mxu0 0.0
      %1337 = vmatpush1.msra.mxu0 0.0
      %1338 = vmatprep.subr.mxu0 0.0
      %1339 = vmatpush1.msra.mxu0 0.0
      %1340 = vmatprep.subr.mxu0 0.0
      %1341 = vmatpush1.msra.mxu0 0.0
      %1342 = vmatprep.subr.mxu0 0.0
      %1343 = vmatpush1.msra.mxu0 0.0
      %1344 = vmatprep.subr.mxu0 0.0
      %1345 = vmatpush1.msra.mxu0 0.0
      %1346 = vmatprep.subr.mxu0 0.0
      %1347 = vmatpush1.msra.mxu0 0.0
      %1348 = vmatprep.subr.mxu0 0.0
      %1349 = vmatpush1.msra.mxu0 0.0
      %1350 = vmatprep.subr.mxu0 0.0
      %1351 = vmatpush1.msra.mxu0 0.0
      %1352 = vmatprep.subr.mxu0 0.0
      %1353 = vmatpush1.msra.mxu0 0.0
      %1354 = vmatprep.subr.mxu0 0.0
      %1355 = vmatpush1.msra.mxu0 0.0
      %1356 = vmatprep.subr.mxu0 0.0
      %1357 = vmatpush1.msra.mxu0 0.0
      %1358 = vmatprep.subr.mxu0 0.0
      %1359 = vmatpush1.msra.mxu0 0.0
      %1360 = vmatprep.subr.mxu0 0.0
      %1361 = vmatpush1.msra.mxu0 0.0
      %1362 = vmatprep.subr.mxu0 0.0
      %1363 = vmatpush1.msra.mxu0 0.0
      %1364 = vmatprep.subr.mxu0 0.0
      %1365 = vmatpush1.msra.mxu0 0.0
      %1366 = vmatprep.subr.mxu0 0.0
      %1367 = vmatpush1.msra.mxu0 0.0
      %1368 = vmatprep.subr.mxu0 0.0
      %1369 = vmatpush1.msra.mxu0 0.0
      %1370 = vmatprep.subr.mxu0 0.0
      %1371 = vmatpush1.msra.mxu0 0.0
      %1372 = vmatprep.subr.mxu0 0.0
      %1373 = vmatpush1.msra.mxu0 0.0
      %1374 = vmatprep.subr.mxu0 0.0
      %1375 = vmatpush1.msra.mxu0 0.0
      %1376 = vmatprep.subr.mxu0 0.0
      %1377 = vmatpush1.msra.mxu0 0.0
      %1378 = vmatprep.subr.mxu0 0.0
      %1379 = vmatpush1.msra.mxu0 0.0
      %1380 = vmatprep.subr.mxu0 0.0
      %1381 = vmatpush1.msra.mxu0 0.0
      %1382 = vmatprep.subr.mxu0 0.0
      %1383 = vmatpush1.msra.mxu0 0.0
      %1384 = vmatprep.subr.mxu0 0.0
      %1385 = vmatpush1.msra.mxu0 0.0
      %1386 = vmatprep.subr.mxu0 0.0
      %1387 = vmatpush1.msra.mxu0 0.0
      %1388 = vmatprep.subr.mxu0 0.0
      %1389 = vmatpush1.msra.mxu0 0.0
      %1390 = vmatprep.subr.mxu0 0.0
      %1391 = vmatpush1.msra.mxu0 0.0
      %1392 = vmatprep.subr.mxu0 0.0
      %1393 = vmatpush1.msra.mxu0 0.0
      %1394 = vmatprep.subr.mxu0 0.0
      %1395 = vmatpush1.msra.mxu0 0.0
      %1396 = vmatprep.subr.mxu0 0.0
      %1397 = vmatpush1.msra.mxu0 0.0
      %1398 = vmatprep.mubr.f32.mxu0 0.0
      %1399 = vmatmul.mubr.f32.gmra.mrb[0].mxu0 %v697
      %v1400 = vpop.f32.mrb[0].mxu0
      %v1401 = vadd.f32 0.0, %v1400
      %v1402 = vpop.f32.mrb[0].mxu0
      %1403 = vmatprep.mubr.f32.mxu0 0.0
      %1404 = vmatmul.mubr.f32.gmra.mrb[0].mxu0 %v699
      %v1405 = vpop.f32.mrb[0].mxu0
      %v1406 = vadd.f32 0.0, %v1405
      %v1407 = vpop.f32.mrb[0].mxu0
      %1408 = vmatprep.mubr.f32.mxu0 0.0
      %1409 = vmatmul.mubr.f32.gmra.mrb[0].mxu0 %v701
      %v1410 = vpop.f32.mrb[0].mxu0
      %v1411 = vadd.f32 0.0, %v1410
      %v1412 = vpop.f32.mrb[0].mxu0
      %1413 = vmatprep.mubr.f32.mxu0 0.0
      %1414 = vmatmul.mubr.f32.gmra.mrb[0].mxu0 %v703
      %v1415 = vpop.f32.mrb[0].mxu0
      %v1416 = vadd.f32 0.0, %v1415
      %v1417 = vpop.f32.mrb[0].mxu0
      %1418 = vmatprep.mubr.f32.mxu0 0.0
      %1419 = vmatmul.mubr.f32.gmra.mrb[0].mxu0 %v705
      %v1420 = vpop.f32.mrb[0].mxu0
      %v1421 = vadd.f32 0.0, %v1420
      %v1422 = vpop.f32.mrb[0].mxu0
      %1423 = vmatprep.mubr.f32.mxu0 0.0
      %1424 = vmatmul.mubr.f32.gmra.mrb[0].mxu0 %v707
      %v1425 = vpop.f32.mrb[0].mxu0
      %v1426 = vadd.f32 0.0, %v1425
      %v1427 = vpop.f32.mrb[0].mxu0
      %1428 = vmatprep.mubr.f32.mxu0 0.0
      %1429 = vmatmul.mubr.f32.gmra.mrb[0].mxu0 %v973
      %v1430 = vpop.f32.mrb[0].mxu0
      %v1431 = vadd.f32 0.0, %v1430
      %v1432 = vpop.f32.mrb[0].mxu0
      %1433 = vmatprep.mubr.f32.mxu0 0.0
      %1434 = vmatmul.mubr.f32.gmra.mrb[0].mxu0 %v1332
      %v1435 = vpop.f32.mrb[0].mxu0
      %v1436 = vadd.f32 0.0, %v1435
      %v1437 = vpop.f32.mrb[0].mxu0
      %1438 = vdwg.mxu0
      %v1439 = vadd.f32 %v1321, %v1401
      %v1440 = vadd.f32 %v1322, %v1406
      %v1441 = vadd.f32 %v1323, %v1411
      %v1442 = vadd.f32 %v1324, %v1416
      %v1443 = vadd.f32 %v1325, %v1421
      %v1444 = vadd.f32 %v1326, %v1426
      %v1445 = vadd.f32 %v1327, %v1431
      %v1446 = vadd.f32 %v1328, %v1436
      %v1448 = vrot.slane %v445, 1
      %v1449 = vrot.slane %v446, 1
      %v1450 = vsel %vm544, %v1448, %v1449
      %s1451 = scalar_lea.vmem %s3, 56
      %v1452 = vld [vmem:[%s1451] sm:$0xff]
      %v1453 = vsel %vm571, %v1450, 0
      %1455 = vmatprep.subr.mxu0 0.0
      %1456 = vmatpush1.msra.mxu0 %v1452
      %1457 = vmatprep.subr.mxu0 0.0
      %1458 = vmatpush1.msra.mxu0 0.0
      %1459 = vmatprep.subr.mxu0 0.0
      %1460 = vmatpush1.msra.mxu0 0.0
      %1461 = vmatprep.subr.mxu0 0.0
      %1462 = vmatpush1.msra.mxu0 0.0
      %1463 = vmatprep.subr.mxu0 0.0
      %1464 = vmatpush1.msra.mxu0 0.0
      %1465 = vmatprep.subr.mxu0 0.0
      %1466 = vmatpush1.msra.mxu0 0.0
      %1467 = vmatprep.subr.mxu0 0.0
      %1468 = vmatpush1.msra.mxu0 0.0
      %1469 = vmatprep.subr.mxu0 0.0
      %1470 = vmatpush1.msra.mxu0 0.0
      %1471 = vmatprep.subr.mxu0 0.0
      %1472 = vmatpush1.msra.mxu0 0.0
      %1473 = vmatprep.subr.mxu0 0.0
      %1474 = vmatpush1.msra.mxu0 0.0
      %1475 = vmatprep.subr.mxu0 0.0
      %1476 = vmatpush1.msra.mxu0 0.0
      %1477 = vmatprep.subr.mxu0 0.0
      %1478 = vmatpush1.msra.mxu0 0.0
      %1479 = vmatprep.subr.mxu0 0.0
      %1480 = vmatpush1.msra.mxu0 0.0
      %1481 = vmatprep.subr.mxu0 0.0
      %1482 = vmatpush1.msra.mxu0 0.0
      %1483 = vmatprep.subr.mxu0 0.0
      %1484 = vmatpush1.msra.mxu0 0.0
      %1485 = vmatprep.subr.mxu0 0.0
      %1486 = vmatpush1.msra.mxu0 0.0
      %1487 = vmatprep.subr.mxu0 0.0
      %1488 = vmatpush1.msra.mxu0 0.0
      %1489 = vmatprep.subr.mxu0 0.0
      %1490 = vmatpush1.msra.mxu0 0.0
      %1491 = vmatprep.subr.mxu0 0.0
      %1492 = vmatpush1.msra.mxu0 0.0
      %1493 = vmatprep.subr.mxu0 0.0
      %1494 = vmatpush1.msra.mxu0 0.0
      %1495 = vmatprep.subr.mxu0 0.0
      %1496 = vmatpush1.msra.mxu0 0.0
      %1497 = vmatprep.subr.mxu0 0.0
      %1498 = vmatpush1.msra.mxu0 0.0
      %1499 = vmatprep.subr.mxu0 0.0
      %1500 = vmatpush1.msra.mxu0 0.0
      %1501 = vmatprep.subr.mxu0 0.0
      %1502 = vmatpush1.msra.mxu0 0.0
      %1503 = vmatprep.subr.mxu0 0.0
      %1504 = vmatpush1.msra.mxu0 0.0
      %1505 = vmatprep.subr.mxu0 0.0
      %1506 = vmatpush1.msra.mxu0 0.0
      %1507 = vmatprep.subr.mxu0 0.0
      %1508 = vmatpush1.msra.mxu0 0.0
      %1509 = vmatprep.subr.mxu0 0.0
      %1510 = vmatpush1.msra.mxu0 0.0
      %1511 = vmatprep.subr.mxu0 0.0
      %1512 = vmatpush1.msra.mxu0 0.0
      %1513 = vmatprep.subr.mxu0 0.0
      %1514 = vmatpush1.msra.mxu0 0.0
      %1515 = vmatprep.subr.mxu0 0.0
      %1516 = vmatpush1.msra.mxu0 0.0
      %1517 = vmatprep.subr.mxu0 0.0
      %1518 = vmatpush1.msra.mxu0 0.0
      %1519 = vmatprep.mubr.f32.mxu0 0.0
      %1520 = vmatmul.mubr.f32.gmra.mrb[0].mxu0 %v576
      %v1521 = vpop.f32.mrb[0].mxu0
      %v1522 = vadd.f32 0.0, %v1521
      %v1523 = vpop.f32.mrb[0].mxu0
      %1524 = vmatprep.mubr.f32.mxu0 0.0
      %1525 = vmatmul.mubr.f32.gmra.mrb[0].mxu0 %v578
      %v1526 = vpop.f32.mrb[0].mxu0
      %v1527 = vadd.f32 0.0, %v1526
      %v1528 = vpop.f32.mrb[0].mxu0
      %1529 = vmatprep.mubr.f32.mxu0 0.0
      %1530 = vmatmul.mubr.f32.gmra.mrb[0].mxu0 %v580
      %v1531 = vpop.f32.mrb[0].mxu0
      %v1532 = vadd.f32 0.0, %v1531
      %v1533 = vpop.f32.mrb[0].mxu0
      %1534 = vmatprep.mubr.f32.mxu0 0.0
      %1535 = vmatmul.mubr.f32.gmra.mrb[0].mxu0 %v582
      %v1536 = vpop.f32.mrb[0].mxu0
      %v1537 = vadd.f32 0.0, %v1536
      %v1538 = vpop.f32.mrb[0].mxu0
      %1539 = vmatprep.mubr.f32.mxu0 0.0
      %1540 = vmatmul.mubr.f32.gmra.mrb[0].mxu0 %v584
      %v1541 = vpop.f32.mrb[0].mxu0
      %v1542 = vadd.f32 0.0, %v1541
      %v1543 = vpop.f32.mrb[0].mxu0
      %1544 = vmatprep.mubr.f32.mxu0 0.0
      %1545 = vmatmul.mubr.f32.gmra.mrb[0].mxu0 %v586
      %v1546 = vpop.f32.mrb[0].mxu0
      %v1547 = vadd.f32 0.0, %v1546
      %v1548 = vpop.f32.mrb[0].mxu0
      %1549 = vmatprep.mubr.f32.mxu0 0.0
      %1550 = vmatmul.mubr.f32.gmra.mrb[0].mxu0 %v1094
      %v1551 = vpop.f32.mrb[0].mxu0
      %v1552 = vadd.f32 0.0, %v1551
      %v1553 = vpop.f32.mrb[0].mxu0
      %1554 = vmatprep.mubr.f32.mxu0 0.0
      %1555 = vmatmul.mubr.f32.gmra.mrb[0].mxu0 %v1453
      %v1556 = vpop.f32.mrb[0].mxu0
      %v1557 = vadd.f32 0.0, %v1556
      %v1558 = vpop.f32.mrb[0].mxu0
      %1559 = vdwg.mxu0
      %v1560 = vadd.f32 %v1439, %v1522
      %v1561 = vadd.f32 %v1440, %v1527
      %v1562 = vadd.f32 %v1441, %v1532
      %v1563 = vadd.f32 %v1442, %v1537
      %v1564 = vadd.f32 %v1443, %v1542
      %v1565 = vadd.f32 %v1444, %v1547
      %v1566 = vadd.f32 %v1445, %v1552
      %v1567 = vadd.f32 %v1446, %v1557
      %v1568 = vrot.slane %v445, 2
      %v1569 = vrot.slane %v446, 2
      %v1570 = vsel %vm814, %v1568, %v1569
      %s1571 = scalar_lea.vmem %s3, 64
      %v1572 = vld [vmem:[%s1571] sm:$0xff]
      %v1573 = vsel %vm571, %v1570, 0
      %1575 = vmatprep.subr.mxu0 0.0
      %1576 = vmatpush1.msra.mxu0 %v1572
      %1577 = vmatprep.subr.mxu0 0.0
      %1578 = vmatpush1.msra.mxu0 0.0
      %1579 = vmatprep.subr.mxu0 0.0
      %1580 = vmatpush1.msra.mxu0 0.0
      %1581 = vmatprep.subr.mxu0 0.0
      %1582 = vmatpush1.msra.mxu0 0.0
      %1583 = vmatprep.subr.mxu0 0.0
      %1584 = vmatpush1.msra.mxu0 0.0
      %1585 = vmatprep.subr.mxu0 0.0
      %1586 = vmatpush1.msra.mxu0 0.0
      %1587 = vmatprep.subr.mxu0 0.0
      %1588 = vmatpush1.msra.mxu0 0.0
      %1589 = vmatprep.subr.mxu0 0.0
      %1590 = vmatpush1.msra.mxu0 0.0
      %1591 = vmatprep.subr.mxu0 0.0
      %1592 = vmatpush1.msra.mxu0 0.0
      %1593 = vmatprep.subr.mxu0 0.0
      %1594 = vmatpush1.msra.mxu0 0.0
      %1595 = vmatprep.subr.mxu0 0.0
      %1596 = vmatpush1.msra.mxu0 0.0
      %1597 = vmatprep.subr.mxu0 0.0
      %1598 = vmatpush1.msra.mxu0 0.0
      %1599 = vmatprep.subr.mxu0 0.0
      %1600 = vmatpush1.msra.mxu0 0.0
      %1601 = vmatprep.subr.mxu0 0.0
      %1602 = vmatpush1.msra.mxu0 0.0
      %1603 = vmatprep.subr.mxu0 0.0
      %1604 = vmatpush1.msra.mxu0 0.0
      %1605 = vmatprep.subr.mxu0 0.0
      %1606 = vmatpush1.msra.mxu0 0.0
      %1607 = vmatprep.subr.mxu0 0.0
      %1608 = vmatpush1.msra.mxu0 0.0
      %1609 = vmatprep.subr.mxu0 0.0
      %1610 = vmatpush1.msra.mxu0 0.0
      %1611 = vmatprep.subr.mxu0 0.0
      %1612 = vmatpush1.msra.mxu0 0.0
      %1613 = vmatprep.subr.mxu0 0.0
      %1614 = vmatpush1.msra.mxu0 0.0
      %1615 = vmatprep.subr.mxu0 0.0
      %1616 = vmatpush1.msra.mxu0 0.0
      %1617 = vmatprep.subr.mxu0 0.0
      %1618 = vmatpush1.msra.mxu0 0.0
      %1619 = vmatprep.subr.mxu0 0.0
      %1620 = vmatpush1.msra.mxu0 0.0
      %1621 = vmatprep.subr.mxu0 0.0
      %1622 = vmatpush1.msra.mxu0 0.0
      %1623 = vmatprep.subr.mxu0 0.0
      %1624 = vmatpush1.msra.mxu0 0.0
      %1625 = vmatprep.subr.mxu0 0.0
      %1626 = vmatpush1.msra.mxu0 0.0
      %1627 = vmatprep.subr.mxu0 0.0
      %1628 = vmatpush1.msra.mxu0 0.0
      %1629 = vmatprep.subr.mxu0 0.0
      %1630 = vmatpush1.msra.mxu0 0.0
      %1631 = vmatprep.subr.mxu0 0.0
      %1632 = vmatpush1.msra.mxu0 0.0
      %1633 = vmatprep.subr.mxu0 0.0
      %1634 = vmatpush1.msra.mxu0 0.0
      %1635 = vmatprep.subr.mxu0 0.0
      %1636 = vmatpush1.msra.mxu0 0.0
      %1637 = vmatprep.subr.mxu0 0.0
      %1638 = vmatpush1.msra.mxu0 0.0
      %1639 = vmatprep.mubr.f32.mxu0 0.0
      %1640 = vmatmul.mubr.f32.gmra.mrb[0].mxu0 %v845
      %v1641 = vpop.f32.mrb[0].mxu0
      %v1642 = vadd.f32 0.0, %v1641
      %v1643 = vpop.f32.mrb[0].mxu0
      %1644 = vmatprep.mubr.f32.mxu0 0.0
      %1645 = vmatmul.mubr.f32.gmra.mrb[0].mxu0 %v847
      %v1646 = vpop.f32.mrb[0].mxu0
      %v1647 = vadd.f32 0.0, %v1646
      %v1648 = vpop.f32.mrb[0].mxu0
      %1649 = vmatprep.mubr.f32.mxu0 0.0
      %1650 = vmatmul.mubr.f32.gmra.mrb[0].mxu0 %v849
      %v1651 = vpop.f32.mrb[0].mxu0
      %v1652 = vadd.f32 0.0, %v1651
      %v1653 = vpop.f32.mrb[0].mxu0
      %1654 = vmatprep.mubr.f32.mxu0 0.0
      %1655 = vmatmul.mubr.f32.gmra.mrb[0].mxu0 %v851
      %v1656 = vpop.f32.mrb[0].mxu0
      %v1657 = vadd.f32 0.0, %v1656
      %v1658 = vpop.f32.mrb[0].mxu0
      %1659 = vmatprep.mubr.f32.mxu0 0.0
      %1660 = vmatmul.mubr.f32.gmra.mrb[0].mxu0 %v853
      %v1661 = vpop.f32.mrb[0].mxu0
      %v1662 = vadd.f32 0.0, %v1661
      %v1663 = vpop.f32.mrb[0].mxu0
      %1664 = vmatprep.mubr.f32.mxu0 0.0
      %1665 = vmatmul.mubr.f32.gmra.mrb[0].mxu0 %v855
      %v1666 = vpop.f32.mrb[0].mxu0
      %v1667 = vadd.f32 0.0, %v1666
      %v1668 = vpop.f32.mrb[0].mxu0
      %1669 = vmatprep.mubr.f32.mxu0 0.0
      %1670 = vmatmul.mubr.f32.gmra.mrb[0].mxu0 %v1214
      %v1671 = vpop.f32.mrb[0].mxu0
      %v1672 = vadd.f32 0.0, %v1671
      %v1673 = vpop.f32.mrb[0].mxu0
      %1674 = vmatprep.mubr.f32.mxu0 0.0
      %1675 = vmatmul.mubr.f32.gmra.mrb[0].mxu0 %v1573
      %v1676 = vpop.f32.mrb[0].mxu0
      %v1677 = vadd.f32 0.0, %v1676
      %v1678 = vpop.f32.mrb[0].mxu0
      %1679 = vdwg.mxu0
      %v1680 = vadd.f32 %v1560, %v1642
      %v1681 = vadd.f32 %v1561, %v1647
      %v1682 = vadd.f32 %v1562, %v1652
      %v1683 = vadd.f32 %v1563, %v1657
      %v1684 = vadd.f32 %v1564, %v1662
      %v1685 = vadd.f32 %v1565, %v1667
      %v1686 = vadd.f32 %v1566, %v1672
      %v1687 = vadd.f32 %v1567, %v1677
      %s1688 = scalar_lea.vmem %s3, 72
      %v1689 = vld [vmem:[%s1688] sm:$0xff]
      %v1691 = vsel %vm571, %v467, 0
      %v1694 = vsel %vm571, %v469, 0
      %v1697 = vsel %vm571, %v471, 0
      %v1700 = vsel %vm571, %v473, 0
      %v1703 = vsel %vm571, %v475, 0
      %v1706 = vsel %vm571, %v477, 0
      %v1709 = vsel %vm571, %v479, 0
      %v1712 = vsel %vm571, %v481, 0
      %1714 = vmatprep.subr.mxu0 0.0
      %1715 = vmatpush1.msra.mxu0 %v1689
      %1716 = vmatprep.subr.mxu0 0.0
      %1717 = vmatpush1.msra.mxu0 0.0
      %1718 = vmatprep.subr.mxu0 0.0
      %1719 = vmatpush1.msra.mxu0 0.0
      %1720 = vmatprep.subr.mxu0 0.0
      %1721 = vmatpush1.msra.mxu0 0.0
      %1722 = vmatprep.subr.mxu0 0.0
      %1723 = vmatpush1.msra.mxu0 0.0
      %1724 = vmatprep.subr.mxu0 0.0
      %1725 = vmatpush1.msra.mxu0 0.0
      %1726 = vmatprep.subr.mxu0 0.0
      %1727 = vmatpush1.msra.mxu0 0.0
      %1728 = vmatprep.subr.mxu0 0.0
      %1729 = vmatpush1.msra.mxu0 0.0
      %1730 = vmatprep.subr.mxu0 0.0
      %1731 = vmatpush1.msra.mxu0 0.0
      %1732 = vmatprep.subr.mxu0 0.0
      %1733 = vmatpush1.msra.mxu0 0.0
      %1734 = vmatprep.subr.mxu0 0.0
      %1735 = vmatpush1.msra.mxu0 0.0
      %1736 = vmatprep.subr.mxu0 0.0
      %1737 = vmatpush1.msra.mxu0 0.0
      %1738 = vmatprep.subr.mxu0 0.0
      %1739 = vmatpush1.msra.mxu0 0.0
      %1740 = vmatprep.subr.mxu0 0.0
      %1741 = vmatpush1.msra.mxu0 0.0
      %1742 = vmatprep.subr.mxu0 0.0
      %1743 = vmatpush1.msra.mxu0 0.0
      %1744 = vmatprep.subr.mxu0 0.0
      %1745 = vmatpush1.msra.mxu0 0.0
      %1746 = vmatprep.subr.mxu0 0.0
      %1747 = vmatpush1.msra.mxu0 0.0
      %1748 = vmatprep.subr.mxu0 0.0
      %1749 = vmatpush1.msra.mxu0 0.0
      %1750 = vmatprep.subr.mxu0 0.0
      %1751 = vmatpush1.msra.mxu0 0.0
      %1752 = vmatprep.subr.mxu0 0.0
      %1753 = vmatpush1.msra.mxu0 0.0
      %1754 = vmatprep.subr.mxu0 0.0
      %1755 = vmatpush1.msra.mxu0 0.0
      %1756 = vmatprep.subr.mxu0 0.0
      %1757 = vmatpush1.msra.mxu0 0.0
      %1758 = vmatprep.subr.mxu0 0.0
      %1759 = vmatpush1.msra.mxu0 0.0
      %1760 = vmatprep.subr.mxu0 0.0
      %1761 = vmatpush1.msra.mxu0 0.0
      %1762 = vmatprep.subr.mxu0 0.0
      %1763 = vmatpush1.msra.mxu0 0.0
      %1764 = vmatprep.subr.mxu0 0.0
      %1765 = vmatpush1.msra.mxu0 0.0
      %1766 = vmatprep.subr.mxu0 0.0
      %1767 = vmatpush1.msra.mxu0 0.0
      %1768 = vmatprep.subr.mxu0 0.0
      %1769 = vmatpush1.msra.mxu0 0.0
      %1770 = vmatprep.subr.mxu0 0.0
      %1771 = vmatpush1.msra.mxu0 0.0
      %1772 = vmatprep.subr.mxu0 0.0
      %1773 = vmatpush1.msra.mxu0 0.0
      %1774 = vmatprep.subr.mxu0 0.0
      %1775 = vmatpush1.msra.mxu0 0.0
      %1776 = vmatprep.subr.mxu0 0.0
      %1777 = vmatpush1.msra.mxu0 0.0
      %1778 = vmatprep.mubr.f32.mxu0 0.0
      %1779 = vmatmul.mubr.f32.gmra.mrb[0].mxu0 %v1691
      %v1780 = vpop.f32.mrb[0].mxu0
      %v1781 = vadd.f32 0.0, %v1780
      %v1782 = vpop.f32.mrb[0].mxu0
      %1783 = vmatprep.mubr.f32.mxu0 0.0
      %1784 = vmatmul.mubr.f32.gmra.mrb[0].mxu0 %v1694
      %v1785 = vpop.f32.mrb[0].mxu0
      %v1786 = vadd.f32 0.0, %v1785
      %v1787 = vpop.f32.mrb[0].mxu0
      %1788 = vmatprep.mubr.f32.mxu0 0.0
      %1789 = vmatmul.mubr.f32.gmra.mrb[0].mxu0 %v1697
      %v1790 = vpop.f32.mrb[0].mxu0
      %v1791 = vadd.f32 0.0, %v1790
      %v1792 = vpop.f32.mrb[0].mxu0
      %1793 = vmatprep.mubr.f32.mxu0 0.0
      %1794 = vmatmul.mubr.f32.gmra.mrb[0].mxu0 %v1700
      %v1795 = vpop.f32.mrb[0].mxu0
      %v1796 = vadd.f32 0.0, %v1795
      %v1797 = vpop.f32.mrb[0].mxu0
      %1798 = vmatprep.mubr.f32.mxu0 0.0
      %1799 = vmatmul.mubr.f32.gmra.mrb[0].mxu0 %v1703
      %v1800 = vpop.f32.mrb[0].mxu0
      %v1801 = vadd.f32 0.0, %v1800
      %v1802 = vpop.f32.mrb[0].mxu0
      %1803 = vmatprep.mubr.f32.mxu0 0.0
      %1804 = vmatmul.mubr.f32.gmra.mrb[0].mxu0 %v1706
      %v1805 = vpop.f32.mrb[0].mxu0
      %v1806 = vadd.f32 0.0, %v1805
      %v1807 = vpop.f32.mrb[0].mxu0
      %1808 = vmatprep.mubr.f32.mxu0 0.0
      %1809 = vmatmul.mubr.f32.gmra.mrb[0].mxu0 %v1709
      %v1810 = vpop.f32.mrb[0].mxu0
      %v1811 = vadd.f32 0.0, %v1810
      %v1812 = vpop.f32.mrb[0].mxu0
      %1813 = vmatprep.mubr.f32.mxu0 0.0
      %1814 = vmatmul.mubr.f32.gmra.mrb[0].mxu0 %v1712
      %v1815 = vpop.f32.mrb[0].mxu0
      %v1816 = vadd.f32 0.0, %v1815
      %v1817 = vpop.f32.mrb[0].mxu0
      %1818 = vdwg.mxu0
      %v1819 = vadd.f32 %v1680, %v1781
      %v1820 = vadd.f32 %v1681, %v1786
      %v1821 = vadd.f32 %v1682, %v1791
      %v1822 = vadd.f32 %v1683, %v1796
      %v1823 = vadd.f32 %v1684, %v1801
      %v1824 = vadd.f32 %v1685, %v1806
      %v1825 = vadd.f32 %v1686, %v1811
      %v1826 = vadd.f32 %v1687, %v1816
      %v1835 = vrot.slane %v467, 1
      %v1836 = vrot.slane %v468, 1
      %v1837 = vsel %vm544, %v1835, %v1836
      %v1838 = vrot.slane %v469, 1
      %v1839 = vrot.slane %v470, 1
      %v1840 = vsel %vm544, %v1838, %v1839
      %v1841 = vrot.slane %v471, 1
      %v1842 = vrot.slane %v472, 1
      %v1843 = vsel %vm544, %v1841, %v1842
      %v1844 = vrot.slane %v473, 1
      %v1845 = vrot.slane %v474, 1
      %v1846 = vsel %vm544, %v1844, %v1845
      %v1847 = vrot.slane %v475, 1
      %v1848 = vrot.slane %v476, 1
      %v1849 = vsel %vm544, %v1847, %v1848
      %v1850 = vrot.slane %v477, 1
      %v1851 = vrot.slane %v478, 1
      %v1852 = vsel %vm544, %v1850, %v1851
      %v1853 = vrot.slane %v479, 1
      %v1854 = vrot.slane %v480, 1
      %v1855 = vsel %vm544, %v1853, %v1854
      %v1856 = vrot.slane %v481, 1
      %v1857 = vrot.slane %v482, 1
      %v1858 = vsel %vm544, %v1856, %v1857
      %s1859 = scalar_lea.vmem %s3, 80
      %v1860 = vld [vmem:[%s1859] sm:$0xff]
      %v1861 = vsel %vm571, %v1837, 0
      %v1863 = vsel %vm571, %v1840, 0
      %v1865 = vsel %vm571, %v1843, 0
      %v1867 = vsel %vm571, %v1846, 0
      %v1869 = vsel %vm571, %v1849, 0
      %v1871 = vsel %vm571, %v1852, 0
      %v1873 = vsel %vm571, %v1855, 0
      %v1875 = vsel %vm571, %v1858, 0
      %1877 = vmatprep.subr.mxu0 0.0
      %1878 = vmatpush1.msra.mxu0 %v1860
      %1879 = vmatprep.subr.mxu0 0.0
      %1880 = vmatpush1.msra.mxu0 0.0
      %1881 = vmatprep.subr.mxu0 0.0
      %1882 = vmatpush1.msra.mxu0 0.0
      %1883 = vmatprep.subr.mxu0 0.0
      %1884 = vmatpush1.msra.mxu0 0.0
      %1885 = vmatprep.subr.mxu0 0.0
      %1886 = vmatpush1.msra.mxu0 0.0
      %1887 = vmatprep.subr.mxu0 0.0
      %1888 = vmatpush1.msra.mxu0 0.0
      %1889 = vmatprep.subr.mxu0 0.0
      %1890 = vmatpush1.msra.mxu0 0.0
      %1891 = vmatprep.subr.mxu0 0.0
      %1892 = vmatpush1.msra.mxu0 0.0
      %1893 = vmatprep.subr.mxu0 0.0
      %1894 = vmatpush1.msra.mxu0 0.0
      %1895 = vmatprep.subr.mxu0 0.0
      %1896 = vmatpush1.msra.mxu0 0.0
      %1897 = vmatprep.subr.mxu0 0.0
      %1898 = vmatpush1.msra.mxu0 0.0
      %1899 = vmatprep.subr.mxu0 0.0
      %1900 = vmatpush1.msra.mxu0 0.0
      %1901 = vmatprep.subr.mxu0 0.0
      %1902 = vmatpush1.msra.mxu0 0.0
      %1903 = vmatprep.subr.mxu0 0.0
      %1904 = vmatpush1.msra.mxu0 0.0
      %1905 = vmatprep.subr.mxu0 0.0
      %1906 = vmatpush1.msra.mxu0 0.0
      %1907 = vmatprep.subr.mxu0 0.0
      %1908 = vmatpush1.msra.mxu0 0.0
      %1909 = vmatprep.subr.mxu0 0.0
      %1910 = vmatpush1.msra.mxu0 0.0
      %1911 = vmatprep.subr.mxu0 0.0
      %1912 = vmatpush1.msra.mxu0 0.0
      %1913 = vmatprep.subr.mxu0 0.0
      %1914 = vmatpush1.msra.mxu0 0.0
      %1915 = vmatprep.subr.mxu0 0.0
      %1916 = vmatpush1.msra.mxu0 0.0
      %1917 = vmatprep.subr.mxu0 0.0
      %1918 = vmatpush1.msra.mxu0 0.0
      %1919 = vmatprep.subr.mxu0 0.0
      %1920 = vmatpush1.msra.mxu0 0.0
      %1921 = vmatprep.subr.mxu0 0.0
      %1922 = vmatpush1.msra.mxu0 0.0
      %1923 = vmatprep.subr.mxu0 0.0
      %1924 = vmatpush1.msra.mxu0 0.0
      %1925 = vmatprep.subr.mxu0 0.0
      %1926 = vmatpush1.msra.mxu0 0.0
      %1927 = vmatprep.subr.mxu0 0.0
      %1928 = vmatpush1.msra.mxu0 0.0
      %1929 = vmatprep.subr.mxu0 0.0
      %1930 = vmatpush1.msra.mxu0 0.0
      %1931 = vmatprep.subr.mxu0 0.0
      %1932 = vmatpush1.msra.mxu0 0.0
      %1933 = vmatprep.subr.mxu0 0.0
      %1934 = vmatpush1.msra.mxu0 0.0
      %1935 = vmatprep.subr.mxu0 0.0
      %1936 = vmatpush1.msra.mxu0 0.0
      %1937 = vmatprep.subr.mxu0 0.0
      %1938 = vmatpush1.msra.mxu0 0.0
      %1939 = vmatprep.subr.mxu0 0.0
      %1940 = vmatpush1.msra.mxu0 0.0
      %1941 = vmatprep.mubr.f32.mxu0 0.0
      %1942 = vmatmul.mubr.f32.gmra.mrb[0].mxu0 %v1861
      %v1943 = vpop.f32.mrb[0].mxu0
      %v1944 = vadd.f32 0.0, %v1943
      %v1945 = vpop.f32.mrb[0].mxu0
      %1946 = vmatprep.mubr.f32.mxu0 0.0
      %1947 = vmatmul.mubr.f32.gmra.mrb[0].mxu0 %v1863
      %v1948 = vpop.f32.mrb[0].mxu0
      %v1949 = vadd.f32 0.0, %v1948
      %v1950 = vpop.f32.mrb[0].mxu0
      %1951 = vmatprep.mubr.f32.mxu0 0.0
      %1952 = vmatmul.mubr.f32.gmra.mrb[0].mxu0 %v1865
      %v1953 = vpop.f32.mrb[0].mxu0
      %v1954 = vadd.f32 0.0, %v1953
      %v1955 = vpop.f32.mrb[0].mxu0
      %1956 = vmatprep.mubr.f32.mxu0 0.0
      %1957 = vmatmul.mubr.f32.gmra.mrb[0].mxu0 %v1867
      %v1958 = vpop.f32.mrb[0].mxu0
      %v1959 = vadd.f32 0.0, %v1958
      %v1960 = vpop.f32.mrb[0].mxu0
      %1961 = vmatprep.mubr.f32.mxu0 0.0
      %1962 = vmatmul.mubr.f32.gmra.mrb[0].mxu0 %v1869
      %v1963 = vpop.f32.mrb[0].mxu0
      %v1964 = vadd.f32 0.0, %v1963
      %v1965 = vpop.f32.mrb[0].mxu0
      %1966 = vmatprep.mubr.f32.mxu0 0.0
      %1967 = vmatmul.mubr.f32.gmra.mrb[0].mxu0 %v1871
      %v1968 = vpop.f32.mrb[0].mxu0
      %v1969 = vadd.f32 0.0, %v1968
      %v1970 = vpop.f32.mrb[0].mxu0
      %1971 = vmatprep.mubr.f32.mxu0 0.0
      %1972 = vmatmul.mubr.f32.gmra.mrb[0].mxu0 %v1873
      %v1973 = vpop.f32.mrb[0].mxu0
      %v1974 = vadd.f32 0.0, %v1973
      %v1975 = vpop.f32.mrb[0].mxu0
      %1976 = vmatprep.mubr.f32.mxu0 0.0
      %1977 = vmatmul.mubr.f32.gmra.mrb[0].mxu0 %v1875
      %v1978 = vpop.f32.mrb[0].mxu0
      %v1979 = vadd.f32 0.0, %v1978
      %v1980 = vpop.f32.mrb[0].mxu0
      %1981 = vdwg.mxu0
      %v1982 = vadd.f32 %v1819, %v1944
      %v1983 = vadd.f32 %v1820, %v1949
      %v1984 = vadd.f32 %v1821, %v1954
      %v1985 = vadd.f32 %v1822, %v1959
      %v1986 = vadd.f32 %v1823, %v1964
      %v1987 = vadd.f32 %v1824, %v1969
      %v1988 = vadd.f32 %v1825, %v1974
      %v1989 = vadd.f32 %v1826, %v1979
      %v1990 = vrot.slane %v467, 2
      %v1991 = vrot.slane %v468, 2
      %v1992 = vsel %vm814, %v1990, %v1991
      %v1993 = vrot.slane %v469, 2
      %v1994 = vrot.slane %v470, 2
      %v1995 = vsel %vm814, %v1993, %v1994
      %v1996 = vrot.slane %v471, 2
      %v1997 = vrot.slane %v472, 2
      %v1998 = vsel %vm814, %v1996, %v1997
      %v1999 = vrot.slane %v473, 2
      %v2000 = vrot.slane %v474, 2
      %v2001 = vsel %vm814, %v1999, %v2000
      %v2002 = vrot.slane %v475, 2
      %v2003 = vrot.slane %v476, 2
      %v2004 = vsel %vm814, %v2002, %v2003
      %v2005 = vrot.slane %v477, 2
      %v2006 = vrot.slane %v478, 2
      %v2007 = vsel %vm814, %v2005, %v2006
      %v2008 = vrot.slane %v479, 2
      %v2009 = vrot.slane %v480, 2
      %v2010 = vsel %vm814, %v2008, %v2009
      %v2011 = vrot.slane %v481, 2
      %v2012 = vrot.slane %v482, 2
      %v2013 = vsel %vm814, %v2011, %v2012
      %s2014 = scalar_lea.vmem %s3, 88
      %v2015 = vld [vmem:[%s2014] sm:$0xff]
      %v2016 = vsel %vm571, %v1992, 0
      %v2018 = vsel %vm571, %v1995, 0
      %v2020 = vsel %vm571, %v1998, 0
      %v2022 = vsel %vm571, %v2001, 0
      %v2024 = vsel %vm571, %v2004, 0
      %v2026 = vsel %vm571, %v2007, 0
      %v2028 = vsel %vm571, %v2010, 0
      %v2030 = vsel %vm571, %v2013, 0
      %2032 = vmatprep.subr.mxu0 0.0
      %2033 = vmatpush1.msra.mxu0 %v2015
      %2034 = vmatprep.subr.mxu0 0.0
      %2035 = vmatpush1.msra.mxu0 0.0
      %2036 = vmatprep.subr.mxu0 0.0
      %2037 = vmatpush1.msra.mxu0 0.0
      %2038 = vmatprep.subr.mxu0 0.0
      %2039 = vmatpush1.msra.mxu0 0.0
      %2040 = vmatprep.subr.mxu0 0.0
      %2041 = vmatpush1.msra.mxu0 0.0
      %2042 = vmatprep.subr.mxu0 0.0
      %2043 = vmatpush1.msra.mxu0 0.0
      %2044 = vmatprep.subr.mxu0 0.0
      %2045 = vmatpush1.msra.mxu0 0.0
      %2046 = vmatprep.subr.mxu0 0.0
      %2047 = vmatpush1.msra.mxu0 0.0
      %2048 = vmatprep.subr.mxu0 0.0
      %2049 = vmatpush1.msra.mxu0 0.0
      %2050 = vmatprep.subr.mxu0 0.0
      %2051 = vmatpush1.msra.mxu0 0.0
      %2052 = vmatprep.subr.mxu0 0.0
      %2053 = vmatpush1.msra.mxu0 0.0
      %2054 = vmatprep.subr.mxu0 0.0
      %2055 = vmatpush1.msra.mxu0 0.0
      %2056 = vmatprep.subr.mxu0 0.0
      %2057 = vmatpush1.msra.mxu0 0.0
      %2058 = vmatprep.subr.mxu0 0.0
      %2059 = vmatpush1.msra.mxu0 0.0
      %2060 = vmatprep.subr.mxu0 0.0
      %2061 = vmatpush1.msra.mxu0 0.0
      %2062 = vmatprep.subr.mxu0 0.0
      %2063 = vmatpush1.msra.mxu0 0.0
      %2064 = vmatprep.subr.mxu0 0.0
      %2065 = vmatpush1.msra.mxu0 0.0
      %2066 = vmatprep.subr.mxu0 0.0
      %2067 = vmatpush1.msra.mxu0 0.0
      %2068 = vmatprep.subr.mxu0 0.0
      %2069 = vmatpush1.msra.mxu0 0.0
      %2070 = vmatprep.subr.mxu0 0.0
      %2071 = vmatpush1.msra.mxu0 0.0
      %2072 = vmatprep.subr.mxu0 0.0
      %2073 = vmatpush1.msra.mxu0 0.0
      %2074 = vmatprep.subr.mxu0 0.0
      %2075 = vmatpush1.msra.mxu0 0.0
      %2076 = vmatprep.subr.mxu0 0.0
      %2077 = vmatpush1.msra.mxu0 0.0
      %2078 = vmatprep.subr.mxu0 0.0
      %2079 = vmatpush1.msra.mxu0 0.0
      %2080 = vmatprep.subr.mxu0 0.0
      %2081 = vmatpush1.msra.mxu0 0.0
      %2082 = vmatprep.subr.mxu0 0.0
      %2083 = vmatpush1.msra.mxu0 0.0
      %2084 = vmatprep.subr.mxu0 0.0
      %2085 = vmatpush1.msra.mxu0 0.0
      %2086 = vmatprep.subr.mxu0 0.0
      %2087 = vmatpush1.msra.mxu0 0.0
      %2088 = vmatprep.subr.mxu0 0.0
      %2089 = vmatpush1.msra.mxu0 0.0
      %2090 = vmatprep.subr.mxu0 0.0
      %2091 = vmatpush1.msra.mxu0 0.0
      %2092 = vmatprep.subr.mxu0 0.0
      %2093 = vmatpush1.msra.mxu0 0.0
      %2094 = vmatprep.subr.mxu0 0.0
      %2095 = vmatpush1.msra.mxu0 0.0
      %2096 = vmatprep.mubr.f32.mxu0 0.0
      %2097 = vmatmul.mubr.f32.gmra.mrb[0].mxu0 %v2016
      %v2098 = vpop.f32.mrb[0].mxu0
      %v2099 = vadd.f32 0.0, %v2098
      %v2100 = vpop.f32.mrb[0].mxu0
      %2101 = vmatprep.mubr.f32.mxu0 0.0
      %2102 = vmatmul.mubr.f32.gmra.mrb[0].mxu0 %v2018
      %v2103 = vpop.f32.mrb[0].mxu0
      %v2104 = vadd.f32 0.0, %v2103
      %v2105 = vpop.f32.mrb[0].mxu0
      %2106 = vmatprep.mubr.f32.mxu0 0.0
      %2107 = vmatmul.mubr.f32.gmra.mrb[0].mxu0 %v2020
      %v2108 = vpop.f32.mrb[0].mxu0
      %v2109 = vadd.f32 0.0, %v2108
      %v2110 = vpop.f32.mrb[0].mxu0
      %2111 = vmatprep.mubr.f32.mxu0 0.0
      %2112 = vmatmul.mubr.f32.gmra.mrb[0].mxu0 %v2022
      %v2113 = vpop.f32.mrb[0].mxu0
      %v2114 = vadd.f32 0.0, %v2113
      %v2115 = vpop.f32.mrb[0].mxu0
      %2116 = vmatprep.mubr.f32.mxu0 0.0
      %2117 = vmatmul.mubr.f32.gmra.mrb[0].mxu0 %v2024
      %v2118 = vpop.f32.mrb[0].mxu0
      %v2119 = vadd.f32 0.0, %v2118
      %v2120 = vpop.f32.mrb[0].mxu0
      %2121 = vmatprep.mubr.f32.mxu0 0.0
      %2122 = vmatmul.mubr.f32.gmra.mrb[0].mxu0 %v2026
      %v2123 = vpop.f32.mrb[0].mxu0
      %v2124 = vadd.f32 0.0, %v2123
      %v2125 = vpop.f32.mrb[0].mxu0
      %2126 = vmatprep.mubr.f32.mxu0 0.0
      %2127 = vmatmul.mubr.f32.gmra.mrb[0].mxu0 %v2028
      %v2128 = vpop.f32.mrb[0].mxu0
      %v2129 = vadd.f32 0.0, %v2128
      %v2130 = vpop.f32.mrb[0].mxu0
      %2131 = vmatprep.mubr.f32.mxu0 0.0
      %2132 = vmatmul.mubr.f32.gmra.mrb[0].mxu0 %v2030
      %v2133 = vpop.f32.mrb[0].mxu0
      %v2134 = vadd.f32 0.0, %v2133
      %v2135 = vpop.f32.mrb[0].mxu0
      %2136 = vdwg.mxu0
      %v2137 = vadd.f32 %v1982, %v2099
      %v2138 = vadd.f32 %v1983, %v2104
      %v2139 = vadd.f32 %v1984, %v2109
      %v2140 = vadd.f32 %v1985, %v2114
      %v2141 = vadd.f32 %v1986, %v2119
      %v2142 = vadd.f32 %v1987, %v2124
      %v2143 = vadd.f32 %v1988, %v2129
      %v2144 = vadd.f32 %v1989, %v2134
      %s2145 = scalar_lea.vmem %s3, 96
      %v2146 = vld [vmem:[%s2145] sm:$0xff]
      %v2148 = vsel %vm571, %v483, 0
      %2150 = vmatprep.subr.mxu0 0.0
      %2151 = vmatpush1.msra.mxu0 %v2146
      %2152 = vmatprep.subr.mxu0 0.0
      %2153 = vmatpush1.msra.mxu0 0.0
      %2154 = vmatprep.subr.mxu0 0.0
      %2155 = vmatpush1.msra.mxu0 0.0
      %2156 = vmatprep.subr.mxu0 0.0
      %2157 = vmatpush1.msra.mxu0 0.0
      %2158 = vmatprep.subr.mxu0 0.0
      %2159 = vmatpush1.msra.mxu0 0.0
      %2160 = vmatprep.subr.mxu0 0.0
      %2161 = vmatpush1.msra.mxu0 0.0
      %2162 = vmatprep.subr.mxu0 0.0
      %2163 = vmatpush1.msra.mxu0 0.0
      %2164 = vmatprep.subr.mxu0 0.0
      %2165 = vmatpush1.msra.mxu0 0.0
      %2166 = vmatprep.subr.mxu0 0.0
      %2167 = vmatpush1.msra.mxu0 0.0
      %2168 = vmatprep.subr.mxu0 0.0
      %2169 = vmatpush1.msra.mxu0 0.0
      %2170 = vmatprep.subr.mxu0 0.0
      %2171 = vmatpush1.msra.mxu0 0.0
      %2172 = vmatprep.subr.mxu0 0.0
      %2173 = vmatpush1.msra.mxu0 0.0
      %2174 = vmatprep.subr.mxu0 0.0
      %2175 = vmatpush1.msra.mxu0 0.0
      %2176 = vmatprep.subr.mxu0 0.0
      %2177 = vmatpush1.msra.mxu0 0.0
      %2178 = vmatprep.subr.mxu0 0.0
      %2179 = vmatpush1.msra.mxu0 0.0
      %2180 = vmatprep.subr.mxu0 0.0
      %2181 = vmatpush1.msra.mxu0 0.0
      %2182 = vmatprep.subr.mxu0 0.0
      %2183 = vmatpush1.msra.mxu0 0.0
      %2184 = vmatprep.subr.mxu0 0.0
      %2185 = vmatpush1.msra.mxu0 0.0
      %2186 = vmatprep.subr.mxu0 0.0
      %2187 = vmatpush1.msra.mxu0 0.0
      %2188 = vmatprep.subr.mxu0 0.0
      %2189 = vmatpush1.msra.mxu0 0.0
      %2190 = vmatprep.subr.mxu0 0.0
      %2191 = vmatpush1.msra.mxu0 0.0
      %2192 = vmatprep.subr.mxu0 0.0
      %2193 = vmatpush1.msra.mxu0 0.0
      %2194 = vmatprep.subr.mxu0 0.0
      %2195 = vmatpush1.msra.mxu0 0.0
      %2196 = vmatprep.subr.mxu0 0.0
      %2197 = vmatpush1.msra.mxu0 0.0
      %2198 = vmatprep.subr.mxu0 0.0
      %2199 = vmatpush1.msra.mxu0 0.0
      %2200 = vmatprep.subr.mxu0 0.0
      %2201 = vmatpush1.msra.mxu0 0.0
      %2202 = vmatprep.subr.mxu0 0.0
      %2203 = vmatpush1.msra.mxu0 0.0
      %2204 = vmatprep.subr.mxu0 0.0
      %2205 = vmatpush1.msra.mxu0 0.0
      %2206 = vmatprep.subr.mxu0 0.0
      %2207 = vmatpush1.msra.mxu0 0.0
      %2208 = vmatprep.subr.mxu0 0.0
      %2209 = vmatpush1.msra.mxu0 0.0
      %2210 = vmatprep.subr.mxu0 0.0
      %2211 = vmatpush1.msra.mxu0 0.0
      %2212 = vmatprep.subr.mxu0 0.0
      %2213 = vmatpush1.msra.mxu0 0.0
      %2214 = vmatprep.mubr.f32.mxu0 0.0
      %2215 = vmatmul.mubr.f32.gmra.mrb[0].mxu0 %v1694
      %v2216 = vpop.f32.mrb[0].mxu0
      %v2217 = vadd.f32 0.0, %v2216
      %v2218 = vpop.f32.mrb[0].mxu0
      %2219 = vmatprep.mubr.f32.mxu0 0.0
      %2220 = vmatmul.mubr.f32.gmra.mrb[0].mxu0 %v1697
      %v2221 = vpop.f32.mrb[0].mxu0
      %v2222 = vadd.f32 0.0, %v2221
      %v2223 = vpop.f32.mrb[0].mxu0
      %2224 = vmatprep.mubr.f32.mxu0 0.0
      %2225 = vmatmul.mubr.f32.gmra.mrb[0].mxu0 %v1700
      %v2226 = vpop.f32.mrb[0].mxu0
      %v2227 = vadd.f32 0.0, %v2226
      %v2228 = vpop.f32.mrb[0].mxu0
      %2229 = vmatprep.mubr.f32.mxu0 0.0
      %2230 = vmatmul.mubr.f32.gmra.mrb[0].mxu0 %v1703
      %v2231 = vpop.f32.mrb[0].mxu0
      %v2232 = vadd.f32 0.0, %v2231
      %v2233 = vpop.f32.mrb[0].mxu0
      %2234 = vmatprep.mubr.f32.mxu0 0.0
      %2235 = vmatmul.mubr.f32.gmra.mrb[0].mxu0 %v1706
      %v2236 = vpop.f32.mrb[0].mxu0
      %v2237 = vadd.f32 0.0, %v2236
      %v2238 = vpop.f32.mrb[0].mxu0
      %2239 = vmatprep.mubr.f32.mxu0 0.0
      %2240 = vmatmul.mubr.f32.gmra.mrb[0].mxu0 %v1709
      %v2241 = vpop.f32.mrb[0].mxu0
      %v2242 = vadd.f32 0.0, %v2241
      %v2243 = vpop.f32.mrb[0].mxu0
      %2244 = vmatprep.mubr.f32.mxu0 0.0
      %2245 = vmatmul.mubr.f32.gmra.mrb[0].mxu0 %v1712
      %v2246 = vpop.f32.mrb[0].mxu0
      %v2247 = vadd.f32 0.0, %v2246
      %v2248 = vpop.f32.mrb[0].mxu0
      %2249 = vmatprep.mubr.f32.mxu0 0.0
      %2250 = vmatmul.mubr.f32.gmra.mrb[0].mxu0 %v2148
      %v2251 = vpop.f32.mrb[0].mxu0
      %v2252 = vadd.f32 0.0, %v2251
      %v2253 = vpop.f32.mrb[0].mxu0
      %2254 = vdwg.mxu0
      %v2255 = vadd.f32 %v2137, %v2217
      %v2256 = vadd.f32 %v2138, %v2222
      %v2257 = vadd.f32 %v2139, %v2227
      %v2258 = vadd.f32 %v2140, %v2232
      %v2259 = vadd.f32 %v2141, %v2237
      %v2260 = vadd.f32 %v2142, %v2242
      %v2261 = vadd.f32 %v2143, %v2247
      %v2262 = vadd.f32 %v2144, %v2252
      %v2264 = vrot.slane %v483, 1
      %v2265 = vrot.slane %v484, 1
      %v2266 = vsel %vm544, %v2264, %v2265
      %s2267 = scalar_lea.vmem %s3, 104
      %v2268 = vld [vmem:[%s2267] sm:$0xff]
      %v2269 = vsel %vm571, %v2266, 0
      %2271 = vmatprep.subr.mxu0 0.0
      %2272 = vmatpush1.msra.mxu0 %v2268
      %2273 = vmatprep.subr.mxu0 0.0
      %2274 = vmatpush1.msra.mxu0 0.0
      %2275 = vmatprep.subr.mxu0 0.0
      %2276 = vmatpush1.msra.mxu0 0.0
      %2277 = vmatprep.subr.mxu0 0.0
      %2278 = vmatpush1.msra.mxu0 0.0
      %2279 = vmatprep.subr.mxu0 0.0
      %2280 = vmatpush1.msra.mxu0 0.0
      %2281 = vmatprep.subr.mxu0 0.0
      %2282 = vmatpush1.msra.mxu0 0.0
      %2283 = vmatprep.subr.mxu0 0.0
      %2284 = vmatpush1.msra.mxu0 0.0
      %2285 = vmatprep.subr.mxu0 0.0
      %2286 = vmatpush1.msra.mxu0 0.0
      %2287 = vmatprep.subr.mxu0 0.0
      %2288 = vmatpush1.msra.mxu0 0.0
      %2289 = vmatprep.subr.mxu0 0.0
      %2290 = vmatpush1.msra.mxu0 0.0
      %2291 = vmatprep.subr.mxu0 0.0
      %2292 = vmatpush1.msra.mxu0 0.0
      %2293 = vmatprep.subr.mxu0 0.0
      %2294 = vmatpush1.msra.mxu0 0.0
      %2295 = vmatprep.subr.mxu0 0.0
      %2296 = vmatpush1.msra.mxu0 0.0
      %2297 = vmatprep.subr.mxu0 0.0
      %2298 = vmatpush1.msra.mxu0 0.0
      %2299 = vmatprep.subr.mxu0 0.0
      %2300 = vmatpush1.msra.mxu0 0.0
      %2301 = vmatprep.subr.mxu0 0.0
      %2302 = vmatpush1.msra.mxu0 0.0
      %2303 = vmatprep.subr.mxu0 0.0
      %2304 = vmatpush1.msra.mxu0 0.0
      %2305 = vmatprep.subr.mxu0 0.0
      %2306 = vmatpush1.msra.mxu0 0.0
      %2307 = vmatprep.subr.mxu0 0.0
      %2308 = vmatpush1.msra.mxu0 0.0
      %2309 = vmatprep.subr.mxu0 0.0
      %2310 = vmatpush1.msra.mxu0 0.0
      %2311 = vmatprep.subr.mxu0 0.0
      %2312 = vmatpush1.msra.mxu0 0.0
      %2313 = vmatprep.subr.mxu0 0.0
      %2314 = vmatpush1.msra.mxu0 0.0
      %2315 = vmatprep.subr.mxu0 0.0
      %2316 = vmatpush1.msra.mxu0 0.0
      %2317 = vmatprep.subr.mxu0 0.0
      %2318 = vmatpush1.msra.mxu0 0.0
      %2319 = vmatprep.subr.mxu0 0.0
      %2320 = vmatpush1.msra.mxu0 0.0
      %2321 = vmatprep.subr.mxu0 0.0
      %2322 = vmatpush1.msra.mxu0 0.0
      %2323 = vmatprep.subr.mxu0 0.0
      %2324 = vmatpush1.msra.mxu0 0.0
      %2325 = vmatprep.subr.mxu0 0.0
      %2326 = vmatpush1.msra.mxu0 0.0
      %2327 = vmatprep.subr.mxu0 0.0
      %2328 = vmatpush1.msra.mxu0 0.0
      %2329 = vmatprep.subr.mxu0 0.0
      %2330 = vmatpush1.msra.mxu0 0.0
      %2331 = vmatprep.subr.mxu0 0.0
      %2332 = vmatpush1.msra.mxu0 0.0
      %2333 = vmatprep.subr.mxu0 0.0
      %2334 = vmatpush1.msra.mxu0 0.0
      %2335 = vmatprep.mubr.f32.mxu0 0.0
      %2336 = vmatmul.mubr.f32.gmra.mrb[0].mxu0 %v1863
      %v2337 = vpop.f32.mrb[0].mxu0
      %v2338 = vadd.f32 0.0, %v2337
      %v2339 = vpop.f32.mrb[0].mxu0
      %2340 = vmatprep.mubr.f32.mxu0 0.0
      %2341 = vmatmul.mubr.f32.gmra.mrb[0].mxu0 %v1865
      %v2342 = vpop.f32.mrb[0].mxu0
      %v2343 = vadd.f32 0.0, %v2342
      %v2344 = vpop.f32.mrb[0].mxu0
      %2345 = vmatprep.mubr.f32.mxu0 0.0
      %2346 = vmatmul.mubr.f32.gmra.mrb[0].mxu0 %v1867
      %v2347 = vpop.f32.mrb[0].mxu0
      %v2348 = vadd.f32 0.0, %v2347
      %v2349 = vpop.f32.mrb[0].mxu0
      %2350 = vmatprep.mubr.f32.mxu0 0.0
      %2351 = vmatmul.mubr.f32.gmra.mrb[0].mxu0 %v1869
      %v2352 = vpop.f32.mrb[0].mxu0
      %v2353 = vadd.f32 0.0, %v2352
      %v2354 = vpop.f32.mrb[0].mxu0
      %2355 = vmatprep.mubr.f32.mxu0 0.0
      %2356 = vmatmul.mubr.f32.gmra.mrb[0].mxu0 %v1871
      %v2357 = vpop.f32.mrb[0].mxu0
      %v2358 = vadd.f32 0.0, %v2357
      %v2359 = vpop.f32.mrb[0].mxu0
      %2360 = vmatprep.mubr.f32.mxu0 0.0
      %2361 = vmatmul.mubr.f32.gmra.mrb[0].mxu0 %v1873
      %v2362 = vpop.f32.mrb[0].mxu0
      %v2363 = vadd.f32 0.0, %v2362
      %v2364 = vpop.f32.mrb[0].mxu0
      %2365 = vmatprep.mubr.f32.mxu0 0.0
      %2366 = vmatmul.mubr.f32.gmra.mrb[0].mxu0 %v1875
      %v2367 = vpop.f32.mrb[0].mxu0
      %v2368 = vadd.f32 0.0, %v2367
      %v2369 = vpop.f32.mrb[0].mxu0
      %2370 = vmatprep.mubr.f32.mxu0 0.0
      %2371 = vmatmul.mubr.f32.gmra.mrb[0].mxu0 %v2269
      %v2372 = vpop.f32.mrb[0].mxu0
      %v2373 = vadd.f32 0.0, %v2372
      %v2374 = vpop.f32.mrb[0].mxu0
      %2375 = vdwg.mxu0
      %v2376 = vadd.f32 %v2255, %v2338
      %v2377 = vadd.f32 %v2256, %v2343
      %v2378 = vadd.f32 %v2257, %v2348
      %v2379 = vadd.f32 %v2258, %v2353
      %v2380 = vadd.f32 %v2259, %v2358
      %v2381 = vadd.f32 %v2260, %v2363
      %v2382 = vadd.f32 %v2261, %v2368
      %v2383 = vadd.f32 %v2262, %v2373
      %v2384 = vrot.slane %v483, 2
      %v2385 = vrot.slane %v484, 2
      %v2386 = vsel %vm814, %v2384, %v2385
      %s2387 = scalar_lea.vmem %s3, 112
      %v2388 = vld [vmem:[%s2387] sm:$0xff]
      %v2389 = vsel %vm571, %v2386, 0
      %2391 = vmatprep.subr.mxu0 0.0
      %2392 = vmatpush1.msra.mxu0 %v2388
      %2393 = vmatprep.subr.mxu0 0.0
      %2394 = vmatpush1.msra.mxu0 0.0
      %2395 = vmatprep.subr.mxu0 0.0
      %2396 = vmatpush1.msra.mxu0 0.0
      %2397 = vmatprep.subr.mxu0 0.0
      %2398 = vmatpush1.msra.mxu0 0.0
      %2399 = vmatprep.subr.mxu0 0.0
      %2400 = vmatpush1.msra.mxu0 0.0
      %2401 = vmatprep.subr.mxu0 0.0
      %2402 = vmatpush1.msra.mxu0 0.0
      %2403 = vmatprep.subr.mxu0 0.0
      %2404 = vmatpush1.msra.mxu0 0.0
      %2405 = vmatprep.subr.mxu0 0.0
      %2406 = vmatpush1.msra.mxu0 0.0
      %2407 = vmatprep.subr.mxu0 0.0
      %2408 = vmatpush1.msra.mxu0 0.0
      %2409 = vmatprep.subr.mxu0 0.0
      %2410 = vmatpush1.msra.mxu0 0.0
      %2411 = vmatprep.subr.mxu0 0.0
      %2412 = vmatpush1.msra.mxu0 0.0
      %2413 = vmatprep.subr.mxu0 0.0
      %2414 = vmatpush1.msra.mxu0 0.0
      %2415 = vmatprep.subr.mxu0 0.0
      %2416 = vmatpush1.msra.mxu0 0.0
      %2417 = vmatprep.subr.mxu0 0.0
      %2418 = vmatpush1.msra.mxu0 0.0
      %2419 = vmatprep.subr.mxu0 0.0
      %2420 = vmatpush1.msra.mxu0 0.0
      %2421 = vmatprep.subr.mxu0 0.0
      %2422 = vmatpush1.msra.mxu0 0.0
      %2423 = vmatprep.subr.mxu0 0.0
      %2424 = vmatpush1.msra.mxu0 0.0
      %2425 = vmatprep.subr.mxu0 0.0
      %2426 = vmatpush1.msra.mxu0 0.0
      %2427 = vmatprep.subr.mxu0 0.0
      %2428 = vmatpush1.msra.mxu0 0.0
      %2429 = vmatprep.subr.mxu0 0.0
      %2430 = vmatpush1.msra.mxu0 0.0
      %2431 = vmatprep.subr.mxu0 0.0
      %2432 = vmatpush1.msra.mxu0 0.0
      %2433 = vmatprep.subr.mxu0 0.0
      %2434 = vmatpush1.msra.mxu0 0.0
      %2435 = vmatprep.subr.mxu0 0.0
      %2436 = vmatpush1.msra.mxu0 0.0
      %2437 = vmatprep.subr.mxu0 0.0
      %2438 = vmatpush1.msra.mxu0 0.0
      %2439 = vmatprep.subr.mxu0 0.0
      %2440 = vmatpush1.msra.mxu0 0.0
      %2441 = vmatprep.subr.mxu0 0.0
      %2442 = vmatpush1.msra.mxu0 0.0
      %2443 = vmatprep.subr.mxu0 0.0
      %2444 = vmatpush1.msra.mxu0 0.0
      %2445 = vmatprep.subr.mxu0 0.0
      %2446 = vmatpush1.msra.mxu0 0.0
      %2447 = vmatprep.subr.mxu0 0.0
      %2448 = vmatpush1.msra.mxu0 0.0
      %2449 = vmatprep.subr.mxu0 0.0
      %2450 = vmatpush1.msra.mxu0 0.0
      %2451 = vmatprep.subr.mxu0 0.0
      %2452 = vmatpush1.msra.mxu0 0.0
      %2453 = vmatprep.subr.mxu0 0.0
      %2454 = vmatpush1.msra.mxu0 0.0
      %2455 = vmatprep.mubr.f32.mxu0 0.0
      %2456 = vmatmul.mubr.f32.gmra.mrb[0].mxu0 %v2018
      %v2457 = vpop.f32.mrb[0].mxu0
      %v2458 = vadd.f32 0.0, %v2457
      %v2459 = vpop.f32.mrb[0].mxu0
      %2460 = vmatprep.mubr.f32.mxu0 0.0
      %2461 = vmatmul.mubr.f32.gmra.mrb[0].mxu0 %v2020
      %v2462 = vpop.f32.mrb[0].mxu0
      %v2463 = vadd.f32 0.0, %v2462
      %v2464 = vpop.f32.mrb[0].mxu0
      %2465 = vmatprep.mubr.f32.mxu0 0.0
      %2466 = vmatmul.mubr.f32.gmra.mrb[0].mxu0 %v2022
      %v2467 = vpop.f32.mrb[0].mxu0
      %v2468 = vadd.f32 0.0, %v2467
      %v2469 = vpop.f32.mrb[0].mxu0
      %2470 = vmatprep.mubr.f32.mxu0 0.0
      %2471 = vmatmul.mubr.f32.gmra.mrb[0].mxu0 %v2024
      %v2472 = vpop.f32.mrb[0].mxu0
      %v2473 = vadd.f32 0.0, %v2472
      %v2474 = vpop.f32.mrb[0].mxu0
      %2475 = vmatprep.mubr.f32.mxu0 0.0
      %2476 = vmatmul.mubr.f32.gmra.mrb[0].mxu0 %v2026
      %v2477 = vpop.f32.mrb[0].mxu0
      %v2478 = vadd.f32 0.0, %v2477
      %v2479 = vpop.f32.mrb[0].mxu0
      %2480 = vmatprep.mubr.f32.mxu0 0.0
      %2481 = vmatmul.mubr.f32.gmra.mrb[0].mxu0 %v2028
      %v2482 = vpop.f32.mrb[0].mxu0
      %v2483 = vadd.f32 0.0, %v2482
      %v2484 = vpop.f32.mrb[0].mxu0
      %2485 = vmatprep.mubr.f32.mxu0 0.0
      %2486 = vmatmul.mubr.f32.gmra.mrb[0].mxu0 %v2030
      %v2487 = vpop.f32.mrb[0].mxu0
      %v2488 = vadd.f32 0.0, %v2487
      %v2489 = vpop.f32.mrb[0].mxu0
      %2490 = vmatprep.mubr.f32.mxu0 0.0
      %2491 = vmatmul.mubr.f32.gmra.mrb[0].mxu0 %v2389
      %v2492 = vpop.f32.mrb[0].mxu0
      %v2493 = vadd.f32 0.0, %v2492
      %v2494 = vpop.f32.mrb[0].mxu0
      %2495 = vdwg.mxu0
      %v2496 = vadd.f32 %v2376, %v2458
      %v2497 = vadd.f32 %v2377, %v2463
      %v2498 = vadd.f32 %v2378, %v2468
      %v2499 = vadd.f32 %v2379, %v2473
      %v2500 = vadd.f32 %v2380, %v2478
      %v2501 = vadd.f32 %v2381, %v2483
      %v2502 = vadd.f32 %v2382, %v2488
      %v2503 = vadd.f32 %v2383, %v2493
      %s2504 = scalar_lea.vmem %s3, 120
      %v2505 = vld [vmem:[%s2504] sm:$0xff]
      %v2507 = vsel %vm571, %v485, 0
      %2509 = vmatprep.subr.mxu0 0.0
      %2510 = vmatpush1.msra.mxu0 %v2505
      %2511 = vmatprep.subr.mxu0 0.0
      %2512 = vmatpush1.msra.mxu0 0.0
      %2513 = vmatprep.subr.mxu0 0.0
      %2514 = vmatpush1.msra.mxu0 0.0
      %2515 = vmatprep.subr.mxu0 0.0
      %2516 = vmatpush1.msra.mxu0 0.0
      %2517 = vmatprep.subr.mxu0 0.0
      %2518 = vmatpush1.msra.mxu0 0.0
      %2519 = vmatprep.subr.mxu0 0.0
      %2520 = vmatpush1.msra.mxu0 0.0
      %2521 = vmatprep.subr.mxu0 0.0
      %2522 = vmatpush1.msra.mxu0 0.0
      %2523 = vmatprep.subr.mxu0 0.0
      %2524 = vmatpush1.msra.mxu0 0.0
      %2525 = vmatprep.subr.mxu0 0.0
      %2526 = vmatpush1.msra.mxu0 0.0
      %2527 = vmatprep.subr.mxu0 0.0
      %2528 = vmatpush1.msra.mxu0 0.0
      %2529 = vmatprep.subr.mxu0 0.0
      %2530 = vmatpush1.msra.mxu0 0.0
      %2531 = vmatprep.subr.mxu0 0.0
      %2532 = vmatpush1.msra.mxu0 0.0
      %2533 = vmatprep.subr.mxu0 0.0
      %2534 = vmatpush1.msra.mxu0 0.0
      %2535 = vmatprep.subr.mxu0 0.0
      %2536 = vmatpush1.msra.mxu0 0.0
      %2537 = vmatprep.subr.mxu0 0.0
      %2538 = vmatpush1.msra.mxu0 0.0
      %2539 = vmatprep.subr.mxu0 0.0
      %2540 = vmatpush1.msra.mxu0 0.0
      %2541 = vmatprep.subr.mxu0 0.0
      %2542 = vmatpush1.msra.mxu0 0.0
      %2543 = vmatprep.subr.mxu0 0.0
      %2544 = vmatpush1.msra.mxu0 0.0
      %2545 = vmatprep.subr.mxu0 0.0
      %2546 = vmatpush1.msra.mxu0 0.0
      %2547 = vmatprep.subr.mxu0 0.0
      %2548 = vmatpush1.msra.mxu0 0.0
      %2549 = vmatprep.subr.mxu0 0.0
      %2550 = vmatpush1.msra.mxu0 0.0
      %2551 = vmatprep.subr.mxu0 0.0
      %2552 = vmatpush1.msra.mxu0 0.0
      %2553 = vmatprep.subr.mxu0 0.0
      %2554 = vmatpush1.msra.mxu0 0.0
      %2555 = vmatprep.subr.mxu0 0.0
      %2556 = vmatpush1.msra.mxu0 0.0
      %2557 = vmatprep.subr.mxu0 0.0
      %2558 = vmatpush1.msra.mxu0 0.0
      %2559 = vmatprep.subr.mxu0 0.0
      %2560 = vmatpush1.msra.mxu0 0.0
      %2561 = vmatprep.subr.mxu0 0.0
      %2562 = vmatpush1.msra.mxu0 0.0
      %2563 = vmatprep.subr.mxu0 0.0
      %2564 = vmatpush1.msra.mxu0 0.0
      %2565 = vmatprep.subr.mxu0 0.0
      %2566 = vmatpush1.msra.mxu0 0.0
      %2567 = vmatprep.subr.mxu0 0.0
      %2568 = vmatpush1.msra.mxu0 0.0
      %2569 = vmatprep.subr.mxu0 0.0
      %2570 = vmatpush1.msra.mxu0 0.0
      %2571 = vmatprep.subr.mxu0 0.0
      %2572 = vmatpush1.msra.mxu0 0.0
      %2573 = vmatprep.mubr.f32.mxu0 0.0
      %2574 = vmatmul.mubr.f32.gmra.mrb[0].mxu0 %v1697
      %v2575 = vpop.f32.mrb[0].mxu0
      %v2576 = vadd.f32 0.0, %v2575
      %v2577 = vpop.f32.mrb[0].mxu0
      %2578 = vmatprep.mubr.f32.mxu0 0.0
      %2579 = vmatmul.mubr.f32.gmra.mrb[0].mxu0 %v1700
      %v2580 = vpop.f32.mrb[0].mxu0
      %v2581 = vadd.f32 0.0, %v2580
      %v2582 = vpop.f32.mrb[0].mxu0
      %2583 = vmatprep.mubr.f32.mxu0 0.0
      %2584 = vmatmul.mubr.f32.gmra.mrb[0].mxu0 %v1703
      %v2585 = vpop.f32.mrb[0].mxu0
      %v2586 = vadd.f32 0.0, %v2585
      %v2587 = vpop.f32.mrb[0].mxu0
      %2588 = vmatprep.mubr.f32.mxu0 0.0
      %2589 = vmatmul.mubr.f32.gmra.mrb[0].mxu0 %v1706
      %v2590 = vpop.f32.mrb[0].mxu0
      %v2591 = vadd.f32 0.0, %v2590
      %v2592 = vpop.f32.mrb[0].mxu0
      %2593 = vmatprep.mubr.f32.mxu0 0.0
      %2594 = vmatmul.mubr.f32.gmra.mrb[0].mxu0 %v1709
      %v2595 = vpop.f32.mrb[0].mxu0
      %v2596 = vadd.f32 0.0, %v2595
      %v2597 = vpop.f32.mrb[0].mxu0
      %2598 = vmatprep.mubr.f32.mxu0 0.0
      %2599 = vmatmul.mubr.f32.gmra.mrb[0].mxu0 %v1712
      %v2600 = vpop.f32.mrb[0].mxu0
      %v2601 = vadd.f32 0.0, %v2600
      %v2602 = vpop.f32.mrb[0].mxu0
      %2603 = vmatprep.mubr.f32.mxu0 0.0
      %2604 = vmatmul.mubr.f32.gmra.mrb[0].mxu0 %v2148
      %v2605 = vpop.f32.mrb[0].mxu0
      %v2606 = vadd.f32 0.0, %v2605
      %v2607 = vpop.f32.mrb[0].mxu0
      %2608 = vmatprep.mubr.f32.mxu0 0.0
      %2609 = vmatmul.mubr.f32.gmra.mrb[0].mxu0 %v2507
      %v2610 = vpop.f32.mrb[0].mxu0
      %v2611 = vadd.f32 0.0, %v2610
      %v2612 = vpop.f32.mrb[0].mxu0
      %2613 = vdwg.mxu0
      %v2614 = vadd.f32 %v2496, %v2576
      %v2615 = vadd.f32 %v2497, %v2581
      %v2616 = vadd.f32 %v2498, %v2586
      %v2617 = vadd.f32 %v2499, %v2591
      %v2618 = vadd.f32 %v2500, %v2596
      %v2619 = vadd.f32 %v2501, %v2601
      %v2620 = vadd.f32 %v2502, %v2606
      %v2621 = vadd.f32 %v2503, %v2611
      %v2623 = vrot.slane %v485, 1
      %v2624 = vrot.slane %v486, 1
      %v2625 = vsel %vm544, %v2623, %v2624
      %s2626 = scalar_lea.vmem %s3, 128
      %v2627 = vld [vmem:[%s2626] sm:$0xff]
      %v2628 = vsel %vm571, %v2625, 0
      %2630 = vmatprep.subr.mxu0 0.0
      %2631 = vmatpush1.msra.mxu0 %v2627
      %2632 = vmatprep.subr.mxu0 0.0
      %2633 = vmatpush1.msra.mxu0 0.0
      %2634 = vmatprep.subr.mxu0 0.0
      %2635 = vmatpush1.msra.mxu0 0.0
      %2636 = vmatprep.subr.mxu0 0.0
      %2637 = vmatpush1.msra.mxu0 0.0
      %2638 = vmatprep.subr.mxu0 0.0
      %2639 = vmatpush1.msra.mxu0 0.0
      %2640 = vmatprep.subr.mxu0 0.0
      %2641 = vmatpush1.msra.mxu0 0.0
      %2642 = vmatprep.subr.mxu0 0.0
      %2643 = vmatpush1.msra.mxu0 0.0
      %2644 = vmatprep.subr.mxu0 0.0
      %2645 = vmatpush1.msra.mxu0 0.0
      %2646 = vmatprep.subr.mxu0 0.0
      %2647 = vmatpush1.msra.mxu0 0.0
      %2648 = vmatprep.subr.mxu0 0.0
      %2649 = vmatpush1.msra.mxu0 0.0
      %2650 = vmatprep.subr.mxu0 0.0
      %2651 = vmatpush1.msra.mxu0 0.0
      %2652 = vmatprep.subr.mxu0 0.0
      %2653 = vmatpush1.msra.mxu0 0.0
      %2654 = vmatprep.subr.mxu0 0.0
      %2655 = vmatpush1.msra.mxu0 0.0
      %2656 = vmatprep.subr.mxu0 0.0
      %2657 = vmatpush1.msra.mxu0 0.0
      %2658 = vmatprep.subr.mxu0 0.0
      %2659 = vmatpush1.msra.mxu0 0.0
      %2660 = vmatprep.subr.mxu0 0.0
      %2661 = vmatpush1.msra.mxu0 0.0
      %2662 = vmatprep.subr.mxu0 0.0
      %2663 = vmatpush1.msra.mxu0 0.0
      %2664 = vmatprep.subr.mxu0 0.0
      %2665 = vmatpush1.msra.mxu0 0.0
      %2666 = vmatprep.subr.mxu0 0.0
      %2667 = vmatpush1.msra.mxu0 0.0
      %2668 = vmatprep.subr.mxu0 0.0
      %2669 = vmatpush1.msra.mxu0 0.0
      %2670 = vmatprep.subr.mxu0 0.0
      %2671 = vmatpush1.msra.mxu0 0.0
      %2672 = vmatprep.subr.mxu0 0.0
      %2673 = vmatpush1.msra.mxu0 0.0
      %2674 = vmatprep.subr.mxu0 0.0
      %2675 = vmatpush1.msra.mxu0 0.0
      %2676 = vmatprep.subr.mxu0 0.0
      %2677 = vmatpush1.msra.mxu0 0.0
      %2678 = vmatprep.subr.mxu0 0.0
      %2679 = vmatpush1.msra.mxu0 0.0
      %2680 = vmatprep.subr.mxu0 0.0
      %2681 = vmatpush1.msra.mxu0 0.0
      %2682 = vmatprep.subr.mxu0 0.0
      %2683 = vmatpush1.msra.mxu0 0.0
      %2684 = vmatprep.subr.mxu0 0.0
      %2685 = vmatpush1.msra.mxu0 0.0
      %2686 = vmatprep.subr.mxu0 0.0
      %2687 = vmatpush1.msra.mxu0 0.0
      %2688 = vmatprep.subr.mxu0 0.0
      %2689 = vmatpush1.msra.mxu0 0.0
      %2690 = vmatprep.subr.mxu0 0.0
      %2691 = vmatpush1.msra.mxu0 0.0
      %2692 = vmatprep.subr.mxu0 0.0
      %2693 = vmatpush1.msra.mxu0 0.0
      %2694 = vmatprep.mubr.f32.mxu0 0.0
      %2695 = vmatmul.mubr.f32.gmra.mrb[0].mxu0 %v1865
      %v2696 = vpop.f32.mrb[0].mxu0
      %v2697 = vadd.f32 0.0, %v2696
      %v2698 = vpop.f32.mrb[0].mxu0
      %2699 = vmatprep.mubr.f32.mxu0 0.0
      %2700 = vmatmul.mubr.f32.gmra.mrb[0].mxu0 %v1867
      %v2701 = vpop.f32.mrb[0].mxu0
      %v2702 = vadd.f32 0.0, %v2701
      %v2703 = vpop.f32.mrb[0].mxu0
      %2704 = vmatprep.mubr.f32.mxu0 0.0
      %2705 = vmatmul.mubr.f32.gmra.mrb[0].mxu0 %v1869
      %v2706 = vpop.f32.mrb[0].mxu0
      %v2707 = vadd.f32 0.0, %v2706
      %v2708 = vpop.f32.mrb[0].mxu0
      %2709 = vmatprep.mubr.f32.mxu0 0.0
      %2710 = vmatmul.mubr.f32.gmra.mrb[0].mxu0 %v1871
      %v2711 = vpop.f32.mrb[0].mxu0
      %v2712 = vadd.f32 0.0, %v2711
      %v2713 = vpop.f32.mrb[0].mxu0
      %2714 = vmatprep.mubr.f32.mxu0 0.0
      %2715 = vmatmul.mubr.f32.gmra.mrb[0].mxu0 %v1873
      %v2716 = vpop.f32.mrb[0].mxu0
      %v2717 = vadd.f32 0.0, %v2716
      %v2718 = vpop.f32.mrb[0].mxu0
      %2719 = vmatprep.mubr.f32.mxu0 0.0
      %2720 = vmatmul.mubr.f32.gmra.mrb[0].mxu0 %v1875
      %v2721 = vpop.f32.mrb[0].mxu0
      %v2722 = vadd.f32 0.0, %v2721
      %v2723 = vpop.f32.mrb[0].mxu0
      %2724 = vmatprep.mubr.f32.mxu0 0.0
      %2725 = vmatmul.mubr.f32.gmra.mrb[0].mxu0 %v2269
      %v2726 = vpop.f32.mrb[0].mxu0
      %v2727 = vadd.f32 0.0, %v2726
      %v2728 = vpop.f32.mrb[0].mxu0
      %2729 = vmatprep.mubr.f32.mxu0 0.0
      %2730 = vmatmul.mubr.f32.gmra.mrb[0].mxu0 %v2628
      %v2731 = vpop.f32.mrb[0].mxu0
      %v2732 = vadd.f32 0.0, %v2731
      %v2733 = vpop.f32.mrb[0].mxu0
      %2734 = vdwg.mxu0
      %v2735 = vadd.f32 %v2614, %v2697
      %v2736 = vadd.f32 %v2615, %v2702
      %v2737 = vadd.f32 %v2616, %v2707
      %v2738 = vadd.f32 %v2617, %v2712
      %v2739 = vadd.f32 %v2618, %v2717
      %v2740 = vadd.f32 %v2619, %v2722
      %v2741 = vadd.f32 %v2620, %v2727
      %v2742 = vadd.f32 %v2621, %v2732
      %v2743 = vrot.slane %v485, 2
      %v2744 = vrot.slane %v486, 2
      %v2745 = vsel %vm814, %v2743, %v2744
      %s2746 = scalar_lea.vmem %s3, 136
      %v2747 = vld [vmem:[%s2746] sm:$0xff]
      %v2748 = vsel %vm571, %v2745, 0
      %2750 = vmatprep.subr.mxu0 0.0
      %2751 = vmatpush1.msra.mxu0 %v2747
      %2752 = vmatprep.subr.mxu0 0.0
      %2753 = vmatpush1.msra.mxu0 0.0
      %2754 = vmatprep.subr.mxu0 0.0
      %2755 = vmatpush1.msra.mxu0 0.0
      %2756 = vmatprep.subr.mxu0 0.0
      %2757 = vmatpush1.msra.mxu0 0.0
      %2758 = vmatprep.subr.mxu0 0.0
      %2759 = vmatpush1.msra.mxu0 0.0
      %2760 = vmatprep.subr.mxu0 0.0
      %2761 = vmatpush1.msra.mxu0 0.0
      %2762 = vmatprep.subr.mxu0 0.0
      %2763 = vmatpush1.msra.mxu0 0.0
      %2764 = vmatprep.subr.mxu0 0.0
      %2765 = vmatpush1.msra.mxu0 0.0
      %2766 = vmatprep.subr.mxu0 0.0
      %2767 = vmatpush1.msra.mxu0 0.0
      %2768 = vmatprep.subr.mxu0 0.0
      %2769 = vmatpush1.msra.mxu0 0.0
      %2770 = vmatprep.subr.mxu0 0.0
      %2771 = vmatpush1.msra.mxu0 0.0
      %2772 = vmatprep.subr.mxu0 0.0
      %2773 = vmatpush1.msra.mxu0 0.0
      %2774 = vmatprep.subr.mxu0 0.0
      %2775 = vmatpush1.msra.mxu0 0.0
      %2776 = vmatprep.subr.mxu0 0.0
      %2777 = vmatpush1.msra.mxu0 0.0
      %2778 = vmatprep.subr.mxu0 0.0
      %2779 = vmatpush1.msra.mxu0 0.0
      %2780 = vmatprep.subr.mxu0 0.0
      %2781 = vmatpush1.msra.mxu0 0.0
      %2782 = vmatprep.subr.mxu0 0.0
      %2783 = vmatpush1.msra.mxu0 0.0
      %2784 = vmatprep.subr.mxu0 0.0
      %2785 = vmatpush1.msra.mxu0 0.0
      %2786 = vmatprep.subr.mxu0 0.0
      %2787 = vmatpush1.msra.mxu0 0.0
      %2788 = vmatprep.subr.mxu0 0.0
      %2789 = vmatpush1.msra.mxu0 0.0
      %2790 = vmatprep.subr.mxu0 0.0
      %2791 = vmatpush1.msra.mxu0 0.0
      %2792 = vmatprep.subr.mxu0 0.0
      %2793 = vmatpush1.msra.mxu0 0.0
      %2794 = vmatprep.subr.mxu0 0.0
      %2795 = vmatpush1.msra.mxu0 0.0
      %2796 = vmatprep.subr.mxu0 0.0
      %2797 = vmatpush1.msra.mxu0 0.0
      %2798 = vmatprep.subr.mxu0 0.0
      %2799 = vmatpush1.msra.mxu0 0.0
      %2800 = vmatprep.subr.mxu0 0.0
      %2801 = vmatpush1.msra.mxu0 0.0
      %2802 = vmatprep.subr.mxu0 0.0
      %2803 = vmatpush1.msra.mxu0 0.0
      %2804 = vmatprep.subr.mxu0 0.0
      %2805 = vmatpush1.msra.mxu0 0.0
      %2806 = vmatprep.subr.mxu0 0.0
      %2807 = vmatpush1.msra.mxu0 0.0
      %2808 = vmatprep.subr.mxu0 0.0
      %2809 = vmatpush1.msra.mxu0 0.0
      %2810 = vmatprep.subr.mxu0 0.0
      %2811 = vmatpush1.msra.mxu0 0.0
      %2812 = vmatprep.subr.mxu0 0.0
      %2813 = vmatpush1.msra.mxu0 0.0
      %2814 = vmatprep.mubr.f32.mxu0 0.0
      %2815 = vmatmul.mubr.f32.gmra.mrb[0].mxu0 %v2020
      %v2816 = vpop.f32.mrb[0].mxu0
      %v2817 = vadd.f32 0.0, %v2816
      %v2818 = vpop.f32.mrb[0].mxu0
      %2819 = vmatprep.mubr.f32.mxu0 0.0
      %2820 = vmatmul.mubr.f32.gmra.mrb[0].mxu0 %v2022
      %v2821 = vpop.f32.mrb[0].mxu0
      %v2822 = vadd.f32 0.0, %v2821
      %v2823 = vpop.f32.mrb[0].mxu0
      %2824 = vmatprep.mubr.f32.mxu0 0.0
      %2825 = vmatmul.mubr.f32.gmra.mrb[0].mxu0 %v2024
      %v2826 = vpop.f32.mrb[0].mxu0
      %v2827 = vadd.f32 0.0, %v2826
      %v2828 = vpop.f32.mrb[0].mxu0
      %2829 = vmatprep.mubr.f32.mxu0 0.0
      %2830 = vmatmul.mubr.f32.gmra.mrb[0].mxu0 %v2026
      %v2831 = vpop.f32.mrb[0].mxu0
      %v2832 = vadd.f32 0.0, %v2831
      %v2833 = vpop.f32.mrb[0].mxu0
      %2834 = vmatprep.mubr.f32.mxu0 0.0
      %2835 = vmatmul.mubr.f32.gmra.mrb[0].mxu0 %v2028
      %v2836 = vpop.f32.mrb[0].mxu0
      %v2837 = vadd.f32 0.0, %v2836
      %v2838 = vpop.f32.mrb[0].mxu0
      %2839 = vmatprep.mubr.f32.mxu0 0.0
      %2840 = vmatmul.mubr.f32.gmra.mrb[0].mxu0 %v2030
      %v2841 = vpop.f32.mrb[0].mxu0
      %v2842 = vadd.f32 0.0, %v2841
      %v2843 = vpop.f32.mrb[0].mxu0
      %2844 = vmatprep.mubr.f32.mxu0 0.0
      %2845 = vmatmul.mubr.f32.gmra.mrb[0].mxu0 %v2389
      %v2846 = vpop.f32.mrb[0].mxu0
      %v2847 = vadd.f32 0.0, %v2846
      %v2848 = vpop.f32.mrb[0].mxu0
      %2849 = vmatprep.mubr.f32.mxu0 0.0
      %2850 = vmatmul.mubr.f32.gmra.mrb[0].mxu0 %v2748
      %v2851 = vpop.f32.mrb[0].mxu0
      %v2852 = vadd.f32 0.0, %v2851
      %v2853 = vpop.f32.mrb[0].mxu0
      %2854 = vdwg.mxu0
      %v2855 = vadd.f32 %v2735, %v2817
      %v2856 = vadd.f32 %v2736, %v2822
      %v2857 = vadd.f32 %v2737, %v2827
      %v2858 = vadd.f32 %v2738, %v2832
      %v2859 = vadd.f32 %v2739, %v2837
      %v2860 = vadd.f32 %v2740, %v2842
      %v2861 = vadd.f32 %v2741, %v2847
      %v2862 = vadd.f32 %v2742, %v2852
      %s2863 = scalar_lea.vmem %s3, 144
      %v2864 = vld [vmem:[%s2863] sm:$0xff]
      %v2866 = vsel %vm571, %v507, 0
      %v2869 = vsel %vm571, %v509, 0
      %v2872 = vsel %vm571, %v511, 0
      %v2875 = vsel %vm571, %v513, 0
      %v2878 = vsel %vm571, %v515, 0
      %v2881 = vsel %vm571, %v517, 0
      %v2884 = vsel %vm571, %v519, 0
      %v2887 = vsel %vm571, %v521, 0
      %2889 = vmatprep.subr.mxu0 0.0
      %2890 = vmatpush1.msra.mxu0 %v2864
      %2891 = vmatprep.subr.mxu0 0.0
      %2892 = vmatpush1.msra.mxu0 0.0
      %2893 = vmatprep.subr.mxu0 0.0
      %2894 = vmatpush1.msra.mxu0 0.0
      %2895 = vmatprep.subr.mxu0 0.0
      %2896 = vmatpush1.msra.mxu0 0.0
      %2897 = vmatprep.subr.mxu0 0.0
      %2898 = vmatpush1.msra.mxu0 0.0
      %2899 = vmatprep.subr.mxu0 0.0
      %2900 = vmatpush1.msra.mxu0 0.0
      %2901 = vmatprep.subr.mxu0 0.0
      %2902 = vmatpush1.msra.mxu0 0.0
      %2903 = vmatprep.subr.mxu0 0.0
      %2904 = vmatpush1.msra.mxu0 0.0
      %2905 = vmatprep.subr.mxu0 0.0
      %2906 = vmatpush1.msra.mxu0 0.0
      %2907 = vmatprep.subr.mxu0 0.0
      %2908 = vmatpush1.msra.mxu0 0.0
      %2909 = vmatprep.subr.mxu0 0.0
      %2910 = vmatpush1.msra.mxu0 0.0
      %2911 = vmatprep.subr.mxu0 0.0
      %2912 = vmatpush1.msra.mxu0 0.0
      %2913 = vmatprep.subr.mxu0 0.0
      %2914 = vmatpush1.msra.mxu0 0.0
      %2915 = vmatprep.subr.mxu0 0.0
      %2916 = vmatpush1.msra.mxu0 0.0
      %2917 = vmatprep.subr.mxu0 0.0
      %2918 = vmatpush1.msra.mxu0 0.0
      %2919 = vmatprep.subr.mxu0 0.0
      %2920 = vmatpush1.msra.mxu0 0.0
      %2921 = vmatprep.subr.mxu0 0.0
      %2922 = vmatpush1.msra.mxu0 0.0
      %2923 = vmatprep.subr.mxu0 0.0
      %2924 = vmatpush1.msra.mxu0 0.0
      %2925 = vmatprep.subr.mxu0 0.0
      %2926 = vmatpush1.msra.mxu0 0.0
      %2927 = vmatprep.subr.mxu0 0.0
      %2928 = vmatpush1.msra.mxu0 0.0
      %2929 = vmatprep.subr.mxu0 0.0
      %2930 = vmatpush1.msra.mxu0 0.0
      %2931 = vmatprep.subr.mxu0 0.0
      %2932 = vmatpush1.msra.mxu0 0.0
      %2933 = vmatprep.subr.mxu0 0.0
      %2934 = vmatpush1.msra.mxu0 0.0
      %2935 = vmatprep.subr.mxu0 0.0
      %2936 = vmatpush1.msra.mxu0 0.0
      %2937 = vmatprep.subr.mxu0 0.0
      %2938 = vmatpush1.msra.mxu0 0.0
      %2939 = vmatprep.subr.mxu0 0.0
      %2940 = vmatpush1.msra.mxu0 0.0
      %2941 = vmatprep.subr.mxu0 0.0
      %2942 = vmatpush1.msra.mxu0 0.0
      %2943 = vmatprep.subr.mxu0 0.0
      %2944 = vmatpush1.msra.mxu0 0.0
      %2945 = vmatprep.subr.mxu0 0.0
      %2946 = vmatpush1.msra.mxu0 0.0
      %2947 = vmatprep.subr.mxu0 0.0
      %2948 = vmatpush1.msra.mxu0 0.0
      %2949 = vmatprep.subr.mxu0 0.0
      %2950 = vmatpush1.msra.mxu0 0.0
      %2951 = vmatprep.subr.mxu0 0.0
      %2952 = vmatpush1.msra.mxu0 0.0
      %2953 = vmatprep.mubr.f32.mxu0 0.0
      %2954 = vmatmul.mubr.f32.gmra.mrb[0].mxu0 %v2866
      %v2955 = vpop.f32.mrb[0].mxu0
      %v2956 = vadd.f32 0.0, %v2955
      %v2957 = vpop.f32.mrb[0].mxu0
      %2958 = vmatprep.mubr.f32.mxu0 0.0
      %2959 = vmatmul.mubr.f32.gmra.mrb[0].mxu0 %v2869
      %v2960 = vpop.f32.mrb[0].mxu0
      %v2961 = vadd.f32 0.0, %v2960
      %v2962 = vpop.f32.mrb[0].mxu0
      %2963 = vmatprep.mubr.f32.mxu0 0.0
      %2964 = vmatmul.mubr.f32.gmra.mrb[0].mxu0 %v2872
      %v2965 = vpop.f32.mrb[0].mxu0
      %v2966 = vadd.f32 0.0, %v2965
      %v2967 = vpop.f32.mrb[0].mxu0
      %2968 = vmatprep.mubr.f32.mxu0 0.0
      %2969 = vmatmul.mubr.f32.gmra.mrb[0].mxu0 %v2875
      %v2970 = vpop.f32.mrb[0].mxu0
      %v2971 = vadd.f32 0.0, %v2970
      %v2972 = vpop.f32.mrb[0].mxu0
      %2973 = vmatprep.mubr.f32.mxu0 0.0
      %2974 = vmatmul.mubr.f32.gmra.mrb[0].mxu0 %v2878
      %v2975 = vpop.f32.mrb[0].mxu0
      %v2976 = vadd.f32 0.0, %v2975
      %v2977 = vpop.f32.mrb[0].mxu0
      %2978 = vmatprep.mubr.f32.mxu0 0.0
      %2979 = vmatmul.mubr.f32.gmra.mrb[0].mxu0 %v2881
      %v2980 = vpop.f32.mrb[0].mxu0
      %v2981 = vadd.f32 0.0, %v2980
      %v2982 = vpop.f32.mrb[0].mxu0
      %2983 = vmatprep.mubr.f32.mxu0 0.0
      %2984 = vmatmul.mubr.f32.gmra.mrb[0].mxu0 %v2884
      %v2985 = vpop.f32.mrb[0].mxu0
      %v2986 = vadd.f32 0.0, %v2985
      %v2987 = vpop.f32.mrb[0].mxu0
      %2988 = vmatprep.mubr.f32.mxu0 0.0
      %2989 = vmatmul.mubr.f32.gmra.mrb[0].mxu0 %v2887
      %v2990 = vpop.f32.mrb[0].mxu0
      %v2991 = vadd.f32 0.0, %v2990
      %v2992 = vpop.f32.mrb[0].mxu0
      %2993 = vdwg.mxu0
      %v2994 = vadd.f32 %v2855, %v2956
      %v2995 = vadd.f32 %v2856, %v2961
      %v2996 = vadd.f32 %v2857, %v2966
      %v2997 = vadd.f32 %v2858, %v2971
      %v2998 = vadd.f32 %v2859, %v2976
      %v2999 = vadd.f32 %v2860, %v2981
      %v3000 = vadd.f32 %v2861, %v2986
      %v3001 = vadd.f32 %v2862, %v2991
      %v3010 = vrot.slane %v507, 1
      %v3011 = vrot.slane %v508, 1
      %v3012 = vsel %vm544, %v3010, %v3011
      %v3013 = vrot.slane %v509, 1
      %v3014 = vrot.slane %v510, 1
      %v3015 = vsel %vm544, %v3013, %v3014
      %v3016 = vrot.slane %v511, 1
      %v3017 = vrot.slane %v512, 1
      %v3018 = vsel %vm544, %v3016, %v3017
      %v3019 = vrot.slane %v513, 1
      %v3020 = vrot.slane %v514, 1
      %v3021 = vsel %vm544, %v3019, %v3020
      %v3022 = vrot.slane %v515, 1
      %v3023 = vrot.slane %v516, 1
      %v3024 = vsel %vm544, %v3022, %v3023
      %v3025 = vrot.slane %v517, 1
      %v3026 = vrot.slane %v518, 1
      %v3027 = vsel %vm544, %v3025, %v3026
      %v3028 = vrot.slane %v519, 1
      %v3029 = vrot.slane %v520, 1
      %v3030 = vsel %vm544, %v3028, %v3029
      %v3031 = vrot.slane %v521, 1
      %v3032 = vrot.slane %v522, 1
      %v3033 = vsel %vm544, %v3031, %v3032
      %s3034 = scalar_lea.vmem %s3, 152
      %v3035 = vld [vmem:[%s3034] sm:$0xff]
      %v3036 = vsel %vm571, %v3012, 0
      %v3038 = vsel %vm571, %v3015, 0
      %v3040 = vsel %vm571, %v3018, 0
      %v3042 = vsel %vm571, %v3021, 0
      %v3044 = vsel %vm571, %v3024, 0
      %v3046 = vsel %vm571, %v3027, 0
      %v3048 = vsel %vm571, %v3030, 0
      %v3050 = vsel %vm571, %v3033, 0
      %3052 = vmatprep.subr.mxu0 0.0
      %3053 = vmatpush1.msra.mxu0 %v3035
      %3054 = vmatprep.subr.mxu0 0.0
      %3055 = vmatpush1.msra.mxu0 0.0
      %3056 = vmatprep.subr.mxu0 0.0
      %3057 = vmatpush1.msra.mxu0 0.0
      %3058 = vmatprep.subr.mxu0 0.0
      %3059 = vmatpush1.msra.mxu0 0.0
      %3060 = vmatprep.subr.mxu0 0.0
      %3061 = vmatpush1.msra.mxu0 0.0
      %3062 = vmatprep.subr.mxu0 0.0
      %3063 = vmatpush1.msra.mxu0 0.0
      %3064 = vmatprep.subr.mxu0 0.0
      %3065 = vmatpush1.msra.mxu0 0.0
      %3066 = vmatprep.subr.mxu0 0.0
      %3067 = vmatpush1.msra.mxu0 0.0
      %3068 = vmatprep.subr.mxu0 0.0
      %3069 = vmatpush1.msra.mxu0 0.0
      %3070 = vmatprep.subr.mxu0 0.0
      %3071 = vmatpush1.msra.mxu0 0.0
      %3072 = vmatprep.subr.mxu0 0.0
      %3073 = vmatpush1.msra.mxu0 0.0
      %3074 = vmatprep.subr.mxu0 0.0
      %3075 = vmatpush1.msra.mxu0 0.0
      %3076 = vmatprep.subr.mxu0 0.0
      %3077 = vmatpush1.msra.mxu0 0.0
      %3078 = vmatprep.subr.mxu0 0.0
      %3079 = vmatpush1.msra.mxu0 0.0
      %3080 = vmatprep.subr.mxu0 0.0
      %3081 = vmatpush1.msra.mxu0 0.0
      %3082 = vmatprep.subr.mxu0 0.0
      %3083 = vmatpush1.msra.mxu0 0.0
      %3084 = vmatprep.subr.mxu0 0.0
      %3085 = vmatpush1.msra.mxu0 0.0
      %3086 = vmatprep.subr.mxu0 0.0
      %3087 = vmatpush1.msra.mxu0 0.0
      %3088 = vmatprep.subr.mxu0 0.0
      %3089 = vmatpush1.msra.mxu0 0.0
      %3090 = vmatprep.subr.mxu0 0.0
      %3091 = vmatpush1.msra.mxu0 0.0
      %3092 = vmatprep.subr.mxu0 0.0
      %3093 = vmatpush1.msra.mxu0 0.0
      %3094 = vmatprep.subr.mxu0 0.0
      %3095 = vmatpush1.msra.mxu0 0.0
      %3096 = vmatprep.subr.mxu0 0.0
      %3097 = vmatpush1.msra.mxu0 0.0
      %3098 = vmatprep.subr.mxu0 0.0
      %3099 = vmatpush1.msra.mxu0 0.0
      %3100 = vmatprep.subr.mxu0 0.0
      %3101 = vmatpush1.msra.mxu0 0.0
      %3102 = vmatprep.subr.mxu0 0.0
      %3103 = vmatpush1.msra.mxu0 0.0
      %3104 = vmatprep.subr.mxu0 0.0
      %3105 = vmatpush1.msra.mxu0 0.0
      %3106 = vmatprep.subr.mxu0 0.0
      %3107 = vmatpush1.msra.mxu0 0.0
      %3108 = vmatprep.subr.mxu0 0.0
      %3109 = vmatpush1.msra.mxu0 0.0
      %3110 = vmatprep.subr.mxu0 0.0
      %3111 = vmatpush1.msra.mxu0 0.0
      %3112 = vmatprep.subr.mxu0 0.0
      %3113 = vmatpush1.msra.mxu0 0.0
      %3114 = vmatprep.subr.mxu0 0.0
      %3115 = vmatpush1.msra.mxu0 0.0
      %3116 = vmatprep.mubr.f32.mxu0 0.0
      %3117 = vmatmul.mubr.f32.gmra.mrb[0].mxu0 %v3036
      %v3118 = vpop.f32.mrb[0].mxu0
      %v3119 = vadd.f32 0.0, %v3118
      %v3120 = vpop.f32.mrb[0].mxu0
      %3121 = vmatprep.mubr.f32.mxu0 0.0
      %3122 = vmatmul.mubr.f32.gmra.mrb[0].mxu0 %v3038
      %v3123 = vpop.f32.mrb[0].mxu0
      %v3124 = vadd.f32 0.0, %v3123
      %v3125 = vpop.f32.mrb[0].mxu0
      %3126 = vmatprep.mubr.f32.mxu0 0.0
      %3127 = vmatmul.mubr.f32.gmra.mrb[0].mxu0 %v3040
      %v3128 = vpop.f32.mrb[0].mxu0
      %v3129 = vadd.f32 0.0, %v3128
      %v3130 = vpop.f32.mrb[0].mxu0
      %3131 = vmatprep.mubr.f32.mxu0 0.0
      %3132 = vmatmul.mubr.f32.gmra.mrb[0].mxu0 %v3042
      %v3133 = vpop.f32.mrb[0].mxu0
      %v3134 = vadd.f32 0.0, %v3133
      %v3135 = vpop.f32.mrb[0].mxu0
      %3136 = vmatprep.mubr.f32.mxu0 0.0
      %3137 = vmatmul.mubr.f32.gmra.mrb[0].mxu0 %v3044
      %v3138 = vpop.f32.mrb[0].mxu0
      %v3139 = vadd.f32 0.0, %v3138
      %v3140 = vpop.f32.mrb[0].mxu0
      %3141 = vmatprep.mubr.f32.mxu0 0.0
      %3142 = vmatmul.mubr.f32.gmra.mrb[0].mxu0 %v3046
      %v3143 = vpop.f32.mrb[0].mxu0
      %v3144 = vadd.f32 0.0, %v3143
      %v3145 = vpop.f32.mrb[0].mxu0
      %3146 = vmatprep.mubr.f32.mxu0 0.0
      %3147 = vmatmul.mubr.f32.gmra.mrb[0].mxu0 %v3048
      %v3148 = vpop.f32.mrb[0].mxu0
      %v3149 = vadd.f32 0.0, %v3148
      %v3150 = vpop.f32.mrb[0].mxu0
      %3151 = vmatprep.mubr.f32.mxu0 0.0
      %3152 = vmatmul.mubr.f32.gmra.mrb[0].mxu0 %v3050
      %v3153 = vpop.f32.mrb[0].mxu0
      %v3154 = vadd.f32 0.0, %v3153
      %v3155 = vpop.f32.mrb[0].mxu0
      %3156 = vdwg.mxu0
      %v3157 = vadd.f32 %v2994, %v3119
      %v3158 = vadd.f32 %v2995, %v3124
      %v3159 = vadd.f32 %v2996, %v3129
      %v3160 = vadd.f32 %v2997, %v3134
      %v3161 = vadd.f32 %v2998, %v3139
      %v3162 = vadd.f32 %v2999, %v3144
      %v3163 = vadd.f32 %v3000, %v3149
      %v3164 = vadd.f32 %v3001, %v3154
      %v3165 = vrot.slane %v507, 2
      %v3166 = vrot.slane %v508, 2
      %v3167 = vsel %vm814, %v3165, %v3166
      %v3168 = vrot.slane %v509, 2
      %v3169 = vrot.slane %v510, 2
      %v3170 = vsel %vm814, %v3168, %v3169
      %v3171 = vrot.slane %v511, 2
      %v3172 = vrot.slane %v512, 2
      %v3173 = vsel %vm814, %v3171, %v3172
      %v3174 = vrot.slane %v513, 2
      %v3175 = vrot.slane %v514, 2
      %v3176 = vsel %vm814, %v3174, %v3175
      %v3177 = vrot.slane %v515, 2
      %v3178 = vrot.slane %v516, 2
      %v3179 = vsel %vm814, %v3177, %v3178
      %v3180 = vrot.slane %v517, 2
      %v3181 = vrot.slane %v518, 2
      %v3182 = vsel %vm814, %v3180, %v3181
      %v3183 = vrot.slane %v519, 2
      %v3184 = vrot.slane %v520, 2
      %v3185 = vsel %vm814, %v3183, %v3184
      %v3186 = vrot.slane %v521, 2
      %v3187 = vrot.slane %v522, 2
      %v3188 = vsel %vm814, %v3186, %v3187
      %s3189 = scalar_lea.vmem %s3, 160
      %v3190 = vld [vmem:[%s3189] sm:$0xff]
      %v3191 = vsel %vm571, %v3167, 0
      %v3193 = vsel %vm571, %v3170, 0
      %v3195 = vsel %vm571, %v3173, 0
      %v3197 = vsel %vm571, %v3176, 0
      %v3199 = vsel %vm571, %v3179, 0
      %v3201 = vsel %vm571, %v3182, 0
      %v3203 = vsel %vm571, %v3185, 0
      %v3205 = vsel %vm571, %v3188, 0
      %3207 = vmatprep.subr.mxu0 0.0
      %3208 = vmatpush1.msra.mxu0 %v3190
      %3209 = vmatprep.subr.mxu0 0.0
      %3210 = vmatpush1.msra.mxu0 0.0
      %3211 = vmatprep.subr.mxu0 0.0
      %3212 = vmatpush1.msra.mxu0 0.0
      %3213 = vmatprep.subr.mxu0 0.0
      %3214 = vmatpush1.msra.mxu0 0.0
      %3215 = vmatprep.subr.mxu0 0.0
      %3216 = vmatpush1.msra.mxu0 0.0
      %3217 = vmatprep.subr.mxu0 0.0
      %3218 = vmatpush1.msra.mxu0 0.0
      %3219 = vmatprep.subr.mxu0 0.0
      %3220 = vmatpush1.msra.mxu0 0.0
      %3221 = vmatprep.subr.mxu0 0.0
      %3222 = vmatpush1.msra.mxu0 0.0
      %3223 = vmatprep.subr.mxu0 0.0
      %3224 = vmatpush1.msra.mxu0 0.0
      %3225 = vmatprep.subr.mxu0 0.0
      %3226 = vmatpush1.msra.mxu0 0.0
      %3227 = vmatprep.subr.mxu0 0.0
      %3228 = vmatpush1.msra.mxu0 0.0
      %3229 = vmatprep.subr.mxu0 0.0
      %3230 = vmatpush1.msra.mxu0 0.0
      %3231 = vmatprep.subr.mxu0 0.0
      %3232 = vmatpush1.msra.mxu0 0.0
      %3233 = vmatprep.subr.mxu0 0.0
      %3234 = vmatpush1.msra.mxu0 0.0
      %3235 = vmatprep.subr.mxu0 0.0
      %3236 = vmatpush1.msra.mxu0 0.0
      %3237 = vmatprep.subr.mxu0 0.0
      %3238 = vmatpush1.msra.mxu0 0.0
      %3239 = vmatprep.subr.mxu0 0.0
      %3240 = vmatpush1.msra.mxu0 0.0
      %3241 = vmatprep.subr.mxu0 0.0
      %3242 = vmatpush1.msra.mxu0 0.0
      %3243 = vmatprep.subr.mxu0 0.0
      %3244 = vmatpush1.msra.mxu0 0.0
      %3245 = vmatprep.subr.mxu0 0.0
      %3246 = vmatpush1.msra.mxu0 0.0
      %3247 = vmatprep.subr.mxu0 0.0
      %3248 = vmatpush1.msra.mxu0 0.0
      %3249 = vmatprep.subr.mxu0 0.0
      %3250 = vmatpush1.msra.mxu0 0.0
      %3251 = vmatprep.subr.mxu0 0.0
      %3252 = vmatpush1.msra.mxu0 0.0
      %3253 = vmatprep.subr.mxu0 0.0
      %3254 = vmatpush1.msra.mxu0 0.0
      %3255 = vmatprep.subr.mxu0 0.0
      %3256 = vmatpush1.msra.mxu0 0.0
      %3257 = vmatprep.subr.mxu0 0.0
      %3258 = vmatpush1.msra.mxu0 0.0
      %3259 = vmatprep.subr.mxu0 0.0
      %3260 = vmatpush1.msra.mxu0 0.0
      %3261 = vmatprep.subr.mxu0 0.0
      %3262 = vmatpush1.msra.mxu0 0.0
      %3263 = vmatprep.subr.mxu0 0.0
      %3264 = vmatpush1.msra.mxu0 0.0
      %3265 = vmatprep.subr.mxu0 0.0
      %3266 = vmatpush1.msra.mxu0 0.0
      %3267 = vmatprep.subr.mxu0 0.0
      %3268 = vmatpush1.msra.mxu0 0.0
      %3269 = vmatprep.subr.mxu0 0.0
      %3270 = vmatpush1.msra.mxu0 0.0
      %3271 = vmatprep.mubr.f32.mxu0 0.0
      %3272 = vmatmul.mubr.f32.gmra.mrb[0].mxu0 %v3191
      %v3273 = vpop.f32.mrb[0].mxu0
      %v3274 = vadd.f32 0.0, %v3273
      %v3275 = vpop.f32.mrb[0].mxu0
      %3276 = vmatprep.mubr.f32.mxu0 0.0
      %3277 = vmatmul.mubr.f32.gmra.mrb[0].mxu0 %v3193
      %v3278 = vpop.f32.mrb[0].mxu0
      %v3279 = vadd.f32 0.0, %v3278
      %v3280 = vpop.f32.mrb[0].mxu0
      %3281 = vmatprep.mubr.f32.mxu0 0.0
      %3282 = vmatmul.mubr.f32.gmra.mrb[0].mxu0 %v3195
      %v3283 = vpop.f32.mrb[0].mxu0
      %v3284 = vadd.f32 0.0, %v3283
      %v3285 = vpop.f32.mrb[0].mxu0
      %3286 = vmatprep.mubr.f32.mxu0 0.0
      %3287 = vmatmul.mubr.f32.gmra.mrb[0].mxu0 %v3197
      %v3288 = vpop.f32.mrb[0].mxu0
      %v3289 = vadd.f32 0.0, %v3288
      %v3290 = vpop.f32.mrb[0].mxu0
      %3291 = vmatprep.mubr.f32.mxu0 0.0
      %3292 = vmatmul.mubr.f32.gmra.mrb[0].mxu0 %v3199
      %v3293 = vpop.f32.mrb[0].mxu0
      %v3294 = vadd.f32 0.0, %v3293
      %v3295 = vpop.f32.mrb[0].mxu0
      %3296 = vmatprep.mubr.f32.mxu0 0.0
      %3297 = vmatmul.mubr.f32.gmra.mrb[0].mxu0 %v3201
      %v3298 = vpop.f32.mrb[0].mxu0
      %v3299 = vadd.f32 0.0, %v3298
      %v3300 = vpop.f32.mrb[0].mxu0
      %3301 = vmatprep.mubr.f32.mxu0 0.0
      %3302 = vmatmul.mubr.f32.gmra.mrb[0].mxu0 %v3203
      %v3303 = vpop.f32.mrb[0].mxu0
      %v3304 = vadd.f32 0.0, %v3303
      %v3305 = vpop.f32.mrb[0].mxu0
      %3306 = vmatprep.mubr.f32.mxu0 0.0
      %3307 = vmatmul.mubr.f32.gmra.mrb[0].mxu0 %v3205
      %v3308 = vpop.f32.mrb[0].mxu0
      %v3309 = vadd.f32 0.0, %v3308
      %v3310 = vpop.f32.mrb[0].mxu0
      %3311 = vdwg.mxu0
      %v3312 = vadd.f32 %v3157, %v3274
      %v3313 = vadd.f32 %v3158, %v3279
      %v3314 = vadd.f32 %v3159, %v3284
      %v3315 = vadd.f32 %v3160, %v3289
      %v3316 = vadd.f32 %v3161, %v3294
      %v3317 = vadd.f32 %v3162, %v3299
      %v3318 = vadd.f32 %v3163, %v3304
      %v3319 = vadd.f32 %v3164, %v3309
      %s3320 = scalar_lea.vmem %s3, 168
      %v3321 = vld [vmem:[%s3320] sm:$0xff]
      %v3323 = vsel %vm571, %v523, 0
      %3325 = vmatprep.subr.mxu0 0.0
      %3326 = vmatpush1.msra.mxu0 %v3321
      %3327 = vmatprep.subr.mxu0 0.0
      %3328 = vmatpush1.msra.mxu0 0.0
      %3329 = vmatprep.subr.mxu0 0.0
      %3330 = vmatpush1.msra.mxu0 0.0
      %3331 = vmatprep.subr.mxu0 0.0
      %3332 = vmatpush1.msra.mxu0 0.0
      %3333 = vmatprep.subr.mxu0 0.0
      %3334 = vmatpush1.msra.mxu0 0.0
      %3335 = vmatprep.subr.mxu0 0.0
      %3336 = vmatpush1.msra.mxu0 0.0
      %3337 = vmatprep.subr.mxu0 0.0
      %3338 = vmatpush1.msra.mxu0 0.0
      %3339 = vmatprep.subr.mxu0 0.0
      %3340 = vmatpush1.msra.mxu0 0.0
      %3341 = vmatprep.subr.mxu0 0.0
      %3342 = vmatpush1.msra.mxu0 0.0
      %3343 = vmatprep.subr.mxu0 0.0
      %3344 = vmatpush1.msra.mxu0 0.0
      %3345 = vmatprep.subr.mxu0 0.0
      %3346 = vmatpush1.msra.mxu0 0.0
      %3347 = vmatprep.subr.mxu0 0.0
      %3348 = vmatpush1.msra.mxu0 0.0
      %3349 = vmatprep.subr.mxu0 0.0
      %3350 = vmatpush1.msra.mxu0 0.0
      %3351 = vmatprep.subr.mxu0 0.0
      %3352 = vmatpush1.msra.mxu0 0.0
      %3353 = vmatprep.subr.mxu0 0.0
      %3354 = vmatpush1.msra.mxu0 0.0
      %3355 = vmatprep.subr.mxu0 0.0
      %3356 = vmatpush1.msra.mxu0 0.0
      %3357 = vmatprep.subr.mxu0 0.0
      %3358 = vmatpush1.msra.mxu0 0.0
      %3359 = vmatprep.subr.mxu0 0.0
      %3360 = vmatpush1.msra.mxu0 0.0
      %3361 = vmatprep.subr.mxu0 0.0
      %3362 = vmatpush1.msra.mxu0 0.0
      %3363 = vmatprep.subr.mxu0 0.0
      %3364 = vmatpush1.msra.mxu0 0.0
      %3365 = vmatprep.subr.mxu0 0.0
      %3366 = vmatpush1.msra.mxu0 0.0
      %3367 = vmatprep.subr.mxu0 0.0
      %3368 = vmatpush1.msra.mxu0 0.0
      %3369 = vmatprep.subr.mxu0 0.0
      %3370 = vmatpush1.msra.mxu0 0.0
      %3371 = vmatprep.subr.mxu0 0.0
      %3372 = vmatpush1.msra.mxu0 0.0
      %3373 = vmatprep.subr.mxu0 0.0
      %3374 = vmatpush1.msra.mxu0 0.0
      %3375 = vmatprep.subr.mxu0 0.0
      %3376 = vmatpush1.msra.mxu0 0.0
      %3377 = vmatprep.subr.mxu0 0.0
      %3378 = vmatpush1.msra.mxu0 0.0
      %3379 = vmatprep.subr.mxu0 0.0
      %3380 = vmatpush1.msra.mxu0 0.0
      %3381 = vmatprep.subr.mxu0 0.0
      %3382 = vmatpush1.msra.mxu0 0.0
      %3383 = vmatprep.subr.mxu0 0.0
      %3384 = vmatpush1.msra.mxu0 0.0
      %3385 = vmatprep.subr.mxu0 0.0
      %3386 = vmatpush1.msra.mxu0 0.0
      %3387 = vmatprep.subr.mxu0 0.0
      %3388 = vmatpush1.msra.mxu0 0.0
      %3389 = vmatprep.mubr.f32.mxu0 0.0
      %3390 = vmatmul.mubr.f32.gmra.mrb[0].mxu0 %v2869
      %v3391 = vpop.f32.mrb[0].mxu0
      %v3392 = vadd.f32 0.0, %v3391
      %v3393 = vpop.f32.mrb[0].mxu0
      %3394 = vmatprep.mubr.f32.mxu0 0.0
      %3395 = vmatmul.mubr.f32.gmra.mrb[0].mxu0 %v2872
      %v3396 = vpop.f32.mrb[0].mxu0
      %v3397 = vadd.f32 0.0, %v3396
      %v3398 = vpop.f32.mrb[0].mxu0
      %3399 = vmatprep.mubr.f32.mxu0 0.0
      %3400 = vmatmul.mubr.f32.gmra.mrb[0].mxu0 %v2875
      %v3401 = vpop.f32.mrb[0].mxu0
      %v3402 = vadd.f32 0.0, %v3401
      %v3403 = vpop.f32.mrb[0].mxu0
      %3404 = vmatprep.mubr.f32.mxu0 0.0
      %3405 = vmatmul.mubr.f32.gmra.mrb[0].mxu0 %v2878
      %v3406 = vpop.f32.mrb[0].mxu0
      %v3407 = vadd.f32 0.0, %v3406
      %v3408 = vpop.f32.mrb[0].mxu0
      %3409 = vmatprep.mubr.f32.mxu0 0.0
      %3410 = vmatmul.mubr.f32.gmra.mrb[0].mxu0 %v2881
      %v3411 = vpop.f32.mrb[0].mxu0
      %v3412 = vadd.f32 0.0, %v3411
      %v3413 = vpop.f32.mrb[0].mxu0
      %3414 = vmatprep.mubr.f32.mxu0 0.0
      %3415 = vmatmul.mubr.f32.gmra.mrb[0].mxu0 %v2884
      %v3416 = vpop.f32.mrb[0].mxu0
      %v3417 = vadd.f32 0.0, %v3416
      %v3418 = vpop.f32.mrb[0].mxu0
      %3419 = vmatprep.mubr.f32.mxu0 0.0
      %3420 = vmatmul.mubr.f32.gmra.mrb[0].mxu0 %v2887
      %v3421 = vpop.f32.mrb[0].mxu0
      %v3422 = vadd.f32 0.0, %v3421
      %v3423 = vpop.f32.mrb[0].mxu0
      %3424 = vmatprep.mubr.f32.mxu0 0.0
      %3425 = vmatmul.mubr.f32.gmra.mrb[0].mxu0 %v3323
      %v3426 = vpop.f32.mrb[0].mxu0
      %v3427 = vadd.f32 0.0, %v3426
      %v3428 = vpop.f32.mrb[0].mxu0
      %3429 = vdwg.mxu0
      %v3430 = vadd.f32 %v3312, %v3392
      %v3431 = vadd.f32 %v3313, %v3397
      %v3432 = vadd.f32 %v3314, %v3402
      %v3433 = vadd.f32 %v3315, %v3407
      %v3434 = vadd.f32 %v3316, %v3412
      %v3435 = vadd.f32 %v3317, %v3417
      %v3436 = vadd.f32 %v3318, %v3422
      %v3437 = vadd.f32 %v3319, %v3427
      %v3439 = vrot.slane %v523, 1
      %v3440 = vrot.slane %v524, 1
      %v3441 = vsel %vm544, %v3439, %v3440
      %s3442 = scalar_lea.vmem %s3, 176
      %v3443 = vld [vmem:[%s3442] sm:$0xff]
      %v3444 = vsel %vm571, %v3441, 0
      %3446 = vmatprep.subr.mxu0 0.0
      %3447 = vmatpush1.msra.mxu0 %v3443
      %3448 = vmatprep.subr.mxu0 0.0
      %3449 = vmatpush1.msra.mxu0 0.0
      %3450 = vmatprep.subr.mxu0 0.0
      %3451 = vmatpush1.msra.mxu0 0.0
      %3452 = vmatprep.subr.mxu0 0.0
      %3453 = vmatpush1.msra.mxu0 0.0
      %3454 = vmatprep.subr.mxu0 0.0
      %3455 = vmatpush1.msra.mxu0 0.0
      %3456 = vmatprep.subr.mxu0 0.0
      %3457 = vmatpush1.msra.mxu0 0.0
      %3458 = vmatprep.subr.mxu0 0.0
      %3459 = vmatpush1.msra.mxu0 0.0
      %3460 = vmatprep.subr.mxu0 0.0
      %3461 = vmatpush1.msra.mxu0 0.0
      %3462 = vmatprep.subr.mxu0 0.0
      %3463 = vmatpush1.msra.mxu0 0.0
      %3464 = vmatprep.subr.mxu0 0.0
      %3465 = vmatpush1.msra.mxu0 0.0
      %3466 = vmatprep.subr.mxu0 0.0
      %3467 = vmatpush1.msra.mxu0 0.0
      %3468 = vmatprep.subr.mxu0 0.0
      %3469 = vmatpush1.msra.mxu0 0.0
      %3470 = vmatprep.subr.mxu0 0.0
      %3471 = vmatpush1.msra.mxu0 0.0
      %3472 = vmatprep.subr.mxu0 0.0
      %3473 = vmatpush1.msra.mxu0 0.0
      %3474 = vmatprep.subr.mxu0 0.0
      %3475 = vmatpush1.msra.mxu0 0.0
      %3476 = vmatprep.subr.mxu0 0.0
      %3477 = vmatpush1.msra.mxu0 0.0
      %3478 = vmatprep.subr.mxu0 0.0
      %3479 = vmatpush1.msra.mxu0 0.0
      %3480 = vmatprep.subr.mxu0 0.0
      %3481 = vmatpush1.msra.mxu0 0.0
      %3482 = vmatprep.subr.mxu0 0.0
      %3483 = vmatpush1.msra.mxu0 0.0
      %3484 = vmatprep.subr.mxu0 0.0
      %3485 = vmatpush1.msra.mxu0 0.0
      %3486 = vmatprep.subr.mxu0 0.0
      %3487 = vmatpush1.msra.mxu0 0.0
      %3488 = vmatprep.subr.mxu0 0.0
      %3489 = vmatpush1.msra.mxu0 0.0
      %3490 = vmatprep.subr.mxu0 0.0
      %3491 = vmatpush1.msra.mxu0 0.0
      %3492 = vmatprep.subr.mxu0 0.0
      %3493 = vmatpush1.msra.mxu0 0.0
      %3494 = vmatprep.subr.mxu0 0.0
      %3495 = vmatpush1.msra.mxu0 0.0
      %3496 = vmatprep.subr.mxu0 0.0
      %3497 = vmatpush1.msra.mxu0 0.0
      %3498 = vmatprep.subr.mxu0 0.0
      %3499 = vmatpush1.msra.mxu0 0.0
      %3500 = vmatprep.subr.mxu0 0.0
      %3501 = vmatpush1.msra.mxu0 0.0
      %3502 = vmatprep.subr.mxu0 0.0
      %3503 = vmatpush1.msra.mxu0 0.0
      %3504 = vmatprep.subr.mxu0 0.0
      %3505 = vmatpush1.msra.mxu0 0.0
      %3506 = vmatprep.subr.mxu0 0.0
      %3507 = vmatpush1.msra.mxu0 0.0
      %3508 = vmatprep.subr.mxu0 0.0
      %3509 = vmatpush1.msra.mxu0 0.0
      %3510 = vmatprep.mubr.f32.mxu0 0.0
      %3511 = vmatmul.mubr.f32.gmra.mrb[0].mxu0 %v3038
      %v3512 = vpop.f32.mrb[0].mxu0
      %v3513 = vadd.f32 0.0, %v3512
      %v3514 = vpop.f32.mrb[0].mxu0
      %3515 = vmatprep.mubr.f32.mxu0 0.0
      %3516 = vmatmul.mubr.f32.gmra.mrb[0].mxu0 %v3040
      %v3517 = vpop.f32.mrb[0].mxu0
      %v3518 = vadd.f32 0.0, %v3517
      %v3519 = vpop.f32.mrb[0].mxu0
      %3520 = vmatprep.mubr.f32.mxu0 0.0
      %3521 = vmatmul.mubr.f32.gmra.mrb[0].mxu0 %v3042
      %v3522 = vpop.f32.mrb[0].mxu0
      %v3523 = vadd.f32 0.0, %v3522
      %v3524 = vpop.f32.mrb[0].mxu0
      %3525 = vmatprep.mubr.f32.mxu0 0.0
      %3526 = vmatmul.mubr.f32.gmra.mrb[0].mxu0 %v3044
      %v3527 = vpop.f32.mrb[0].mxu0
      %v3528 = vadd.f32 0.0, %v3527
      %v3529 = vpop.f32.mrb[0].mxu0
      %3530 = vmatprep.mubr.f32.mxu0 0.0
      %3531 = vmatmul.mubr.f32.gmra.mrb[0].mxu0 %v3046
      %v3532 = vpop.f32.mrb[0].mxu0
      %v3533 = vadd.f32 0.0, %v3532
      %v3534 = vpop.f32.mrb[0].mxu0
      %3535 = vmatprep.mubr.f32.mxu0 0.0
      %3536 = vmatmul.mubr.f32.gmra.mrb[0].mxu0 %v3048
      %v3537 = vpop.f32.mrb[0].mxu0
      %v3538 = vadd.f32 0.0, %v3537
      %v3539 = vpop.f32.mrb[0].mxu0
      %3540 = vmatprep.mubr.f32.mxu0 0.0
      %3541 = vmatmul.mubr.f32.gmra.mrb[0].mxu0 %v3050
      %v3542 = vpop.f32.mrb[0].mxu0
      %v3543 = vadd.f32 0.0, %v3542
      %v3544 = vpop.f32.mrb[0].mxu0
      %3545 = vmatprep.mubr.f32.mxu0 0.0
      %3546 = vmatmul.mubr.f32.gmra.mrb[0].mxu0 %v3444
      %v3547 = vpop.f32.mrb[0].mxu0
      %v3548 = vadd.f32 0.0, %v3547
      %v3549 = vpop.f32.mrb[0].mxu0
      %3550 = vdwg.mxu0
      %v3551 = vadd.f32 %v3430, %v3513
      %v3552 = vadd.f32 %v3431, %v3518
      %v3553 = vadd.f32 %v3432, %v3523
      %v3554 = vadd.f32 %v3433, %v3528
      %v3555 = vadd.f32 %v3434, %v3533
      %v3556 = vadd.f32 %v3435, %v3538
      %v3557 = vadd.f32 %v3436, %v3543
      %v3558 = vadd.f32 %v3437, %v3548
      %v3559 = vrot.slane %v523, 2
      %v3560 = vrot.slane %v524, 2
      %v3561 = vsel %vm814, %v3559, %v3560
      %s3562 = scalar_lea.vmem %s3, 184
      %v3563 = vld [vmem:[%s3562] sm:$0xff]
      %v3564 = vsel %vm571, %v3561, 0
      %3566 = vmatprep.subr.mxu0 0.0
      %3567 = vmatpush1.msra.mxu0 %v3563
      %3568 = vmatprep.subr.mxu0 0.0
      %3569 = vmatpush1.msra.mxu0 0.0
      %3570 = vmatprep.subr.mxu0 0.0
      %3571 = vmatpush1.msra.mxu0 0.0
      %3572 = vmatprep.subr.mxu0 0.0
      %3573 = vmatpush1.msra.mxu0 0.0
      %3574 = vmatprep.subr.mxu0 0.0
      %3575 = vmatpush1.msra.mxu0 0.0
      %3576 = vmatprep.subr.mxu0 0.0
      %3577 = vmatpush1.msra.mxu0 0.0
      %3578 = vmatprep.subr.mxu0 0.0
      %3579 = vmatpush1.msra.mxu0 0.0
      %3580 = vmatprep.subr.mxu0 0.0
      %3581 = vmatpush1.msra.mxu0 0.0
      %3582 = vmatprep.subr.mxu0 0.0
      %3583 = vmatpush1.msra.mxu0 0.0
      %3584 = vmatprep.subr.mxu0 0.0
      %3585 = vmatpush1.msra.mxu0 0.0
      %3586 = vmatprep.subr.mxu0 0.0
      %3587 = vmatpush1.msra.mxu0 0.0
      %3588 = vmatprep.subr.mxu0 0.0
      %3589 = vmatpush1.msra.mxu0 0.0
      %3590 = vmatprep.subr.mxu0 0.0
      %3591 = vmatpush1.msra.mxu0 0.0
      %3592 = vmatprep.subr.mxu0 0.0
      %3593 = vmatpush1.msra.mxu0 0.0
      %3594 = vmatprep.subr.mxu0 0.0
      %3595 = vmatpush1.msra.mxu0 0.0
      %3596 = vmatprep.subr.mxu0 0.0
      %3597 = vmatpush1.msra.mxu0 0.0
      %3598 = vmatprep.subr.mxu0 0.0
      %3599 = vmatpush1.msra.mxu0 0.0
      %3600 = vmatprep.subr.mxu0 0.0
      %3601 = vmatpush1.msra.mxu0 0.0
      %3602 = vmatprep.subr.mxu0 0.0
      %3603 = vmatpush1.msra.mxu0 0.0
      %3604 = vmatprep.subr.mxu0 0.0
      %3605 = vmatpush1.msra.mxu0 0.0
      %3606 = vmatprep.subr.mxu0 0.0
      %3607 = vmatpush1.msra.mxu0 0.0
      %3608 = vmatprep.subr.mxu0 0.0
      %3609 = vmatpush1.msra.mxu0 0.0
      %3610 = vmatprep.subr.mxu0 0.0
      %3611 = vmatpush1.msra.mxu0 0.0
      %3612 = vmatprep.subr.mxu0 0.0
      %3613 = vmatpush1.msra.mxu0 0.0
      %3614 = vmatprep.subr.mxu0 0.0
      %3615 = vmatpush1.msra.mxu0 0.0
      %3616 = vmatprep.subr.mxu0 0.0
      %3617 = vmatpush1.msra.mxu0 0.0
      %3618 = vmatprep.subr.mxu0 0.0
      %3619 = vmatpush1.msra.mxu0 0.0
      %3620 = vmatprep.subr.mxu0 0.0
      %3621 = vmatpush1.msra.mxu0 0.0
      %3622 = vmatprep.subr.mxu0 0.0
      %3623 = vmatpush1.msra.mxu0 0.0
      %3624 = vmatprep.subr.mxu0 0.0
      %3625 = vmatpush1.msra.mxu0 0.0
      %3626 = vmatprep.subr.mxu0 0.0
      %3627 = vmatpush1.msra.mxu0 0.0
      %3628 = vmatprep.subr.mxu0 0.0
      %3629 = vmatpush1.msra.mxu0 0.0
      %3630 = vmatprep.mubr.f32.mxu0 0.0
      %3631 = vmatmul.mubr.f32.gmra.mrb[0].mxu0 %v3193
      %v3632 = vpop.f32.mrb[0].mxu0
      %v3633 = vadd.f32 0.0, %v3632
      %v3634 = vpop.f32.mrb[0].mxu0
      %3635 = vmatprep.mubr.f32.mxu0 0.0
      %3636 = vmatmul.mubr.f32.gmra.mrb[0].mxu0 %v3195
      %v3637 = vpop.f32.mrb[0].mxu0
      %v3638 = vadd.f32 0.0, %v3637
      %v3639 = vpop.f32.mrb[0].mxu0
      %3640 = vmatprep.mubr.f32.mxu0 0.0
      %3641 = vmatmul.mubr.f32.gmra.mrb[0].mxu0 %v3197
      %v3642 = vpop.f32.mrb[0].mxu0
      %v3643 = vadd.f32 0.0, %v3642
      %v3644 = vpop.f32.mrb[0].mxu0
      %3645 = vmatprep.mubr.f32.mxu0 0.0
      %3646 = vmatmul.mubr.f32.gmra.mrb[0].mxu0 %v3199
      %v3647 = vpop.f32.mrb[0].mxu0
      %v3648 = vadd.f32 0.0, %v3647
      %v3649 = vpop.f32.mrb[0].mxu0
      %3650 = vmatprep.mubr.f32.mxu0 0.0
      %3651 = vmatmul.mubr.f32.gmra.mrb[0].mxu0 %v3201
      %v3652 = vpop.f32.mrb[0].mxu0
      %v3653 = vadd.f32 0.0, %v3652
      %v3654 = vpop.f32.mrb[0].mxu0
      %3655 = vmatprep.mubr.f32.mxu0 0.0
      %3656 = vmatmul.mubr.f32.gmra.mrb[0].mxu0 %v3203
      %v3657 = vpop.f32.mrb[0].mxu0
      %v3658 = vadd.f32 0.0, %v3657
      %v3659 = vpop.f32.mrb[0].mxu0
      %3660 = vmatprep.mubr.f32.mxu0 0.0
      %3661 = vmatmul.mubr.f32.gmra.mrb[0].mxu0 %v3205
      %v3662 = vpop.f32.mrb[0].mxu0
      %v3663 = vadd.f32 0.0, %v3662
      %v3664 = vpop.f32.mrb[0].mxu0
      %3665 = vmatprep.mubr.f32.mxu0 0.0
      %3666 = vmatmul.mubr.f32.gmra.mrb[0].mxu0 %v3564
      %v3667 = vpop.f32.mrb[0].mxu0
      %v3668 = vadd.f32 0.0, %v3667
      %v3669 = vpop.f32.mrb[0].mxu0
      %3670 = vdwg.mxu0
      %v3671 = vadd.f32 %v3551, %v3633
      %v3672 = vadd.f32 %v3552, %v3638
      %v3673 = vadd.f32 %v3553, %v3643
      %v3674 = vadd.f32 %v3554, %v3648
      %v3675 = vadd.f32 %v3555, %v3653
      %v3676 = vadd.f32 %v3556, %v3658
      %v3677 = vadd.f32 %v3557, %v3663
      %v3678 = vadd.f32 %v3558, %v3668
      %s3679 = scalar_lea.vmem %s3, 192
      %v3680 = vld [vmem:[%s3679] sm:$0xff]
      %v3682 = vsel %vm571, %v525, 0
      %3684 = vmatprep.subr.mxu0 0.0
      %3685 = vmatpush1.msra.mxu0 %v3680
      %3686 = vmatprep.subr.mxu0 0.0
      %3687 = vmatpush1.msra.mxu0 0.0
      %3688 = vmatprep.subr.mxu0 0.0
      %3689 = vmatpush1.msra.mxu0 0.0
      %3690 = vmatprep.subr.mxu0 0.0
      %3691 = vmatpush1.msra.mxu0 0.0
      %3692 = vmatprep.subr.mxu0 0.0
      %3693 = vmatpush1.msra.mxu0 0.0
      %3694 = vmatprep.subr.mxu0 0.0
      %3695 = vmatpush1.msra.mxu0 0.0
      %3696 = vmatprep.subr.mxu0 0.0
      %3697 = vmatpush1.msra.mxu0 0.0
      %3698 = vmatprep.subr.mxu0 0.0
      %3699 = vmatpush1.msra.mxu0 0.0
      %3700 = vmatprep.subr.mxu0 0.0
      %3701 = vmatpush1.msra.mxu0 0.0
      %3702 = vmatprep.subr.mxu0 0.0
      %3703 = vmatpush1.msra.mxu0 0.0
      %3704 = vmatprep.subr.mxu0 0.0
      %3705 = vmatpush1.msra.mxu0 0.0
      %3706 = vmatprep.subr.mxu0 0.0
      %3707 = vmatpush1.msra.mxu0 0.0
      %3708 = vmatprep.subr.mxu0 0.0
      %3709 = vmatpush1.msra.mxu0 0.0
      %3710 = vmatprep.subr.mxu0 0.0
      %3711 = vmatpush1.msra.mxu0 0.0
      %3712 = vmatprep.subr.mxu0 0.0
      %3713 = vmatpush1.msra.mxu0 0.0
      %3714 = vmatprep.subr.mxu0 0.0
      %3715 = vmatpush1.msra.mxu0 0.0
      %3716 = vmatprep.subr.mxu0 0.0
      %3717 = vmatpush1.msra.mxu0 0.0
      %3718 = vmatprep.subr.mxu0 0.0
      %3719 = vmatpush1.msra.mxu0 0.0
      %3720 = vmatprep.subr.mxu0 0.0
      %3721 = vmatpush1.msra.mxu0 0.0
      %3722 = vmatprep.subr.mxu0 0.0
      %3723 = vmatpush1.msra.mxu0 0.0
      %3724 = vmatprep.subr.mxu0 0.0
      %3725 = vmatpush1.msra.mxu0 0.0
      %3726 = vmatprep.subr.mxu0 0.0
      %3727 = vmatpush1.msra.mxu0 0.0
      %3728 = vmatprep.subr.mxu0 0.0
      %3729 = vmatpush1.msra.mxu0 0.0
      %3730 = vmatprep.subr.mxu0 0.0
      %3731 = vmatpush1.msra.mxu0 0.0
      %3732 = vmatprep.subr.mxu0 0.0
      %3733 = vmatpush1.msra.mxu0 0.0
      %3734 = vmatprep.subr.mxu0 0.0
      %3735 = vmatpush1.msra.mxu0 0.0
      %3736 = vmatprep.subr.mxu0 0.0
      %3737 = vmatpush1.msra.mxu0 0.0
      %3738 = vmatprep.subr.mxu0 0.0
      %3739 = vmatpush1.msra.mxu0 0.0
      %3740 = vmatprep.subr.mxu0 0.0
      %3741 = vmatpush1.msra.mxu0 0.0
      %3742 = vmatprep.subr.mxu0 0.0
      %3743 = vmatpush1.msra.mxu0 0.0
      %3744 = vmatprep.subr.mxu0 0.0
      %3745 = vmatpush1.msra.mxu0 0.0
      %3746 = vmatprep.subr.mxu0 0.0
      %3747 = vmatpush1.msra.mxu0 0.0
      %3748 = vmatprep.mubr.f32.mxu0 0.0
      %3749 = vmatmul.mubr.f32.gmra.mrb[0].mxu0 %v2872
      %v3750 = vpop.f32.mrb[0].mxu0
      %v3751 = vadd.f32 0.0, %v3750
      %v3752 = vpop.f32.mrb[0].mxu0
      %3753 = vmatprep.mubr.f32.mxu0 0.0
      %3754 = vmatmul.mubr.f32.gmra.mrb[0].mxu0 %v2875
      %v3755 = vpop.f32.mrb[0].mxu0
      %v3756 = vadd.f32 0.0, %v3755
      %v3757 = vpop.f32.mrb[0].mxu0
      %3758 = vmatprep.mubr.f32.mxu0 0.0
      %3759 = vmatmul.mubr.f32.gmra.mrb[0].mxu0 %v2878
      %v3760 = vpop.f32.mrb[0].mxu0
      %v3761 = vadd.f32 0.0, %v3760
      %v3762 = vpop.f32.mrb[0].mxu0
      %3763 = vmatprep.mubr.f32.mxu0 0.0
      %3764 = vmatmul.mubr.f32.gmra.mrb[0].mxu0 %v2881
      %v3765 = vpop.f32.mrb[0].mxu0
      %v3766 = vadd.f32 0.0, %v3765
      %v3767 = vpop.f32.mrb[0].mxu0
      %3768 = vmatprep.mubr.f32.mxu0 0.0
      %3769 = vmatmul.mubr.f32.gmra.mrb[0].mxu0 %v2884
      %v3770 = vpop.f32.mrb[0].mxu0
      %v3771 = vadd.f32 0.0, %v3770
      %v3772 = vpop.f32.mrb[0].mxu0
      %3773 = vmatprep.mubr.f32.mxu0 0.0
      %3774 = vmatmul.mubr.f32.gmra.mrb[0].mxu0 %v2887
      %v3775 = vpop.f32.mrb[0].mxu0
      %v3776 = vadd.f32 0.0, %v3775
      %v3777 = vpop.f32.mrb[0].mxu0
      %3778 = vmatprep.mubr.f32.mxu0 0.0
      %3779 = vmatmul.mubr.f32.gmra.mrb[0].mxu0 %v3323
      %v3780 = vpop.f32.mrb[0].mxu0
      %v3781 = vadd.f32 0.0, %v3780
      %v3782 = vpop.f32.mrb[0].mxu0
      %3783 = vmatprep.mubr.f32.mxu0 0.0
      %3784 = vmatmul.mubr.f32.gmra.mrb[0].mxu0 %v3682
      %v3785 = vpop.f32.mrb[0].mxu0
      %v3786 = vadd.f32 0.0, %v3785
      %v3787 = vpop.f32.mrb[0].mxu0
      %3788 = vdwg.mxu0
      %v3789 = vadd.f32 %v3671, %v3751
      %v3790 = vadd.f32 %v3672, %v3756
      %v3791 = vadd.f32 %v3673, %v3761
      %v3792 = vadd.f32 %v3674, %v3766
      %v3793 = vadd.f32 %v3675, %v3771
      %v3794 = vadd.f32 %v3676, %v3776
      %v3795 = vadd.f32 %v3677, %v3781
      %v3796 = vadd.f32 %v3678, %v3786
      %v3798 = vrot.slane %v525, 1
      %v3799 = vrot.slane %v526, 1
      %v3800 = vsel %vm544, %v3798, %v3799
      %s3801 = scalar_lea.vmem %s3, 200
      %v3802 = vld [vmem:[%s3801] sm:$0xff]
      %v3803 = vsel %vm571, %v3800, 0
      %3805 = vmatprep.subr.mxu0 0.0
      %3806 = vmatpush1.msra.mxu0 %v3802
      %3807 = vmatprep.subr.mxu0 0.0
      %3808 = vmatpush1.msra.mxu0 0.0
      %3809 = vmatprep.subr.mxu0 0.0
      %3810 = vmatpush1.msra.mxu0 0.0
      %3811 = vmatprep.subr.mxu0 0.0
      %3812 = vmatpush1.msra.mxu0 0.0
      %3813 = vmatprep.subr.mxu0 0.0
      %3814 = vmatpush1.msra.mxu0 0.0
      %3815 = vmatprep.subr.mxu0 0.0
      %3816 = vmatpush1.msra.mxu0 0.0
      %3817 = vmatprep.subr.mxu0 0.0
      %3818 = vmatpush1.msra.mxu0 0.0
      %3819 = vmatprep.subr.mxu0 0.0
      %3820 = vmatpush1.msra.mxu0 0.0
      %3821 = vmatprep.subr.mxu0 0.0
      %3822 = vmatpush1.msra.mxu0 0.0
      %3823 = vmatprep.subr.mxu0 0.0
      %3824 = vmatpush1.msra.mxu0 0.0
      %3825 = vmatprep.subr.mxu0 0.0
      %3826 = vmatpush1.msra.mxu0 0.0
      %3827 = vmatprep.subr.mxu0 0.0
      %3828 = vmatpush1.msra.mxu0 0.0
      %3829 = vmatprep.subr.mxu0 0.0
      %3830 = vmatpush1.msra.mxu0 0.0
      %3831 = vmatprep.subr.mxu0 0.0
      %3832 = vmatpush1.msra.mxu0 0.0
      %3833 = vmatprep.subr.mxu0 0.0
      %3834 = vmatpush1.msra.mxu0 0.0
      %3835 = vmatprep.subr.mxu0 0.0
      %3836 = vmatpush1.msra.mxu0 0.0
      %3837 = vmatprep.subr.mxu0 0.0
      %3838 = vmatpush1.msra.mxu0 0.0
      %3839 = vmatprep.subr.mxu0 0.0
      %3840 = vmatpush1.msra.mxu0 0.0
      %3841 = vmatprep.subr.mxu0 0.0
      %3842 = vmatpush1.msra.mxu0 0.0
      %3843 = vmatprep.subr.mxu0 0.0
      %3844 = vmatpush1.msra.mxu0 0.0
      %3845 = vmatprep.subr.mxu0 0.0
      %3846 = vmatpush1.msra.mxu0 0.0
      %3847 = vmatprep.subr.mxu0 0.0
      %3848 = vmatpush1.msra.mxu0 0.0
      %3849 = vmatprep.subr.mxu0 0.0
      %3850 = vmatpush1.msra.mxu0 0.0
      %3851 = vmatprep.subr.mxu0 0.0
      %3852 = vmatpush1.msra.mxu0 0.0
      %3853 = vmatprep.subr.mxu0 0.0
      %3854 = vmatpush1.msra.mxu0 0.0
      %3855 = vmatprep.subr.mxu0 0.0
      %3856 = vmatpush1.msra.mxu0 0.0
      %3857 = vmatprep.subr.mxu0 0.0
      %3858 = vmatpush1.msra.mxu0 0.0
      %3859 = vmatprep.subr.mxu0 0.0
      %3860 = vmatpush1.msra.mxu0 0.0
      %3861 = vmatprep.subr.mxu0 0.0
      %3862 = vmatpush1.msra.mxu0 0.0
      %3863 = vmatprep.subr.mxu0 0.0
      %3864 = vmatpush1.msra.mxu0 0.0
      %3865 = vmatprep.subr.mxu0 0.0
      %3866 = vmatpush1.msra.mxu0 0.0
      %3867 = vmatprep.subr.mxu0 0.0
      %3868 = vmatpush1.msra.mxu0 0.0
      %3869 = vmatprep.mubr.f32.mxu0 0.0
      %3870 = vmatmul.mubr.f32.gmra.mrb[0].mxu0 %v3040
      %v3871 = vpop.f32.mrb[0].mxu0
      %v3872 = vadd.f32 0.0, %v3871
      %v3873 = vpop.f32.mrb[0].mxu0
      %3874 = vmatprep.mubr.f32.mxu0 0.0
      %3875 = vmatmul.mubr.f32.gmra.mrb[0].mxu0 %v3042
      %v3876 = vpop.f32.mrb[0].mxu0
      %v3877 = vadd.f32 0.0, %v3876
      %v3878 = vpop.f32.mrb[0].mxu0
      %3879 = vmatprep.mubr.f32.mxu0 0.0
      %3880 = vmatmul.mubr.f32.gmra.mrb[0].mxu0 %v3044
      %v3881 = vpop.f32.mrb[0].mxu0
      %v3882 = vadd.f32 0.0, %v3881
      %v3883 = vpop.f32.mrb[0].mxu0
      %3884 = vmatprep.mubr.f32.mxu0 0.0
      %3885 = vmatmul.mubr.f32.gmra.mrb[0].mxu0 %v3046
      %v3886 = vpop.f32.mrb[0].mxu0
      %v3887 = vadd.f32 0.0, %v3886
      %v3888 = vpop.f32.mrb[0].mxu0
      %3889 = vmatprep.mubr.f32.mxu0 0.0
      %3890 = vmatmul.mubr.f32.gmra.mrb[0].mxu0 %v3048
      %v3891 = vpop.f32.mrb[0].mxu0
      %v3892 = vadd.f32 0.0, %v3891
      %v3893 = vpop.f32.mrb[0].mxu0
      %3894 = vmatprep.mubr.f32.mxu0 0.0
      %3895 = vmatmul.mubr.f32.gmra.mrb[0].mxu0 %v3050
      %v3896 = vpop.f32.mrb[0].mxu0
      %v3897 = vadd.f32 0.0, %v3896
      %v3898 = vpop.f32.mrb[0].mxu0
      %3899 = vmatprep.mubr.f32.mxu0 0.0
      %3900 = vmatmul.mubr.f32.gmra.mrb[0].mxu0 %v3444
      %v3901 = vpop.f32.mrb[0].mxu0
      %v3902 = vadd.f32 0.0, %v3901
      %v3903 = vpop.f32.mrb[0].mxu0
      %3904 = vmatprep.mubr.f32.mxu0 0.0
      %3905 = vmatmul.mubr.f32.gmra.mrb[0].mxu0 %v3803
      %v3906 = vpop.f32.mrb[0].mxu0
      %v3907 = vadd.f32 0.0, %v3906
      %v3908 = vpop.f32.mrb[0].mxu0
      %3909 = vdwg.mxu0
      %v3910 = vadd.f32 %v3789, %v3872
      %v3911 = vadd.f32 %v3790, %v3877
      %v3912 = vadd.f32 %v3791, %v3882
      %v3913 = vadd.f32 %v3792, %v3887
      %v3914 = vadd.f32 %v3793, %v3892
      %v3915 = vadd.f32 %v3794, %v3897
      %v3916 = vadd.f32 %v3795, %v3902
      %v3917 = vadd.f32 %v3796, %v3907
      %v3918 = vrot.slane %v525, 2
      %v3919 = vrot.slane %v526, 2
      %v3920 = vsel %vm814, %v3918, %v3919
      %s3921 = scalar_lea.vmem %s3, 208
      %v3922 = vld [vmem:[%s3921] sm:$0xff]
      %v3923 = vsel %vm571, %v3920, 0
      %3925 = vmatprep.subr.mxu0 0.0
      %3926 = vmatpush1.msra.mxu0 %v3922
      %3927 = vmatprep.subr.mxu0 0.0
      %3928 = vmatpush1.msra.mxu0 0.0
      %3929 = vmatprep.subr.mxu0 0.0
      %3930 = vmatpush1.msra.mxu0 0.0
      %3931 = vmatprep.subr.mxu0 0.0
      %3932 = vmatpush1.msra.mxu0 0.0
      %3933 = vmatprep.subr.mxu0 0.0
      %3934 = vmatpush1.msra.mxu0 0.0
      %3935 = vmatprep.subr.mxu0 0.0
      %3936 = vmatpush1.msra.mxu0 0.0
      %3937 = vmatprep.subr.mxu0 0.0
      %3938 = vmatpush1.msra.mxu0 0.0
      %3939 = vmatprep.subr.mxu0 0.0
      %3940 = vmatpush1.msra.mxu0 0.0
      %3941 = vmatprep.subr.mxu0 0.0
      %3942 = vmatpush1.msra.mxu0 0.0
      %3943 = vmatprep.subr.mxu0 0.0
      %3944 = vmatpush1.msra.mxu0 0.0
      %3945 = vmatprep.subr.mxu0 0.0
      %3946 = vmatpush1.msra.mxu0 0.0
      %3947 = vmatprep.subr.mxu0 0.0
      %3948 = vmatpush1.msra.mxu0 0.0
      %3949 = vmatprep.subr.mxu0 0.0
      %3950 = vmatpush1.msra.mxu0 0.0
      %3951 = vmatprep.subr.mxu0 0.0
      %3952 = vmatpush1.msra.mxu0 0.0
      %3953 = vmatprep.subr.mxu0 0.0
      %3954 = vmatpush1.msra.mxu0 0.0
      %3955 = vmatprep.subr.mxu0 0.0
      %3956 = vmatpush1.msra.mxu0 0.0
      %3957 = vmatprep.subr.mxu0 0.0
      %3958 = vmatpush1.msra.mxu0 0.0
      %3959 = vmatprep.subr.mxu0 0.0
      %3960 = vmatpush1.msra.mxu0 0.0
      %3961 = vmatprep.subr.mxu0 0.0
      %3962 = vmatpush1.msra.mxu0 0.0
      %3963 = vmatprep.subr.mxu0 0.0
      %3964 = vmatpush1.msra.mxu0 0.0
      %3965 = vmatprep.subr.mxu0 0.0
      %3966 = vmatpush1.msra.mxu0 0.0
      %3967 = vmatprep.subr.mxu0 0.0
      %3968 = vmatpush1.msra.mxu0 0.0
      %3969 = vmatprep.subr.mxu0 0.0
      %3970 = vmatpush1.msra.mxu0 0.0
      %3971 = vmatprep.subr.mxu0 0.0
      %3972 = vmatpush1.msra.mxu0 0.0
      %3973 = vmatprep.subr.mxu0 0.0
      %3974 = vmatpush1.msra.mxu0 0.0
      %3975 = vmatprep.subr.mxu0 0.0
      %3976 = vmatpush1.msra.mxu0 0.0
      %3977 = vmatprep.subr.mxu0 0.0
      %3978 = vmatpush1.msra.mxu0 0.0
      %3979 = vmatprep.subr.mxu0 0.0
      %3980 = vmatpush1.msra.mxu0 0.0
      %3981 = vmatprep.subr.mxu0 0.0
      %3982 = vmatpush1.msra.mxu0 0.0
      %3983 = vmatprep.subr.mxu0 0.0
      %3984 = vmatpush1.msra.mxu0 0.0
      %3985 = vmatprep.subr.mxu0 0.0
      %3986 = vmatpush1.msra.mxu0 0.0
      %3987 = vmatprep.subr.mxu0 0.0
      %3988 = vmatpush1.msra.mxu0 0.0
      %3989 = vmatprep.mubr.f32.mxu0 0.0
      %3990 = vmatmul.mubr.f32.gmra.mrb[0].mxu0 %v3195
      %v3991 = vpop.f32.mrb[0].mxu0
      %v3992 = vadd.f32 0.0, %v3991
      %v3993 = vpop.f32.mrb[0].mxu0
      %3994 = vmatprep.mubr.f32.mxu0 0.0
      %3995 = vmatmul.mubr.f32.gmra.mrb[0].mxu0 %v3197
      %v3996 = vpop.f32.mrb[0].mxu0
      %v3997 = vadd.f32 0.0, %v3996
      %v3998 = vpop.f32.mrb[0].mxu0
      %3999 = vmatprep.mubr.f32.mxu0 0.0
      %4000 = vmatmul.mubr.f32.gmra.mrb[0].mxu0 %v3199
      %v4001 = vpop.f32.mrb[0].mxu0
      %v4002 = vadd.f32 0.0, %v4001
      %v4003 = vpop.f32.mrb[0].mxu0
      %4004 = vmatprep.mubr.f32.mxu0 0.0
      %4005 = vmatmul.mubr.f32.gmra.mrb[0].mxu0 %v3201
      %v4006 = vpop.f32.mrb[0].mxu0
      %v4007 = vadd.f32 0.0, %v4006
      %v4008 = vpop.f32.mrb[0].mxu0
      %4009 = vmatprep.mubr.f32.mxu0 0.0
      %4010 = vmatmul.mubr.f32.gmra.mrb[0].mxu0 %v3203
      %v4011 = vpop.f32.mrb[0].mxu0
      %v4012 = vadd.f32 0.0, %v4011
      %v4013 = vpop.f32.mrb[0].mxu0
      %4014 = vmatprep.mubr.f32.mxu0 0.0
      %4015 = vmatmul.mubr.f32.gmra.mrb[0].mxu0 %v3205
      %v4016 = vpop.f32.mrb[0].mxu0
      %v4017 = vadd.f32 0.0, %v4016
      %v4018 = vpop.f32.mrb[0].mxu0
      %4019 = vmatprep.mubr.f32.mxu0 0.0
      %4020 = vmatmul.mubr.f32.gmra.mrb[0].mxu0 %v3564
      %v4021 = vpop.f32.mrb[0].mxu0
      %v4022 = vadd.f32 0.0, %v4021
      %v4023 = vpop.f32.mrb[0].mxu0
      %4024 = vmatprep.mubr.f32.mxu0 0.0
      %4025 = vmatmul.mubr.f32.gmra.mrb[0].mxu0 %v3923
      %v4026 = vpop.f32.mrb[0].mxu0
      %v4027 = vadd.f32 0.0, %v4026
      %v4028 = vpop.f32.mrb[0].mxu0
      %4029 = vdwg.mxu0
      %v4030 = vadd.f32 %v3910, %v3992
      %v4031 = vadd.f32 %v3911, %v3997
      %v4032 = vadd.f32 %v3912, %v4002
      %v4033 = vadd.f32 %v3913, %v4007
      %v4034 = vadd.f32 %v3914, %v4012
      %v4035 = vadd.f32 %v3915, %v4017
      %v4036 = vadd.f32 %v3916, %v4022
      %v4037 = vadd.f32 %v3917, %v4027
      %v4038 = vpack.c.bf16 %v4031, %v4030
      %v4039 = vpack.c.bf16 %v4033, %v4032
      %v4040 = vpack.c.bf16 %v4035, %v4034
      %v4041 = vpack.c.bf16 %v4037, %v4036
      %v4046 = vunpack.c.l.b16 %v4038
      %v4047 = vunpack.c.h.b16 %v4038
      %v4048 = vunpack.c.l.b16 %v4039
      %v4049 = vunpack.c.h.b16 %v4039
      %v4050 = vunpack.c.l.b16 %v4040
      %v4051 = vunpack.c.h.b16 %v4040
      %v4052 = vunpack.c.l.b16 %v4041
      %v4053 = vunpack.c.h.b16 %v4041
      %v4054 = vpack.c.b16 %v4046, %v4046
      %v4055 = vpack.c.b16 %v4047, %v4047
      %v4056 = vpack.c.b16 %v4048, %v4048
      %v4057 = vpack.c.b16 %v4049, %v4049
      %v4058 = vpack.c.b16 %v4050, %v4050
      %v4059 = vpack.c.b16 %v4051, %v4051
      %v4060 = vpack.c.b16 %v4052, %v4052
      %v4061 = vpack.c.b16 %v4053, %v4053
      %vm4070 = vcmask 27648
      %4071 = vst.msk [vmem:[%s392] sm:$0xf] %vm4070, %v4054
      %4072 = vst.msk [vmem:[%s392 + $0x4] sm:$0xf] %vm4070, %v4055
      %4073 = vst.msk [vmem:[%s392 + $0x8] sm:$0xf] %vm4070, %v4056
      %4074 = vst.msk [vmem:[%s392 + $0xc] sm:$0xf] %vm4070, %v4057
      %4075 = vst.msk [vmem:[%s392 + $0x10] sm:$0xf] %vm4070, %v4058
      %4076 = vst.msk [vmem:[%s392 + $0x14] sm:$0xf] %vm4070, %v4059
      %4077 = vst.msk [vmem:[%s392 + $0x18] sm:$0xf] %vm4070, %v4060
      %4078 = vst.msk [vmem:[%s392 + $0x1c] sm:$0xf] %vm4070, %v4061
      %vm4079 = vcmask 31744
      %v4080 = vsel %vm4079, %v4030, 0.0
      %v4081 = vsel %vm4079, %v4031, 0.0
      %v4082 = vadd.f32 %v4080, %v4081
      %v4083 = vsel %vm4079, %v4032, 0.0
      %v4084 = vadd.f32 %v4082, %v4083
      %v4085 = vsel %vm4079, %v4033, 0.0
      %v4086 = vadd.f32 %v4084, %v4085
      %v4087 = vsel %vm4079, %v4034, 0.0
      %v4088 = vadd.f32 %v4086, %v4087
      %v4089 = vsel %vm4079, %v4035, 0.0
      %v4090 = vadd.f32 %v4088, %v4089
      %v4091 = vsel %vm4079, %v4036, 0.0
      %v4092 = vadd.f32 %v4090, %v4091
      %v4093 = vsel %vm4079, %v4037, 0.0
      %v4094 = vadd.f32 %v4092, %v4093
      %v4095 = vrot.slane %v4094, 4
      %v4096 = vadd.f32 %v4094, %v4095
      %v4097 = vrot.slane %v4096, 2
      %v4098 = vadd.f32 %v4096, %v4097
      %v4099 = vrot.slane %v4098, 1
      %v4100 = vadd.f32 %v4098, %v4099
      %vm4101 = vcmask 24576
      %4102 = vst.msk [vmem:[%s399] sm:$0x1] %vm4101, %v4100
      %v4103 = vmul.f32 %v4030, %v4030
      %v4104 = vmul.f32 %v4031, %v4031
      %v4105 = vmul.f32 %v4032, %v4032
      %v4106 = vmul.f32 %v4033, %v4033
      %v4107 = vmul.f32 %v4034, %v4034
      %v4108 = vmul.f32 %v4035, %v4035
      %v4109 = vmul.f32 %v4036, %v4036
      %v4110 = vmul.f32 %v4037, %v4037
      %v4111 = vsel %vm4079, %v4103, 0.0
      %v4112 = vsel %vm4079, %v4104, 0.0
      %v4113 = vadd.f32 %v4111, %v4112
      %v4114 = vsel %vm4079, %v4105, 0.0
      %v4115 = vadd.f32 %v4113, %v4114
      %v4116 = vsel %vm4079, %v4106, 0.0
      %v4117 = vadd.f32 %v4115, %v4116
      %v4118 = vsel %vm4079, %v4107, 0.0
      %v4119 = vadd.f32 %v4117, %v4118
      %v4120 = vsel %vm4079, %v4108, 0.0
      %v4121 = vadd.f32 %v4119, %v4120
      %v4122 = vsel %vm4079, %v4109, 0.0
      %v4123 = vadd.f32 %v4121, %v4122
      %v4124 = vsel %vm4079, %v4110, 0.0
      %v4125 = vadd.f32 %v4123, %v4124
      %v4126 = vrot.slane %v4125, 4
      %v4127 = vadd.f32 %v4125, %v4126
      %v4128 = vrot.slane %v4127, 2
      %v4129 = vadd.f32 %v4127, %v4128
      %v4130 = vrot.slane %v4129, 1
      %v4131 = vadd.f32 %v4129, %v4130
      %4132 = vst.msk [vmem:[%s406] sm:$0x1] %vm4101, %v4131
      %p4133 = scmp.lt.s32.totalorder %s23, 1
      %s4134 = scalar_select %p4133, %s23, 1
      %p4135 = scmp.lt.s32.totalorder %s22, 7
      %s4136 = scalar_select %p4135, %s22, 7
      %s4137 = smul.addr %s4136, 8
      %s4138 = smul.addr %s4134, 64
      %s4139 = sadd.s32 %s4137, %s4138
      %s4140 = smul.addr %s4139, 4
      %s4141 = scalar_lea.vmem %s4, %s4140
      %p4142 = scmp.lt.s32.totalorder %s23, 1
      %s4143 = scalar_select %p4142, %s23, 1
      %p4144 = scmp.lt.s32.totalorder %s22, 7
      %s4145 = scalar_select %p4144, %s22, 7
      %s4146 = smul.addr %s4143, 8
      %s4147 = sadd.s32 %s4145, %s4146
      %s4148 = scalar_lea.vmem %s5, %s4147
      %p4149 = scmp.lt.s32.totalorder %s23, 1
      %s4150 = scalar_select %p4149, %s23, 1
      %p4151 = scmp.lt.s32.totalorder %s22, 7
      %s4152 = scalar_select %p4151, %s22, 7
      %s4153 = smul.addr %s4150, 8
      %s4154 = sadd.s32 %s4152, %s4153
      %s4155 = scalar_lea.vmem %s6, %s4154
      // Predicated region
      $region37: #{bridge_block.6} parent=35 // pred_check
        %p4156 = pneg %p159
      $region38: #{bridge_block.6} parent=35 // pred_check_branch
        %4158 = sbr.rel (%p4156) target = $region40
      $region39: #{bridge_block.6} parent=35 // pred_region
        _
      $region40: #{bridge_block.6} parent=35 // pred_fallthru
        _
      // Predicated region
      $region41: #{bridge_block.6} parent=35 // pred_check
        %p4159 = pneg %p187
      $region42: #{bridge_block.6} parent=35 // pred_check_branch
        %4161 = sbr.rel (%p4159) target = $region44
      $region43: #{bridge_block.6} parent=35 // pred_region
        _
      $region44: #{bridge_block.6} parent=35 // pred_fallthru
        _
      // Predicated region
      $region45: #{bridge_block.6} parent=35 // pred_check
        %p4162 = pneg %p215
      $region46: #{bridge_block.6} parent=35 // pred_check_branch
        %4164 = sbr.rel (%p4162) target = $region48
      $region47: #{bridge_block.6} parent=35 // pred_region
        _
      $region48: #{bridge_block.6} parent=35 // pred_fallthru
        _
    $region36: #{bridge_block.6} parent=5 // pred_fallthru
      _
    %p4165 = scmp.le.s32.totalorder 2, %s13
    // Predicated region
    $region49: #{bridge_block.6} parent=5 // pred_check
      %p4166 = pneg %p4165
    $region50: #{bridge_block.6} parent=5 // pred_check_branch
      %4168 = sbr.rel (%p4166) target = $region52
    $region51: #{bridge_block.6} parent=5 // pred_region
      %s4169 = ssub.s32 %s13, 2
      // Predicated region
      $region53: #{bridge_block.6} parent=51 // pred_check
        %p4170 = pneg %p165
      $region54: #{bridge_block.6} parent=51 // pred_check_branch
        %4172 = sbr.rel (%p4170) target = $region56
      $region55: #{bridge_block.6} parent=51 // pred_region
        %p4173 = scmp.lt.s32.totalorder %s25, 1
        %s4174 = scalar_select %p4173, %s25, 1
        %p4175 = scmp.lt.s32.totalorder %s24, 7
        %s4176 = scalar_select %p4175, %s24, 7
        %s4177 = smul.addr %s4176, 8
        %s4178 = smul.addr %s4174, 64
        %s4179 = sadd.s32 %s4177, %s4178
        %s4180 = smul.addr %s4179, 4
        %s4181 = scalar_lea.vmem %s4, %s4180
      $region56: #{bridge_block.6} parent=51 // pred_fallthru
        _
      // Predicated region
      $region57: #{bridge_block.6} parent=51 // pred_check
        %p4182 = pneg %p193
      $region58: #{bridge_block.6} parent=51 // pred_check_branch
        %4184 = sbr.rel (%p4182) target = $region60
      $region59: #{bridge_block.6} parent=51 // pred_region
        %p4185 = scmp.lt.s32.totalorder %s25, 1
        %s4186 = scalar_select %p4185, %s25, 1
        %p4187 = scmp.lt.s32.totalorder %s24, 7
        %s4188 = scalar_select %p4187, %s24, 7
        %s4189 = smul.addr %s4186, 8
        %s4190 = sadd.s32 %s4188, %s4189
        %s4191 = scalar_lea.vmem %s5, %s4190
      $region60: #{bridge_block.6} parent=51 // pred_fallthru
        _
      // Predicated region
      $region61: #{bridge_block.6} parent=51 // pred_check
        %p4192 = pneg %p221
      $region62: #{bridge_block.6} parent=51 // pred_check_branch
        %4194 = sbr.rel (%p4192) target = $region64
      $region63: #{bridge_block.6} parent=51 // pred_region
        %p4195 = scmp.lt.s32.totalorder %s25, 1
        %s4196 = scalar_select %p4195, %s25, 1
        %p4197 = scmp.lt.s32.totalorder %s24, 7
        %s4198 = scalar_select %p4197, %s24, 7
        %s4199 = smul.addr %s4196, 8
        %s4200 = sadd.s32 %s4198, %s4199
        %s4201 = scalar_lea.vmem %s6, %s4200
      $region64: #{bridge_block.6} parent=51 // pred_fallthru
        _
    $region52: #{bridge_block.6} parent=5 // pred_fallthru
      _
  $region6: #{bridge_block.6} parent=0 // loop_footer
    %s17 = sadd.s32 1, %s13
  $region7: #{bridge_block.6} parent=0 // loop_footer_branch
    %12 = sbr.rel target = $region3
  $region8: #{bridge_block.6} parent=0 // loop_exit
    _

</llo_original>
